<compile_context>
chip_gen: v6e
topology: v6e:2x2x1
jax: 0.10.0
libtpu: 0.0.40
codegen_flags: <defaults>
</compile_context>

<pallas_src>
import functools

import jax
import jax.numpy as jnp
from jax import lax
from jax.experimental import pallas as pl
from jax.experimental.pallas import tpu as pltpu

NEG_SLOPE = 0.01             # nn.LeakyReLU default negative_slope
BN_EPS = 1e-5                # nn.BatchNorm2d default eps
EXPANSION = 4
MATMUL_DTYPE = jnp.bfloat16  # matmul input dtype (f32 accumulation always)


def _leaky(y):
    return jnp.where(y >= 0, y, NEG_SLOPE * y)


def _round_up(x, m):
    return ((x + m - 1) // m) * m


# ---------------------------------------------------------------------------
# Fused kernel: conv1+bn1+relu -> conv2(3x3)+bn2+relu -> conv3+bn3
#               -> +residual -> relu     (all in VMEM, per image block)
# ---------------------------------------------------------------------------
def _bottleneck_kernel(x_ref, yy_ref, xx_ref, w1_ref, b1_ref, w2_ref, b2_ref,
                       w3_ref, b3_ref, o_ref, cols_ref, *, H, W, imgs):
    rows = imgs * H * W
    Cp = x_ref.shape[-1]                 # lane-padded in/out channel width
    Pp = w1_ref.shape[1]                 # lane-padded planes width

    # x is read from HBM once; also reused as the identity residual.
    x2d = x_ref[...].reshape(rows, Cp)   # f32

    # --- conv1 (1x1) + BN1 (scale folded into w1) + LeakyReLU ---------------
    h1 = jnp.dot(x2d.astype(MATMUL_DTYPE), w1_ref[...],
                 preferred_element_type=jnp.float32)
    h1 = _leaky(h1 + b1_ref[...])        # (rows, Pp) f32

    # --- conv2 (3x3, pad=1, stride=1) + BN2 + LeakyReLU ---------------------
    # Each tap: XLU roll of the flat activation + boundary mask, written
    # (lane-aligned, bf16) into the stacked-K cols scratch.  Masks also kill
    # any cross-image / wrap-around contamination when imgs > 1.
    yy = yy_ref[...]                     # (rows, 1) int32: row within image
    xx = xx_ref[...]                     # (rows, 1) int32: col within image
    for ky in range(3):
        for kx in range(3):
            dy, dx = ky - 1, kx - 1
            s = dy * W + dx              # flat-index shift of the source pixel
            rolled = h1 if s == 0 else pltpu.roll(h1, shift=(-s) % rows, axis=0)
            conds = []
            if dy == -1:
                conds.append(yy >= 1)
            elif dy == 1:
                conds.append(yy <= H - 2)
            if dx == -1:
                conds.append(xx >= 1)
            elif dx == 1:
                conds.append(xx <= W - 2)
            tap = rolled
            if conds:
                valid = conds[0]
                for c in conds[1:]:
                    valid = valid & c
                tap = jnp.where(valid, rolled, 0.0)
            t = ky * 3 + kx
            cols_ref[:, t * Pp:(t + 1) * Pp] = tap.astype(MATMUL_DTYPE)

    # One deep-K matmul: (rows, 9*Pp) @ (9*Pp, Pp), f32 accumulation.
    h2 = jnp.dot(cols_ref[...], w2_ref[...], preferred_element_type=jnp.float32)
    h2 = _leaky(h2 + b2_ref[...])        # (rows, Pp) f32

    # --- conv3 (1x1) + BN3 + identity residual + LeakyReLU ------------------
    y = jnp.dot(h2.astype(MATMUL_DTYPE), w3_ref[...],
                preferred_element_type=jnp.float32)
    out = _leaky(y + b3_ref[...] + x2d)  # padded lanes stay exactly 0
    o_ref[...] = out.reshape(o_ref.shape)


# ---------------------------------------------------------------------------
# Wrapper: layout glue, BN folding, lane padding, batching, pallas_call
# ---------------------------------------------------------------------------
def _fold_bn(gamma, beta, mean, var):
    scale = gamma / jnp.sqrt(var + BN_EPS)
    return scale, beta - mean * scale


def _pick_batch_block(N, HW, Cp, Pp, budget_bytes=16 << 20):
    # Rough per-image VMEM: double-buffered x/out f32 blocks + bf16 cols
    # scratch + f32 intermediates.  Keep >=2 grid steps when N >= 2 so both
    # v7x TensorCores get work.
    per_img = HW * (4 * Cp * 4 + 9 * Pp * 2 + 8 * Pp * 4)
    b = max(1, budget_bytes // max(1, per_img))
    if N >= 2:
        b = min(b, max(1, N // 2))
    if HW % 8 != 0:
        b = 1
    return int(max(1, min(b, N)))


def bottleneck_forward(x_nchw, params, batch_block=None):
    N, Cin, H, W = x_nchw.shape
    P = params["w1"].shape[0]            # planes
    Cout = params["w3"].shape[0]         # planes * expansion
    if Cout != Cin:
        # TODO(synk): downsample / stride>1 residual path not implemented.
        raise ValueError(
            f"identity residual requires inplanes == planes*{EXPANSION} "
            f"(got Cin={Cin}, Cout={Cout})")

    HW = H * W
    Pp = _round_up(P, 128)               # lane-dense intermediate channels
    Cp = _round_up(Cin, 128)             # lane-dense in/out channels

    if batch_block is None:
        batch_block = _pick_batch_block(N, HW, Cp, Pp)
    Np = _round_up(N, batch_block)
    rows = batch_block * HW

    # NCHW -> NHWC, flatten spatial dims, zero-pad channels to Cp and batch
    # to a multiple of batch_block.
    x_nhwc = jnp.transpose(x_nchw, (0, 2, 3, 1)).astype(jnp.float32)
    x_flat = x_nhwc.reshape(N, HW, Cin)
    x_flat = jnp.pad(x_flat, ((0, Np - N), (0, 0), (0, Cp - Cin)))

    s1, t1 = _fold_bn(params["bn1_g"], params["bn1_b"], params["bn1_m"], params["bn1_v"])
    s2, t2 = _fold_bn(params["bn2_g"], params["bn2_b"], params["bn2_m"], params["bn2_v"])
    s3, t3 = _fold_bn(params["bn3_g"], params["bn3_b"], params["bn3_m"], params["bn3_v"])

    # BN scales folded into the conv weights; channel dims zero-padded.
    w1_mat = params["w1"].reshape(P, Cin).T * s1[None, :]                    # (Cin, P)
    w1_p = jnp.pad(w1_mat, ((0, Cp - Cin), (0, Pp - P))).astype(MATMUL_DTYPE)

    w2_taps = jnp.transpose(params["w2"], (2, 3, 1, 0)).reshape(9, P, P)     # (ky*3+kx, ci, co)
    w2_taps = w2_taps * s2[None, None, :]
    w2_p = jnp.pad(w2_taps, ((0, 0), (0, Pp - P), (0, Pp - P)))
    w2_p = w2_p.reshape(9 * Pp, Pp).astype(MATMUL_DTYPE)                     # stacked-K weight

    w3_mat = params["w3"].reshape(Cout, P).T * s3[None, :]                   # (P, Cout)
    w3_p = jnp.pad(w3_mat, ((0, Pp - P), (0, Cp - Cout))).astype(MATMUL_DTYPE)

    b1_p = jnp.pad(t1, (0, Pp - P)).reshape(1, Pp).astype(jnp.float32)
    b2_p = jnp.pad(t2, (0, Pp - P)).reshape(1, Pp).astype(jnp.float32)
    b3_p = jnp.pad(t3, (0, Cp - Cout)).reshape(1, Cp).astype(jnp.float32)

    # Per-row image coordinates for the conv2 boundary masks (resident).
    pos = jnp.arange(rows, dtype=jnp.int32)
    xx = (pos % W).reshape(rows, 1).astype(jnp.int32)
    yy = ((pos // W) % H).reshape(rows, 1).astype(jnp.int32)

    KW = 9 * Pp
    est_vmem = (4 * batch_block * HW * Cp * 4          # x/out blocks, double-buffered
                + rows * KW * 2                        # cols scratch (bf16)
                + 6 * rows * Pp * 4                    # f32 intermediates
                + (Cp * Pp + KW * Pp + Pp * Cp) * 2    # resident weights
                + (1 << 20))
    vmem_limit = int(min(128 << 20, max(32 << 20, int(est_vmem * 1.5))))

    out_flat = pl.pallas_call(
        functools.partial(_bottleneck_kernel, H=H, W=W, imgs=batch_block),
        out_shape=jax.ShapeDtypeStruct((Np, HW, Cp), jnp.float32),
        grid=(Np // batch_block,),
        in_specs=[
            pl.BlockSpec((batch_block, HW, Cp), lambda n: (n, 0, 0)),  # activations
            pl.BlockSpec((rows, 1), lambda n: (0, 0)),                 # yy coords (resident)
            pl.BlockSpec((rows, 1), lambda n: (0, 0)),                 # xx coords (resident)
            pl.BlockSpec((Cp, Pp), lambda n: (0, 0)),                  # w1 (resident)
            pl.BlockSpec((1, Pp), lambda n: (0, 0)),                   # bn1 shift
            pl.BlockSpec((KW, Pp), lambda n: (0, 0)),                  # w2 stacked (resident)
            pl.BlockSpec((1, Pp), lambda n: (0, 0)),                   # bn2 shift
            pl.BlockSpec((Pp, Cp), lambda n: (0, 0)),                  # w3 (resident)
            pl.BlockSpec((1, Cp), lambda n: (0, 0)),                   # bn3 shift
        ],
        out_specs=pl.BlockSpec((batch_block, HW, Cp), lambda n: (n, 0, 0)),
        scratch_shapes=[pltpu.VMEM((rows, KW), MATMUL_DTYPE)],         # cols (bf16)
        compiler_params=pltpu.CompilerParams(
            dimension_semantics=("parallel",),
            vmem_limit_bytes=vmem_limit),
    )(x_flat, yy, xx, w1_p, b1_p, w2_p, b2_p, w3_p, b3_p)

    out = out_flat[:N, :, :Cout].reshape(N, H, W, Cout)
    return jnp.transpose(out, (0, 3, 1, 2))   # back to NCHW


# ---------------------------------------------------------------------------
# Deterministic parameter init (shapes from Bottleneck.__init__)
# ---------------------------------------------------------------------------
def init_params(inplanes, planes, key):
    k1, k2, k3 = jax.random.split(key, 3)

    def bn_params(c, phase):
        g = 1.0 + 0.05 * jnp.arange(c, dtype=jnp.float32)
        b = 0.02 * jnp.arange(c, dtype=jnp.float32) - 0.1
        m = 0.03 * jnp.arange(c, dtype=jnp.float32) * ((-1.0) ** phase)
        v = 1.0 + 0.1 * jnp.arange(c, dtype=jnp.float32)
        return g, b, m, v

    p = {
        "w1": 0.1 * jax.random.normal(k1, (planes, inplanes, 1, 1), jnp.float32),
        "w2": 0.1 * jax.random.normal(k2, (planes, planes, 3, 3), jnp.float32),
        "w3": 0.1 * jax.random.normal(k3, (planes * EXPANSION, planes, 1, 1), jnp.float32),
    }
    p["bn1_g"], p["bn1_b"], p["bn1_m"], p["bn1_v"] = bn_params(planes, 0)
    p["bn2_g"], p["bn2_b"], p["bn2_m"], p["bn2_v"] = bn_params(planes, 1)
    p["bn3_g"], p["bn3_b"], p["bn3_m"], p["bn3_v"] = bn_params(planes * EXPANSION, 0)
    return p


# ---------------------------------------------------------------------------
# Pure-JAX (NCHW) reference for correctness check
# ---------------------------------------------------------------------------
def reference_forward(x, p):
    def conv(a, w, pad=0):
        return lax.conv_general_dilated(
            a, w, window_strides=(1, 1), padding=((pad, pad), (pad, pad)),
            dimension_numbers=("NCHW", "OIHW", "NCHW"))

    def bn(a, g, b, m, v):
        g, b, m, v = (t.reshape(1, -1, 1, 1) for t in (g, b, m, v))
        return (a - m) / jnp.sqrt(v + BN_EPS) * g + b

    out = _leaky(bn(conv(x, p["w1"]), p["bn1_g"], p["bn1_b"], p["bn1_m"], p["bn1_v"]))
    out = _leaky(bn(conv(out, p["w2"], pad=1), p["bn2_g"], p["bn2_b"], p["bn2_m"], p["bn2_v"]))
    out = bn(conv(out, p["w3"]), p["bn3_g"], p["bn3_b"], p["bn3_m"], p["bn3_v"])
    return _leaky(out + x)


if __name__ == "__main__":
    key = jax.random.PRNGKey(0)
    kx, kp = jax.random.split(key)

    inplanes, planes = 16, 4       # inplanes == planes * expansion -> identity residual
    N, H, W = 2, 16, 16

    x = jax.random.normal(kx, (N, inplanes, H, W), jnp.float32)
    params = init_params(inplanes, planes, kp)

    out = jax.jit(bottleneck_forward)(x, params)
    out = jax.block_until_ready(out)

    ref = reference_forward(x, params)
    assert out.shape == (N, planes * EXPANSION, H, W), out.shape

    # bf16 matmul inputs (f32 accumulation) -> looser tolerance; exact path
    # (MATMUL_DTYPE = float32) matches to 1e-4.
    tol = 5e-2 if MATMUL_DTYPE == jnp.bfloat16 else 1e-4
    max_err = float(jnp.max(jnp.abs(out - ref)))
    assert jnp.allclose(out, ref, atol=tol, rtol=tol), max_err

    print("KERNEL_OK")
</pallas_src>

<mosaic_0001>
module attributes {stable_mosaic.version = 11 : i64} {
  func.func @_bottleneck_kernel(%arg0: i32, %arg1: memref<1x256x128xf32, #tpu.memory_space<vmem>>, %arg2: memref<256x1xi32, #tpu.memory_space<vmem>>, %arg3: memref<256x1xi32, #tpu.memory_space<vmem>>, %arg4: memref<128x128xbf16, #tpu.memory_space<vmem>>, %arg5: memref<1x128xf32, #tpu.memory_space<vmem>>, %arg6: memref<1152x128xbf16, #tpu.memory_space<vmem>>, %arg7: memref<1x128xf32, #tpu.memory_space<vmem>>, %arg8: memref<128x128xbf16, #tpu.memory_space<vmem>>, %arg9: memref<1x128xf32, #tpu.memory_space<vmem>>, %arg10: memref<1x256x128xf32, #tpu.memory_space<vmem>>, %arg11: memref<256x1152xbf16, #tpu.memory_space<vmem>>) attributes {dimension_semantics = [#tpu.dimension_semantics<parallel>], iteration_bounds = array<i64: 2>, scalar_prefetch = 0 : i64, scratch_operands = 1 : i64, tpu.core_type = #tpu.core_type<tc>, window_params = [{transform_indices = @transform_0, window_bounds = array<i64: 1, 256, 128>}, {pipeline_mode = #tpu.pipeline_mode<synchronous>, transform_indices = @transform_1, window_bounds = array<i64: 256, 1>}, {pipeline_mode = #tpu.pipeline_mode<synchronous>, transform_indices = @transform_2, window_bounds = array<i64: 256, 1>}, {pipeline_mode = #tpu.pipeline_mode<synchronous>, transform_indices = @transform_3, window_bounds = array<i64: 128, 128>}, {pipeline_mode = #tpu.pipeline_mode<synchronous>, transform_indices = @transform_4, window_bounds = array<i64: 1, 128>}, {pipeline_mode = #tpu.pipeline_mode<synchronous>, transform_indices = @transform_5, window_bounds = array<i64: 1152, 128>}, {pipeline_mode = #tpu.pipeline_mode<synchronous>, transform_indices = @transform_6, window_bounds = array<i64: 1, 128>}, {pipeline_mode = #tpu.pipeline_mode<synchronous>, transform_indices = @transform_7, window_bounds = array<i64: 128, 128>}, {pipeline_mode = #tpu.pipeline_mode<synchronous>, transform_indices = @transform_8, window_bounds = array<i64: 1, 128>}, {transform_indices = @transform_9, window_bounds = array<i64: 1, 256, 128>}]} {
    %c0 = arith.constant 0 : index
    %c0_0 = arith.constant 0 : index
    %c0_1 = arith.constant 0 : index
    %0 = vector.load %arg1[%c0, %c0_0, %c0_1] : memref<1x256x128xf32, #tpu.memory_space<vmem>>, vector<1x256x128xf32>
    %1 = vector.shape_cast %0 : vector<1x256x128xf32> to vector<256x128xf32>
    %2 = arith.truncf %1 : vector<256x128xf32> to vector<256x128xbf16>
    %c0_2 = arith.constant 0 : index
    %c0_3 = arith.constant 0 : index
    %3 = vector.load %arg4[%c0_2, %c0_3] : memref<128x128xbf16, #tpu.memory_space<vmem>>, vector<128x128xbf16>
    %cst = arith.constant dense<0.000000e+00> : vector<256x128xf32>
    %4 = tpu.matmul %2, %3, %cst {dimension_numbers = #tpu.dot_dimension_numbers<[1], [0], [0], [1], [0, 0, 1, 1], [], []>} : vector<256x128xbf16>, vector<128x128xbf16>, vector<256x128xf32> -> vector<256x128xf32>
    %c0_4 = arith.constant 0 : index
    %c0_5 = arith.constant 0 : index
    %5 = vector.load %arg5[%c0_4, %c0_5] : memref<1x128xf32, #tpu.memory_space<vmem>>, vector<1x128xf32>
    %6 = vector.broadcast %5 : vector<1x128xf32> to vector<256x128xf32>
    %7 = arith.addf %4, %6 : vector<256x128xf32>
    %cst_6 = arith.constant 0.000000e+00 : f32
    %8 = vector.broadcast %cst_6 : f32 to vector<256x128xf32>
    %9 = arith.cmpf oge, %7, %8 : vector<256x128xf32>
    %cst_7 = arith.constant 0.00999999977 : f32
    %10 = vector.broadcast %cst_7 : f32 to vector<256x128xf32>
    %11 = arith.mulf %10, %7 : vector<256x128xf32>
    %12 = arith.select %9, %7, %11 : vector<256x128xi1>, vector<256x128xf32>
    %c0_8 = arith.constant 0 : index
    %c0_9 = arith.constant 0 : index
    %13 = vector.load %arg2[%c0_8, %c0_9] : memref<256x1xi32, #tpu.memory_space<vmem>>, vector<256x1xi32>
    %c0_10 = arith.constant 0 : index
    %c0_11 = arith.constant 0 : index
    %14 = vector.load %arg3[%c0_10, %c0_11] : memref<256x1xi32, #tpu.memory_space<vmem>>, vector<256x1xi32>
    %c17_i32 = arith.constant 17 : i32
    %15 = tpu.dynamic_rotate %12 by %c17_i32 dim 0 : vector<256x128xf32>, i32 -> vector<256x128xf32>
    %c1_i32 = arith.constant 1 : i32
    %16 = vector.broadcast %c1_i32 : i32 to vector<256x1xi32>
    %17 = arith.cmpi sge, %13, %16 : vector<256x1xi32>
    %c1_i32_12 = arith.constant 1 : i32
    %18 = vector.broadcast %c1_i32_12 : i32 to vector<256x1xi32>
    %19 = arith.cmpi sge, %14, %18 : vector<256x1xi32>
    %20 = arith.andi %17, %19 : vector<256x1xi1>
    %cst_13 = arith.constant 0.000000e+00 : f32
    %21 = vector.shape_cast %20 : vector<256x1xi1> to vector<256x1xi1>
    %22 = vector.broadcast %21 : vector<256x1xi1> to vector<256x128xi1>
    %23 = vector.broadcast %cst_13 : f32 to vector<256x128xf32>
    %24 = arith.select %22, %15, %23 : vector<256x128xi1>, vector<256x128xf32>
    %25 = arith.truncf %24 : vector<256x128xf32> to vector<256x128xbf16>
    %c0_14 = arith.constant 0 : index
    %c0_15 = arith.constant 0 : index
    %26 = vector.load %arg11[%c0_14, %c0_15] : memref<256x1152xbf16, #tpu.memory_space<vmem>>, vector<256x128xbf16>
    tpu.vector_store %arg11[%c0_14, %c0_15], %25 {strides = array<i32>} : memref<256x1152xbf16, #tpu.memory_space<vmem>>, vector<256x128xbf16>,
    %c16_i32 = arith.constant 16 : i32
    %27 = tpu.dynamic_rotate %12 by %c16_i32 dim 0 : vector<256x128xf32>, i32 -> vector<256x128xf32>
    %c1_i32_16 = arith.constant 1 : i32
    %28 = vector.broadcast %c1_i32_16 : i32 to vector<256x1xi32>
    %29 = arith.cmpi sge, %13, %28 : vector<256x1xi32>
    %cst_17 = arith.constant 0.000000e+00 : f32
    %30 = vector.shape_cast %29 : vector<256x1xi1> to vector<256x1xi1>
    %31 = vector.broadcast %30 : vector<256x1xi1> to vector<256x128xi1>
    %32 = vector.broadcast %cst_17 : f32 to vector<256x128xf32>
    %33 = arith.select %31, %27, %32 : vector<256x128xi1>, vector<256x128xf32>
    %34 = arith.truncf %33 : vector<256x128xf32> to vector<256x128xbf16>
    %c0_18 = arith.constant 0 : index
    %c128 = arith.constant 128 : index
    %35 = vector.load %arg11[%c0_18, %c128] : memref<256x1152xbf16, #tpu.memory_space<vmem>>, vector<256x128xbf16>
    tpu.vector_store %arg11[%c0_18, %c128], %34 {strides = array<i32>} : memref<256x1152xbf16, #tpu.memory_space<vmem>>, vector<256x128xbf16>,
    %c15_i32 = arith.constant 15 : i32
    %36 = tpu.dynamic_rotate %12 by %c15_i32 dim 0 : vector<256x128xf32>, i32 -> vector<256x128xf32>
    %c1_i32_19 = arith.constant 1 : i32
    %37 = vector.broadcast %c1_i32_19 : i32 to vector<256x1xi32>
    %38 = arith.cmpi sge, %13, %37 : vector<256x1xi32>
    %c14_i32 = arith.constant 14 : i32
    %39 = vector.broadcast %c14_i32 : i32 to vector<256x1xi32>
    %40 = arith.cmpi sle, %14, %39 : vector<256x1xi32>
    %41 = arith.andi %38, %40 : vector<256x1xi1>
    %cst_20 = arith.constant 0.000000e+00 : f32
    %42 = vector.shape_cast %41 : vector<256x1xi1> to vector<256x1xi1>
    %43 = vector.broadcast %42 : vector<256x1xi1> to vector<256x128xi1>
    %44 = vector.broadcast %cst_20 : f32 to vector<256x128xf32>
    %45 = arith.select %43, %36, %44 : vector<256x128xi1>, vector<256x128xf32>
    %46 = arith.truncf %45 : vector<256x128xf32> to vector<256x128xbf16>
    %c0_21 = arith.constant 0 : index
    %c256 = arith.constant 256 : index
    %47 = vector.load %arg11[%c0_21, %c256] : memref<256x1152xbf16, #tpu.memory_space<vmem>>, vector<256x128xbf16>
    tpu.vector_store %arg11[%c0_21, %c256], %46 {strides = array<i32>} : memref<256x1152xbf16, #tpu.memory_space<vmem>>, vector<256x128xbf16>,
    %c1_i32_22 = arith.constant 1 : i32
    %48 = tpu.dynamic_rotate %12 by %c1_i32_22 dim 0 : vector<256x128xf32>, i32 -> vector<256x128xf32>
    %c1_i32_23 = arith.constant 1 : i32
    %49 = vector.broadcast %c1_i32_23 : i32 to vector<256x1xi32>
    %50 = arith.cmpi sge, %14, %49 : vector<256x1xi32>
    %cst_24 = arith.constant 0.000000e+00 : f32
    %51 = vector.shape_cast %50 : vector<256x1xi1> to vector<256x1xi1>
    %52 = vector.broadcast %51 : vector<256x1xi1> to vector<256x128xi1>
    %53 = vector.broadcast %cst_24 : f32 to vector<256x128xf32>
    %54 = arith.select %52, %48, %53 : vector<256x128xi1>, vector<256x128xf32>
    %55 = arith.truncf %54 : vector<256x128xf32> to vector<256x128xbf16>
    %c0_25 = arith.constant 0 : index
    %c384 = arith.constant 384 : index
    %56 = vector.load %arg11[%c0_25, %c384] : memref<256x1152xbf16, #tpu.memory_space<vmem>>, vector<256x128xbf16>
    tpu.vector_store %arg11[%c0_25, %c384], %55 {strides = array<i32>} : memref<256x1152xbf16, #tpu.memory_space<vmem>>, vector<256x128xbf16>,
    %57 = arith.truncf %12 : vector<256x128xf32> to vector<256x128xbf16>
    %c0_26 = arith.constant 0 : index
    %c512 = arith.constant 512 : index
    %58 = vector.load %arg11[%c0_26, %c512] : memref<256x1152xbf16, #tpu.memory_space<vmem>>, vector<256x128xbf16>
    tpu.vector_store %arg11[%c0_26, %c512], %57 {strides = array<i32>} : memref<256x1152xbf16, #tpu.memory_space<vmem>>, vector<256x128xbf16>,
    %c255_i32 = arith.constant 255 : i32
    %59 = tpu.dynamic_rotate %12 by %c255_i32 dim 0 : vector<256x128xf32>, i32 -> vector<256x128xf32>
    %c14_i32_27 = arith.constant 14 : i32
    %60 = vector.broadcast %c14_i32_27 : i32 to vector<256x1xi32>
    %61 = arith.cmpi sle, %14, %60 : vector<256x1xi32>
    %cst_28 = arith.constant 0.000000e+00 : f32
    %62 = vector.shape_cast %61 : vector<256x1xi1> to vector<256x1xi1>
    %63 = vector.broadcast %62 : vector<256x1xi1> to vector<256x128xi1>
    %64 = vector.broadcast %cst_28 : f32 to vector<256x128xf32>
    %65 = arith.select %63, %59, %64 : vector<256x128xi1>, vector<256x128xf32>
    %66 = arith.truncf %65 : vector<256x128xf32> to vector<256x128xbf16>
    %c0_29 = arith.constant 0 : index
    %c640 = arith.constant 640 : index
    %67 = vector.load %arg11[%c0_29, %c640] : memref<256x1152xbf16, #tpu.memory_space<vmem>>, vector<256x128xbf16>
    tpu.vector_store %arg11[%c0_29, %c640], %66 {strides = array<i32>} : memref<256x1152xbf16, #tpu.memory_space<vmem>>, vector<256x128xbf16>,
    %c241_i32 = arith.constant 241 : i32
    %68 = tpu.dynamic_rotate %12 by %c241_i32 dim 0 : vector<256x128xf32>, i32 -> vector<256x128xf32>
    %c14_i32_30 = arith.constant 14 : i32
    %69 = vector.broadcast %c14_i32_30 : i32 to vector<256x1xi32>
    %70 = arith.cmpi sle, %13, %69 : vector<256x1xi32>
    %c1_i32_31 = arith.constant 1 : i32
    %71 = vector.broadcast %c1_i32_31 : i32 to vector<256x1xi32>
    %72 = arith.cmpi sge, %14, %71 : vector<256x1xi32>
    %73 = arith.andi %70, %72 : vector<256x1xi1>
    %cst_32 = arith.constant 0.000000e+00 : f32
    %74 = vector.shape_cast %73 : vector<256x1xi1> to vector<256x1xi1>
    %75 = vector.broadcast %74 : vector<256x1xi1> to vector<256x128xi1>
    %76 = vector.broadcast %cst_32 : f32 to vector<256x128xf32>
    %77 = arith.select %75, %68, %76 : vector<256x128xi1>, vector<256x128xf32>
    %78 = arith.truncf %77 : vector<256x128xf32> to vector<256x128xbf16>
    %c0_33 = arith.constant 0 : index
    %c768 = arith.constant 768 : index
    %79 = vector.load %arg11[%c0_33, %c768] : memref<256x1152xbf16, #tpu.memory_space<vmem>>, vector<256x128xbf16>
    tpu.vector_store %arg11[%c0_33, %c768], %78 {strides = array<i32>} : memref<256x1152xbf16, #tpu.memory_space<vmem>>, vector<256x128xbf16>,
    %c240_i32 = arith.constant 240 : i32
    %80 = tpu.dynamic_rotate %12 by %c240_i32 dim 0 : vector<256x128xf32>, i32 -> vector<256x128xf32>
    %c14_i32_34 = arith.constant 14 : i32
    %81 = vector.broadcast %c14_i32_34 : i32 to vector<256x1xi32>
    %82 = arith.cmpi sle, %13, %81 : vector<256x1xi32>
    %cst_35 = arith.constant 0.000000e+00 : f32
    %83 = vector.shape_cast %82 : vector<256x1xi1> to vector<256x1xi1>
    %84 = vector.broadcast %83 : vector<256x1xi1> to vector<256x128xi1>
    %85 = vector.broadcast %cst_35 : f32 to vector<256x128xf32>
    %86 = arith.select %84, %80, %85 : vector<256x128xi1>, vector<256x128xf32>
    %87 = arith.truncf %86 : vector<256x128xf32> to vector<256x128xbf16>
    %c0_36 = arith.constant 0 : index
    %c896 = arith.constant 896 : index
    %88 = vector.load %arg11[%c0_36, %c896] : memref<256x1152xbf16, #tpu.memory_space<vmem>>, vector<256x128xbf16>
    tpu.vector_store %arg11[%c0_36, %c896], %87 {strides = array<i32>} : memref<256x1152xbf16, #tpu.memory_space<vmem>>, vector<256x128xbf16>,
    %c239_i32 = arith.constant 239 : i32
    %89 = tpu.dynamic_rotate %12 by %c239_i32 dim 0 : vector<256x128xf32>, i32 -> vector<256x128xf32>
    %c14_i32_37 = arith.constant 14 : i32
    %90 = vector.broadcast %c14_i32_37 : i32 to vector<256x1xi32>
    %91 = arith.cmpi sle, %13, %90 : vector<256x1xi32>
    %c14_i32_38 = arith.constant 14 : i32
    %92 = vector.broadcast %c14_i32_38 : i32 to vector<256x1xi32>
    %93 = arith.cmpi sle, %14, %92 : vector<256x1xi32>
    %94 = arith.andi %91, %93 : vector<256x1xi1>
    %cst_39 = arith.constant 0.000000e+00 : f32
    %95 = vector.shape_cast %94 : vector<256x1xi1> to vector<256x1xi1>
    %96 = vector.broadcast %95 : vector<256x1xi1> to vector<256x128xi1>
    %97 = vector.broadcast %cst_39 : f32 to vector<256x128xf32>
    %98 = arith.select %96, %89, %97 : vector<256x128xi1>, vector<256x128xf32>
    %99 = arith.truncf %98 : vector<256x128xf32> to vector<256x128xbf16>
    %c0_40 = arith.constant 0 : index
    %c1024 = arith.constant 1024 : index
    %100 = vector.load %arg11[%c0_40, %c1024] : memref<256x1152xbf16, #tpu.memory_space<vmem>>, vector<256x128xbf16>
    tpu.vector_store %arg11[%c0_40, %c1024], %99 {strides = array<i32>} : memref<256x1152xbf16, #tpu.memory_space<vmem>>, vector<256x128xbf16>,
    %c0_41 = arith.constant 0 : index
    %c0_42 = arith.constant 0 : index
    %101 = vector.load %arg11[%c0_41, %c0_42] : memref<256x1152xbf16, #tpu.memory_space<vmem>>, vector<256x1152xbf16>
    %c0_43 = arith.constant 0 : index
    %c0_44 = arith.constant 0 : index
    %102 = vector.load %arg6[%c0_43, %c0_44] : memref<1152x128xbf16, #tpu.memory_space<vmem>>, vector<1152x128xbf16>
    %cst_45 = arith.constant dense<0.000000e+00> : vector<256x128xf32>
    %103 = tpu.matmul %101, %102, %cst_45 {dimension_numbers = #tpu.dot_dimension_numbers<[1], [0], [0], [1], [0, 0, 1, 1], [], []>} : vector<256x1152xbf16>, vector<1152x128xbf16>, vector<256x128xf32> -> vector<256x128xf32>
    %c0_46 = arith.constant 0 : index
    %c0_47 = arith.constant 0 : index
    %104 = vector.load %arg7[%c0_46, %c0_47] : memref<1x128xf32, #tpu.memory_space<vmem>>, vector<1x128xf32>
    %105 = vector.broadcast %104 : vector<1x128xf32> to vector<256x128xf32>
    %106 = arith.addf %103, %105 : vector<256x128xf32>
    %cst_48 = arith.constant 0.000000e+00 : f32
    %107 = vector.broadcast %cst_48 : f32 to vector<256x128xf32>
    %108 = arith.cmpf oge, %106, %107 : vector<256x128xf32>
    %cst_49 = arith.constant 0.00999999977 : f32
    %109 = vector.broadcast %cst_49 : f32 to vector<256x128xf32>
    %110 = arith.mulf %109, %106 : vector<256x128xf32>
    %111 = arith.select %108, %106, %110 : vector<256x128xi1>, vector<256x128xf32>
    %112 = arith.truncf %111 : vector<256x128xf32> to vector<256x128xbf16>
    %c0_50 = arith.constant 0 : index
    %c0_51 = arith.constant 0 : index
    %113 = vector.load %arg8[%c0_50, %c0_51] : memref<128x128xbf16, #tpu.memory_space<vmem>>, vector<128x128xbf16>
    %cst_52 = arith.constant dense<0.000000e+00> : vector<256x128xf32>
    %114 = tpu.matmul %112, %113, %cst_52 {dimension_numbers = #tpu.dot_dimension_numbers<[1], [0], [0], [1], [0, 0, 1, 1], [], []>} : vector<256x128xbf16>, vector<128x128xbf16>, vector<256x128xf32> -> vector<256x128xf32>
    %c0_53 = arith.constant 0 : index
    %c0_54 = arith.constant 0 : index
    %115 = vector.load %arg9[%c0_53, %c0_54] : memref<1x128xf32, #tpu.memory_space<vmem>>, vector<1x128xf32>
    %116 = vector.broadcast %115 : vector<1x128xf32> to vector<256x128xf32>
    %117 = arith.addf %114, %116 : vector<256x128xf32>
    %118 = arith.addf %117, %1 : vector<256x128xf32>
    %cst_55 = arith.constant 0.000000e+00 : f32
    %119 = vector.broadcast %cst_55 : f32 to vector<256x128xf32>
    %120 = arith.cmpf oge, %118, %119 : vector<256x128xf32>
    %cst_56 = arith.constant 0.00999999977 : f32
    %121 = vector.broadcast %cst_56 : f32 to vector<256x128xf32>
    %122 = arith.mulf %121, %118 : vector<256x128xf32>
    %123 = arith.select %120, %118, %122 : vector<256x128xi1>, vector<256x128xf32>
    %124 = vector.shape_cast %123 : vector<256x128xf32> to vector<1x256x128xf32>
    %c0_57 = arith.constant 0 : index
    %c0_58 = arith.constant 0 : index
    %c0_59 = arith.constant 0 : index
    %125 = vector.load %arg10[%c0_57, %c0_58, %c0_59] : memref<1x256x128xf32, #tpu.memory_space<vmem>>, vector<1x256x128xf32>
    tpu.vector_store %arg10[%c0_57, %c0_58, %c0_59], %124 {strides = array<i32>} : memref<1x256x128xf32, #tpu.memory_space<vmem>>, vector<1x256x128xf32>,
    return
  }
  func.func @transform_0(%arg0: i32) -> (i32, i32, i32) {
    %c0_i32 = arith.constant 0 : i32
    %c0_i32_0 = arith.constant 0 : i32
    %c0_i32_1 = arith.constant 0 : i32
    return %arg0, %c0_i32, %c0_i32_0 : i32, i32, i32
  }
  func.func @transform_1(%arg0: i32) -> (i32, i32) {
    %c0_i32 = arith.constant 0 : i32
    %c0_i32_0 = arith.constant 0 : i32
    %c0_i32_1 = arith.constant 0 : i32
    return %c0_i32, %c0_i32_0 : i32, i32
  }
  func.func @transform_2(%arg0: i32) -> (i32, i32) {
    %c0_i32 = arith.constant 0 : i32
    %c0_i32_0 = arith.constant 0 : i32
    %c0_i32_1 = arith.constant 0 : i32
    return %c0_i32, %c0_i32_0 : i32, i32
  }
  func.func @transform_3(%arg0: i32) -> (i32, i32) {
    %c0_i32 = arith.constant 0 : i32
    %c0_i32_0 = arith.constant 0 : i32
    %c0_i32_1 = arith.constant 0 : i32
    return %c0_i32, %c0_i32_0 : i32, i32
  }
  func.func @transform_4(%arg0: i32) -> (i32, i32) {
    %c0_i32 = arith.constant 0 : i32
    %c0_i32_0 = arith.constant 0 : i32
    %c0_i32_1 = arith.constant 0 : i32
    return %c0_i32, %c0_i32_0 : i32, i32
  }
  func.func @transform_5(%arg0: i32) -> (i32, i32) {
    %c0_i32 = arith.constant 0 : i32
    %c0_i32_0 = arith.constant 0 : i32
    %c0_i32_1 = arith.constant 0 : i32
    return %c0_i32, %c0_i32_0 : i32, i32
  }
  func.func @transform_6(%arg0: i32) -> (i32, i32) {
    %c0_i32 = arith.constant 0 : i32
    %c0_i32_0 = arith.constant 0 : i32
    %c0_i32_1 = arith.constant 0 : i32
    return %c0_i32, %c0_i32_0 : i32, i32
  }
  func.func @transform_7(%arg0: i32) -> (i32, i32) {
    %c0_i32 = arith.constant 0 : i32
    %c0_i32_0 = arith.constant 0 : i32
    %c0_i32_1 = arith.constant 0 : i32
    return %c0_i32, %c0_i32_0 : i32, i32
  }
  func.func @transform_8(%arg0: i32) -> (i32, i32) {
    %c0_i32 = arith.constant 0 : i32
    %c0_i32_0 = arith.constant 0 : i32
    %c0_i32_1 = arith.constant 0 : i32
    return %c0_i32, %c0_i32_0 : i32, i32
  }
  func.func @transform_9(%arg0: i32) -> (i32, i32, i32) {
    %c0_i32 = arith.constant 0 : i32
    %c0_i32_0 = arith.constant 0 : i32
    %c0_i32_1 = arith.constant 0 : i32
    return %arg0, %c0_i32, %c0_i32_0 : i32, i32, i32
  }
}

</mosaic_0001>

<llo_original>
// kernel: bottleneck_forward.1
$region0: #{bottleneck_forward.1}
  #allocation0 [shape = 'u32[]', space=smem, size = 0x4, offset = 0x4, fixed_abs, tag = 'smem constant byte address 0x4 - core index']
  #allocation1 [shape = 'u32[144,128]{1,0:T(1,128)}', space=vmem, size = 0x12000, scoped, tag = 'internal scratch']
  #allocation2 [shape = 'bf16[256,1152]{1,0:T(8,128)(2,1)}', space=vmem, size = 0x90000, scoped, tag = 'scratch operand']
  %s0 = inlined_call_operand.vmem [shape: f32[2,256,128], index: 0, kind: input, shape index: {}]
  %s1 = inlined_call_operand.vmem [shape: s32[256,1], index: 1, kind: input, shape index: {}]
  %s2 = inlined_call_operand.vmem [shape: s32[256,1], index: 2, kind: input, shape index: {}]
  %s3 = inlined_call_operand.vmem [shape: bf16[128,128], index: 3, kind: input, shape index: {}]
  %s4 = inlined_call_operand.vmem [shape: f32[1,128], index: 4, kind: input, shape index: {}]
  %s5 = inlined_call_operand.vmem [shape: bf16[1152,128], index: 5, kind: input, shape index: {}]
  %s6 = inlined_call_operand.vmem [shape: f32[1,128], index: 6, kind: input, shape index: {}]
  %s7 = inlined_call_operand.vmem [shape: bf16[128,128], index: 7, kind: input, shape index: {}]
  %s8 = inlined_call_operand.vmem [shape: f32[1,128], index: 8, kind: input, shape index: {}]
  %s9 = inlined_call_operand.vmem [shape: f32[2,256,128], index: 9, kind: output, shape index: {}]
  %s10 = sld [smem:[#allocation0]]
  $region69: #{bottleneck_forward.1} parent=0
    _
  %s12 = ssub.s32 1, %s10
  %s13 = scalar_select 0, %s12, %s10
  loop: start=0, step=1, limit=4
  $region2: #{bottleneck_forward.1} parent=0 // loop_pre_header
    _
  $region3: #{bottleneck_forward.1} parent=0 // loop_header
    %s15 = sphi 0, %s19
    %p16 = scmp.ge.s32.totalorder %s15, 4
    %s25 = sphi 0, %s27
    %s28 = sphi 0, %s25
    %s29 = sphi 0, %s28
    %s45 = sphi 0, %s29
    %s49 = sphi 0, %s49
    %s51 = sphi 0, %s49
    %s52 = sphi 0, %s51
    %s66 = sphi 0, %s52
    %s70 = sphi 0, %s70
    %s72 = sphi 0, %s70
    %s73 = sphi 0, %s72
    %s87 = sphi 0, %s73
    %s91 = sphi 0, %s91
    %s93 = sphi 0, %s91
    %s94 = sphi 0, %s93
    %s108 = sphi 0, %s94
    %s112 = sphi 0, %s112
    %s114 = sphi 0, %s112
    %s115 = sphi 0, %s114
    %s129 = sphi 0, %s115
    %s133 = sphi 0, %s133
    %s135 = sphi 0, %s133
    %s136 = sphi 0, %s135
    %s150 = sphi 0, %s136
    %s154 = sphi 0, %s154
    %s156 = sphi 0, %s154
    %s157 = sphi 0, %s156
    %s171 = sphi 0, %s157
    %s175 = sphi 0, %s175
    %s177 = sphi 0, %s175
    %s178 = sphi 0, %s177
    %s192 = sphi 0, %s178
    %s196 = sphi 0, %s196
    %s198 = sphi 0, %s196
    %s199 = sphi 0, %s198
    %s213 = sphi 0, %s199
    %s219 = sphi 0, %s221
    %s222 = sphi 0, %s219
    %s223 = sphi 0, %s222
    %s239 = sphi 0, %s223
  $region4: #{bottleneck_forward.1} parent=0 // loop_header_branch
    %18 = sbr.rel (%p16) target = $region8
  $region5: #{bottleneck_forward.1} parent=0 // loop_body
    %s20 = ssub.s32 %s15, 1
    %s21 = ssub.s32 %s15, 2
    %s22 = sadd.s32 %s15, 1
    %s23 = ssub.s32 %s15, %s22
    %p24 = scmp.eq.s32.totalorder %s23, 0
    %s26 = sadd.s32 %s25, 1
    %s27 = scalar_select %p24, %s25, %s26
    %p30 = pneg %p24
    %p31 = scmp.eq.s32.totalorder %s15, 1
    %p32 = por %p30, %p31
    %p33 = scmp.ne.s32.totalorder %s25, %s28
    %p34 = scmp.eq.s32.totalorder %s15, 0
    %p35 = por %p33, %p34
    %p36 = scmp.ne.s32.totalorder %s25, %s28
    %p37 = scmp.eq.s32.totalorder %s20, 1
    %p38 = por %p36, %p37
    %p39 = scmp.ne.s32.totalorder %s28, %s29
    %p40 = scmp.eq.s32.totalorder %s20, 0
    %p41 = por %p39, %p40
    %p42 = scmp.ne.s32.totalorder %s28, %s29
    %p43 = scmp.eq.s32.totalorder %s21, 1
    %p44 = por %p42, %p43
    %p46 = scmp.ne.s32.totalorder %s29, %s45
    %p47 = scmp.eq.s32.totalorder %s21, 0
    %p48 = por %p46, %p47
    %s50 = sadd.s32 %s49, 1
    %p53 = scmp.eq.s32.totalorder %s15, 1
    %p54 = scmp.ne.s32.totalorder %s49, %s51
    %p55 = scmp.eq.s32.totalorder %s15, 0
    %p56 = por %p54, %p55
    %p57 = scmp.ne.s32.totalorder %s49, %s51
    %p58 = scmp.eq.s32.totalorder %s20, 1
    %p59 = por %p57, %p58
    %p60 = scmp.ne.s32.totalorder %s51, %s52
    %p61 = scmp.eq.s32.totalorder %s20, 0
    %p62 = por %p60, %p61
    %p63 = scmp.ne.s32.totalorder %s51, %s52
    %p64 = scmp.eq.s32.totalorder %s21, 1
    %p65 = por %p63, %p64
    %p67 = scmp.ne.s32.totalorder %s52, %s66
    %p68 = scmp.eq.s32.totalorder %s21, 0
    %p69 = por %p67, %p68
    %s71 = sadd.s32 %s70, 1
    %p74 = scmp.eq.s32.totalorder %s15, 1
    %p75 = scmp.ne.s32.totalorder %s70, %s72
    %p76 = scmp.eq.s32.totalorder %s15, 0
    %p77 = por %p75, %p76
    %p78 = scmp.ne.s32.totalorder %s70, %s72
    %p79 = scmp.eq.s32.totalorder %s20, 1
    %p80 = por %p78, %p79
    %p81 = scmp.ne.s32.totalorder %s72, %s73
    %p82 = scmp.eq.s32.totalorder %s20, 0
    %p83 = por %p81, %p82
    %p84 = scmp.ne.s32.totalorder %s72, %s73
    %p85 = scmp.eq.s32.totalorder %s21, 1
    %p86 = por %p84, %p85
    %p88 = scmp.ne.s32.totalorder %s73, %s87
    %p89 = scmp.eq.s32.totalorder %s21, 0
    %p90 = por %p88, %p89
    %s92 = sadd.s32 %s91, 1
    %p95 = scmp.eq.s32.totalorder %s15, 1
    %p96 = scmp.ne.s32.totalorder %s91, %s93
    %p97 = scmp.eq.s32.totalorder %s15, 0
    %p98 = por %p96, %p97
    %p99 = scmp.ne.s32.totalorder %s91, %s93
    %p100 = scmp.eq.s32.totalorder %s20, 1
    %p101 = por %p99, %p100
    %p102 = scmp.ne.s32.totalorder %s93, %s94
    %p103 = scmp.eq.s32.totalorder %s20, 0
    %p104 = por %p102, %p103
    %p105 = scmp.ne.s32.totalorder %s93, %s94
    %p106 = scmp.eq.s32.totalorder %s21, 1
    %p107 = por %p105, %p106
    %p109 = scmp.ne.s32.totalorder %s94, %s108
    %p110 = scmp.eq.s32.totalorder %s21, 0
    %p111 = por %p109, %p110
    %s113 = sadd.s32 %s112, 1
    %p116 = scmp.eq.s32.totalorder %s15, 1
    %p117 = scmp.ne.s32.totalorder %s112, %s114
    %p118 = scmp.eq.s32.totalorder %s15, 0
    %p119 = por %p117, %p118
    %p120 = scmp.ne.s32.totalorder %s112, %s114
    %p121 = scmp.eq.s32.totalorder %s20, 1
    %p122 = por %p120, %p121
    %p123 = scmp.ne.s32.totalorder %s114, %s115
    %p124 = scmp.eq.s32.totalorder %s20, 0
    %p125 = por %p123, %p124
    %p126 = scmp.ne.s32.totalorder %s114, %s115
    %p127 = scmp.eq.s32.totalorder %s21, 1
    %p128 = por %p126, %p127
    %p130 = scmp.ne.s32.totalorder %s115, %s129
    %p131 = scmp.eq.s32.totalorder %s21, 0
    %p132 = por %p130, %p131
    %s134 = sadd.s32 %s133, 1
    %p137 = scmp.eq.s32.totalorder %s15, 1
    %p138 = scmp.ne.s32.totalorder %s133, %s135
    %p139 = scmp.eq.s32.totalorder %s15, 0
    %p140 = por %p138, %p139
    %p141 = scmp.ne.s32.totalorder %s133, %s135
    %p142 = scmp.eq.s32.totalorder %s20, 1
    %p143 = por %p141, %p142
    %p144 = scmp.ne.s32.totalorder %s135, %s136
    %p145 = scmp.eq.s32.totalorder %s20, 0
    %p146 = por %p144, %p145
    %p147 = scmp.ne.s32.totalorder %s135, %s136
    %p148 = scmp.eq.s32.totalorder %s21, 1
    %p149 = por %p147, %p148
    %p151 = scmp.ne.s32.totalorder %s136, %s150
    %p152 = scmp.eq.s32.totalorder %s21, 0
    %p153 = por %p151, %p152
    %s155 = sadd.s32 %s154, 1
    %p158 = scmp.eq.s32.totalorder %s15, 1
    %p159 = scmp.ne.s32.totalorder %s154, %s156
    %p160 = scmp.eq.s32.totalorder %s15, 0
    %p161 = por %p159, %p160
    %p162 = scmp.ne.s32.totalorder %s154, %s156
    %p163 = scmp.eq.s32.totalorder %s20, 1
    %p164 = por %p162, %p163
    %p165 = scmp.ne.s32.totalorder %s156, %s157
    %p166 = scmp.eq.s32.totalorder %s20, 0
    %p167 = por %p165, %p166
    %p168 = scmp.ne.s32.totalorder %s156, %s157
    %p169 = scmp.eq.s32.totalorder %s21, 1
    %p170 = por %p168, %p169
    %p172 = scmp.ne.s32.totalorder %s157, %s171
    %p173 = scmp.eq.s32.totalorder %s21, 0
    %p174 = por %p172, %p173
    %s176 = sadd.s32 %s175, 1
    %p179 = scmp.eq.s32.totalorder %s15, 1
    %p180 = scmp.ne.s32.totalorder %s175, %s177
    %p181 = scmp.eq.s32.totalorder %s15, 0
    %p182 = por %p180, %p181
    %p183 = scmp.ne.s32.totalorder %s175, %s177
    %p184 = scmp.eq.s32.totalorder %s20, 1
    %p185 = por %p183, %p184
    %p186 = scmp.ne.s32.totalorder %s177, %s178
    %p187 = scmp.eq.s32.totalorder %s20, 0
    %p188 = por %p186, %p187
    %p189 = scmp.ne.s32.totalorder %s177, %s178
    %p190 = scmp.eq.s32.totalorder %s21, 1
    %p191 = por %p189, %p190
    %p193 = scmp.ne.s32.totalorder %s178, %s192
    %p194 = scmp.eq.s32.totalorder %s21, 0
    %p195 = por %p193, %p194
    %s197 = sadd.s32 %s196, 1
    %p200 = scmp.eq.s32.totalorder %s15, 1
    %p201 = scmp.ne.s32.totalorder %s196, %s198
    %p202 = scmp.eq.s32.totalorder %s15, 0
    %p203 = por %p201, %p202
    %p204 = scmp.ne.s32.totalorder %s196, %s198
    %p205 = scmp.eq.s32.totalorder %s20, 1
    %p206 = por %p204, %p205
    %p207 = scmp.ne.s32.totalorder %s198, %s199
    %p208 = scmp.eq.s32.totalorder %s20, 0
    %p209 = por %p207, %p208
    %p210 = scmp.ne.s32.totalorder %s198, %s199
    %p211 = scmp.eq.s32.totalorder %s21, 1
    %p212 = por %p210, %p211
    %p214 = scmp.ne.s32.totalorder %s199, %s213
    %p215 = scmp.eq.s32.totalorder %s21, 0
    %p216 = por %p214, %p215
    %s217 = ssub.s32 %s15, %s22
    %p218 = scmp.eq.s32.totalorder %s217, 0
    %s220 = sadd.s32 %s219, 1
    %s221 = scalar_select %p218, %s219, %s220
    %p224 = pneg %p218
    %p225 = scmp.eq.s32.totalorder %s15, 1
    %p226 = por %p224, %p225
    %p227 = scmp.ne.s32.totalorder %s219, %s222
    %p228 = scmp.eq.s32.totalorder %s15, 0
    %p229 = por %p227, %p228
    %p230 = scmp.ne.s32.totalorder %s219, %s222
    %p231 = scmp.eq.s32.totalorder %s20, 1
    %p232 = por %p230, %p231
    %p233 = scmp.ne.s32.totalorder %s222, %s223
    %p234 = scmp.eq.s32.totalorder %s20, 0
    %p235 = por %p233, %p234
    %p236 = scmp.ne.s32.totalorder %s222, %s223
    %p237 = scmp.eq.s32.totalorder %s21, 1
    %p238 = por %p236, %p237
    %p240 = scmp.ne.s32.totalorder %s223, %s239
    %p241 = scmp.eq.s32.totalorder %s21, 0
    %p242 = por %p240, %p241
    %p243 = scmp.le.s32.totalorder 1, %s15
    %p244 = scmp.lt.s32.totalorder %s15, 3
    %p245 = pnand %p243, %p244
    %p246 = pneg %p245
    // Predicated region
    $region9: #{bottleneck_forward.1} parent=5 // pred_check
      _
    $region10: #{bottleneck_forward.1} parent=5 // pred_check_branch
      %248 = sbr.rel (%p245) target = $region12
    $region11: #{bottleneck_forward.1} parent=5 // pred_region
      %s249 = ssub.s32 %s15, 1
      // Predicated region
      $region13: #{bottleneck_forward.1} parent=11 // pred_check
        %p250 = pneg %p62
      $region14: #{bottleneck_forward.1} parent=11 // pred_check_branch
        %252 = sbr.rel (%p250) target = $region16
      $region15: #{bottleneck_forward.1} parent=11 // pred_region
        _
      $region16: #{bottleneck_forward.1} parent=11 // pred_fallthru
        _
      // Predicated region
      $region17: #{bottleneck_forward.1} parent=11 // pred_check
        %p253 = pneg %p83
      $region18: #{bottleneck_forward.1} parent=11 // pred_check_branch
        %255 = sbr.rel (%p253) target = $region20
      $region19: #{bottleneck_forward.1} parent=11 // pred_region
        _
      $region20: #{bottleneck_forward.1} parent=11 // pred_fallthru
        _
      // Predicated region
      $region21: #{bottleneck_forward.1} parent=11 // pred_check
        %p256 = pneg %p104
      $region22: #{bottleneck_forward.1} parent=11 // pred_check_branch
        %258 = sbr.rel (%p256) target = $region24
      $region23: #{bottleneck_forward.1} parent=11 // pred_region
        _
      $region24: #{bottleneck_forward.1} parent=11 // pred_fallthru
        _
      // Predicated region
      $region25: #{bottleneck_forward.1} parent=11 // pred_check
        %p259 = pneg %p125
      $region26: #{bottleneck_forward.1} parent=11 // pred_check_branch
        %261 = sbr.rel (%p259) target = $region28
      $region27: #{bottleneck_forward.1} parent=11 // pred_region
        _
      $region28: #{bottleneck_forward.1} parent=11 // pred_fallthru
        _
      // Predicated region
      $region29: #{bottleneck_forward.1} parent=11 // pred_check
        %p262 = pneg %p146
      $region30: #{bottleneck_forward.1} parent=11 // pred_check_branch
        %264 = sbr.rel (%p262) target = $region32
      $region31: #{bottleneck_forward.1} parent=11 // pred_region
        _
      $region32: #{bottleneck_forward.1} parent=11 // pred_fallthru
        _
      // Predicated region
      $region33: #{bottleneck_forward.1} parent=11 // pred_check
        %p265 = pneg %p167
      $region34: #{bottleneck_forward.1} parent=11 // pred_check_branch
        %267 = sbr.rel (%p265) target = $region36
      $region35: #{bottleneck_forward.1} parent=11 // pred_region
        _
      $region36: #{bottleneck_forward.1} parent=11 // pred_fallthru
        _
      // Predicated region
      $region37: #{bottleneck_forward.1} parent=11 // pred_check
        %p268 = pneg %p188
      $region38: #{bottleneck_forward.1} parent=11 // pred_check_branch
        %270 = sbr.rel (%p268) target = $region40
      $region39: #{bottleneck_forward.1} parent=11 // pred_region
        _
      $region40: #{bottleneck_forward.1} parent=11 // pred_fallthru
        _
      // Predicated region
      $region41: #{bottleneck_forward.1} parent=11 // pred_check
        %p271 = pneg %p209
      $region42: #{bottleneck_forward.1} parent=11 // pred_check_branch
        %273 = sbr.rel (%p271) target = $region44
      $region43: #{bottleneck_forward.1} parent=11 // pred_region
        _
      $region44: #{bottleneck_forward.1} parent=11 // pred_fallthru
        _
    $region12: #{bottleneck_forward.1} parent=5 // pred_fallthru
      _
    %p274 = scmp.lt.s32.totalorder %s15, 2
    // Predicated region
    $region45: #{bottleneck_forward.1} parent=5 // pred_check
      %p275 = pneg %p274
    $region46: #{bottleneck_forward.1} parent=5 // pred_check_branch
      %277 = sbr.rel (%p275) target = $region48
    $region47: #{bottleneck_forward.1} parent=5 // pred_region
      // Predicated region
      $region49: #{bottleneck_forward.1} parent=47 // pred_check
        %p278 = pneg %p35
      $region50: #{bottleneck_forward.1} parent=47 // pred_check_branch
        %280 = sbr.rel (%p278) target = $region52
      $region51: #{bottleneck_forward.1} parent=47 // pred_region
        %p281 = scmp.lt.s32.totalorder %s15, 1
        %s282 = scalar_select %p281, %s15, 1
        %s283 = smul.addr %s282, 32
        %s284 = smul.addr %s283, 8
        %s285 = scalar_lea.vmem %s0, %s284
      $region52: #{bottleneck_forward.1} parent=47 // pred_fallthru
        _
    $region48: #{bottleneck_forward.1} parent=5 // pred_fallthru
      _
    %p286 = scmp.le.s32.totalorder 1, %s15
    %p287 = scmp.lt.s32.totalorder %s15, 3
    %p288 = pnand %p286, %p287
    %p289 = pneg %p288
    // Predicated region
    $region53: #{bottleneck_forward.1} parent=5 // pred_check
      _
    $region54: #{bottleneck_forward.1} parent=5 // pred_check_branch
      %291 = sbr.rel (%p288) target = $region56
    $region55: #{bottleneck_forward.1} parent=5 // pred_region
      %s292 = ssub.s32 %s15, 1
      %p293 = scmp.lt.s32.totalorder %s20, 1
      %s294 = scalar_select %p293, %s20, 1
      %s295 = smul.addr %s294, 32
      %s296 = smul.addr %s295, 8
      %s297 = scalar_lea.vmem %s0, %s296
      %p298 = pneg %p41
      %p299 = pneg %p38
      %p300 = pneg %p62
      %p301 = pneg %p59
      %p302 = pneg %p83
      %p303 = pneg %p80
      %p304 = pneg %p104
      %p305 = pneg %p101
      %p306 = pneg %p125
      %p307 = pneg %p122
      %p308 = pneg %p146
      %p309 = pneg %p143
      %p310 = pneg %p167
      %p311 = pneg %p164
      %p312 = pneg %p188
      %p313 = pneg %p185
      %p314 = pneg %p209
      %p315 = pneg %p206
      %p316 = pneg %p235
      %p317 = pneg %p232
      %p318 = scmp.lt.s32.totalorder %s20, 1
      %s319 = scalar_select %p318, %s20, 1
      %s320 = smul.addr %s319, 32
      %s321 = smul.addr %s320, 8
      %s322 = scalar_lea.vmem %s9, %s321
      %p323 = scmp.lt.s32.totalorder %s20, 1
      %s324 = scalar_select %p323, %s20, 1
      %s325 = smul.addr %s324, 32
      %s326 = smul.addr %s325, 8
      %s327 = scalar_lea.vmem %s0, %s326
      %p328 = scmp.lt.s32.totalorder %s20, 1
      %s329 = scalar_select %p328, %s20, 1
      %s330 = smul.addr %s329, 32
      %s331 = smul.addr %s330, 8
      %s332 = scalar_lea.vmem %s9, %s331
      %v334 = vld [vmem:[%s327] sm:$0xff]
      %v335 = vld [vmem:[%s327 + $0x8] sm:$0xff]
      %v336 = vld [vmem:[%s327 + $0x10] sm:$0xff]
      %v337 = vld [vmem:[%s327 + $0x18] sm:$0xff]
      %v338 = vld [vmem:[%s327 + $0x20] sm:$0xff]
      %v339 = vld [vmem:[%s327 + $0x28] sm:$0xff]
      %v340 = vld [vmem:[%s327 + $0x30] sm:$0xff]
      %v341 = vld [vmem:[%s327 + $0x38] sm:$0xff]
      %v342 = vld [vmem:[%s327 + $0x40] sm:$0xff]
      %v343 = vld [vmem:[%s327 + $0x48] sm:$0xff]
      %v344 = vld [vmem:[%s327 + $0x50] sm:$0xff]
      %v345 = vld [vmem:[%s327 + $0x58] sm:$0xff]
      %v346 = vld [vmem:[%s327 + $0x60] sm:$0xff]
      %v347 = vld [vmem:[%s327 + $0x68] sm:$0xff]
      %v348 = vld [vmem:[%s327 + $0x70] sm:$0xff]
      %v349 = vld [vmem:[%s327 + $0x78] sm:$0xff]
      %v350 = vld [vmem:[%s327 + $0x80] sm:$0xff]
      %v351 = vld [vmem:[%s327 + $0x88] sm:$0xff]
      %v352 = vld [vmem:[%s327 + $0x90] sm:$0xff]
      %v353 = vld [vmem:[%s327 + $0x98] sm:$0xff]
      %v354 = vld [vmem:[%s327 + $0xa0] sm:$0xff]
      %v355 = vld [vmem:[%s327 + $0xa8] sm:$0xff]
      %v356 = vld [vmem:[%s327 + $0xb0] sm:$0xff]
      %v357 = vld [vmem:[%s327 + $0xb8] sm:$0xff]
      %v358 = vld [vmem:[%s327 + $0xc0] sm:$0xff]
      %v359 = vld [vmem:[%s327 + $0xc8] sm:$0xff]
      %v360 = vld [vmem:[%s327 + $0xd0] sm:$0xff]
      %v361 = vld [vmem:[%s327 + $0xd8] sm:$0xff]
      %v362 = vld [vmem:[%s327 + $0xe0] sm:$0xff]
      %v363 = vld [vmem:[%s327 + $0xe8] sm:$0xff]
      %v364 = vld [vmem:[%s327 + $0xf0] sm:$0xff]
      %v365 = vld [vmem:[%s327 + $0xf8] sm:$0xff]
      %v366 = vpack.c.bf16 %v335, %v334
      %v367 = vpack.c.bf16 %v337, %v336
      %v368 = vpack.c.bf16 %v339, %v338
      %v369 = vpack.c.bf16 %v341, %v340
      %v370 = vpack.c.bf16 %v343, %v342
      %v371 = vpack.c.bf16 %v345, %v344
      %v372 = vpack.c.bf16 %v347, %v346
      %v373 = vpack.c.bf16 %v349, %v348
      %v374 = vpack.c.bf16 %v351, %v350
      %v375 = vpack.c.bf16 %v353, %v352
      %v376 = vpack.c.bf16 %v355, %v354
      %v377 = vpack.c.bf16 %v357, %v356
      %v378 = vpack.c.bf16 %v359, %v358
      %v379 = vpack.c.bf16 %v361, %v360
      %v380 = vpack.c.bf16 %v363, %v362
      %v381 = vpack.c.bf16 %v365, %v364
      %v382 = vld [vmem:[%s3] sm:$0xf]
      %v383 = vld [vmem:[%s3 + $0x4] sm:$0xf]
      %v384 = vld [vmem:[%s3 + $0x8] sm:$0xf]
      %v385 = vld [vmem:[%s3 + $0xc] sm:$0xf]
      %v386 = vld [vmem:[%s3 + $0x10] sm:$0xf]
      %v387 = vld [vmem:[%s3 + $0x14] sm:$0xf]
      %v388 = vld [vmem:[%s3 + $0x18] sm:$0xf]
      %v389 = vld [vmem:[%s3 + $0x1c] sm:$0xf]
      %v390 = vld [vmem:[%s3 + $0x20] sm:$0xf]
      %v391 = vld [vmem:[%s3 + $0x24] sm:$0xf]
      %v392 = vld [vmem:[%s3 + $0x28] sm:$0xf]
      %v393 = vld [vmem:[%s3 + $0x2c] sm:$0xf]
      %v394 = vld [vmem:[%s3 + $0x30] sm:$0xf]
      %v395 = vld [vmem:[%s3 + $0x34] sm:$0xf]
      %v396 = vld [vmem:[%s3 + $0x38] sm:$0xf]
      %v397 = vld [vmem:[%s3 + $0x3c] sm:$0xf]
      %v398 = vld [vmem:[%s4] sm:$0x1]
      %v400 = vlaneseq
      %v401 = vshrl.u32 %v400, 7
      %v402 = vsub.s32 0, %v401
      %v403 = vrot.slane %v398, %v402
      %v421 = vunpack.c.l.b16 %v382
      %v422 = vunpack.c.l.b16 %v383
      %v423 = vunpack.c.l.b16 %v384
      %v424 = vunpack.c.l.b16 %v385
      %v425 = vunpack.c.l.b16 %v386
      %v426 = vunpack.c.l.b16 %v387
      %v427 = vunpack.c.l.b16 %v388
      %v428 = vunpack.c.l.b16 %v389
      %v429 = vunpack.c.l.b16 %v390
      %v430 = vunpack.c.l.b16 %v391
      %v431 = vunpack.c.l.b16 %v392
      %v432 = vunpack.c.l.b16 %v393
      %v433 = vunpack.c.l.b16 %v394
      %v434 = vunpack.c.l.b16 %v395
      %v435 = vunpack.c.l.b16 %v396
      %v436 = vunpack.c.l.b16 %v397
      %v437 = vpack.c.b16 %v422, %v421
      %v438 = vpack.c.b16 %v424, %v423
      %v439 = vpack.c.b16 %v426, %v425
      %v440 = vpack.c.b16 %v428, %v427
      %v441 = vpack.c.b16 %v430, %v429
      %v442 = vpack.c.b16 %v432, %v431
      %v443 = vpack.c.b16 %v434, %v433
      %v444 = vpack.c.b16 %v436, %v435
      %453 = vmatprep.subr.bf16.mxu0 0
      %454 = vmatpush1.bf16.msra.mxu0 %v444
      %455 = vmatprep.subr.bf16.mxu0 0
      %456 = vmatpush1.bf16.msra.mxu0 %v443
      %457 = vmatprep.subr.bf16.mxu0 0
      %458 = vmatpush1.bf16.msra.mxu0 %v442
      %459 = vmatprep.subr.bf16.mxu0 0
      %460 = vmatpush1.bf16.msra.mxu0 %v441
      %461 = vmatprep.subr.bf16.mxu0 0
      %462 = vmatpush1.bf16.msra.mxu0 %v440
      %463 = vmatprep.subr.bf16.mxu0 0
      %464 = vmatpush1.bf16.msra.mxu0 %v439
      %465 = vmatprep.subr.bf16.mxu0 0
      %466 = vmatpush1.bf16.msra.mxu0 %v438
      %467 = vmatprep.subr.bf16.mxu0 0
      %468 = vmatpush1.bf16.msra.mxu0 %v437
      %469 = vmatprep.subr.bf16.mxu0 0
      %470 = vmatpush2.bf16.msra.mxu0 0
      %471 = vmatprep.subr.bf16.mxu0 0
      %472 = vmatpush2.bf16.msra.mxu0 0
      %473 = vmatprep.subr.bf16.mxu0 0
      %474 = vmatpush2.bf16.msra.mxu0 0
      %475 = vmatprep.subr.bf16.mxu0 0
      %476 = vmatpush2.bf16.msra.mxu0 0
      %477 = vmatprep.subr.bf16.mxu0 0
      %478 = vmatpush2.bf16.msra.mxu0 0
      %479 = vmatprep.subr.bf16.mxu0 0
      %480 = vmatpush2.bf16.msra.mxu0 0
      %481 = vmatprep.subr.bf16.mxu0 0
      %482 = vmatpush2.bf16.msra.mxu0 0
      %483 = vmatprep.subr.bf16.mxu0 0
      %484 = vmatpush2.bf16.msra.mxu0 0
      %485 = vmatprep.mubr.bf16.mxu0 0
      %486 = vmatmul.mubr.bf16.gmra.mxu0 %v366
      %v487 = vpop.f32.mrf.mxu0
      %v488 = vadd.f32 %v403, %v487
      %v489 = vpop.f32.mrf.mxu0
      %v490 = vpop.f32.mrf.mxu0
      %v491 = vadd.f32 %v403, %v490
      %v492 = vpop.f32.mrf.mxu0
      %493 = vmatprep.mubr.bf16.mxu0 0
      %494 = vmatmul.mubr.bf16.gmra.mxu0 %v367
      %v495 = vpop.f32.mrf.mxu0
      %v496 = vadd.f32 %v403, %v495
      %v497 = vpop.f32.mrf.mxu0
      %v498 = vpop.f32.mrf.mxu0
      %v499 = vadd.f32 %v403, %v498
      %v500 = vpop.f32.mrf.mxu0
      %501 = vmatprep.mubr.bf16.mxu0 0
      %502 = vmatmul.mubr.bf16.gmra.mxu0 %v368
      %v503 = vpop.f32.mrf.mxu0
      %v504 = vadd.f32 %v403, %v503
      %v505 = vpop.f32.mrf.mxu0
      %v506 = vpop.f32.mrf.mxu0
      %v507 = vadd.f32 %v403, %v506
      %v508 = vpop.f32.mrf.mxu0
      %509 = vmatprep.mubr.bf16.mxu0 0
      %510 = vmatmul.mubr.bf16.gmra.mxu0 %v369
      %v511 = vpop.f32.mrf.mxu0
      %v512 = vadd.f32 %v403, %v511
      %v513 = vpop.f32.mrf.mxu0
      %v514 = vpop.f32.mrf.mxu0
      %v515 = vadd.f32 %v403, %v514
      %v516 = vpop.f32.mrf.mxu0
      %517 = vmatprep.mubr.bf16.mxu0 0
      %518 = vmatmul.mubr.bf16.gmra.mxu0 %v370
      %v519 = vpop.f32.mrf.mxu0
      %v520 = vadd.f32 %v403, %v519
      %v521 = vpop.f32.mrf.mxu0
      %v522 = vpop.f32.mrf.mxu0
      %v523 = vadd.f32 %v403, %v522
      %v524 = vpop.f32.mrf.mxu0
      %525 = vmatprep.mubr.bf16.mxu0 0
      %526 = vmatmul.mubr.bf16.gmra.mxu0 %v371
      %v527 = vpop.f32.mrf.mxu0
      %v528 = vadd.f32 %v403, %v527
      %v529 = vpop.f32.mrf.mxu0
      %v530 = vpop.f32.mrf.mxu0
      %v531 = vadd.f32 %v403, %v530
      %v532 = vpop.f32.mrf.mxu0
      %533 = vmatprep.mubr.bf16.mxu0 0
      %534 = vmatmul.mubr.bf16.gmra.mxu0 %v372
      %v535 = vpop.f32.mrf.mxu0
      %v536 = vadd.f32 %v403, %v535
      %v537 = vpop.f32.mrf.mxu0
      %v538 = vpop.f32.mrf.mxu0
      %v539 = vadd.f32 %v403, %v538
      %v540 = vpop.f32.mrf.mxu0
      %541 = vmatprep.mubr.bf16.mxu0 0
      %542 = vmatmul.mubr.bf16.gmra.mxu0 %v373
      %v543 = vpop.f32.mrf.mxu0
      %v544 = vadd.f32 %v403, %v543
      %v545 = vpop.f32.mrf.mxu0
      %v546 = vpop.f32.mrf.mxu0
      %v547 = vadd.f32 %v403, %v546
      %v548 = vpop.f32.mrf.mxu0
      %549 = vmatprep.mubr.bf16.mxu0 0
      %550 = vmatmul.mubr.bf16.gmra.mxu0 %v374
      %v551 = vpop.f32.mrf.mxu0
      %v552 = vadd.f32 %v403, %v551
      %v553 = vpop.f32.mrf.mxu0
      %v554 = vpop.f32.mrf.mxu0
      %v555 = vadd.f32 %v403, %v554
      %v556 = vpop.f32.mrf.mxu0
      %557 = vmatprep.mubr.bf16.mxu0 0
      %558 = vmatmul.mubr.bf16.gmra.mxu0 %v375
      %v559 = vpop.f32.mrf.mxu0
      %v560 = vadd.f32 %v403, %v559
      %v561 = vpop.f32.mrf.mxu0
      %v562 = vpop.f32.mrf.mxu0
      %v563 = vadd.f32 %v403, %v562
      %v564 = vpop.f32.mrf.mxu0
      %565 = vmatprep.mubr.bf16.mxu0 0
      %566 = vmatmul.mubr.bf16.gmra.mxu0 %v376
      %v567 = vpop.f32.mrf.mxu0
      %v568 = vadd.f32 %v403, %v567
      %v569 = vpop.f32.mrf.mxu0
      %v570 = vpop.f32.mrf.mxu0
      %v571 = vadd.f32 %v403, %v570
      %v572 = vpop.f32.mrf.mxu0
      %573 = vmatprep.mubr.bf16.mxu0 0
      %574 = vmatmul.mubr.bf16.gmra.mxu0 %v377
      %v575 = vpop.f32.mrf.mxu0
      %v576 = vadd.f32 %v403, %v575
      %v577 = vpop.f32.mrf.mxu0
      %v578 = vpop.f32.mrf.mxu0
      %v579 = vadd.f32 %v403, %v578
      %v580 = vpop.f32.mrf.mxu0
      %581 = vmatprep.mubr.bf16.mxu0 0
      %582 = vmatmul.mubr.bf16.gmra.mxu0 %v378
      %v583 = vpop.f32.mrf.mxu0
      %v584 = vadd.f32 %v403, %v583
      %v585 = vpop.f32.mrf.mxu0
      %v586 = vpop.f32.mrf.mxu0
      %v587 = vadd.f32 %v403, %v586
      %v588 = vpop.f32.mrf.mxu0
      %589 = vmatprep.mubr.bf16.mxu0 0
      %590 = vmatmul.mubr.bf16.gmra.mxu0 %v379
      %v591 = vpop.f32.mrf.mxu0
      %v592 = vadd.f32 %v403, %v591
      %v593 = vpop.f32.mrf.mxu0
      %v594 = vpop.f32.mrf.mxu0
      %v595 = vadd.f32 %v403, %v594
      %v596 = vpop.f32.mrf.mxu0
      %597 = vmatprep.mubr.bf16.mxu0 0
      %598 = vmatmul.mubr.bf16.gmra.mxu0 %v380
      %v599 = vpop.f32.mrf.mxu0
      %v600 = vadd.f32 %v403, %v599
      %v601 = vpop.f32.mrf.mxu0
      %v602 = vpop.f32.mrf.mxu0
      %v603 = vadd.f32 %v403, %v602
      %v604 = vpop.f32.mrf.mxu0
      %605 = vmatprep.mubr.bf16.mxu0 0
      %606 = vmatmul.mubr.bf16.gmra.mxu0 %v381
      %v607 = vpop.f32.mrf.mxu0
      %v608 = vadd.f32 %v403, %v607
      %v609 = vpop.f32.mrf.mxu0
      %v610 = vpop.f32.mrf.mxu0
      %v611 = vadd.f32 %v403, %v610
      %v612 = vpop.f32.mrf.mxu0
      %613 = vdwg.mxu0
      %vm614 = vcmp.ge.f32.partialorder %v488, 0.0
      %vm615 = vcmp.ge.f32.partialorder %v491, 0.0
      %vm616 = vcmp.ge.f32.partialorder %v496, 0.0
      %vm617 = vcmp.ge.f32.partialorder %v499, 0.0
      %vm618 = vcmp.ge.f32.partialorder %v504, 0.0
      %vm619 = vcmp.ge.f32.partialorder %v507, 0.0
      %vm620 = vcmp.ge.f32.partialorder %v512, 0.0
      %vm621 = vcmp.ge.f32.partialorder %v515, 0.0
      %vm622 = vcmp.ge.f32.partialorder %v520, 0.0
      %vm623 = vcmp.ge.f32.partialorder %v523, 0.0
      %vm624 = vcmp.ge.f32.partialorder %v528, 0.0
      %vm625 = vcmp.ge.f32.partialorder %v531, 0.0
      %vm626 = vcmp.ge.f32.partialorder %v536, 0.0
      %vm627 = vcmp.ge.f32.partialorder %v539, 0.0
      %vm628 = vcmp.ge.f32.partialorder %v544, 0.0
      %vm629 = vcmp.ge.f32.partialorder %v547, 0.0
      %vm630 = vcmp.ge.f32.partialorder %v552, 0.0
      %vm631 = vcmp.ge.f32.partialorder %v555, 0.0
      %vm632 = vcmp.ge.f32.partialorder %v560, 0.0
      %vm633 = vcmp.ge.f32.partialorder %v563, 0.0
      %vm634 = vcmp.ge.f32.partialorder %v568, 0.0
      %vm635 = vcmp.ge.f32.partialorder %v571, 0.0
      %vm636 = vcmp.ge.f32.partialorder %v576, 0.0
      %vm637 = vcmp.ge.f32.partialorder %v579, 0.0
      %vm638 = vcmp.ge.f32.partialorder %v584, 0.0
      %vm639 = vcmp.ge.f32.partialorder %v587, 0.0
      %vm640 = vcmp.ge.f32.partialorder %v592, 0.0
      %vm641 = vcmp.ge.f32.partialorder %v595, 0.0
      %vm642 = vcmp.ge.f32.partialorder %v600, 0.0
      %vm643 = vcmp.ge.f32.partialorder %v603, 0.0
      %vm644 = vcmp.ge.f32.partialorder %v608, 0.0
      %vm645 = vcmp.ge.f32.partialorder %v611, 0.0
      %v646 = vmul.f32 %v488, 0.01
      %v647 = vmul.f32 %v491, 0.01
      %v648 = vmul.f32 %v496, 0.01
      %v649 = vmul.f32 %v499, 0.01
      %v650 = vmul.f32 %v504, 0.01
      %v651 = vmul.f32 %v507, 0.01
      %v652 = vmul.f32 %v512, 0.01
      %v653 = vmul.f32 %v515, 0.01
      %v654 = vmul.f32 %v520, 0.01
      %v655 = vmul.f32 %v523, 0.01
      %v656 = vmul.f32 %v528, 0.01
      %v657 = vmul.f32 %v531, 0.01
      %v658 = vmul.f32 %v536, 0.01
      %v659 = vmul.f32 %v539, 0.01
      %v660 = vmul.f32 %v544, 0.01
      %v661 = vmul.f32 %v547, 0.01
      %v662 = vmul.f32 %v552, 0.01
      %v663 = vmul.f32 %v555, 0.01
      %v664 = vmul.f32 %v560, 0.01
      %v665 = vmul.f32 %v563, 0.01
      %v666 = vmul.f32 %v568, 0.01
      %v667 = vmul.f32 %v571, 0.01
      %v668 = vmul.f32 %v576, 0.01
      %v669 = vmul.f32 %v579, 0.01
      %v670 = vmul.f32 %v584, 0.01
      %v671 = vmul.f32 %v587, 0.01
      %v672 = vmul.f32 %v592, 0.01
      %v673 = vmul.f32 %v595, 0.01
      %v674 = vmul.f32 %v600, 0.01
      %v675 = vmul.f32 %v603, 0.01
      %v676 = vmul.f32 %v608, 0.01
      %v677 = vmul.f32 %v611, 0.01
      %v678 = vsel %vm614, %v488, %v646
      %v679 = vsel %vm615, %v491, %v647
      %v680 = vsel %vm616, %v496, %v648
      %v681 = vsel %vm617, %v499, %v649
      %v682 = vsel %vm618, %v504, %v650
      %v683 = vsel %vm619, %v507, %v651
      %v684 = vsel %vm620, %v512, %v652
      %v685 = vsel %vm621, %v515, %v653
      %v686 = vsel %vm622, %v520, %v654
      %v687 = vsel %vm623, %v523, %v655
      %v688 = vsel %vm624, %v528, %v656
      %v689 = vsel %vm625, %v531, %v657
      %v690 = vsel %vm626, %v536, %v658
      %v691 = vsel %vm627, %v539, %v659
      %v692 = vsel %vm628, %v544, %v660
      %v693 = vsel %vm629, %v547, %v661
      %v694 = vsel %vm630, %v552, %v662
      %v695 = vsel %vm631, %v555, %v663
      %v696 = vsel %vm632, %v560, %v664
      %v697 = vsel %vm633, %v563, %v665
      %v698 = vsel %vm634, %v568, %v666
      %v699 = vsel %vm635, %v571, %v667
      %v700 = vsel %vm636, %v576, %v668
      %v701 = vsel %vm637, %v579, %v669
      %v702 = vsel %vm638, %v584, %v670
      %v703 = vsel %vm639, %v587, %v671
      %v704 = vsel %vm640, %v592, %v672
      %v705 = vsel %vm641, %v595, %v673
      %v706 = vsel %vm642, %v600, %v674
      %v707 = vsel %vm643, %v603, %v675
      %v708 = vsel %vm644, %v608, %v676
      %v709 = vsel %vm645, %v611, %v677
      %v710 = vld [vmem:[%s1] sm:$0xff]
      %v711 = vld [vmem:[%s1 + $0x8] sm:$0xff]
      %v712 = vld [vmem:[%s1 + $0x10] sm:$0xff]
      %v713 = vld [vmem:[%s1 + $0x18] sm:$0xff]
      %v714 = vld [vmem:[%s1 + $0x20] sm:$0xff]
      %v715 = vld [vmem:[%s1 + $0x28] sm:$0xff]
      %v716 = vld [vmem:[%s1 + $0x30] sm:$0xff]
      %v717 = vld [vmem:[%s1 + $0x38] sm:$0xff]
      %v718 = vld [vmem:[%s1 + $0x40] sm:$0xff]
      %v719 = vld [vmem:[%s1 + $0x48] sm:$0xff]
      %v720 = vld [vmem:[%s1 + $0x50] sm:$0xff]
      %v721 = vld [vmem:[%s1 + $0x58] sm:$0xff]
      %v722 = vld [vmem:[%s1 + $0x60] sm:$0xff]
      %v723 = vld [vmem:[%s1 + $0x68] sm:$0xff]
      %v724 = vld [vmem:[%s1 + $0x70] sm:$0xff]
      %v725 = vld [vmem:[%s1 + $0x78] sm:$0xff]
      %v726 = vld [vmem:[%s1 + $0x80] sm:$0xff]
      %v727 = vld [vmem:[%s1 + $0x88] sm:$0xff]
      %v728 = vld [vmem:[%s1 + $0x90] sm:$0xff]
      %v729 = vld [vmem:[%s1 + $0x98] sm:$0xff]
      %v730 = vld [vmem:[%s1 + $0xa0] sm:$0xff]
      %v731 = vld [vmem:[%s1 + $0xa8] sm:$0xff]
      %v732 = vld [vmem:[%s1 + $0xb0] sm:$0xff]
      %v733 = vld [vmem:[%s1 + $0xb8] sm:$0xff]
      %v734 = vld [vmem:[%s1 + $0xc0] sm:$0xff]
      %v735 = vld [vmem:[%s1 + $0xc8] sm:$0xff]
      %v736 = vld [vmem:[%s1 + $0xd0] sm:$0xff]
      %v737 = vld [vmem:[%s1 + $0xd8] sm:$0xff]
      %v738 = vld [vmem:[%s1 + $0xe0] sm:$0xff]
      %v739 = vld [vmem:[%s1 + $0xe8] sm:$0xff]
      %v740 = vld [vmem:[%s1 + $0xf0] sm:$0xff]
      %v741 = vld [vmem:[%s1 + $0xf8] sm:$0xff]
      %v742 = vld [vmem:[%s2] sm:$0xff]
      %v743 = vld [vmem:[%s2 + $0x8] sm:$0xff]
      %v744 = vld [vmem:[%s2 + $0x10] sm:$0xff]
      %v745 = vld [vmem:[%s2 + $0x18] sm:$0xff]
      %v746 = vld [vmem:[%s2 + $0x20] sm:$0xff]
      %v747 = vld [vmem:[%s2 + $0x28] sm:$0xff]
      %v748 = vld [vmem:[%s2 + $0x30] sm:$0xff]
      %v749 = vld [vmem:[%s2 + $0x38] sm:$0xff]
      %v750 = vld [vmem:[%s2 + $0x40] sm:$0xff]
      %v751 = vld [vmem:[%s2 + $0x48] sm:$0xff]
      %v752 = vld [vmem:[%s2 + $0x50] sm:$0xff]
      %v753 = vld [vmem:[%s2 + $0x58] sm:$0xff]
      %v754 = vld [vmem:[%s2 + $0x60] sm:$0xff]
      %v755 = vld [vmem:[%s2 + $0x68] sm:$0xff]
      %v756 = vld [vmem:[%s2 + $0x70] sm:$0xff]
      %v757 = vld [vmem:[%s2 + $0x78] sm:$0xff]
      %v758 = vld [vmem:[%s2 + $0x80] sm:$0xff]
      %v759 = vld [vmem:[%s2 + $0x88] sm:$0xff]
      %v760 = vld [vmem:[%s2 + $0x90] sm:$0xff]
      %v761 = vld [vmem:[%s2 + $0x98] sm:$0xff]
      %v762 = vld [vmem:[%s2 + $0xa0] sm:$0xff]
      %v763 = vld [vmem:[%s2 + $0xa8] sm:$0xff]
      %v764 = vld [vmem:[%s2 + $0xb0] sm:$0xff]
      %v765 = vld [vmem:[%s2 + $0xb8] sm:$0xff]
      %v766 = vld [vmem:[%s2 + $0xc0] sm:$0xff]
      %v767 = vld [vmem:[%s2 + $0xc8] sm:$0xff]
      %v768 = vld [vmem:[%s2 + $0xd0] sm:$0xff]
      %v769 = vld [vmem:[%s2 + $0xd8] sm:$0xff]
      %v770 = vld [vmem:[%s2 + $0xe0] sm:$0xff]
      %v771 = vld [vmem:[%s2 + $0xe8] sm:$0xff]
      %v772 = vld [vmem:[%s2 + $0xf0] sm:$0xff]
      %v773 = vld [vmem:[%s2 + $0xf8] sm:$0xff]
      %v774 = vrot.slane %v678, 7
      %v775 = vrot.slane %v679, 7
      %v776 = vrot.slane %v680, 7
      %v777 = vrot.slane %v681, 7
      %v778 = vrot.slane %v682, 7
      %v779 = vrot.slane %v683, 7
      %v780 = vrot.slane %v684, 7
      %v781 = vrot.slane %v685, 7
      %v782 = vrot.slane %v686, 7
      %v783 = vrot.slane %v687, 7
      %v784 = vrot.slane %v688, 7
      %v785 = vrot.slane %v689, 7
      %v786 = vrot.slane %v690, 7
      %v787 = vrot.slane %v691, 7
      %v788 = vrot.slane %v692, 7
      %v789 = vrot.slane %v693, 7
      %v790 = vrot.slane %v694, 7
      %v791 = vrot.slane %v695, 7
      %v792 = vrot.slane %v696, 7
      %v793 = vrot.slane %v697, 7
      %v794 = vrot.slane %v698, 7
      %v795 = vrot.slane %v699, 7
      %v796 = vrot.slane %v700, 7
      %v797 = vrot.slane %v701, 7
      %v798 = vrot.slane %v702, 7
      %v799 = vrot.slane %v703, 7
      %v800 = vrot.slane %v704, 7
      %v801 = vrot.slane %v705, 7
      %v802 = vrot.slane %v706, 7
      %v803 = vrot.slane %v707, 7
      %v804 = vrot.slane %v708, 7
      %v805 = vrot.slane %v709, 7
      %v806 = vlaneseq
      %v807 = vshrl.u32 %v806, 7
      %vm808 = vcmp.lt.s32.totalorder %v807, 1
      %v809 = vsel %vm808, %v804, %v805
      %v810 = vsel %vm808, %v803, %v804
      %v811 = vsel %vm808, %v802, %v803
      %v812 = vsel %vm808, %v801, %v802
      %v813 = vsel %vm808, %v800, %v801
      %v814 = vsel %vm808, %v799, %v800
      %v815 = vsel %vm808, %v798, %v799
      %v816 = vsel %vm808, %v797, %v798
      %v817 = vsel %vm808, %v796, %v797
      %v818 = vsel %vm808, %v795, %v796
      %v819 = vsel %vm808, %v794, %v795
      %v820 = vsel %vm808, %v793, %v794
      %v821 = vsel %vm808, %v792, %v793
      %v822 = vsel %vm808, %v791, %v792
      %v823 = vsel %vm808, %v790, %v791
      %v824 = vsel %vm808, %v789, %v790
      %v825 = vsel %vm808, %v788, %v789
      %v826 = vsel %vm808, %v787, %v788
      %v827 = vsel %vm808, %v786, %v787
      %v828 = vsel %vm808, %v785, %v786
      %v829 = vsel %vm808, %v784, %v785
      %v830 = vsel %vm808, %v783, %v784
      %v831 = vsel %vm808, %v782, %v783
      %v832 = vsel %vm808, %v781, %v782
      %v833 = vsel %vm808, %v780, %v781
      %v834 = vsel %vm808, %v779, %v780
      %v835 = vsel %vm808, %v778, %v779
      %v836 = vsel %vm808, %v777, %v778
      %v837 = vsel %vm808, %v776, %v777
      %v838 = vsel %vm808, %v775, %v776
      %v839 = vsel %vm808, %v774, %v775
      %v840 = vsel %vm808, %v805, %v774
      %vm841 = vcmp.ge.s32.totalorder %v710, 1
      %vm842 = vcmp.ge.s32.totalorder %v711, 1
      %vm843 = vcmp.ge.s32.totalorder %v712, 1
      %vm844 = vcmp.ge.s32.totalorder %v713, 1
      %vm845 = vcmp.ge.s32.totalorder %v714, 1
      %vm846 = vcmp.ge.s32.totalorder %v715, 1
      %vm847 = vcmp.ge.s32.totalorder %v716, 1
      %vm848 = vcmp.ge.s32.totalorder %v717, 1
      %vm849 = vcmp.ge.s32.totalorder %v718, 1
      %vm850 = vcmp.ge.s32.totalorder %v719, 1
      %vm851 = vcmp.ge.s32.totalorder %v720, 1
      %vm852 = vcmp.ge.s32.totalorder %v721, 1
      %vm853 = vcmp.ge.s32.totalorder %v722, 1
      %vm854 = vcmp.ge.s32.totalorder %v723, 1
      %vm855 = vcmp.ge.s32.totalorder %v724, 1
      %vm856 = vcmp.ge.s32.totalorder %v725, 1
      %vm857 = vcmp.ge.s32.totalorder %v726, 1
      %vm858 = vcmp.ge.s32.totalorder %v727, 1
      %vm859 = vcmp.ge.s32.totalorder %v728, 1
      %vm860 = vcmp.ge.s32.totalorder %v729, 1
      %vm861 = vcmp.ge.s32.totalorder %v730, 1
      %vm862 = vcmp.ge.s32.totalorder %v731, 1
      %vm863 = vcmp.ge.s32.totalorder %v732, 1
      %vm864 = vcmp.ge.s32.totalorder %v733, 1
      %vm865 = vcmp.ge.s32.totalorder %v734, 1
      %vm866 = vcmp.ge.s32.totalorder %v735, 1
      %vm867 = vcmp.ge.s32.totalorder %v736, 1
      %vm868 = vcmp.ge.s32.totalorder %v737, 1
      %vm869 = vcmp.ge.s32.totalorder %v738, 1
      %vm870 = vcmp.ge.s32.totalorder %v739, 1
      %vm871 = vcmp.ge.s32.totalorder %v740, 1
      %vm872 = vcmp.ge.s32.totalorder %v741, 1
      %vm873 = vcmp.ge.s32.totalorder %v742, 1
      %vm874 = vcmp.ge.s32.totalorder %v743, 1
      %vm875 = vcmp.ge.s32.totalorder %v744, 1
      %vm876 = vcmp.ge.s32.totalorder %v745, 1
      %vm877 = vcmp.ge.s32.totalorder %v746, 1
      %vm878 = vcmp.ge.s32.totalorder %v747, 1
      %vm879 = vcmp.ge.s32.totalorder %v748, 1
      %vm880 = vcmp.ge.s32.totalorder %v749, 1
      %vm881 = vcmp.ge.s32.totalorder %v750, 1
      %vm882 = vcmp.ge.s32.totalorder %v751, 1
      %vm883 = vcmp.ge.s32.totalorder %v752, 1
      %vm884 = vcmp.ge.s32.totalorder %v753, 1
      %vm885 = vcmp.ge.s32.totalorder %v754, 1
      %vm886 = vcmp.ge.s32.totalorder %v755, 1
      %vm887 = vcmp.ge.s32.totalorder %v756, 1
      %vm888 = vcmp.ge.s32.totalorder %v757, 1
      %vm889 = vcmp.ge.s32.totalorder %v758, 1
      %vm890 = vcmp.ge.s32.totalorder %v759, 1
      %vm891 = vcmp.ge.s32.totalorder %v760, 1
      %vm892 = vcmp.ge.s32.totalorder %v761, 1
      %vm893 = vcmp.ge.s32.totalorder %v762, 1
      %vm894 = vcmp.ge.s32.totalorder %v763, 1
      %vm895 = vcmp.ge.s32.totalorder %v764, 1
      %vm896 = vcmp.ge.s32.totalorder %v765, 1
      %vm897 = vcmp.ge.s32.totalorder %v766, 1
      %vm898 = vcmp.ge.s32.totalorder %v767, 1
      %vm899 = vcmp.ge.s32.totalorder %v768, 1
      %vm900 = vcmp.ge.s32.totalorder %v769, 1
      %vm901 = vcmp.ge.s32.totalorder %v770, 1
      %vm902 = vcmp.ge.s32.totalorder %v771, 1
      %vm903 = vcmp.ge.s32.totalorder %v772, 1
      %vm904 = vcmp.ge.s32.totalorder %v773, 1
      %vm905 = vmand %vm841, %vm873
      %vm906 = vmand %vm842, %vm874
      %vm907 = vmand %vm843, %vm875
      %vm908 = vmand %vm844, %vm876
      %vm909 = vmand %vm845, %vm877
      %vm910 = vmand %vm846, %vm878
      %vm911 = vmand %vm847, %vm879
      %vm912 = vmand %vm848, %vm880
      %vm913 = vmand %vm849, %vm881
      %vm914 = vmand %vm850, %vm882
      %vm915 = vmand %vm851, %vm883
      %vm916 = vmand %vm852, %vm884
      %vm917 = vmand %vm853, %vm885
      %vm918 = vmand %vm854, %vm886
      %vm919 = vmand %vm855, %vm887
      %vm920 = vmand %vm856, %vm888
      %vm921 = vmand %vm857, %vm889
      %vm922 = vmand %vm858, %vm890
      %vm923 = vmand %vm859, %vm891
      %vm924 = vmand %vm860, %vm892
      %vm925 = vmand %vm861, %vm893
      %vm926 = vmand %vm862, %vm894
      %vm927 = vmand %vm863, %vm895
      %vm928 = vmand %vm864, %vm896
      %vm929 = vmand %vm865, %vm897
      %vm930 = vmand %vm866, %vm898
      %vm931 = vmand %vm867, %vm899
      %vm932 = vmand %vm868, %vm900
      %vm933 = vmand %vm869, %vm901
      %vm934 = vmand %vm870, %vm902
      %vm935 = vmand %vm871, %vm903
      %vm936 = vmand %vm872, %vm904
      %v937 = vsel %vm905, 1, 0
      %v938 = vsel %vm906, 1, 0
      %v939 = vsel %vm907, 1, 0
      %v940 = vsel %vm908, 1, 0
      %v941 = vsel %vm909, 1, 0
      %v942 = vsel %vm910, 1, 0
      %v943 = vsel %vm911, 1, 0
      %v944 = vsel %vm912, 1, 0
      %v945 = vsel %vm913, 1, 0
      %v946 = vsel %vm914, 1, 0
      %v947 = vsel %vm915, 1, 0
      %v948 = vsel %vm916, 1, 0
      %v949 = vsel %vm917, 1, 0
      %v950 = vsel %vm918, 1, 0
      %v951 = vsel %vm919, 1, 0
      %v952 = vsel %vm920, 1, 0
      %v953 = vsel %vm921, 1, 0
      %v954 = vsel %vm922, 1, 0
      %v955 = vsel %vm923, 1, 0
      %v956 = vsel %vm924, 1, 0
      %v957 = vsel %vm925, 1, 0
      %v958 = vsel %vm926, 1, 0
      %v959 = vsel %vm927, 1, 0
      %v960 = vsel %vm928, 1, 0
      %v961 = vsel %vm929, 1, 0
      %v962 = vsel %vm930, 1, 0
      %v963 = vsel %vm931, 1, 0
      %v964 = vsel %vm932, 1, 0
      %v965 = vsel %vm933, 1, 0
      %v966 = vsel %vm934, 1, 0
      %v967 = vsel %vm935, 1, 0
      %v968 = vsel %vm936, 1, 0
      %969 = vset.pattern.permute.xlu0 0
      %970 = vperm.xlu0 %969, %v937
      %v971 = vpop.permute.xlu0 %970
      %972 = vset.pattern.permute.xlu0 0
      %973 = vperm.xlu0 %972, %v938
      %v974 = vpop.permute.xlu0 %973
      %975 = vset.pattern.permute.xlu0 0
      %976 = vperm.xlu0 %975, %v939
      %v977 = vpop.permute.xlu0 %976
      %978 = vset.pattern.permute.xlu0 0
      %979 = vperm.xlu0 %978, %v940
      %v980 = vpop.permute.xlu0 %979
      %981 = vset.pattern.permute.xlu0 0
      %982 = vperm.xlu0 %981, %v941
      %v983 = vpop.permute.xlu0 %982
      %984 = vset.pattern.permute.xlu0 0
      %985 = vperm.xlu0 %984, %v942
      %v986 = vpop.permute.xlu0 %985
      %987 = vset.pattern.permute.xlu0 0
      %988 = vperm.xlu0 %987, %v943
      %v989 = vpop.permute.xlu0 %988
      %990 = vset.pattern.permute.xlu0 0
      %991 = vperm.xlu0 %990, %v944
      %v992 = vpop.permute.xlu0 %991
      %993 = vset.pattern.permute.xlu0 0
      %994 = vperm.xlu0 %993, %v945
      %v995 = vpop.permute.xlu0 %994
      %996 = vset.pattern.permute.xlu0 0
      %997 = vperm.xlu0 %996, %v946
      %v998 = vpop.permute.xlu0 %997
      %999 = vset.pattern.permute.xlu0 0
      %1000 = vperm.xlu0 %999, %v947
      %v1001 = vpop.permute.xlu0 %1000
      %1002 = vset.pattern.permute.xlu0 0
      %1003 = vperm.xlu0 %1002, %v948
      %v1004 = vpop.permute.xlu0 %1003
      %1005 = vset.pattern.permute.xlu0 0
      %1006 = vperm.xlu0 %1005, %v949
      %v1007 = vpop.permute.xlu0 %1006
      %1008 = vset.pattern.permute.xlu0 0
      %1009 = vperm.xlu0 %1008, %v950
      %v1010 = vpop.permute.xlu0 %1009
      %1011 = vset.pattern.permute.xlu0 0
      %1012 = vperm.xlu0 %1011, %v951
      %v1013 = vpop.permute.xlu0 %1012
      %1014 = vset.pattern.permute.xlu0 0
      %1015 = vperm.xlu0 %1014, %v952
      %v1016 = vpop.permute.xlu0 %1015
      %1017 = vset.pattern.permute.xlu0 0
      %1018 = vperm.xlu0 %1017, %v953
      %v1019 = vpop.permute.xlu0 %1018
      %1020 = vset.pattern.permute.xlu0 0
      %1021 = vperm.xlu0 %1020, %v954
      %v1022 = vpop.permute.xlu0 %1021
      %1023 = vset.pattern.permute.xlu0 0
      %1024 = vperm.xlu0 %1023, %v955
      %v1025 = vpop.permute.xlu0 %1024
      %1026 = vset.pattern.permute.xlu0 0
      %1027 = vperm.xlu0 %1026, %v956
      %v1028 = vpop.permute.xlu0 %1027
      %1029 = vset.pattern.permute.xlu0 0
      %1030 = vperm.xlu0 %1029, %v957
      %v1031 = vpop.permute.xlu0 %1030
      %1032 = vset.pattern.permute.xlu0 0
      %1033 = vperm.xlu0 %1032, %v958
      %v1034 = vpop.permute.xlu0 %1033
      %1035 = vset.pattern.permute.xlu0 0
      %1036 = vperm.xlu0 %1035, %v959
      %v1037 = vpop.permute.xlu0 %1036
      %1038 = vset.pattern.permute.xlu0 0
      %1039 = vperm.xlu0 %1038, %v960
      %v1040 = vpop.permute.xlu0 %1039
      %1041 = vset.pattern.permute.xlu0 0
      %1042 = vperm.xlu0 %1041, %v961
      %v1043 = vpop.permute.xlu0 %1042
      %1044 = vset.pattern.permute.xlu0 0
      %1045 = vperm.xlu0 %1044, %v962
      %v1046 = vpop.permute.xlu0 %1045
      %1047 = vset.pattern.permute.xlu0 0
      %1048 = vperm.xlu0 %1047, %v963
      %v1049 = vpop.permute.xlu0 %1048
      %1050 = vset.pattern.permute.xlu0 0
      %1051 = vperm.xlu0 %1050, %v964
      %v1052 = vpop.permute.xlu0 %1051
      %1053 = vset.pattern.permute.xlu0 0
      %1054 = vperm.xlu0 %1053, %v965
      %v1055 = vpop.permute.xlu0 %1054
      %1056 = vset.pattern.permute.xlu0 0
      %1057 = vperm.xlu0 %1056, %v966
      %v1058 = vpop.permute.xlu0 %1057
      %1059 = vset.pattern.permute.xlu0 0
      %1060 = vperm.xlu0 %1059, %v967
      %v1061 = vpop.permute.xlu0 %1060
      %1062 = vset.pattern.permute.xlu0 0
      %1063 = vperm.xlu0 %1062, %v968
      %v1064 = vpop.permute.xlu0 %1063
      %vm1065 = vcmp.eq.s32.totalorder %v971, 1
      %vm1066 = vcmp.eq.s32.totalorder %v974, 1
      %vm1067 = vcmp.eq.s32.totalorder %v977, 1
      %vm1068 = vcmp.eq.s32.totalorder %v980, 1
      %vm1069 = vcmp.eq.s32.totalorder %v983, 1
      %vm1070 = vcmp.eq.s32.totalorder %v986, 1
      %vm1071 = vcmp.eq.s32.totalorder %v989, 1
      %vm1072 = vcmp.eq.s32.totalorder %v992, 1
      %vm1073 = vcmp.eq.s32.totalorder %v995, 1
      %vm1074 = vcmp.eq.s32.totalorder %v998, 1
      %vm1075 = vcmp.eq.s32.totalorder %v1001, 1
      %vm1076 = vcmp.eq.s32.totalorder %v1004, 1
      %vm1077 = vcmp.eq.s32.totalorder %v1007, 1
      %vm1078 = vcmp.eq.s32.totalorder %v1010, 1
      %vm1079 = vcmp.eq.s32.totalorder %v1013, 1
      %vm1080 = vcmp.eq.s32.totalorder %v1016, 1
      %vm1081 = vcmp.eq.s32.totalorder %v1019, 1
      %vm1082 = vcmp.eq.s32.totalorder %v1022, 1
      %vm1083 = vcmp.eq.s32.totalorder %v1025, 1
      %vm1084 = vcmp.eq.s32.totalorder %v1028, 1
      %vm1085 = vcmp.eq.s32.totalorder %v1031, 1
      %vm1086 = vcmp.eq.s32.totalorder %v1034, 1
      %vm1087 = vcmp.eq.s32.totalorder %v1037, 1
      %vm1088 = vcmp.eq.s32.totalorder %v1040, 1
      %vm1089 = vcmp.eq.s32.totalorder %v1043, 1
      %vm1090 = vcmp.eq.s32.totalorder %v1046, 1
      %vm1091 = vcmp.eq.s32.totalorder %v1049, 1
      %vm1092 = vcmp.eq.s32.totalorder %v1052, 1
      %vm1093 = vcmp.eq.s32.totalorder %v1055, 1
      %vm1094 = vcmp.eq.s32.totalorder %v1058, 1
      %vm1095 = vcmp.eq.s32.totalorder %v1061, 1
      %vm1096 = vcmp.eq.s32.totalorder %v1064, 1
      %v1097 = vsel %vm1065, %v810, 0.0
      %v1098 = vsel %vm1066, %v809, 0.0
      %v1099 = vsel %vm1067, %v840, 0.0
      %v1100 = vsel %vm1068, %v839, 0.0
      %v1101 = vsel %vm1069, %v838, 0.0
      %v1102 = vsel %vm1070, %v837, 0.0
      %v1103 = vsel %vm1071, %v836, 0.0
      %v1104 = vsel %vm1072, %v835, 0.0
      %v1105 = vsel %vm1073, %v834, 0.0
      %v1106 = vsel %vm1074, %v833, 0.0
      %v1107 = vsel %vm1075, %v832, 0.0
      %v1108 = vsel %vm1076, %v831, 0.0
      %v1109 = vsel %vm1077, %v830, 0.0
      %v1110 = vsel %vm1078, %v829, 0.0
      %v1111 = vsel %vm1079, %v828, 0.0
      %v1112 = vsel %vm1080, %v827, 0.0
      %v1113 = vsel %vm1081, %v826, 0.0
      %v1114 = vsel %vm1082, %v825, 0.0
      %v1115 = vsel %vm1083, %v824, 0.0
      %v1116 = vsel %vm1084, %v823, 0.0
      %v1117 = vsel %vm1085, %v822, 0.0
      %v1118 = vsel %vm1086, %v821, 0.0
      %v1119 = vsel %vm1087, %v820, 0.0
      %v1120 = vsel %vm1088, %v819, 0.0
      %v1121 = vsel %vm1089, %v818, 0.0
      %v1122 = vsel %vm1090, %v817, 0.0
      %v1123 = vsel %vm1091, %v816, 0.0
      %v1124 = vsel %vm1092, %v815, 0.0
      %v1125 = vsel %vm1093, %v814, 0.0
      %v1126 = vsel %vm1094, %v813, 0.0
      %v1127 = vsel %vm1095, %v812, 0.0
      %v1128 = vsel %vm1096, %v811, 0.0
      %v1129 = vpack.c.bf16 %v1098, %v1097
      %v1130 = vpack.c.bf16 %v1100, %v1099
      %v1131 = vpack.c.bf16 %v1102, %v1101
      %v1132 = vpack.c.bf16 %v1104, %v1103
      %v1133 = vpack.c.bf16 %v1106, %v1105
      %v1134 = vpack.c.bf16 %v1108, %v1107
      %v1135 = vpack.c.bf16 %v1110, %v1109
      %v1136 = vpack.c.bf16 %v1112, %v1111
      %v1137 = vpack.c.bf16 %v1114, %v1113
      %v1138 = vpack.c.bf16 %v1116, %v1115
      %v1139 = vpack.c.bf16 %v1118, %v1117
      %v1140 = vpack.c.bf16 %v1120, %v1119
      %v1141 = vpack.c.bf16 %v1122, %v1121
      %v1142 = vpack.c.bf16 %v1124, %v1123
      %v1143 = vpack.c.bf16 %v1126, %v1125
      %v1144 = vpack.c.bf16 %v1128, %v1127
      %v1161 = vunpack.c.l.b16 %v1129
      %v1162 = vunpack.c.h.b16 %v1129
      %v1163 = vunpack.c.l.b16 %v1130
      %v1164 = vunpack.c.h.b16 %v1130
      %v1165 = vunpack.c.l.b16 %v1131
      %v1166 = vunpack.c.h.b16 %v1131
      %v1167 = vunpack.c.l.b16 %v1132
      %v1168 = vunpack.c.h.b16 %v1132
      %v1169 = vunpack.c.l.b16 %v1133
      %v1170 = vunpack.c.h.b16 %v1133
      %v1171 = vunpack.c.l.b16 %v1134
      %v1172 = vunpack.c.h.b16 %v1134
      %v1173 = vunpack.c.l.b16 %v1135
      %v1174 = vunpack.c.h.b16 %v1135
      %v1175 = vunpack.c.l.b16 %v1136
      %v1176 = vunpack.c.h.b16 %v1136
      %v1177 = vunpack.c.l.b16 %v1137
      %v1178 = vunpack.c.h.b16 %v1137
      %v1179 = vunpack.c.l.b16 %v1138
      %v1180 = vunpack.c.h.b16 %v1138
      %v1181 = vunpack.c.l.b16 %v1139
      %v1182 = vunpack.c.h.b16 %v1139
      %v1183 = vunpack.c.l.b16 %v1140
      %v1184 = vunpack.c.h.b16 %v1140
      %v1185 = vunpack.c.l.b16 %v1141
      %v1186 = vunpack.c.h.b16 %v1141
      %v1187 = vunpack.c.l.b16 %v1142
      %v1188 = vunpack.c.h.b16 %v1142
      %v1189 = vunpack.c.l.b16 %v1143
      %v1190 = vunpack.c.h.b16 %v1143
      %v1191 = vunpack.c.l.b16 %v1144
      %v1192 = vunpack.c.h.b16 %v1144
      %v1193 = vpack.c.b16 %v1161, %v1161
      %v1194 = vpack.c.b16 %v1162, %v1162
      %v1195 = vpack.c.b16 %v1163, %v1163
      %v1196 = vpack.c.b16 %v1164, %v1164
      %v1197 = vpack.c.b16 %v1165, %v1165
      %v1198 = vpack.c.b16 %v1166, %v1166
      %v1199 = vpack.c.b16 %v1167, %v1167
      %v1200 = vpack.c.b16 %v1168, %v1168
      %v1201 = vpack.c.b16 %v1169, %v1169
      %v1202 = vpack.c.b16 %v1170, %v1170
      %v1203 = vpack.c.b16 %v1171, %v1171
      %v1204 = vpack.c.b16 %v1172, %v1172
      %v1205 = vpack.c.b16 %v1173, %v1173
      %v1206 = vpack.c.b16 %v1174, %v1174
      %v1207 = vpack.c.b16 %v1175, %v1175
      %v1208 = vpack.c.b16 %v1176, %v1176
      %v1209 = vpack.c.b16 %v1177, %v1177
      %v1210 = vpack.c.b16 %v1178, %v1178
      %v1211 = vpack.c.b16 %v1179, %v1179
      %v1212 = vpack.c.b16 %v1180, %v1180
      %v1213 = vpack.c.b16 %v1181, %v1181
      %v1214 = vpack.c.b16 %v1182, %v1182
      %v1215 = vpack.c.b16 %v1183, %v1183
      %v1216 = vpack.c.b16 %v1184, %v1184
      %v1217 = vpack.c.b16 %v1185, %v1185
      %v1218 = vpack.c.b16 %v1186, %v1186
      %v1219 = vpack.c.b16 %v1187, %v1187
      %v1220 = vpack.c.b16 %v1188, %v1188
      %v1221 = vpack.c.b16 %v1189, %v1189
      %v1222 = vpack.c.b16 %v1190, %v1190
      %v1223 = vpack.c.b16 %v1191, %v1191
      %v1224 = vpack.c.b16 %v1192, %v1192
      %1257 = vst [vmem:[#allocation2] sm:$0xf] %v1193
      %1258 = vst [vmem:[#allocation2 + $0x24] sm:$0xf] %v1194
      %1259 = vst [vmem:[#allocation2 + $0x48] sm:$0xf] %v1195
      %1260 = vst [vmem:[#allocation2 + $0x6c] sm:$0xf] %v1196
      %1261 = vst [vmem:[#allocation2 + $0x90] sm:$0xf] %v1197
      %1262 = vst [vmem:[#allocation2 + $0xb4] sm:$0xf] %v1198
      %1263 = vst [vmem:[#allocation2 + $0xd8] sm:$0xf] %v1199
      %1264 = vst [vmem:[#allocation2 + $0xfc] sm:$0xf] %v1200
      %1265 = vst [vmem:[#allocation2 + $0x120] sm:$0xf] %v1201
      %1266 = vst [vmem:[#allocation2 + $0x144] sm:$0xf] %v1202
      %1267 = vst [vmem:[#allocation2 + $0x168] sm:$0xf] %v1203
      %1268 = vst [vmem:[#allocation2 + $0x18c] sm:$0xf] %v1204
      %1269 = vst [vmem:[#allocation2 + $0x1b0] sm:$0xf] %v1205
      %1270 = vst [vmem:[#allocation2 + $0x1d4] sm:$0xf] %v1206
      %1271 = vst [vmem:[#allocation2 + $0x1f8] sm:$0xf] %v1207
      %1272 = vst [vmem:[#allocation2 + $0x21c] sm:$0xf] %v1208
      %1273 = vst [vmem:[#allocation2 + $0x240] sm:$0xf] %v1209
      %1274 = vst [vmem:[#allocation2 + $0x264] sm:$0xf] %v1210
      %1275 = vst [vmem:[#allocation2 + $0x288] sm:$0xf] %v1211
      %1276 = vst [vmem:[#allocation2 + $0x2ac] sm:$0xf] %v1212
      %1277 = vst [vmem:[#allocation2 + $0x2d0] sm:$0xf] %v1213
      %1278 = vst [vmem:[#allocation2 + $0x2f4] sm:$0xf] %v1214
      %1279 = vst [vmem:[#allocation2 + $0x318] sm:$0xf] %v1215
      %1280 = vst [vmem:[#allocation2 + $0x33c] sm:$0xf] %v1216
      %1281 = vst [vmem:[#allocation2 + $0x360] sm:$0xf] %v1217
      %1282 = vst [vmem:[#allocation2 + $0x384] sm:$0xf] %v1218
      %1283 = vst [vmem:[#allocation2 + $0x3a8] sm:$0xf] %v1219
      %1284 = vst [vmem:[#allocation2 + $0x3cc] sm:$0xf] %v1220
      %1285 = vst [vmem:[#allocation2 + $0x3f0] sm:$0xf] %v1221
      %1286 = vst [vmem:[#allocation2 + $0x414] sm:$0xf] %v1222
      %1287 = vst [vmem:[#allocation2 + $0x438] sm:$0xf] %v1223
      %1288 = vst [vmem:[#allocation2 + $0x45c] sm:$0xf] %v1224
      %v1289 = vsel %vm841, 1, 0
      %v1290 = vsel %vm842, 1, 0
      %v1291 = vsel %vm843, 1, 0
      %v1292 = vsel %vm844, 1, 0
      %v1293 = vsel %vm845, 1, 0
      %v1294 = vsel %vm846, 1, 0
      %v1295 = vsel %vm847, 1, 0
      %v1296 = vsel %vm848, 1, 0
      %v1297 = vsel %vm849, 1, 0
      %v1298 = vsel %vm850, 1, 0
      %v1299 = vsel %vm851, 1, 0
      %v1300 = vsel %vm852, 1, 0
      %v1301 = vsel %vm853, 1, 0
      %v1302 = vsel %vm854, 1, 0
      %v1303 = vsel %vm855, 1, 0
      %v1304 = vsel %vm856, 1, 0
      %v1305 = vsel %vm857, 1, 0
      %v1306 = vsel %vm858, 1, 0
      %v1307 = vsel %vm859, 1, 0
      %v1308 = vsel %vm860, 1, 0
      %v1309 = vsel %vm861, 1, 0
      %v1310 = vsel %vm862, 1, 0
      %v1311 = vsel %vm863, 1, 0
      %v1312 = vsel %vm864, 1, 0
      %v1313 = vsel %vm865, 1, 0
      %v1314 = vsel %vm866, 1, 0
      %v1315 = vsel %vm867, 1, 0
      %v1316 = vsel %vm868, 1, 0
      %v1317 = vsel %vm869, 1, 0
      %v1318 = vsel %vm870, 1, 0
      %v1319 = vsel %vm871, 1, 0
      %v1320 = vsel %vm872, 1, 0
      %1321 = vset.pattern.permute.xlu0 0
      %1322 = vperm.xlu0 %1321, %v1289
      %v1323 = vpop.permute.xlu0 %1322
      %1324 = vset.pattern.permute.xlu0 0
      %1325 = vperm.xlu0 %1324, %v1290
      %v1326 = vpop.permute.xlu0 %1325
      %1327 = vset.pattern.permute.xlu0 0
      %1328 = vperm.xlu0 %1327, %v1291
      %v1329 = vpop.permute.xlu0 %1328
      %1330 = vset.pattern.permute.xlu0 0
      %1331 = vperm.xlu0 %1330, %v1292
      %v1332 = vpop.permute.xlu0 %1331
      %1333 = vset.pattern.permute.xlu0 0
      %1334 = vperm.xlu0 %1333, %v1293
      %v1335 = vpop.permute.xlu0 %1334
      %1336 = vset.pattern.permute.xlu0 0
      %1337 = vperm.xlu0 %1336, %v1294
      %v1338 = vpop.permute.xlu0 %1337
      %1339 = vset.pattern.permute.xlu0 0
      %1340 = vperm.xlu0 %1339, %v1295
      %v1341 = vpop.permute.xlu0 %1340
      %1342 = vset.pattern.permute.xlu0 0
      %1343 = vperm.xlu0 %1342, %v1296
      %v1344 = vpop.permute.xlu0 %1343
      %1345 = vset.pattern.permute.xlu0 0
      %1346 = vperm.xlu0 %1345, %v1297
      %v1347 = vpop.permute.xlu0 %1346
      %1348 = vset.pattern.permute.xlu0 0
      %1349 = vperm.xlu0 %1348, %v1298
      %v1350 = vpop.permute.xlu0 %1349
      %1351 = vset.pattern.permute.xlu0 0
      %1352 = vperm.xlu0 %1351, %v1299
      %v1353 = vpop.permute.xlu0 %1352
      %1354 = vset.pattern.permute.xlu0 0
      %1355 = vperm.xlu0 %1354, %v1300
      %v1356 = vpop.permute.xlu0 %1355
      %1357 = vset.pattern.permute.xlu0 0
      %1358 = vperm.xlu0 %1357, %v1301
      %v1359 = vpop.permute.xlu0 %1358
      %1360 = vset.pattern.permute.xlu0 0
      %1361 = vperm.xlu0 %1360, %v1302
      %v1362 = vpop.permute.xlu0 %1361
      %1363 = vset.pattern.permute.xlu0 0
      %1364 = vperm.xlu0 %1363, %v1303
      %v1365 = vpop.permute.xlu0 %1364
      %1366 = vset.pattern.permute.xlu0 0
      %1367 = vperm.xlu0 %1366, %v1304
      %v1368 = vpop.permute.xlu0 %1367
      %1369 = vset.pattern.permute.xlu0 0
      %1370 = vperm.xlu0 %1369, %v1305
      %v1371 = vpop.permute.xlu0 %1370
      %1372 = vset.pattern.permute.xlu0 0
      %1373 = vperm.xlu0 %1372, %v1306
      %v1374 = vpop.permute.xlu0 %1373
      %1375 = vset.pattern.permute.xlu0 0
      %1376 = vperm.xlu0 %1375, %v1307
      %v1377 = vpop.permute.xlu0 %1376
      %1378 = vset.pattern.permute.xlu0 0
      %1379 = vperm.xlu0 %1378, %v1308
      %v1380 = vpop.permute.xlu0 %1379
      %1381 = vset.pattern.permute.xlu0 0
      %1382 = vperm.xlu0 %1381, %v1309
      %v1383 = vpop.permute.xlu0 %1382
      %1384 = vset.pattern.permute.xlu0 0
      %1385 = vperm.xlu0 %1384, %v1310
      %v1386 = vpop.permute.xlu0 %1385
      %1387 = vset.pattern.permute.xlu0 0
      %1388 = vperm.xlu0 %1387, %v1311
      %v1389 = vpop.permute.xlu0 %1388
      %1390 = vset.pattern.permute.xlu0 0
      %1391 = vperm.xlu0 %1390, %v1312
      %v1392 = vpop.permute.xlu0 %1391
      %1393 = vset.pattern.permute.xlu0 0
      %1394 = vperm.xlu0 %1393, %v1313
      %v1395 = vpop.permute.xlu0 %1394
      %1396 = vset.pattern.permute.xlu0 0
      %1397 = vperm.xlu0 %1396, %v1314
      %v1398 = vpop.permute.xlu0 %1397
      %1399 = vset.pattern.permute.xlu0 0
      %1400 = vperm.xlu0 %1399, %v1315
      %v1401 = vpop.permute.xlu0 %1400
      %1402 = vset.pattern.permute.xlu0 0
      %1403 = vperm.xlu0 %1402, %v1316
      %v1404 = vpop.permute.xlu0 %1403
      %1405 = vset.pattern.permute.xlu0 0
      %1406 = vperm.xlu0 %1405, %v1317
      %v1407 = vpop.permute.xlu0 %1406
      %1408 = vset.pattern.permute.xlu0 0
      %1409 = vperm.xlu0 %1408, %v1318
      %v1410 = vpop.permute.xlu0 %1409
      %1411 = vset.pattern.permute.xlu0 0
      %1412 = vperm.xlu0 %1411, %v1319
      %v1413 = vpop.permute.xlu0 %1412
      %1414 = vset.pattern.permute.xlu0 0
      %1415 = vperm.xlu0 %1414, %v1320
      %v1416 = vpop.permute.xlu0 %1415
      %vm1417 = vcmp.eq.s32.totalorder %v1323, 1
      %vm1418 = vcmp.eq.s32.totalorder %v1326, 1
      %vm1419 = vcmp.eq.s32.totalorder %v1329, 1
      %vm1420 = vcmp.eq.s32.totalorder %v1332, 1
      %vm1421 = vcmp.eq.s32.totalorder %v1335, 1
      %vm1422 = vcmp.eq.s32.totalorder %v1338, 1
      %vm1423 = vcmp.eq.s32.totalorder %v1341, 1
      %vm1424 = vcmp.eq.s32.totalorder %v1344, 1
      %vm1425 = vcmp.eq.s32.totalorder %v1347, 1
      %vm1426 = vcmp.eq.s32.totalorder %v1350, 1
      %vm1427 = vcmp.eq.s32.totalorder %v1353, 1
      %vm1428 = vcmp.eq.s32.totalorder %v1356, 1
      %vm1429 = vcmp.eq.s32.totalorder %v1359, 1
      %vm1430 = vcmp.eq.s32.totalorder %v1362, 1
      %vm1431 = vcmp.eq.s32.totalorder %v1365, 1
      %vm1432 = vcmp.eq.s32.totalorder %v1368, 1
      %vm1433 = vcmp.eq.s32.totalorder %v1371, 1
      %vm1434 = vcmp.eq.s32.totalorder %v1374, 1
      %vm1435 = vcmp.eq.s32.totalorder %v1377, 1
      %vm1436 = vcmp.eq.s32.totalorder %v1380, 1
      %vm1437 = vcmp.eq.s32.totalorder %v1383, 1
      %vm1438 = vcmp.eq.s32.totalorder %v1386, 1
      %vm1439 = vcmp.eq.s32.totalorder %v1389, 1
      %vm1440 = vcmp.eq.s32.totalorder %v1392, 1
      %vm1441 = vcmp.eq.s32.totalorder %v1395, 1
      %vm1442 = vcmp.eq.s32.totalorder %v1398, 1
      %vm1443 = vcmp.eq.s32.totalorder %v1401, 1
      %vm1444 = vcmp.eq.s32.totalorder %v1404, 1
      %vm1445 = vcmp.eq.s32.totalorder %v1407, 1
      %vm1446 = vcmp.eq.s32.totalorder %v1410, 1
      %vm1447 = vcmp.eq.s32.totalorder %v1413, 1
      %vm1448 = vcmp.eq.s32.totalorder %v1416, 1
      %v1449 = vsel %vm1417, %v708, 0.0
      %v1450 = vsel %vm1418, %v709, 0.0
      %v1451 = vsel %vm1419, %v678, 0.0
      %v1452 = vsel %vm1420, %v679, 0.0
      %v1453 = vsel %vm1421, %v680, 0.0
      %v1454 = vsel %vm1422, %v681, 0.0
      %v1455 = vsel %vm1423, %v682, 0.0
      %v1456 = vsel %vm1424, %v683, 0.0
      %v1457 = vsel %vm1425, %v684, 0.0
      %v1458 = vsel %vm1426, %v685, 0.0
      %v1459 = vsel %vm1427, %v686, 0.0
      %v1460 = vsel %vm1428, %v687, 0.0
      %v1461 = vsel %vm1429, %v688, 0.0
      %v1462 = vsel %vm1430, %v689, 0.0
      %v1463 = vsel %vm1431, %v690, 0.0
      %v1464 = vsel %vm1432, %v691, 0.0
      %v1465 = vsel %vm1433, %v692, 0.0
      %v1466 = vsel %vm1434, %v693, 0.0
      %v1467 = vsel %vm1435, %v694, 0.0
      %v1468 = vsel %vm1436, %v695, 0.0
      %v1469 = vsel %vm1437, %v696, 0.0
      %v1470 = vsel %vm1438, %v697, 0.0
      %v1471 = vsel %vm1439, %v698, 0.0
      %v1472 = vsel %vm1440, %v699, 0.0
      %v1473 = vsel %vm1441, %v700, 0.0
      %v1474 = vsel %vm1442, %v701, 0.0
      %v1475 = vsel %vm1443, %v702, 0.0
      %v1476 = vsel %vm1444, %v703, 0.0
      %v1477 = vsel %vm1445, %v704, 0.0
      %v1478 = vsel %vm1446, %v705, 0.0
      %v1479 = vsel %vm1447, %v706, 0.0
      %v1480 = vsel %vm1448, %v707, 0.0
      %v1481 = vpack.c.bf16 %v1450, %v1449
      %v1482 = vpack.c.bf16 %v1452, %v1451
      %v1483 = vpack.c.bf16 %v1454, %v1453
      %v1484 = vpack.c.bf16 %v1456, %v1455
      %v1485 = vpack.c.bf16 %v1458, %v1457
      %v1486 = vpack.c.bf16 %v1460, %v1459
      %v1487 = vpack.c.bf16 %v1462, %v1461
      %v1488 = vpack.c.bf16 %v1464, %v1463
      %v1489 = vpack.c.bf16 %v1466, %v1465
      %v1490 = vpack.c.bf16 %v1468, %v1467
      %v1491 = vpack.c.bf16 %v1470, %v1469
      %v1492 = vpack.c.bf16 %v1472, %v1471
      %v1493 = vpack.c.bf16 %v1474, %v1473
      %v1494 = vpack.c.bf16 %v1476, %v1475
      %v1495 = vpack.c.bf16 %v1478, %v1477
      %v1496 = vpack.c.bf16 %v1480, %v1479
      %v1513 = vunpack.c.l.b16 %v1481
      %v1514 = vunpack.c.h.b16 %v1481
      %v1515 = vunpack.c.l.b16 %v1482
      %v1516 = vunpack.c.h.b16 %v1482
      %v1517 = vunpack.c.l.b16 %v1483
      %v1518 = vunpack.c.h.b16 %v1483
      %v1519 = vunpack.c.l.b16 %v1484
      %v1520 = vunpack.c.h.b16 %v1484
      %v1521 = vunpack.c.l.b16 %v1485
      %v1522 = vunpack.c.h.b16 %v1485
      %v1523 = vunpack.c.l.b16 %v1486
      %v1524 = vunpack.c.h.b16 %v1486
      %v1525 = vunpack.c.l.b16 %v1487
      %v1526 = vunpack.c.h.b16 %v1487
      %v1527 = vunpack.c.l.b16 %v1488
      %v1528 = vunpack.c.h.b16 %v1488
      %v1529 = vunpack.c.l.b16 %v1489
      %v1530 = vunpack.c.h.b16 %v1489
      %v1531 = vunpack.c.l.b16 %v1490
      %v1532 = vunpack.c.h.b16 %v1490
      %v1533 = vunpack.c.l.b16 %v1491
      %v1534 = vunpack.c.h.b16 %v1491
      %v1535 = vunpack.c.l.b16 %v1492
      %v1536 = vunpack.c.h.b16 %v1492
      %v1537 = vunpack.c.l.b16 %v1493
      %v1538 = vunpack.c.h.b16 %v1493
      %v1539 = vunpack.c.l.b16 %v1494
      %v1540 = vunpack.c.h.b16 %v1494
      %v1541 = vunpack.c.l.b16 %v1495
      %v1542 = vunpack.c.h.b16 %v1495
      %v1543 = vunpack.c.l.b16 %v1496
      %v1544 = vunpack.c.h.b16 %v1496
      %v1545 = vpack.c.b16 %v1513, %v1513
      %v1546 = vpack.c.b16 %v1514, %v1514
      %v1547 = vpack.c.b16 %v1515, %v1515
      %v1548 = vpack.c.b16 %v1516, %v1516
      %v1549 = vpack.c.b16 %v1517, %v1517
      %v1550 = vpack.c.b16 %v1518, %v1518
      %v1551 = vpack.c.b16 %v1519, %v1519
      %v1552 = vpack.c.b16 %v1520, %v1520
      %v1553 = vpack.c.b16 %v1521, %v1521
      %v1554 = vpack.c.b16 %v1522, %v1522
      %v1555 = vpack.c.b16 %v1523, %v1523
      %v1556 = vpack.c.b16 %v1524, %v1524
      %v1557 = vpack.c.b16 %v1525, %v1525
      %v1558 = vpack.c.b16 %v1526, %v1526
      %v1559 = vpack.c.b16 %v1527, %v1527
      %v1560 = vpack.c.b16 %v1528, %v1528
      %v1561 = vpack.c.b16 %v1529, %v1529
      %v1562 = vpack.c.b16 %v1530, %v1530
      %v1563 = vpack.c.b16 %v1531, %v1531
      %v1564 = vpack.c.b16 %v1532, %v1532
      %v1565 = vpack.c.b16 %v1533, %v1533
      %v1566 = vpack.c.b16 %v1534, %v1534
      %v1567 = vpack.c.b16 %v1535, %v1535
      %v1568 = vpack.c.b16 %v1536, %v1536
      %v1569 = vpack.c.b16 %v1537, %v1537
      %v1570 = vpack.c.b16 %v1538, %v1538
      %v1571 = vpack.c.b16 %v1539, %v1539
      %v1572 = vpack.c.b16 %v1540, %v1540
      %v1573 = vpack.c.b16 %v1541, %v1541
      %v1574 = vpack.c.b16 %v1542, %v1542
      %v1575 = vpack.c.b16 %v1543, %v1543
      %v1576 = vpack.c.b16 %v1544, %v1544
      %1609 = vst [vmem:[#allocation2 + $0x4] sm:$0xf] %v1545
      %1610 = vst [vmem:[#allocation2 + $0x28] sm:$0xf] %v1546
      %1611 = vst [vmem:[#allocation2 + $0x4c] sm:$0xf] %v1547
      %1612 = vst [vmem:[#allocation2 + $0x70] sm:$0xf] %v1548
      %1613 = vst [vmem:[#allocation2 + $0x94] sm:$0xf] %v1549
      %1614 = vst [vmem:[#allocation2 + $0xb8] sm:$0xf] %v1550
      %1615 = vst [vmem:[#allocation2 + $0xdc] sm:$0xf] %v1551
      %1616 = vst [vmem:[#allocation2 + $0x100] sm:$0xf] %v1552
      %1617 = vst [vmem:[#allocation2 + $0x124] sm:$0xf] %v1553
      %1618 = vst [vmem:[#allocation2 + $0x148] sm:$0xf] %v1554
      %1619 = vst [vmem:[#allocation2 + $0x16c] sm:$0xf] %v1555
      %1620 = vst [vmem:[#allocation2 + $0x190] sm:$0xf] %v1556
      %1621 = vst [vmem:[#allocation2 + $0x1b4] sm:$0xf] %v1557
      %1622 = vst [vmem:[#allocation2 + $0x1d8] sm:$0xf] %v1558
      %1623 = vst [vmem:[#allocation2 + $0x1fc] sm:$0xf] %v1559
      %1624 = vst [vmem:[#allocation2 + $0x220] sm:$0xf] %v1560
      %1625 = vst [vmem:[#allocation2 + $0x244] sm:$0xf] %v1561
      %1626 = vst [vmem:[#allocation2 + $0x268] sm:$0xf] %v1562
      %1627 = vst [vmem:[#allocation2 + $0x28c] sm:$0xf] %v1563
      %1628 = vst [vmem:[#allocation2 + $0x2b0] sm:$0xf] %v1564
      %1629 = vst [vmem:[#allocation2 + $0x2d4] sm:$0xf] %v1565
      %1630 = vst [vmem:[#allocation2 + $0x2f8] sm:$0xf] %v1566
      %1631 = vst [vmem:[#allocation2 + $0x31c] sm:$0xf] %v1567
      %1632 = vst [vmem:[#allocation2 + $0x340] sm:$0xf] %v1568
      %1633 = vst [vmem:[#allocation2 + $0x364] sm:$0xf] %v1569
      %1634 = vst [vmem:[#allocation2 + $0x388] sm:$0xf] %v1570
      %1635 = vst [vmem:[#allocation2 + $0x3ac] sm:$0xf] %v1571
      %1636 = vst [vmem:[#allocation2 + $0x3d0] sm:$0xf] %v1572
      %1637 = vst [vmem:[#allocation2 + $0x3f4] sm:$0xf] %v1573
      %1638 = vst [vmem:[#allocation2 + $0x418] sm:$0xf] %v1574
      %1639 = vst [vmem:[#allocation2 + $0x43c] sm:$0xf] %v1575
      %1640 = vst [vmem:[#allocation2 + $0x460] sm:$0xf] %v1576
      %v1641 = vrot.slane %v678, 1
      %v1642 = vrot.slane %v679, 1
      %v1643 = vrot.slane %v680, 1
      %v1644 = vrot.slane %v681, 1
      %v1645 = vrot.slane %v682, 1
      %v1646 = vrot.slane %v683, 1
      %v1647 = vrot.slane %v684, 1
      %v1648 = vrot.slane %v685, 1
      %v1649 = vrot.slane %v686, 1
      %v1650 = vrot.slane %v687, 1
      %v1651 = vrot.slane %v688, 1
      %v1652 = vrot.slane %v689, 1
      %v1653 = vrot.slane %v690, 1
      %v1654 = vrot.slane %v691, 1
      %v1655 = vrot.slane %v692, 1
      %v1656 = vrot.slane %v693, 1
      %v1657 = vrot.slane %v694, 1
      %v1658 = vrot.slane %v695, 1
      %v1659 = vrot.slane %v696, 1
      %v1660 = vrot.slane %v697, 1
      %v1661 = vrot.slane %v698, 1
      %v1662 = vrot.slane %v699, 1
      %v1663 = vrot.slane %v700, 1
      %v1664 = vrot.slane %v701, 1
      %v1665 = vrot.slane %v702, 1
      %v1666 = vrot.slane %v703, 1
      %v1667 = vrot.slane %v704, 1
      %v1668 = vrot.slane %v705, 1
      %v1669 = vrot.slane %v706, 1
      %v1670 = vrot.slane %v707, 1
      %v1671 = vrot.slane %v708, 1
      %v1672 = vrot.slane %v709, 1
      %vm1673 = vcmp.lt.s32.totalorder %v807, 7
      %v1674 = vsel %vm1673, %v1671, %v1672
      %v1675 = vsel %vm1673, %v1670, %v1671
      %v1676 = vsel %vm1673, %v1669, %v1670
      %v1677 = vsel %vm1673, %v1668, %v1669
      %v1678 = vsel %vm1673, %v1667, %v1668
      %v1679 = vsel %vm1673, %v1666, %v1667
      %v1680 = vsel %vm1673, %v1665, %v1666
      %v1681 = vsel %vm1673, %v1664, %v1665
      %v1682 = vsel %vm1673, %v1663, %v1664
      %v1683 = vsel %vm1673, %v1662, %v1663
      %v1684 = vsel %vm1673, %v1661, %v1662
      %v1685 = vsel %vm1673, %v1660, %v1661
      %v1686 = vsel %vm1673, %v1659, %v1660
      %v1687 = vsel %vm1673, %v1658, %v1659
      %v1688 = vsel %vm1673, %v1657, %v1658
      %v1689 = vsel %vm1673, %v1656, %v1657
      %v1690 = vsel %vm1673, %v1655, %v1656
      %v1691 = vsel %vm1673, %v1654, %v1655
      %v1692 = vsel %vm1673, %v1653, %v1654
      %v1693 = vsel %vm1673, %v1652, %v1653
      %v1694 = vsel %vm1673, %v1651, %v1652
      %v1695 = vsel %vm1673, %v1650, %v1651
      %v1696 = vsel %vm1673, %v1649, %v1650
      %v1697 = vsel %vm1673, %v1648, %v1649
      %v1698 = vsel %vm1673, %v1647, %v1648
      %v1699 = vsel %vm1673, %v1646, %v1647
      %v1700 = vsel %vm1673, %v1645, %v1646
      %v1701 = vsel %vm1673, %v1644, %v1645
      %v1702 = vsel %vm1673, %v1643, %v1644
      %v1703 = vsel %vm1673, %v1642, %v1643
      %v1704 = vsel %vm1673, %v1641, %v1642
      %v1705 = vsel %vm1673, %v1672, %v1641
      %vm1706 = vcmp.le.s32.totalorder %v742, 14
      %vm1707 = vcmp.le.s32.totalorder %v743, 14
      %vm1708 = vcmp.le.s32.totalorder %v744, 14
      %vm1709 = vcmp.le.s32.totalorder %v745, 14
      %vm1710 = vcmp.le.s32.totalorder %v746, 14
      %vm1711 = vcmp.le.s32.totalorder %v747, 14
      %vm1712 = vcmp.le.s32.totalorder %v748, 14
      %vm1713 = vcmp.le.s32.totalorder %v749, 14
      %vm1714 = vcmp.le.s32.totalorder %v750, 14
      %vm1715 = vcmp.le.s32.totalorder %v751, 14
      %vm1716 = vcmp.le.s32.totalorder %v752, 14
      %vm1717 = vcmp.le.s32.totalorder %v753, 14
      %vm1718 = vcmp.le.s32.totalorder %v754, 14
      %vm1719 = vcmp.le.s32.totalorder %v755, 14
      %vm1720 = vcmp.le.s32.totalorder %v756, 14
      %vm1721 = vcmp.le.s32.totalorder %v757, 14
      %vm1722 = vcmp.le.s32.totalorder %v758, 14
      %vm1723 = vcmp.le.s32.totalorder %v759, 14
      %vm1724 = vcmp.le.s32.totalorder %v760, 14
      %vm1725 = vcmp.le.s32.totalorder %v761, 14
      %vm1726 = vcmp.le.s32.totalorder %v762, 14
      %vm1727 = vcmp.le.s32.totalorder %v763, 14
      %vm1728 = vcmp.le.s32.totalorder %v764, 14
      %vm1729 = vcmp.le.s32.totalorder %v765, 14
      %vm1730 = vcmp.le.s32.totalorder %v766, 14
      %vm1731 = vcmp.le.s32.totalorder %v767, 14
      %vm1732 = vcmp.le.s32.totalorder %v768, 14
      %vm1733 = vcmp.le.s32.totalorder %v769, 14
      %vm1734 = vcmp.le.s32.totalorder %v770, 14
      %vm1735 = vcmp.le.s32.totalorder %v771, 14
      %vm1736 = vcmp.le.s32.totalorder %v772, 14
      %vm1737 = vcmp.le.s32.totalorder %v773, 14
      %vm1738 = vmand %vm841, %vm1706
      %vm1739 = vmand %vm842, %vm1707
      %vm1740 = vmand %vm843, %vm1708
      %vm1741 = vmand %vm844, %vm1709
      %vm1742 = vmand %vm845, %vm1710
      %vm1743 = vmand %vm846, %vm1711
      %vm1744 = vmand %vm847, %vm1712
      %vm1745 = vmand %vm848, %vm1713
      %vm1746 = vmand %vm849, %vm1714
      %vm1747 = vmand %vm850, %vm1715
      %vm1748 = vmand %vm851, %vm1716
      %vm1749 = vmand %vm852, %vm1717
      %vm1750 = vmand %vm853, %vm1718
      %vm1751 = vmand %vm854, %vm1719
      %vm1752 = vmand %vm855, %vm1720
      %vm1753 = vmand %vm856, %vm1721
      %vm1754 = vmand %vm857, %vm1722
      %vm1755 = vmand %vm858, %vm1723
      %vm1756 = vmand %vm859, %vm1724
      %vm1757 = vmand %vm860, %vm1725
      %vm1758 = vmand %vm861, %vm1726
      %vm1759 = vmand %vm862, %vm1727
      %vm1760 = vmand %vm863, %vm1728
      %vm1761 = vmand %vm864, %vm1729
      %vm1762 = vmand %vm865, %vm1730
      %vm1763 = vmand %vm866, %vm1731
      %vm1764 = vmand %vm867, %vm1732
      %vm1765 = vmand %vm868, %vm1733
      %vm1766 = vmand %vm869, %vm1734
      %vm1767 = vmand %vm870, %vm1735
      %vm1768 = vmand %vm871, %vm1736
      %vm1769 = vmand %vm872, %vm1737
      %v1770 = vsel %vm1738, 1, 0
      %v1771 = vsel %vm1739, 1, 0
      %v1772 = vsel %vm1740, 1, 0
      %v1773 = vsel %vm1741, 1, 0
      %v1774 = vsel %vm1742, 1, 0
      %v1775 = vsel %vm1743, 1, 0
      %v1776 = vsel %vm1744, 1, 0
      %v1777 = vsel %vm1745, 1, 0
      %v1778 = vsel %vm1746, 1, 0
      %v1779 = vsel %vm1747, 1, 0
      %v1780 = vsel %vm1748, 1, 0
      %v1781 = vsel %vm1749, 1, 0
      %v1782 = vsel %vm1750, 1, 0
      %v1783 = vsel %vm1751, 1, 0
      %v1784 = vsel %vm1752, 1, 0
      %v1785 = vsel %vm1753, 1, 0
      %v1786 = vsel %vm1754, 1, 0
      %v1787 = vsel %vm1755, 1, 0
      %v1788 = vsel %vm1756, 1, 0
      %v1789 = vsel %vm1757, 1, 0
      %v1790 = vsel %vm1758, 1, 0
      %v1791 = vsel %vm1759, 1, 0
      %v1792 = vsel %vm1760, 1, 0
      %v1793 = vsel %vm1761, 1, 0
      %v1794 = vsel %vm1762, 1, 0
      %v1795 = vsel %vm1763, 1, 0
      %v1796 = vsel %vm1764, 1, 0
      %v1797 = vsel %vm1765, 1, 0
      %v1798 = vsel %vm1766, 1, 0
      %v1799 = vsel %vm1767, 1, 0
      %v1800 = vsel %vm1768, 1, 0
      %v1801 = vsel %vm1769, 1, 0
      %1802 = vset.pattern.permute.xlu0 0
      %1803 = vperm.xlu0 %1802, %v1770
      %v1804 = vpop.permute.xlu0 %1803
      %1805 = vset.pattern.permute.xlu0 0
      %1806 = vperm.xlu0 %1805, %v1771
      %v1807 = vpop.permute.xlu0 %1806
      %1808 = vset.pattern.permute.xlu0 0
      %1809 = vperm.xlu0 %1808, %v1772
      %v1810 = vpop.permute.xlu0 %1809
      %1811 = vset.pattern.permute.xlu0 0
      %1812 = vperm.xlu0 %1811, %v1773
      %v1813 = vpop.permute.xlu0 %1812
      %1814 = vset.pattern.permute.xlu0 0
      %1815 = vperm.xlu0 %1814, %v1774
      %v1816 = vpop.permute.xlu0 %1815
      %1817 = vset.pattern.permute.xlu0 0
      %1818 = vperm.xlu0 %1817, %v1775
      %v1819 = vpop.permute.xlu0 %1818
      %1820 = vset.pattern.permute.xlu0 0
      %1821 = vperm.xlu0 %1820, %v1776
      %v1822 = vpop.permute.xlu0 %1821
      %1823 = vset.pattern.permute.xlu0 0
      %1824 = vperm.xlu0 %1823, %v1777
      %v1825 = vpop.permute.xlu0 %1824
      %1826 = vset.pattern.permute.xlu0 0
      %1827 = vperm.xlu0 %1826, %v1778
      %v1828 = vpop.permute.xlu0 %1827
      %1829 = vset.pattern.permute.xlu0 0
      %1830 = vperm.xlu0 %1829, %v1779
      %v1831 = vpop.permute.xlu0 %1830
      %1832 = vset.pattern.permute.xlu0 0
      %1833 = vperm.xlu0 %1832, %v1780
      %v1834 = vpop.permute.xlu0 %1833
      %1835 = vset.pattern.permute.xlu0 0
      %1836 = vperm.xlu0 %1835, %v1781
      %v1837 = vpop.permute.xlu0 %1836
      %1838 = vset.pattern.permute.xlu0 0
      %1839 = vperm.xlu0 %1838, %v1782
      %v1840 = vpop.permute.xlu0 %1839
      %1841 = vset.pattern.permute.xlu0 0
      %1842 = vperm.xlu0 %1841, %v1783
      %v1843 = vpop.permute.xlu0 %1842
      %1844 = vset.pattern.permute.xlu0 0
      %1845 = vperm.xlu0 %1844, %v1784
      %v1846 = vpop.permute.xlu0 %1845
      %1847 = vset.pattern.permute.xlu0 0
      %1848 = vperm.xlu0 %1847, %v1785
      %v1849 = vpop.permute.xlu0 %1848
      %1850 = vset.pattern.permute.xlu0 0
      %1851 = vperm.xlu0 %1850, %v1786
      %v1852 = vpop.permute.xlu0 %1851
      %1853 = vset.pattern.permute.xlu0 0
      %1854 = vperm.xlu0 %1853, %v1787
      %v1855 = vpop.permute.xlu0 %1854
      %1856 = vset.pattern.permute.xlu0 0
      %1857 = vperm.xlu0 %1856, %v1788
      %v1858 = vpop.permute.xlu0 %1857
      %1859 = vset.pattern.permute.xlu0 0
      %1860 = vperm.xlu0 %1859, %v1789
      %v1861 = vpop.permute.xlu0 %1860
      %1862 = vset.pattern.permute.xlu0 0
      %1863 = vperm.xlu0 %1862, %v1790
      %v1864 = vpop.permute.xlu0 %1863
      %1865 = vset.pattern.permute.xlu0 0
      %1866 = vperm.xlu0 %1865, %v1791
      %v1867 = vpop.permute.xlu0 %1866
      %1868 = vset.pattern.permute.xlu0 0
      %1869 = vperm.xlu0 %1868, %v1792
      %v1870 = vpop.permute.xlu0 %1869
      %1871 = vset.pattern.permute.xlu0 0
      %1872 = vperm.xlu0 %1871, %v1793
      %v1873 = vpop.permute.xlu0 %1872
      %1874 = vset.pattern.permute.xlu0 0
      %1875 = vperm.xlu0 %1874, %v1794
      %v1876 = vpop.permute.xlu0 %1875
      %1877 = vset.pattern.permute.xlu0 0
      %1878 = vperm.xlu0 %1877, %v1795
      %v1879 = vpop.permute.xlu0 %1878
      %1880 = vset.pattern.permute.xlu0 0
      %1881 = vperm.xlu0 %1880, %v1796
      %v1882 = vpop.permute.xlu0 %1881
      %1883 = vset.pattern.permute.xlu0 0
      %1884 = vperm.xlu0 %1883, %v1797
      %v1885 = vpop.permute.xlu0 %1884
      %1886 = vset.pattern.permute.xlu0 0
      %1887 = vperm.xlu0 %1886, %v1798
      %v1888 = vpop.permute.xlu0 %1887
      %1889 = vset.pattern.permute.xlu0 0
      %1890 = vperm.xlu0 %1889, %v1799
      %v1891 = vpop.permute.xlu0 %1890
      %1892 = vset.pattern.permute.xlu0 0
      %1893 = vperm.xlu0 %1892, %v1800
      %v1894 = vpop.permute.xlu0 %1893
      %1895 = vset.pattern.permute.xlu0 0
      %1896 = vperm.xlu0 %1895, %v1801
      %v1897 = vpop.permute.xlu0 %1896
      %vm1898 = vcmp.eq.s32.totalorder %v1804, 1
      %vm1899 = vcmp.eq.s32.totalorder %v1807, 1
      %vm1900 = vcmp.eq.s32.totalorder %v1810, 1
      %vm1901 = vcmp.eq.s32.totalorder %v1813, 1
      %vm1902 = vcmp.eq.s32.totalorder %v1816, 1
      %vm1903 = vcmp.eq.s32.totalorder %v1819, 1
      %vm1904 = vcmp.eq.s32.totalorder %v1822, 1
      %vm1905 = vcmp.eq.s32.totalorder %v1825, 1
      %vm1906 = vcmp.eq.s32.totalorder %v1828, 1
      %vm1907 = vcmp.eq.s32.totalorder %v1831, 1
      %vm1908 = vcmp.eq.s32.totalorder %v1834, 1
      %vm1909 = vcmp.eq.s32.totalorder %v1837, 1
      %vm1910 = vcmp.eq.s32.totalorder %v1840, 1
      %vm1911 = vcmp.eq.s32.totalorder %v1843, 1
      %vm1912 = vcmp.eq.s32.totalorder %v1846, 1
      %vm1913 = vcmp.eq.s32.totalorder %v1849, 1
      %vm1914 = vcmp.eq.s32.totalorder %v1852, 1
      %vm1915 = vcmp.eq.s32.totalorder %v1855, 1
      %vm1916 = vcmp.eq.s32.totalorder %v1858, 1
      %vm1917 = vcmp.eq.s32.totalorder %v1861, 1
      %vm1918 = vcmp.eq.s32.totalorder %v1864, 1
      %vm1919 = vcmp.eq.s32.totalorder %v1867, 1
      %vm1920 = vcmp.eq.s32.totalorder %v1870, 1
      %vm1921 = vcmp.eq.s32.totalorder %v1873, 1
      %vm1922 = vcmp.eq.s32.totalorder %v1876, 1
      %vm1923 = vcmp.eq.s32.totalorder %v1879, 1
      %vm1924 = vcmp.eq.s32.totalorder %v1882, 1
      %vm1925 = vcmp.eq.s32.totalorder %v1885, 1
      %vm1926 = vcmp.eq.s32.totalorder %v1888, 1
      %vm1927 = vcmp.eq.s32.totalorder %v1891, 1
      %vm1928 = vcmp.eq.s32.totalorder %v1894, 1
      %vm1929 = vcmp.eq.s32.totalorder %v1897, 1
      %v1930 = vsel %vm1898, %v1674, 0.0
      %v1931 = vsel %vm1899, %v1705, 0.0
      %v1932 = vsel %vm1900, %v1704, 0.0
      %v1933 = vsel %vm1901, %v1703, 0.0
      %v1934 = vsel %vm1902, %v1702, 0.0
      %v1935 = vsel %vm1903, %v1701, 0.0
      %v1936 = vsel %vm1904, %v1700, 0.0
      %v1937 = vsel %vm1905, %v1699, 0.0
      %v1938 = vsel %vm1906, %v1698, 0.0
      %v1939 = vsel %vm1907, %v1697, 0.0
      %v1940 = vsel %vm1908, %v1696, 0.0
      %v1941 = vsel %vm1909, %v1695, 0.0
      %v1942 = vsel %vm1910, %v1694, 0.0
      %v1943 = vsel %vm1911, %v1693, 0.0
      %v1944 = vsel %vm1912, %v1692, 0.0
      %v1945 = vsel %vm1913, %v1691, 0.0
      %v1946 = vsel %vm1914, %v1690, 0.0
      %v1947 = vsel %vm1915, %v1689, 0.0
      %v1948 = vsel %vm1916, %v1688, 0.0
      %v1949 = vsel %vm1917, %v1687, 0.0
      %v1950 = vsel %vm1918, %v1686, 0.0
      %v1951 = vsel %vm1919, %v1685, 0.0
      %v1952 = vsel %vm1920, %v1684, 0.0
      %v1953 = vsel %vm1921, %v1683, 0.0
      %v1954 = vsel %vm1922, %v1682, 0.0
      %v1955 = vsel %vm1923, %v1681, 0.0
      %v1956 = vsel %vm1924, %v1680, 0.0
      %v1957 = vsel %vm1925, %v1679, 0.0
      %v1958 = vsel %vm1926, %v1678, 0.0
      %v1959 = vsel %vm1927, %v1677, 0.0
      %v1960 = vsel %vm1928, %v1676, 0.0
      %v1961 = vsel %vm1929, %v1675, 0.0
      %v1962 = vpack.c.bf16 %v1931, %v1930
      %v1963 = vpack.c.bf16 %v1933, %v1932
      %v1964 = vpack.c.bf16 %v1935, %v1934
      %v1965 = vpack.c.bf16 %v1937, %v1936
      %v1966 = vpack.c.bf16 %v1939, %v1938
      %v1967 = vpack.c.bf16 %v1941, %v1940
      %v1968 = vpack.c.bf16 %v1943, %v1942
      %v1969 = vpack.c.bf16 %v1945, %v1944
      %v1970 = vpack.c.bf16 %v1947, %v1946
      %v1971 = vpack.c.bf16 %v1949, %v1948
      %v1972 = vpack.c.bf16 %v1951, %v1950
      %v1973 = vpack.c.bf16 %v1953, %v1952
      %v1974 = vpack.c.bf16 %v1955, %v1954
      %v1975 = vpack.c.bf16 %v1957, %v1956
      %v1976 = vpack.c.bf16 %v1959, %v1958
      %v1977 = vpack.c.bf16 %v1961, %v1960
      %v1994 = vunpack.c.l.b16 %v1962
      %v1995 = vunpack.c.h.b16 %v1962
      %v1996 = vunpack.c.l.b16 %v1963
      %v1997 = vunpack.c.h.b16 %v1963
      %v1998 = vunpack.c.l.b16 %v1964
      %v1999 = vunpack.c.h.b16 %v1964
      %v2000 = vunpack.c.l.b16 %v1965
      %v2001 = vunpack.c.h.b16 %v1965
      %v2002 = vunpack.c.l.b16 %v1966
      %v2003 = vunpack.c.h.b16 %v1966
      %v2004 = vunpack.c.l.b16 %v1967
      %v2005 = vunpack.c.h.b16 %v1967
      %v2006 = vunpack.c.l.b16 %v1968
      %v2007 = vunpack.c.h.b16 %v1968
      %v2008 = vunpack.c.l.b16 %v1969
      %v2009 = vunpack.c.h.b16 %v1969
      %v2010 = vunpack.c.l.b16 %v1970
      %v2011 = vunpack.c.h.b16 %v1970
      %v2012 = vunpack.c.l.b16 %v1971
      %v2013 = vunpack.c.h.b16 %v1971
      %v2014 = vunpack.c.l.b16 %v1972
      %v2015 = vunpack.c.h.b16 %v1972
      %v2016 = vunpack.c.l.b16 %v1973
      %v2017 = vunpack.c.h.b16 %v1973
      %v2018 = vunpack.c.l.b16 %v1974
      %v2019 = vunpack.c.h.b16 %v1974
      %v2020 = vunpack.c.l.b16 %v1975
      %v2021 = vunpack.c.h.b16 %v1975
      %v2022 = vunpack.c.l.b16 %v1976
      %v2023 = vunpack.c.h.b16 %v1976
      %v2024 = vunpack.c.l.b16 %v1977
      %v2025 = vunpack.c.h.b16 %v1977
      %v2026 = vpack.c.b16 %v1994, %v1994
      %v2027 = vpack.c.b16 %v1995, %v1995
      %v2028 = vpack.c.b16 %v1996, %v1996
      %v2029 = vpack.c.b16 %v1997, %v1997
      %v2030 = vpack.c.b16 %v1998, %v1998
      %v2031 = vpack.c.b16 %v1999, %v1999
      %v2032 = vpack.c.b16 %v2000, %v2000
      %v2033 = vpack.c.b16 %v2001, %v2001
      %v2034 = vpack.c.b16 %v2002, %v2002
      %v2035 = vpack.c.b16 %v2003, %v2003
      %v2036 = vpack.c.b16 %v2004, %v2004
      %v2037 = vpack.c.b16 %v2005, %v2005
      %v2038 = vpack.c.b16 %v2006, %v2006
      %v2039 = vpack.c.b16 %v2007, %v2007
      %v2040 = vpack.c.b16 %v2008, %v2008
      %v2041 = vpack.c.b16 %v2009, %v2009
      %v2042 = vpack.c.b16 %v2010, %v2010
      %v2043 = vpack.c.b16 %v2011, %v2011
      %v2044 = vpack.c.b16 %v2012, %v2012
      %v2045 = vpack.c.b16 %v2013, %v2013
      %v2046 = vpack.c.b16 %v2014, %v2014
      %v2047 = vpack.c.b16 %v2015, %v2015
      %v2048 = vpack.c.b16 %v2016, %v2016
      %v2049 = vpack.c.b16 %v2017, %v2017
      %v2050 = vpack.c.b16 %v2018, %v2018
      %v2051 = vpack.c.b16 %v2019, %v2019
      %v2052 = vpack.c.b16 %v2020, %v2020
      %v2053 = vpack.c.b16 %v2021, %v2021
      %v2054 = vpack.c.b16 %v2022, %v2022
      %v2055 = vpack.c.b16 %v2023, %v2023
      %v2056 = vpack.c.b16 %v2024, %v2024
      %v2057 = vpack.c.b16 %v2025, %v2025
      %2090 = vst [vmem:[#allocation2 + $0x8] sm:$0xf] %v2026
      %2091 = vst [vmem:[#allocation2 + $0x2c] sm:$0xf] %v2027
      %2092 = vst [vmem:[#allocation2 + $0x50] sm:$0xf] %v2028
      %2093 = vst [vmem:[#allocation2 + $0x74] sm:$0xf] %v2029
      %2094 = vst [vmem:[#allocation2 + $0x98] sm:$0xf] %v2030
      %2095 = vst [vmem:[#allocation2 + $0xbc] sm:$0xf] %v2031
      %2096 = vst [vmem:[#allocation2 + $0xe0] sm:$0xf] %v2032
      %2097 = vst [vmem:[#allocation2 + $0x104] sm:$0xf] %v2033
      %2098 = vst [vmem:[#allocation2 + $0x128] sm:$0xf] %v2034
      %2099 = vst [vmem:[#allocation2 + $0x14c] sm:$0xf] %v2035
      %2100 = vst [vmem:[#allocation2 + $0x170] sm:$0xf] %v2036
      %2101 = vst [vmem:[#allocation2 + $0x194] sm:$0xf] %v2037
      %2102 = vst [vmem:[#allocation2 + $0x1b8] sm:$0xf] %v2038
      %2103 = vst [vmem:[#allocation2 + $0x1dc] sm:$0xf] %v2039
      %2104 = vst [vmem:[#allocation2 + $0x200] sm:$0xf] %v2040
      %2105 = vst [vmem:[#allocation2 + $0x224] sm:$0xf] %v2041
      %2106 = vst [vmem:[#allocation2 + $0x248] sm:$0xf] %v2042
      %2107 = vst [vmem:[#allocation2 + $0x26c] sm:$0xf] %v2043
      %2108 = vst [vmem:[#allocation2 + $0x290] sm:$0xf] %v2044
      %2109 = vst [vmem:[#allocation2 + $0x2b4] sm:$0xf] %v2045
      %2110 = vst [vmem:[#allocation2 + $0x2d8] sm:$0xf] %v2046
      %2111 = vst [vmem:[#allocation2 + $0x2fc] sm:$0xf] %v2047
      %2112 = vst [vmem:[#allocation2 + $0x320] sm:$0xf] %v2048
      %2113 = vst [vmem:[#allocation2 + $0x344] sm:$0xf] %v2049
      %2114 = vst [vmem:[#allocation2 + $0x368] sm:$0xf] %v2050
      %2115 = vst [vmem:[#allocation2 + $0x38c] sm:$0xf] %v2051
      %2116 = vst [vmem:[#allocation2 + $0x3b0] sm:$0xf] %v2052
      %2117 = vst [vmem:[#allocation2 + $0x3d4] sm:$0xf] %v2053
      %2118 = vst [vmem:[#allocation2 + $0x3f8] sm:$0xf] %v2054
      %2119 = vst [vmem:[#allocation2 + $0x41c] sm:$0xf] %v2055
      %2120 = vst [vmem:[#allocation2 + $0x440] sm:$0xf] %v2056
      %2121 = vst [vmem:[#allocation2 + $0x464] sm:$0xf] %v2057
      %v2122 = vsel %vm873, 1, 0
      %v2123 = vsel %vm874, 1, 0
      %v2124 = vsel %vm875, 1, 0
      %v2125 = vsel %vm876, 1, 0
      %v2126 = vsel %vm877, 1, 0
      %v2127 = vsel %vm878, 1, 0
      %v2128 = vsel %vm879, 1, 0
      %v2129 = vsel %vm880, 1, 0
      %v2130 = vsel %vm881, 1, 0
      %v2131 = vsel %vm882, 1, 0
      %v2132 = vsel %vm883, 1, 0
      %v2133 = vsel %vm884, 1, 0
      %v2134 = vsel %vm885, 1, 0
      %v2135 = vsel %vm886, 1, 0
      %v2136 = vsel %vm887, 1, 0
      %v2137 = vsel %vm888, 1, 0
      %v2138 = vsel %vm889, 1, 0
      %v2139 = vsel %vm890, 1, 0
      %v2140 = vsel %vm891, 1, 0
      %v2141 = vsel %vm892, 1, 0
      %v2142 = vsel %vm893, 1, 0
      %v2143 = vsel %vm894, 1, 0
      %v2144 = vsel %vm895, 1, 0
      %v2145 = vsel %vm896, 1, 0
      %v2146 = vsel %vm897, 1, 0
      %v2147 = vsel %vm898, 1, 0
      %v2148 = vsel %vm899, 1, 0
      %v2149 = vsel %vm900, 1, 0
      %v2150 = vsel %vm901, 1, 0
      %v2151 = vsel %vm902, 1, 0
      %v2152 = vsel %vm903, 1, 0
      %v2153 = vsel %vm904, 1, 0
      %2154 = vset.pattern.permute.xlu0 0
      %2155 = vperm.xlu0 %2154, %v2122
      %v2156 = vpop.permute.xlu0 %2155
      %2157 = vset.pattern.permute.xlu0 0
      %2158 = vperm.xlu0 %2157, %v2123
      %v2159 = vpop.permute.xlu0 %2158
      %2160 = vset.pattern.permute.xlu0 0
      %2161 = vperm.xlu0 %2160, %v2124
      %v2162 = vpop.permute.xlu0 %2161
      %2163 = vset.pattern.permute.xlu0 0
      %2164 = vperm.xlu0 %2163, %v2125
      %v2165 = vpop.permute.xlu0 %2164
      %2166 = vset.pattern.permute.xlu0 0
      %2167 = vperm.xlu0 %2166, %v2126
      %v2168 = vpop.permute.xlu0 %2167
      %2169 = vset.pattern.permute.xlu0 0
      %2170 = vperm.xlu0 %2169, %v2127
      %v2171 = vpop.permute.xlu0 %2170
      %2172 = vset.pattern.permute.xlu0 0
      %2173 = vperm.xlu0 %2172, %v2128
      %v2174 = vpop.permute.xlu0 %2173
      %2175 = vset.pattern.permute.xlu0 0
      %2176 = vperm.xlu0 %2175, %v2129
      %v2177 = vpop.permute.xlu0 %2176
      %2178 = vset.pattern.permute.xlu0 0
      %2179 = vperm.xlu0 %2178, %v2130
      %v2180 = vpop.permute.xlu0 %2179
      %2181 = vset.pattern.permute.xlu0 0
      %2182 = vperm.xlu0 %2181, %v2131
      %v2183 = vpop.permute.xlu0 %2182
      %2184 = vset.pattern.permute.xlu0 0
      %2185 = vperm.xlu0 %2184, %v2132
      %v2186 = vpop.permute.xlu0 %2185
      %2187 = vset.pattern.permute.xlu0 0
      %2188 = vperm.xlu0 %2187, %v2133
      %v2189 = vpop.permute.xlu0 %2188
      %2190 = vset.pattern.permute.xlu0 0
      %2191 = vperm.xlu0 %2190, %v2134
      %v2192 = vpop.permute.xlu0 %2191
      %2193 = vset.pattern.permute.xlu0 0
      %2194 = vperm.xlu0 %2193, %v2135
      %v2195 = vpop.permute.xlu0 %2194
      %2196 = vset.pattern.permute.xlu0 0
      %2197 = vperm.xlu0 %2196, %v2136
      %v2198 = vpop.permute.xlu0 %2197
      %2199 = vset.pattern.permute.xlu0 0
      %2200 = vperm.xlu0 %2199, %v2137
      %v2201 = vpop.permute.xlu0 %2200
      %2202 = vset.pattern.permute.xlu0 0
      %2203 = vperm.xlu0 %2202, %v2138
      %v2204 = vpop.permute.xlu0 %2203
      %2205 = vset.pattern.permute.xlu0 0
      %2206 = vperm.xlu0 %2205, %v2139
      %v2207 = vpop.permute.xlu0 %2206
      %2208 = vset.pattern.permute.xlu0 0
      %2209 = vperm.xlu0 %2208, %v2140
      %v2210 = vpop.permute.xlu0 %2209
      %2211 = vset.pattern.permute.xlu0 0
      %2212 = vperm.xlu0 %2211, %v2141
      %v2213 = vpop.permute.xlu0 %2212
      %2214 = vset.pattern.permute.xlu0 0
      %2215 = vperm.xlu0 %2214, %v2142
      %v2216 = vpop.permute.xlu0 %2215
      %2217 = vset.pattern.permute.xlu0 0
      %2218 = vperm.xlu0 %2217, %v2143
      %v2219 = vpop.permute.xlu0 %2218
      %2220 = vset.pattern.permute.xlu0 0
      %2221 = vperm.xlu0 %2220, %v2144
      %v2222 = vpop.permute.xlu0 %2221
      %2223 = vset.pattern.permute.xlu0 0
      %2224 = vperm.xlu0 %2223, %v2145
      %v2225 = vpop.permute.xlu0 %2224
      %2226 = vset.pattern.permute.xlu0 0
      %2227 = vperm.xlu0 %2226, %v2146
      %v2228 = vpop.permute.xlu0 %2227
      %2229 = vset.pattern.permute.xlu0 0
      %2230 = vperm.xlu0 %2229, %v2147
      %v2231 = vpop.permute.xlu0 %2230
      %2232 = vset.pattern.permute.xlu0 0
      %2233 = vperm.xlu0 %2232, %v2148
      %v2234 = vpop.permute.xlu0 %2233
      %2235 = vset.pattern.permute.xlu0 0
      %2236 = vperm.xlu0 %2235, %v2149
      %v2237 = vpop.permute.xlu0 %2236
      %2238 = vset.pattern.permute.xlu0 0
      %2239 = vperm.xlu0 %2238, %v2150
      %v2240 = vpop.permute.xlu0 %2239
      %2241 = vset.pattern.permute.xlu0 0
      %2242 = vperm.xlu0 %2241, %v2151
      %v2243 = vpop.permute.xlu0 %2242
      %2244 = vset.pattern.permute.xlu0 0
      %2245 = vperm.xlu0 %2244, %v2152
      %v2246 = vpop.permute.xlu0 %2245
      %2247 = vset.pattern.permute.xlu0 0
      %2248 = vperm.xlu0 %2247, %v2153
      %v2249 = vpop.permute.xlu0 %2248
      %vm2250 = vcmp.eq.s32.totalorder %v2156, 1
      %vm2251 = vcmp.eq.s32.totalorder %v2159, 1
      %vm2252 = vcmp.eq.s32.totalorder %v2162, 1
      %vm2253 = vcmp.eq.s32.totalorder %v2165, 1
      %vm2254 = vcmp.eq.s32.totalorder %v2168, 1
      %vm2255 = vcmp.eq.s32.totalorder %v2171, 1
      %vm2256 = vcmp.eq.s32.totalorder %v2174, 1
      %vm2257 = vcmp.eq.s32.totalorder %v2177, 1
      %vm2258 = vcmp.eq.s32.totalorder %v2180, 1
      %vm2259 = vcmp.eq.s32.totalorder %v2183, 1
      %vm2260 = vcmp.eq.s32.totalorder %v2186, 1
      %vm2261 = vcmp.eq.s32.totalorder %v2189, 1
      %vm2262 = vcmp.eq.s32.totalorder %v2192, 1
      %vm2263 = vcmp.eq.s32.totalorder %v2195, 1
      %vm2264 = vcmp.eq.s32.totalorder %v2198, 1
      %vm2265 = vcmp.eq.s32.totalorder %v2201, 1
      %vm2266 = vcmp.eq.s32.totalorder %v2204, 1
      %vm2267 = vcmp.eq.s32.totalorder %v2207, 1
      %vm2268 = vcmp.eq.s32.totalorder %v2210, 1
      %vm2269 = vcmp.eq.s32.totalorder %v2213, 1
      %vm2270 = vcmp.eq.s32.totalorder %v2216, 1
      %vm2271 = vcmp.eq.s32.totalorder %v2219, 1
      %vm2272 = vcmp.eq.s32.totalorder %v2222, 1
      %vm2273 = vcmp.eq.s32.totalorder %v2225, 1
      %vm2274 = vcmp.eq.s32.totalorder %v2228, 1
      %vm2275 = vcmp.eq.s32.totalorder %v2231, 1
      %vm2276 = vcmp.eq.s32.totalorder %v2234, 1
      %vm2277 = vcmp.eq.s32.totalorder %v2237, 1
      %vm2278 = vcmp.eq.s32.totalorder %v2240, 1
      %vm2279 = vcmp.eq.s32.totalorder %v2243, 1
      %vm2280 = vcmp.eq.s32.totalorder %v2246, 1
      %vm2281 = vcmp.eq.s32.totalorder %v2249, 1
      %v2282 = vsel %vm2250, %v840, 0.0
      %v2283 = vsel %vm2251, %v839, 0.0
      %v2284 = vsel %vm2252, %v838, 0.0
      %v2285 = vsel %vm2253, %v837, 0.0
      %v2286 = vsel %vm2254, %v836, 0.0
      %v2287 = vsel %vm2255, %v835, 0.0
      %v2288 = vsel %vm2256, %v834, 0.0
      %v2289 = vsel %vm2257, %v833, 0.0
      %v2290 = vsel %vm2258, %v832, 0.0
      %v2291 = vsel %vm2259, %v831, 0.0
      %v2292 = vsel %vm2260, %v830, 0.0
      %v2293 = vsel %vm2261, %v829, 0.0
      %v2294 = vsel %vm2262, %v828, 0.0
      %v2295 = vsel %vm2263, %v827, 0.0
      %v2296 = vsel %vm2264, %v826, 0.0
      %v2297 = vsel %vm2265, %v825, 0.0
      %v2298 = vsel %vm2266, %v824, 0.0
      %v2299 = vsel %vm2267, %v823, 0.0
      %v2300 = vsel %vm2268, %v822, 0.0
      %v2301 = vsel %vm2269, %v821, 0.0
      %v2302 = vsel %vm2270, %v820, 0.0
      %v2303 = vsel %vm2271, %v819, 0.0
      %v2304 = vsel %vm2272, %v818, 0.0
      %v2305 = vsel %vm2273, %v817, 0.0
      %v2306 = vsel %vm2274, %v816, 0.0
      %v2307 = vsel %vm2275, %v815, 0.0
      %v2308 = vsel %vm2276, %v814, 0.0
      %v2309 = vsel %vm2277, %v813, 0.0
      %v2310 = vsel %vm2278, %v812, 0.0
      %v2311 = vsel %vm2279, %v811, 0.0
      %v2312 = vsel %vm2280, %v810, 0.0
      %v2313 = vsel %vm2281, %v809, 0.0
      %v2314 = vpack.c.bf16 %v2283, %v2282
      %v2315 = vpack.c.bf16 %v2285, %v2284
      %v2316 = vpack.c.bf16 %v2287, %v2286
      %v2317 = vpack.c.bf16 %v2289, %v2288
      %v2318 = vpack.c.bf16 %v2291, %v2290
      %v2319 = vpack.c.bf16 %v2293, %v2292
      %v2320 = vpack.c.bf16 %v2295, %v2294
      %v2321 = vpack.c.bf16 %v2297, %v2296
      %v2322 = vpack.c.bf16 %v2299, %v2298
      %v2323 = vpack.c.bf16 %v2301, %v2300
      %v2324 = vpack.c.bf16 %v2303, %v2302
      %v2325 = vpack.c.bf16 %v2305, %v2304
      %v2326 = vpack.c.bf16 %v2307, %v2306
      %v2327 = vpack.c.bf16 %v2309, %v2308
      %v2328 = vpack.c.bf16 %v2311, %v2310
      %v2329 = vpack.c.bf16 %v2313, %v2312
      %v2346 = vunpack.c.l.b16 %v2314
      %v2347 = vunpack.c.h.b16 %v2314
      %v2348 = vunpack.c.l.b16 %v2315
      %v2349 = vunpack.c.h.b16 %v2315
      %v2350 = vunpack.c.l.b16 %v2316
      %v2351 = vunpack.c.h.b16 %v2316
      %v2352 = vunpack.c.l.b16 %v2317
      %v2353 = vunpack.c.h.b16 %v2317
      %v2354 = vunpack.c.l.b16 %v2318
      %v2355 = vunpack.c.h.b16 %v2318
      %v2356 = vunpack.c.l.b16 %v2319
      %v2357 = vunpack.c.h.b16 %v2319
      %v2358 = vunpack.c.l.b16 %v2320
      %v2359 = vunpack.c.h.b16 %v2320
      %v2360 = vunpack.c.l.b16 %v2321
      %v2361 = vunpack.c.h.b16 %v2321
      %v2362 = vunpack.c.l.b16 %v2322
      %v2363 = vunpack.c.h.b16 %v2322
      %v2364 = vunpack.c.l.b16 %v2323
      %v2365 = vunpack.c.h.b16 %v2323
      %v2366 = vunpack.c.l.b16 %v2324
      %v2367 = vunpack.c.h.b16 %v2324
      %v2368 = vunpack.c.l.b16 %v2325
      %v2369 = vunpack.c.h.b16 %v2325
      %v2370 = vunpack.c.l.b16 %v2326
      %v2371 = vunpack.c.h.b16 %v2326
      %v2372 = vunpack.c.l.b16 %v2327
      %v2373 = vunpack.c.h.b16 %v2327
      %v2374 = vunpack.c.l.b16 %v2328
      %v2375 = vunpack.c.h.b16 %v2328
      %v2376 = vunpack.c.l.b16 %v2329
      %v2377 = vunpack.c.h.b16 %v2329
      %v2378 = vpack.c.b16 %v2346, %v2346
      %v2379 = vpack.c.b16 %v2347, %v2347
      %v2380 = vpack.c.b16 %v2348, %v2348
      %v2381 = vpack.c.b16 %v2349, %v2349
      %v2382 = vpack.c.b16 %v2350, %v2350
      %v2383 = vpack.c.b16 %v2351, %v2351
      %v2384 = vpack.c.b16 %v2352, %v2352
      %v2385 = vpack.c.b16 %v2353, %v2353
      %v2386 = vpack.c.b16 %v2354, %v2354
      %v2387 = vpack.c.b16 %v2355, %v2355
      %v2388 = vpack.c.b16 %v2356, %v2356
      %v2389 = vpack.c.b16 %v2357, %v2357
      %v2390 = vpack.c.b16 %v2358, %v2358
      %v2391 = vpack.c.b16 %v2359, %v2359
      %v2392 = vpack.c.b16 %v2360, %v2360
      %v2393 = vpack.c.b16 %v2361, %v2361
      %v2394 = vpack.c.b16 %v2362, %v2362
      %v2395 = vpack.c.b16 %v2363, %v2363
      %v2396 = vpack.c.b16 %v2364, %v2364
      %v2397 = vpack.c.b16 %v2365, %v2365
      %v2398 = vpack.c.b16 %v2366, %v2366
      %v2399 = vpack.c.b16 %v2367, %v2367
      %v2400 = vpack.c.b16 %v2368, %v2368
      %v2401 = vpack.c.b16 %v2369, %v2369
      %v2402 = vpack.c.b16 %v2370, %v2370
      %v2403 = vpack.c.b16 %v2371, %v2371
      %v2404 = vpack.c.b16 %v2372, %v2372
      %v2405 = vpack.c.b16 %v2373, %v2373
      %v2406 = vpack.c.b16 %v2374, %v2374
      %v2407 = vpack.c.b16 %v2375, %v2375
      %v2408 = vpack.c.b16 %v2376, %v2376
      %v2409 = vpack.c.b16 %v2377, %v2377
      %2442 = vst [vmem:[#allocation2 + $0xc] sm:$0xf] %v2378
      %2443 = vst [vmem:[#allocation2 + $0x30] sm:$0xf] %v2379
      %2444 = vst [vmem:[#allocation2 + $0x54] sm:$0xf] %v2380
      %2445 = vst [vmem:[#allocation2 + $0x78] sm:$0xf] %v2381
      %2446 = vst [vmem:[#allocation2 + $0x9c] sm:$0xf] %v2382
      %2447 = vst [vmem:[#allocation2 + $0xc0] sm:$0xf] %v2383
      %2448 = vst [vmem:[#allocation2 + $0xe4] sm:$0xf] %v2384
      %2449 = vst [vmem:[#allocation2 + $0x108] sm:$0xf] %v2385
      %2450 = vst [vmem:[#allocation2 + $0x12c] sm:$0xf] %v2386
      %2451 = vst [vmem:[#allocation2 + $0x150] sm:$0xf] %v2387
      %2452 = vst [vmem:[#allocation2 + $0x174] sm:$0xf] %v2388
      %2453 = vst [vmem:[#allocation2 + $0x198] sm:$0xf] %v2389
      %2454 = vst [vmem:[#allocation2 + $0x1bc] sm:$0xf] %v2390
      %2455 = vst [vmem:[#allocation2 + $0x1e0] sm:$0xf] %v2391
      %2456 = vst [vmem:[#allocation2 + $0x204] sm:$0xf] %v2392
      %2457 = vst [vmem:[#allocation2 + $0x228] sm:$0xf] %v2393
      %2458 = vst [vmem:[#allocation2 + $0x24c] sm:$0xf] %v2394
      %2459 = vst [vmem:[#allocation2 + $0x270] sm:$0xf] %v2395
      %2460 = vst [vmem:[#allocation2 + $0x294] sm:$0xf] %v2396
      %2461 = vst [vmem:[#allocation2 + $0x2b8] sm:$0xf] %v2397
      %2462 = vst [vmem:[#allocation2 + $0x2dc] sm:$0xf] %v2398
      %2463 = vst [vmem:[#allocation2 + $0x300] sm:$0xf] %v2399
      %2464 = vst [vmem:[#allocation2 + $0x324] sm:$0xf] %v2400
      %2465 = vst [vmem:[#allocation2 + $0x348] sm:$0xf] %v2401
      %2466 = vst [vmem:[#allocation2 + $0x36c] sm:$0xf] %v2402
      %2467 = vst [vmem:[#allocation2 + $0x390] sm:$0xf] %v2403
      %2468 = vst [vmem:[#allocation2 + $0x3b4] sm:$0xf] %v2404
      %2469 = vst [vmem:[#allocation2 + $0x3d8] sm:$0xf] %v2405
      %2470 = vst [vmem:[#allocation2 + $0x3fc] sm:$0xf] %v2406
      %2471 = vst [vmem:[#allocation2 + $0x420] sm:$0xf] %v2407
      %2472 = vst [vmem:[#allocation2 + $0x444] sm:$0xf] %v2408
      %2473 = vst [vmem:[#allocation2 + $0x468] sm:$0xf] %v2409
      %v2474 = vpack.c.bf16 %v679, %v678
      %v2475 = vpack.c.bf16 %v681, %v680
      %v2476 = vpack.c.bf16 %v683, %v682
      %v2477 = vpack.c.bf16 %v685, %v684
      %v2478 = vpack.c.bf16 %v687, %v686
      %v2479 = vpack.c.bf16 %v689, %v688
      %v2480 = vpack.c.bf16 %v691, %v690
      %v2481 = vpack.c.bf16 %v693, %v692
      %v2482 = vpack.c.bf16 %v695, %v694
      %v2483 = vpack.c.bf16 %v697, %v696
      %v2484 = vpack.c.bf16 %v699, %v698
      %v2485 = vpack.c.bf16 %v701, %v700
      %v2486 = vpack.c.bf16 %v703, %v702
      %v2487 = vpack.c.bf16 %v705, %v704
      %v2488 = vpack.c.bf16 %v707, %v706
      %v2489 = vpack.c.bf16 %v709, %v708
      %v2506 = vunpack.c.l.b16 %v2474
      %v2507 = vunpack.c.h.b16 %v2474
      %v2508 = vunpack.c.l.b16 %v2475
      %v2509 = vunpack.c.h.b16 %v2475
      %v2510 = vunpack.c.l.b16 %v2476
      %v2511 = vunpack.c.h.b16 %v2476
      %v2512 = vunpack.c.l.b16 %v2477
      %v2513 = vunpack.c.h.b16 %v2477
      %v2514 = vunpack.c.l.b16 %v2478
      %v2515 = vunpack.c.h.b16 %v2478
      %v2516 = vunpack.c.l.b16 %v2479
      %v2517 = vunpack.c.h.b16 %v2479
      %v2518 = vunpack.c.l.b16 %v2480
      %v2519 = vunpack.c.h.b16 %v2480
      %v2520 = vunpack.c.l.b16 %v2481
      %v2521 = vunpack.c.h.b16 %v2481
      %v2522 = vunpack.c.l.b16 %v2482
      %v2523 = vunpack.c.h.b16 %v2482
      %v2524 = vunpack.c.l.b16 %v2483
      %v2525 = vunpack.c.h.b16 %v2483
      %v2526 = vunpack.c.l.b16 %v2484
      %v2527 = vunpack.c.h.b16 %v2484
      %v2528 = vunpack.c.l.b16 %v2485
      %v2529 = vunpack.c.h.b16 %v2485
      %v2530 = vunpack.c.l.b16 %v2486
      %v2531 = vunpack.c.h.b16 %v2486
      %v2532 = vunpack.c.l.b16 %v2487
      %v2533 = vunpack.c.h.b16 %v2487
      %v2534 = vunpack.c.l.b16 %v2488
      %v2535 = vunpack.c.h.b16 %v2488
      %v2536 = vunpack.c.l.b16 %v2489
      %v2537 = vunpack.c.h.b16 %v2489
      %v2538 = vpack.c.b16 %v2506, %v2506
      %v2539 = vpack.c.b16 %v2507, %v2507
      %v2540 = vpack.c.b16 %v2508, %v2508
      %v2541 = vpack.c.b16 %v2509, %v2509
      %v2542 = vpack.c.b16 %v2510, %v2510
      %v2543 = vpack.c.b16 %v2511, %v2511
      %v2544 = vpack.c.b16 %v2512, %v2512
      %v2545 = vpack.c.b16 %v2513, %v2513
      %v2546 = vpack.c.b16 %v2514, %v2514
      %v2547 = vpack.c.b16 %v2515, %v2515
      %v2548 = vpack.c.b16 %v2516, %v2516
      %v2549 = vpack.c.b16 %v2517, %v2517
      %v2550 = vpack.c.b16 %v2518, %v2518
      %v2551 = vpack.c.b16 %v2519, %v2519
      %v2552 = vpack.c.b16 %v2520, %v2520
      %v2553 = vpack.c.b16 %v2521, %v2521
      %v2554 = vpack.c.b16 %v2522, %v2522
      %v2555 = vpack.c.b16 %v2523, %v2523
      %v2556 = vpack.c.b16 %v2524, %v2524
      %v2557 = vpack.c.b16 %v2525, %v2525
      %v2558 = vpack.c.b16 %v2526, %v2526
      %v2559 = vpack.c.b16 %v2527, %v2527
      %v2560 = vpack.c.b16 %v2528, %v2528
      %v2561 = vpack.c.b16 %v2529, %v2529
      %v2562 = vpack.c.b16 %v2530, %v2530
      %v2563 = vpack.c.b16 %v2531, %v2531
      %v2564 = vpack.c.b16 %v2532, %v2532
      %v2565 = vpack.c.b16 %v2533, %v2533
      %v2566 = vpack.c.b16 %v2534, %v2534
      %v2567 = vpack.c.b16 %v2535, %v2535
      %v2568 = vpack.c.b16 %v2536, %v2536
      %v2569 = vpack.c.b16 %v2537, %v2537
      %2602 = vst [vmem:[#allocation2 + $0x10] sm:$0xf] %v2538
      %2603 = vst [vmem:[#allocation2 + $0x34] sm:$0xf] %v2539
      %2604 = vst [vmem:[#allocation2 + $0x58] sm:$0xf] %v2540
      %2605 = vst [vmem:[#allocation2 + $0x7c] sm:$0xf] %v2541
      %2606 = vst [vmem:[#allocation2 + $0xa0] sm:$0xf] %v2542
      %2607 = vst [vmem:[#allocation2 + $0xc4] sm:$0xf] %v2543
      %2608 = vst [vmem:[#allocation2 + $0xe8] sm:$0xf] %v2544
      %2609 = vst [vmem:[#allocation2 + $0x10c] sm:$0xf] %v2545
      %2610 = vst [vmem:[#allocation2 + $0x130] sm:$0xf] %v2546
      %2611 = vst [vmem:[#allocation2 + $0x154] sm:$0xf] %v2547
      %2612 = vst [vmem:[#allocation2 + $0x178] sm:$0xf] %v2548
      %2613 = vst [vmem:[#allocation2 + $0x19c] sm:$0xf] %v2549
      %2614 = vst [vmem:[#allocation2 + $0x1c0] sm:$0xf] %v2550
      %2615 = vst [vmem:[#allocation2 + $0x1e4] sm:$0xf] %v2551
      %2616 = vst [vmem:[#allocation2 + $0x208] sm:$0xf] %v2552
      %2617 = vst [vmem:[#allocation2 + $0x22c] sm:$0xf] %v2553
      %2618 = vst [vmem:[#allocation2 + $0x250] sm:$0xf] %v2554
      %2619 = vst [vmem:[#allocation2 + $0x274] sm:$0xf] %v2555
      %2620 = vst [vmem:[#allocation2 + $0x298] sm:$0xf] %v2556
      %2621 = vst [vmem:[#allocation2 + $0x2bc] sm:$0xf] %v2557
      %2622 = vst [vmem:[#allocation2 + $0x2e0] sm:$0xf] %v2558
      %2623 = vst [vmem:[#allocation2 + $0x304] sm:$0xf] %v2559
      %2624 = vst [vmem:[#allocation2 + $0x328] sm:$0xf] %v2560
      %2625 = vst [vmem:[#allocation2 + $0x34c] sm:$0xf] %v2561
      %2626 = vst [vmem:[#allocation2 + $0x370] sm:$0xf] %v2562
      %2627 = vst [vmem:[#allocation2 + $0x394] sm:$0xf] %v2563
      %2628 = vst [vmem:[#allocation2 + $0x3b8] sm:$0xf] %v2564
      %2629 = vst [vmem:[#allocation2 + $0x3dc] sm:$0xf] %v2565
      %2630 = vst [vmem:[#allocation2 + $0x400] sm:$0xf] %v2566
      %2631 = vst [vmem:[#allocation2 + $0x424] sm:$0xf] %v2567
      %2632 = vst [vmem:[#allocation2 + $0x448] sm:$0xf] %v2568
      %2633 = vst [vmem:[#allocation2 + $0x46c] sm:$0xf] %v2569
      %v2634 = vsel %vm1706, 1, 0
      %v2635 = vsel %vm1707, 1, 0
      %v2636 = vsel %vm1708, 1, 0
      %v2637 = vsel %vm1709, 1, 0
      %v2638 = vsel %vm1710, 1, 0
      %v2639 = vsel %vm1711, 1, 0
      %v2640 = vsel %vm1712, 1, 0
      %v2641 = vsel %vm1713, 1, 0
      %v2642 = vsel %vm1714, 1, 0
      %v2643 = vsel %vm1715, 1, 0
      %v2644 = vsel %vm1716, 1, 0
      %v2645 = vsel %vm1717, 1, 0
      %v2646 = vsel %vm1718, 1, 0
      %v2647 = vsel %vm1719, 1, 0
      %v2648 = vsel %vm1720, 1, 0
      %v2649 = vsel %vm1721, 1, 0
      %v2650 = vsel %vm1722, 1, 0
      %v2651 = vsel %vm1723, 1, 0
      %v2652 = vsel %vm1724, 1, 0
      %v2653 = vsel %vm1725, 1, 0
      %v2654 = vsel %vm1726, 1, 0
      %v2655 = vsel %vm1727, 1, 0
      %v2656 = vsel %vm1728, 1, 0
      %v2657 = vsel %vm1729, 1, 0
      %v2658 = vsel %vm1730, 1, 0
      %v2659 = vsel %vm1731, 1, 0
      %v2660 = vsel %vm1732, 1, 0
      %v2661 = vsel %vm1733, 1, 0
      %v2662 = vsel %vm1734, 1, 0
      %v2663 = vsel %vm1735, 1, 0
      %v2664 = vsel %vm1736, 1, 0
      %v2665 = vsel %vm1737, 1, 0
      %2666 = vset.pattern.permute.xlu0 0
      %2667 = vperm.xlu0 %2666, %v2634
      %v2668 = vpop.permute.xlu0 %2667
      %2669 = vset.pattern.permute.xlu0 0
      %2670 = vperm.xlu0 %2669, %v2635
      %v2671 = vpop.permute.xlu0 %2670
      %2672 = vset.pattern.permute.xlu0 0
      %2673 = vperm.xlu0 %2672, %v2636
      %v2674 = vpop.permute.xlu0 %2673
      %2675 = vset.pattern.permute.xlu0 0
      %2676 = vperm.xlu0 %2675, %v2637
      %v2677 = vpop.permute.xlu0 %2676
      %2678 = vset.pattern.permute.xlu0 0
      %2679 = vperm.xlu0 %2678, %v2638
      %v2680 = vpop.permute.xlu0 %2679
      %2681 = vset.pattern.permute.xlu0 0
      %2682 = vperm.xlu0 %2681, %v2639
      %v2683 = vpop.permute.xlu0 %2682
      %2684 = vset.pattern.permute.xlu0 0
      %2685 = vperm.xlu0 %2684, %v2640
      %v2686 = vpop.permute.xlu0 %2685
      %2687 = vset.pattern.permute.xlu0 0
      %2688 = vperm.xlu0 %2687, %v2641
      %v2689 = vpop.permute.xlu0 %2688
      %2690 = vset.pattern.permute.xlu0 0
      %2691 = vperm.xlu0 %2690, %v2642
      %v2692 = vpop.permute.xlu0 %2691
      %2693 = vset.pattern.permute.xlu0 0
      %2694 = vperm.xlu0 %2693, %v2643
      %v2695 = vpop.permute.xlu0 %2694
      %2696 = vset.pattern.permute.xlu0 0
      %2697 = vperm.xlu0 %2696, %v2644
      %v2698 = vpop.permute.xlu0 %2697
      %2699 = vset.pattern.permute.xlu0 0
      %2700 = vperm.xlu0 %2699, %v2645
      %v2701 = vpop.permute.xlu0 %2700
      %2702 = vset.pattern.permute.xlu0 0
      %2703 = vperm.xlu0 %2702, %v2646
      %v2704 = vpop.permute.xlu0 %2703
      %2705 = vset.pattern.permute.xlu0 0
      %2706 = vperm.xlu0 %2705, %v2647
      %v2707 = vpop.permute.xlu0 %2706
      %2708 = vset.pattern.permute.xlu0 0
      %2709 = vperm.xlu0 %2708, %v2648
      %v2710 = vpop.permute.xlu0 %2709
      %2711 = vset.pattern.permute.xlu0 0
      %2712 = vperm.xlu0 %2711, %v2649
      %v2713 = vpop.permute.xlu0 %2712
      %2714 = vset.pattern.permute.xlu0 0
      %2715 = vperm.xlu0 %2714, %v2650
      %v2716 = vpop.permute.xlu0 %2715
      %2717 = vset.pattern.permute.xlu0 0
      %2718 = vperm.xlu0 %2717, %v2651
      %v2719 = vpop.permute.xlu0 %2718
      %2720 = vset.pattern.permute.xlu0 0
      %2721 = vperm.xlu0 %2720, %v2652
      %v2722 = vpop.permute.xlu0 %2721
      %2723 = vset.pattern.permute.xlu0 0
      %2724 = vperm.xlu0 %2723, %v2653
      %v2725 = vpop.permute.xlu0 %2724
      %2726 = vset.pattern.permute.xlu0 0
      %2727 = vperm.xlu0 %2726, %v2654
      %v2728 = vpop.permute.xlu0 %2727
      %2729 = vset.pattern.permute.xlu0 0
      %2730 = vperm.xlu0 %2729, %v2655
      %v2731 = vpop.permute.xlu0 %2730
      %2732 = vset.pattern.permute.xlu0 0
      %2733 = vperm.xlu0 %2732, %v2656
      %v2734 = vpop.permute.xlu0 %2733
      %2735 = vset.pattern.permute.xlu0 0
      %2736 = vperm.xlu0 %2735, %v2657
      %v2737 = vpop.permute.xlu0 %2736
      %2738 = vset.pattern.permute.xlu0 0
      %2739 = vperm.xlu0 %2738, %v2658
      %v2740 = vpop.permute.xlu0 %2739
      %2741 = vset.pattern.permute.xlu0 0
      %2742 = vperm.xlu0 %2741, %v2659
      %v2743 = vpop.permute.xlu0 %2742
      %2744 = vset.pattern.permute.xlu0 0
      %2745 = vperm.xlu0 %2744, %v2660
      %v2746 = vpop.permute.xlu0 %2745
      %2747 = vset.pattern.permute.xlu0 0
      %2748 = vperm.xlu0 %2747, %v2661
      %v2749 = vpop.permute.xlu0 %2748
      %2750 = vset.pattern.permute.xlu0 0
      %2751 = vperm.xlu0 %2750, %v2662
      %v2752 = vpop.permute.xlu0 %2751
      %2753 = vset.pattern.permute.xlu0 0
      %2754 = vperm.xlu0 %2753, %v2663
      %v2755 = vpop.permute.xlu0 %2754
      %2756 = vset.pattern.permute.xlu0 0
      %2757 = vperm.xlu0 %2756, %v2664
      %v2758 = vpop.permute.xlu0 %2757
      %2759 = vset.pattern.permute.xlu0 0
      %2760 = vperm.xlu0 %2759, %v2665
      %v2761 = vpop.permute.xlu0 %2760
      %vm2762 = vcmp.eq.s32.totalorder %v2668, 1
      %vm2763 = vcmp.eq.s32.totalorder %v2671, 1
      %vm2764 = vcmp.eq.s32.totalorder %v2674, 1
      %vm2765 = vcmp.eq.s32.totalorder %v2677, 1
      %vm2766 = vcmp.eq.s32.totalorder %v2680, 1
      %vm2767 = vcmp.eq.s32.totalorder %v2683, 1
      %vm2768 = vcmp.eq.s32.totalorder %v2686, 1
      %vm2769 = vcmp.eq.s32.totalorder %v2689, 1
      %vm2770 = vcmp.eq.s32.totalorder %v2692, 1
      %vm2771 = vcmp.eq.s32.totalorder %v2695, 1
      %vm2772 = vcmp.eq.s32.totalorder %v2698, 1
      %vm2773 = vcmp.eq.s32.totalorder %v2701, 1
      %vm2774 = vcmp.eq.s32.totalorder %v2704, 1
      %vm2775 = vcmp.eq.s32.totalorder %v2707, 1
      %vm2776 = vcmp.eq.s32.totalorder %v2710, 1
      %vm2777 = vcmp.eq.s32.totalorder %v2713, 1
      %vm2778 = vcmp.eq.s32.totalorder %v2716, 1
      %vm2779 = vcmp.eq.s32.totalorder %v2719, 1
      %vm2780 = vcmp.eq.s32.totalorder %v2722, 1
      %vm2781 = vcmp.eq.s32.totalorder %v2725, 1
      %vm2782 = vcmp.eq.s32.totalorder %v2728, 1
      %vm2783 = vcmp.eq.s32.totalorder %v2731, 1
      %vm2784 = vcmp.eq.s32.totalorder %v2734, 1
      %vm2785 = vcmp.eq.s32.totalorder %v2737, 1
      %vm2786 = vcmp.eq.s32.totalorder %v2740, 1
      %vm2787 = vcmp.eq.s32.totalorder %v2743, 1
      %vm2788 = vcmp.eq.s32.totalorder %v2746, 1
      %vm2789 = vcmp.eq.s32.totalorder %v2749, 1
      %vm2790 = vcmp.eq.s32.totalorder %v2752, 1
      %vm2791 = vcmp.eq.s32.totalorder %v2755, 1
      %vm2792 = vcmp.eq.s32.totalorder %v2758, 1
      %vm2793 = vcmp.eq.s32.totalorder %v2761, 1
      %v2794 = vsel %vm2762, %v1704, 0.0
      %v2795 = vsel %vm2763, %v1703, 0.0
      %v2796 = vsel %vm2764, %v1702, 0.0
      %v2797 = vsel %vm2765, %v1701, 0.0
      %v2798 = vsel %vm2766, %v1700, 0.0
      %v2799 = vsel %vm2767, %v1699, 0.0
      %v2800 = vsel %vm2768, %v1698, 0.0
      %v2801 = vsel %vm2769, %v1697, 0.0
      %v2802 = vsel %vm2770, %v1696, 0.0
      %v2803 = vsel %vm2771, %v1695, 0.0
      %v2804 = vsel %vm2772, %v1694, 0.0
      %v2805 = vsel %vm2773, %v1693, 0.0
      %v2806 = vsel %vm2774, %v1692, 0.0
      %v2807 = vsel %vm2775, %v1691, 0.0
      %v2808 = vsel %vm2776, %v1690, 0.0
      %v2809 = vsel %vm2777, %v1689, 0.0
      %v2810 = vsel %vm2778, %v1688, 0.0
      %v2811 = vsel %vm2779, %v1687, 0.0
      %v2812 = vsel %vm2780, %v1686, 0.0
      %v2813 = vsel %vm2781, %v1685, 0.0
      %v2814 = vsel %vm2782, %v1684, 0.0
      %v2815 = vsel %vm2783, %v1683, 0.0
      %v2816 = vsel %vm2784, %v1682, 0.0
      %v2817 = vsel %vm2785, %v1681, 0.0
      %v2818 = vsel %vm2786, %v1680, 0.0
      %v2819 = vsel %vm2787, %v1679, 0.0
      %v2820 = vsel %vm2788, %v1678, 0.0
      %v2821 = vsel %vm2789, %v1677, 0.0
      %v2822 = vsel %vm2790, %v1676, 0.0
      %v2823 = vsel %vm2791, %v1675, 0.0
      %v2824 = vsel %vm2792, %v1674, 0.0
      %v2825 = vsel %vm2793, %v1705, 0.0
      %v2826 = vpack.c.bf16 %v2795, %v2794
      %v2827 = vpack.c.bf16 %v2797, %v2796
      %v2828 = vpack.c.bf16 %v2799, %v2798
      %v2829 = vpack.c.bf16 %v2801, %v2800
      %v2830 = vpack.c.bf16 %v2803, %v2802
      %v2831 = vpack.c.bf16 %v2805, %v2804
      %v2832 = vpack.c.bf16 %v2807, %v2806
      %v2833 = vpack.c.bf16 %v2809, %v2808
      %v2834 = vpack.c.bf16 %v2811, %v2810
      %v2835 = vpack.c.bf16 %v2813, %v2812
      %v2836 = vpack.c.bf16 %v2815, %v2814
      %v2837 = vpack.c.bf16 %v2817, %v2816
      %v2838 = vpack.c.bf16 %v2819, %v2818
      %v2839 = vpack.c.bf16 %v2821, %v2820
      %v2840 = vpack.c.bf16 %v2823, %v2822
      %v2841 = vpack.c.bf16 %v2825, %v2824
      %v2858 = vunpack.c.l.b16 %v2826
      %v2859 = vunpack.c.h.b16 %v2826
      %v2860 = vunpack.c.l.b16 %v2827
      %v2861 = vunpack.c.h.b16 %v2827
      %v2862 = vunpack.c.l.b16 %v2828
      %v2863 = vunpack.c.h.b16 %v2828
      %v2864 = vunpack.c.l.b16 %v2829
      %v2865 = vunpack.c.h.b16 %v2829
      %v2866 = vunpack.c.l.b16 %v2830
      %v2867 = vunpack.c.h.b16 %v2830
      %v2868 = vunpack.c.l.b16 %v2831
      %v2869 = vunpack.c.h.b16 %v2831
      %v2870 = vunpack.c.l.b16 %v2832
      %v2871 = vunpack.c.h.b16 %v2832
      %v2872 = vunpack.c.l.b16 %v2833
      %v2873 = vunpack.c.h.b16 %v2833
      %v2874 = vunpack.c.l.b16 %v2834
      %v2875 = vunpack.c.h.b16 %v2834
      %v2876 = vunpack.c.l.b16 %v2835
      %v2877 = vunpack.c.h.b16 %v2835
      %v2878 = vunpack.c.l.b16 %v2836
      %v2879 = vunpack.c.h.b16 %v2836
      %v2880 = vunpack.c.l.b16 %v2837
      %v2881 = vunpack.c.h.b16 %v2837
      %v2882 = vunpack.c.l.b16 %v2838
      %v2883 = vunpack.c.h.b16 %v2838
      %v2884 = vunpack.c.l.b16 %v2839
      %v2885 = vunpack.c.h.b16 %v2839
      %v2886 = vunpack.c.l.b16 %v2840
      %v2887 = vunpack.c.h.b16 %v2840
      %v2888 = vunpack.c.l.b16 %v2841
      %v2889 = vunpack.c.h.b16 %v2841
      %v2890 = vpack.c.b16 %v2858, %v2858
      %v2891 = vpack.c.b16 %v2859, %v2859
      %v2892 = vpack.c.b16 %v2860, %v2860
      %v2893 = vpack.c.b16 %v2861, %v2861
      %v2894 = vpack.c.b16 %v2862, %v2862
      %v2895 = vpack.c.b16 %v2863, %v2863
      %v2896 = vpack.c.b16 %v2864, %v2864
      %v2897 = vpack.c.b16 %v2865, %v2865
      %v2898 = vpack.c.b16 %v2866, %v2866
      %v2899 = vpack.c.b16 %v2867, %v2867
      %v2900 = vpack.c.b16 %v2868, %v2868
      %v2901 = vpack.c.b16 %v2869, %v2869
      %v2902 = vpack.c.b16 %v2870, %v2870
      %v2903 = vpack.c.b16 %v2871, %v2871
      %v2904 = vpack.c.b16 %v2872, %v2872
      %v2905 = vpack.c.b16 %v2873, %v2873
      %v2906 = vpack.c.b16 %v2874, %v2874
      %v2907 = vpack.c.b16 %v2875, %v2875
      %v2908 = vpack.c.b16 %v2876, %v2876
      %v2909 = vpack.c.b16 %v2877, %v2877
      %v2910 = vpack.c.b16 %v2878, %v2878
      %v2911 = vpack.c.b16 %v2879, %v2879
      %v2912 = vpack.c.b16 %v2880, %v2880
      %v2913 = vpack.c.b16 %v2881, %v2881
      %v2914 = vpack.c.b16 %v2882, %v2882
      %v2915 = vpack.c.b16 %v2883, %v2883
      %v2916 = vpack.c.b16 %v2884, %v2884
      %v2917 = vpack.c.b16 %v2885, %v2885
      %v2918 = vpack.c.b16 %v2886, %v2886
      %v2919 = vpack.c.b16 %v2887, %v2887
      %v2920 = vpack.c.b16 %v2888, %v2888
      %v2921 = vpack.c.b16 %v2889, %v2889
      %2954 = vst [vmem:[#allocation2 + $0x14] sm:$0xf] %v2890
      %2955 = vst [vmem:[#allocation2 + $0x38] sm:$0xf] %v2891
      %2956 = vst [vmem:[#allocation2 + $0x5c] sm:$0xf] %v2892
      %2957 = vst [vmem:[#allocation2 + $0x80] sm:$0xf] %v2893
      %2958 = vst [vmem:[#allocation2 + $0xa4] sm:$0xf] %v2894
      %2959 = vst [vmem:[#allocation2 + $0xc8] sm:$0xf] %v2895
      %2960 = vst [vmem:[#allocation2 + $0xec] sm:$0xf] %v2896
      %2961 = vst [vmem:[#allocation2 + $0x110] sm:$0xf] %v2897
      %2962 = vst [vmem:[#allocation2 + $0x134] sm:$0xf] %v2898
      %2963 = vst [vmem:[#allocation2 + $0x158] sm:$0xf] %v2899
      %2964 = vst [vmem:[#allocation2 + $0x17c] sm:$0xf] %v2900
      %2965 = vst [vmem:[#allocation2 + $0x1a0] sm:$0xf] %v2901
      %2966 = vst [vmem:[#allocation2 + $0x1c4] sm:$0xf] %v2902
      %2967 = vst [vmem:[#allocation2 + $0x1e8] sm:$0xf] %v2903
      %2968 = vst [vmem:[#allocation2 + $0x20c] sm:$0xf] %v2904
      %2969 = vst [vmem:[#allocation2 + $0x230] sm:$0xf] %v2905
      %2970 = vst [vmem:[#allocation2 + $0x254] sm:$0xf] %v2906
      %2971 = vst [vmem:[#allocation2 + $0x278] sm:$0xf] %v2907
      %2972 = vst [vmem:[#allocation2 + $0x29c] sm:$0xf] %v2908
      %2973 = vst [vmem:[#allocation2 + $0x2c0] sm:$0xf] %v2909
      %2974 = vst [vmem:[#allocation2 + $0x2e4] sm:$0xf] %v2910
      %2975 = vst [vmem:[#allocation2 + $0x308] sm:$0xf] %v2911
      %2976 = vst [vmem:[#allocation2 + $0x32c] sm:$0xf] %v2912
      %2977 = vst [vmem:[#allocation2 + $0x350] sm:$0xf] %v2913
      %2978 = vst [vmem:[#allocation2 + $0x374] sm:$0xf] %v2914
      %2979 = vst [vmem:[#allocation2 + $0x398] sm:$0xf] %v2915
      %2980 = vst [vmem:[#allocation2 + $0x3bc] sm:$0xf] %v2916
      %2981 = vst [vmem:[#allocation2 + $0x3e0] sm:$0xf] %v2917
      %2982 = vst [vmem:[#allocation2 + $0x404] sm:$0xf] %v2918
      %2983 = vst [vmem:[#allocation2 + $0x428] sm:$0xf] %v2919
      %2984 = vst [vmem:[#allocation2 + $0x44c] sm:$0xf] %v2920
      %2985 = vst [vmem:[#allocation2 + $0x470] sm:$0xf] %v2921
      %vm2986 = vcmp.le.s32.totalorder %v710, 14
      %vm2987 = vcmp.le.s32.totalorder %v711, 14
      %vm2988 = vcmp.le.s32.totalorder %v712, 14
      %vm2989 = vcmp.le.s32.totalorder %v713, 14
      %vm2990 = vcmp.le.s32.totalorder %v714, 14
      %vm2991 = vcmp.le.s32.totalorder %v715, 14
      %vm2992 = vcmp.le.s32.totalorder %v716, 14
      %vm2993 = vcmp.le.s32.totalorder %v717, 14
      %vm2994 = vcmp.le.s32.totalorder %v718, 14
      %vm2995 = vcmp.le.s32.totalorder %v719, 14
      %vm2996 = vcmp.le.s32.totalorder %v720, 14
      %vm2997 = vcmp.le.s32.totalorder %v721, 14
      %vm2998 = vcmp.le.s32.totalorder %v722, 14
      %vm2999 = vcmp.le.s32.totalorder %v723, 14
      %vm3000 = vcmp.le.s32.totalorder %v724, 14
      %vm3001 = vcmp.le.s32.totalorder %v725, 14
      %vm3002 = vcmp.le.s32.totalorder %v726, 14
      %vm3003 = vcmp.le.s32.totalorder %v727, 14
      %vm3004 = vcmp.le.s32.totalorder %v728, 14
      %vm3005 = vcmp.le.s32.totalorder %v729, 14
      %vm3006 = vcmp.le.s32.totalorder %v730, 14
      %vm3007 = vcmp.le.s32.totalorder %v731, 14
      %vm3008 = vcmp.le.s32.totalorder %v732, 14
      %vm3009 = vcmp.le.s32.totalorder %v733, 14
      %vm3010 = vcmp.le.s32.totalorder %v734, 14
      %vm3011 = vcmp.le.s32.totalorder %v735, 14
      %vm3012 = vcmp.le.s32.totalorder %v736, 14
      %vm3013 = vcmp.le.s32.totalorder %v737, 14
      %vm3014 = vcmp.le.s32.totalorder %v738, 14
      %vm3015 = vcmp.le.s32.totalorder %v739, 14
      %vm3016 = vcmp.le.s32.totalorder %v740, 14
      %vm3017 = vcmp.le.s32.totalorder %v741, 14
      %vm3018 = vmand %vm2986, %vm873
      %vm3019 = vmand %vm2987, %vm874
      %vm3020 = vmand %vm2988, %vm875
      %vm3021 = vmand %vm2989, %vm876
      %vm3022 = vmand %vm2990, %vm877
      %vm3023 = vmand %vm2991, %vm878
      %vm3024 = vmand %vm2992, %vm879
      %vm3025 = vmand %vm2993, %vm880
      %vm3026 = vmand %vm2994, %vm881
      %vm3027 = vmand %vm2995, %vm882
      %vm3028 = vmand %vm2996, %vm883
      %vm3029 = vmand %vm2997, %vm884
      %vm3030 = vmand %vm2998, %vm885
      %vm3031 = vmand %vm2999, %vm886
      %vm3032 = vmand %vm3000, %vm887
      %vm3033 = vmand %vm3001, %vm888
      %vm3034 = vmand %vm3002, %vm889
      %vm3035 = vmand %vm3003, %vm890
      %vm3036 = vmand %vm3004, %vm891
      %vm3037 = vmand %vm3005, %vm892
      %vm3038 = vmand %vm3006, %vm893
      %vm3039 = vmand %vm3007, %vm894
      %vm3040 = vmand %vm3008, %vm895
      %vm3041 = vmand %vm3009, %vm896
      %vm3042 = vmand %vm3010, %vm897
      %vm3043 = vmand %vm3011, %vm898
      %vm3044 = vmand %vm3012, %vm899
      %vm3045 = vmand %vm3013, %vm900
      %vm3046 = vmand %vm3014, %vm901
      %vm3047 = vmand %vm3015, %vm902
      %vm3048 = vmand %vm3016, %vm903
      %vm3049 = vmand %vm3017, %vm904
      %v3050 = vsel %vm3018, 1, 0
      %v3051 = vsel %vm3019, 1, 0
      %v3052 = vsel %vm3020, 1, 0
      %v3053 = vsel %vm3021, 1, 0
      %v3054 = vsel %vm3022, 1, 0
      %v3055 = vsel %vm3023, 1, 0
      %v3056 = vsel %vm3024, 1, 0
      %v3057 = vsel %vm3025, 1, 0
      %v3058 = vsel %vm3026, 1, 0
      %v3059 = vsel %vm3027, 1, 0
      %v3060 = vsel %vm3028, 1, 0
      %v3061 = vsel %vm3029, 1, 0
      %v3062 = vsel %vm3030, 1, 0
      %v3063 = vsel %vm3031, 1, 0
      %v3064 = vsel %vm3032, 1, 0
      %v3065 = vsel %vm3033, 1, 0
      %v3066 = vsel %vm3034, 1, 0
      %v3067 = vsel %vm3035, 1, 0
      %v3068 = vsel %vm3036, 1, 0
      %v3069 = vsel %vm3037, 1, 0
      %v3070 = vsel %vm3038, 1, 0
      %v3071 = vsel %vm3039, 1, 0
      %v3072 = vsel %vm3040, 1, 0
      %v3073 = vsel %vm3041, 1, 0
      %v3074 = vsel %vm3042, 1, 0
      %v3075 = vsel %vm3043, 1, 0
      %v3076 = vsel %vm3044, 1, 0
      %v3077 = vsel %vm3045, 1, 0
      %v3078 = vsel %vm3046, 1, 0
      %v3079 = vsel %vm3047, 1, 0
      %v3080 = vsel %vm3048, 1, 0
      %v3081 = vsel %vm3049, 1, 0
      %3082 = vset.pattern.permute.xlu0 0
      %3083 = vperm.xlu0 %3082, %v3050
      %v3084 = vpop.permute.xlu0 %3083
      %3085 = vset.pattern.permute.xlu0 0
      %3086 = vperm.xlu0 %3085, %v3051
      %v3087 = vpop.permute.xlu0 %3086
      %3088 = vset.pattern.permute.xlu0 0
      %3089 = vperm.xlu0 %3088, %v3052
      %v3090 = vpop.permute.xlu0 %3089
      %3091 = vset.pattern.permute.xlu0 0
      %3092 = vperm.xlu0 %3091, %v3053
      %v3093 = vpop.permute.xlu0 %3092
      %3094 = vset.pattern.permute.xlu0 0
      %3095 = vperm.xlu0 %3094, %v3054
      %v3096 = vpop.permute.xlu0 %3095
      %3097 = vset.pattern.permute.xlu0 0
      %3098 = vperm.xlu0 %3097, %v3055
      %v3099 = vpop.permute.xlu0 %3098
      %3100 = vset.pattern.permute.xlu0 0
      %3101 = vperm.xlu0 %3100, %v3056
      %v3102 = vpop.permute.xlu0 %3101
      %3103 = vset.pattern.permute.xlu0 0
      %3104 = vperm.xlu0 %3103, %v3057
      %v3105 = vpop.permute.xlu0 %3104
      %3106 = vset.pattern.permute.xlu0 0
      %3107 = vperm.xlu0 %3106, %v3058
      %v3108 = vpop.permute.xlu0 %3107
      %3109 = vset.pattern.permute.xlu0 0
      %3110 = vperm.xlu0 %3109, %v3059
      %v3111 = vpop.permute.xlu0 %3110
      %3112 = vset.pattern.permute.xlu0 0
      %3113 = vperm.xlu0 %3112, %v3060
      %v3114 = vpop.permute.xlu0 %3113
      %3115 = vset.pattern.permute.xlu0 0
      %3116 = vperm.xlu0 %3115, %v3061
      %v3117 = vpop.permute.xlu0 %3116
      %3118 = vset.pattern.permute.xlu0 0
      %3119 = vperm.xlu0 %3118, %v3062
      %v3120 = vpop.permute.xlu0 %3119
      %3121 = vset.pattern.permute.xlu0 0
      %3122 = vperm.xlu0 %3121, %v3063
      %v3123 = vpop.permute.xlu0 %3122
      %3124 = vset.pattern.permute.xlu0 0
      %3125 = vperm.xlu0 %3124, %v3064
      %v3126 = vpop.permute.xlu0 %3125
      %3127 = vset.pattern.permute.xlu0 0
      %3128 = vperm.xlu0 %3127, %v3065
      %v3129 = vpop.permute.xlu0 %3128
      %3130 = vset.pattern.permute.xlu0 0
      %3131 = vperm.xlu0 %3130, %v3066
      %v3132 = vpop.permute.xlu0 %3131
      %3133 = vset.pattern.permute.xlu0 0
      %3134 = vperm.xlu0 %3133, %v3067
      %v3135 = vpop.permute.xlu0 %3134
      %3136 = vset.pattern.permute.xlu0 0
      %3137 = vperm.xlu0 %3136, %v3068
      %v3138 = vpop.permute.xlu0 %3137
      %3139 = vset.pattern.permute.xlu0 0
      %3140 = vperm.xlu0 %3139, %v3069
      %v3141 = vpop.permute.xlu0 %3140
      %3142 = vset.pattern.permute.xlu0 0
      %3143 = vperm.xlu0 %3142, %v3070
      %v3144 = vpop.permute.xlu0 %3143
      %3145 = vset.pattern.permute.xlu0 0
      %3146 = vperm.xlu0 %3145, %v3071
      %v3147 = vpop.permute.xlu0 %3146
      %3148 = vset.pattern.permute.xlu0 0
      %3149 = vperm.xlu0 %3148, %v3072
      %v3150 = vpop.permute.xlu0 %3149
      %3151 = vset.pattern.permute.xlu0 0
      %3152 = vperm.xlu0 %3151, %v3073
      %v3153 = vpop.permute.xlu0 %3152
      %3154 = vset.pattern.permute.xlu0 0
      %3155 = vperm.xlu0 %3154, %v3074
      %v3156 = vpop.permute.xlu0 %3155
      %3157 = vset.pattern.permute.xlu0 0
      %3158 = vperm.xlu0 %3157, %v3075
      %v3159 = vpop.permute.xlu0 %3158
      %3160 = vset.pattern.permute.xlu0 0
      %3161 = vperm.xlu0 %3160, %v3076
      %v3162 = vpop.permute.xlu0 %3161
      %3163 = vset.pattern.permute.xlu0 0
      %3164 = vperm.xlu0 %3163, %v3077
      %v3165 = vpop.permute.xlu0 %3164
      %3166 = vset.pattern.permute.xlu0 0
      %3167 = vperm.xlu0 %3166, %v3078
      %v3168 = vpop.permute.xlu0 %3167
      %3169 = vset.pattern.permute.xlu0 0
      %3170 = vperm.xlu0 %3169, %v3079
      %v3171 = vpop.permute.xlu0 %3170
      %3172 = vset.pattern.permute.xlu0 0
      %3173 = vperm.xlu0 %3172, %v3080
      %v3174 = vpop.permute.xlu0 %3173
      %3175 = vset.pattern.permute.xlu0 0
      %3176 = vperm.xlu0 %3175, %v3081
      %v3177 = vpop.permute.xlu0 %3176
      %vm3178 = vcmp.eq.s32.totalorder %v3084, 1
      %vm3179 = vcmp.eq.s32.totalorder %v3087, 1
      %vm3180 = vcmp.eq.s32.totalorder %v3090, 1
      %vm3181 = vcmp.eq.s32.totalorder %v3093, 1
      %vm3182 = vcmp.eq.s32.totalorder %v3096, 1
      %vm3183 = vcmp.eq.s32.totalorder %v3099, 1
      %vm3184 = vcmp.eq.s32.totalorder %v3102, 1
      %vm3185 = vcmp.eq.s32.totalorder %v3105, 1
      %vm3186 = vcmp.eq.s32.totalorder %v3108, 1
      %vm3187 = vcmp.eq.s32.totalorder %v3111, 1
      %vm3188 = vcmp.eq.s32.totalorder %v3114, 1
      %vm3189 = vcmp.eq.s32.totalorder %v3117, 1
      %vm3190 = vcmp.eq.s32.totalorder %v3120, 1
      %vm3191 = vcmp.eq.s32.totalorder %v3123, 1
      %vm3192 = vcmp.eq.s32.totalorder %v3126, 1
      %vm3193 = vcmp.eq.s32.totalorder %v3129, 1
      %vm3194 = vcmp.eq.s32.totalorder %v3132, 1
      %vm3195 = vcmp.eq.s32.totalorder %v3135, 1
      %vm3196 = vcmp.eq.s32.totalorder %v3138, 1
      %vm3197 = vcmp.eq.s32.totalorder %v3141, 1
      %vm3198 = vcmp.eq.s32.totalorder %v3144, 1
      %vm3199 = vcmp.eq.s32.totalorder %v3147, 1
      %vm3200 = vcmp.eq.s32.totalorder %v3150, 1
      %vm3201 = vcmp.eq.s32.totalorder %v3153, 1
      %vm3202 = vcmp.eq.s32.totalorder %v3156, 1
      %vm3203 = vcmp.eq.s32.totalorder %v3159, 1
      %vm3204 = vcmp.eq.s32.totalorder %v3162, 1
      %vm3205 = vcmp.eq.s32.totalorder %v3165, 1
      %vm3206 = vcmp.eq.s32.totalorder %v3168, 1
      %vm3207 = vcmp.eq.s32.totalorder %v3171, 1
      %vm3208 = vcmp.eq.s32.totalorder %v3174, 1
      %vm3209 = vcmp.eq.s32.totalorder %v3177, 1
      %v3210 = vsel %vm3178, %v838, 0.0
      %v3211 = vsel %vm3179, %v837, 0.0
      %v3212 = vsel %vm3180, %v836, 0.0
      %v3213 = vsel %vm3181, %v835, 0.0
      %v3214 = vsel %vm3182, %v834, 0.0
      %v3215 = vsel %vm3183, %v833, 0.0
      %v3216 = vsel %vm3184, %v832, 0.0
      %v3217 = vsel %vm3185, %v831, 0.0
      %v3218 = vsel %vm3186, %v830, 0.0
      %v3219 = vsel %vm3187, %v829, 0.0
      %v3220 = vsel %vm3188, %v828, 0.0
      %v3221 = vsel %vm3189, %v827, 0.0
      %v3222 = vsel %vm3190, %v826, 0.0
      %v3223 = vsel %vm3191, %v825, 0.0
      %v3224 = vsel %vm3192, %v824, 0.0
      %v3225 = vsel %vm3193, %v823, 0.0
      %v3226 = vsel %vm3194, %v822, 0.0
      %v3227 = vsel %vm3195, %v821, 0.0
      %v3228 = vsel %vm3196, %v820, 0.0
      %v3229 = vsel %vm3197, %v819, 0.0
      %v3230 = vsel %vm3198, %v818, 0.0
      %v3231 = vsel %vm3199, %v817, 0.0
      %v3232 = vsel %vm3200, %v816, 0.0
      %v3233 = vsel %vm3201, %v815, 0.0
      %v3234 = vsel %vm3202, %v814, 0.0
      %v3235 = vsel %vm3203, %v813, 0.0
      %v3236 = vsel %vm3204, %v812, 0.0
      %v3237 = vsel %vm3205, %v811, 0.0
      %v3238 = vsel %vm3206, %v810, 0.0
      %v3239 = vsel %vm3207, %v809, 0.0
      %v3240 = vsel %vm3208, %v840, 0.0
      %v3241 = vsel %vm3209, %v839, 0.0
      %v3242 = vpack.c.bf16 %v3211, %v3210
      %v3243 = vpack.c.bf16 %v3213, %v3212
      %v3244 = vpack.c.bf16 %v3215, %v3214
      %v3245 = vpack.c.bf16 %v3217, %v3216
      %v3246 = vpack.c.bf16 %v3219, %v3218
      %v3247 = vpack.c.bf16 %v3221, %v3220
      %v3248 = vpack.c.bf16 %v3223, %v3222
      %v3249 = vpack.c.bf16 %v3225, %v3224
      %v3250 = vpack.c.bf16 %v3227, %v3226
      %v3251 = vpack.c.bf16 %v3229, %v3228
      %v3252 = vpack.c.bf16 %v3231, %v3230
      %v3253 = vpack.c.bf16 %v3233, %v3232
      %v3254 = vpack.c.bf16 %v3235, %v3234
      %v3255 = vpack.c.bf16 %v3237, %v3236
      %v3256 = vpack.c.bf16 %v3239, %v3238
      %v3257 = vpack.c.bf16 %v3241, %v3240
      %v3274 = vunpack.c.l.b16 %v3242
      %v3275 = vunpack.c.h.b16 %v3242
      %v3276 = vunpack.c.l.b16 %v3243
      %v3277 = vunpack.c.h.b16 %v3243
      %v3278 = vunpack.c.l.b16 %v3244
      %v3279 = vunpack.c.h.b16 %v3244
      %v3280 = vunpack.c.l.b16 %v3245
      %v3281 = vunpack.c.h.b16 %v3245
      %v3282 = vunpack.c.l.b16 %v3246
      %v3283 = vunpack.c.h.b16 %v3246
      %v3284 = vunpack.c.l.b16 %v3247
      %v3285 = vunpack.c.h.b16 %v3247
      %v3286 = vunpack.c.l.b16 %v3248
      %v3287 = vunpack.c.h.b16 %v3248
      %v3288 = vunpack.c.l.b16 %v3249
      %v3289 = vunpack.c.h.b16 %v3249
      %v3290 = vunpack.c.l.b16 %v3250
      %v3291 = vunpack.c.h.b16 %v3250
      %v3292 = vunpack.c.l.b16 %v3251
      %v3293 = vunpack.c.h.b16 %v3251
      %v3294 = vunpack.c.l.b16 %v3252
      %v3295 = vunpack.c.h.b16 %v3252
      %v3296 = vunpack.c.l.b16 %v3253
      %v3297 = vunpack.c.h.b16 %v3253
      %v3298 = vunpack.c.l.b16 %v3254
      %v3299 = vunpack.c.h.b16 %v3254
      %v3300 = vunpack.c.l.b16 %v3255
      %v3301 = vunpack.c.h.b16 %v3255
      %v3302 = vunpack.c.l.b16 %v3256
      %v3303 = vunpack.c.h.b16 %v3256
      %v3304 = vunpack.c.l.b16 %v3257
      %v3305 = vunpack.c.h.b16 %v3257
      %v3306 = vpack.c.b16 %v3274, %v3274
      %v3307 = vpack.c.b16 %v3275, %v3275
      %v3308 = vpack.c.b16 %v3276, %v3276
      %v3309 = vpack.c.b16 %v3277, %v3277
      %v3310 = vpack.c.b16 %v3278, %v3278
      %v3311 = vpack.c.b16 %v3279, %v3279
      %v3312 = vpack.c.b16 %v3280, %v3280
      %v3313 = vpack.c.b16 %v3281, %v3281
      %v3314 = vpack.c.b16 %v3282, %v3282
      %v3315 = vpack.c.b16 %v3283, %v3283
      %v3316 = vpack.c.b16 %v3284, %v3284
      %v3317 = vpack.c.b16 %v3285, %v3285
      %v3318 = vpack.c.b16 %v3286, %v3286
      %v3319 = vpack.c.b16 %v3287, %v3287
      %v3320 = vpack.c.b16 %v3288, %v3288
      %v3321 = vpack.c.b16 %v3289, %v3289
      %v3322 = vpack.c.b16 %v3290, %v3290
      %v3323 = vpack.c.b16 %v3291, %v3291
      %v3324 = vpack.c.b16 %v3292, %v3292
      %v3325 = vpack.c.b16 %v3293, %v3293
      %v3326 = vpack.c.b16 %v3294, %v3294
      %v3327 = vpack.c.b16 %v3295, %v3295
      %v3328 = vpack.c.b16 %v3296, %v3296
      %v3329 = vpack.c.b16 %v3297, %v3297
      %v3330 = vpack.c.b16 %v3298, %v3298
      %v3331 = vpack.c.b16 %v3299, %v3299
      %v3332 = vpack.c.b16 %v3300, %v3300
      %v3333 = vpack.c.b16 %v3301, %v3301
      %v3334 = vpack.c.b16 %v3302, %v3302
      %v3335 = vpack.c.b16 %v3303, %v3303
      %v3336 = vpack.c.b16 %v3304, %v3304
      %v3337 = vpack.c.b16 %v3305, %v3305
      %3370 = vst [vmem:[#allocation2 + $0x18] sm:$0xf] %v3306
      %3371 = vst [vmem:[#allocation2 + $0x3c] sm:$0xf] %v3307
      %3372 = vst [vmem:[#allocation2 + $0x60] sm:$0xf] %v3308
      %3373 = vst [vmem:[#allocation2 + $0x84] sm:$0xf] %v3309
      %3374 = vst [vmem:[#allocation2 + $0xa8] sm:$0xf] %v3310
      %3375 = vst [vmem:[#allocation2 + $0xcc] sm:$0xf] %v3311
      %3376 = vst [vmem:[#allocation2 + $0xf0] sm:$0xf] %v3312
      %3377 = vst [vmem:[#allocation2 + $0x114] sm:$0xf] %v3313
      %3378 = vst [vmem:[#allocation2 + $0x138] sm:$0xf] %v3314
      %3379 = vst [vmem:[#allocation2 + $0x15c] sm:$0xf] %v3315
      %3380 = vst [vmem:[#allocation2 + $0x180] sm:$0xf] %v3316
      %3381 = vst [vmem:[#allocation2 + $0x1a4] sm:$0xf] %v3317
      %3382 = vst [vmem:[#allocation2 + $0x1c8] sm:$0xf] %v3318
      %3383 = vst [vmem:[#allocation2 + $0x1ec] sm:$0xf] %v3319
      %3384 = vst [vmem:[#allocation2 + $0x210] sm:$0xf] %v3320
      %3385 = vst [vmem:[#allocation2 + $0x234] sm:$0xf] %v3321
      %3386 = vst [vmem:[#allocation2 + $0x258] sm:$0xf] %v3322
      %3387 = vst [vmem:[#allocation2 + $0x27c] sm:$0xf] %v3323
      %3388 = vst [vmem:[#allocation2 + $0x2a0] sm:$0xf] %v3324
      %3389 = vst [vmem:[#allocation2 + $0x2c4] sm:$0xf] %v3325
      %3390 = vst [vmem:[#allocation2 + $0x2e8] sm:$0xf] %v3326
      %3391 = vst [vmem:[#allocation2 + $0x30c] sm:$0xf] %v3327
      %3392 = vst [vmem:[#allocation2 + $0x330] sm:$0xf] %v3328
      %3393 = vst [vmem:[#allocation2 + $0x354] sm:$0xf] %v3329
      %3394 = vst [vmem:[#allocation2 + $0x378] sm:$0xf] %v3330
      %3395 = vst [vmem:[#allocation2 + $0x39c] sm:$0xf] %v3331
      %3396 = vst [vmem:[#allocation2 + $0x3c0] sm:$0xf] %v3332
      %3397 = vst [vmem:[#allocation2 + $0x3e4] sm:$0xf] %v3333
      %3398 = vst [vmem:[#allocation2 + $0x408] sm:$0xf] %v3334
      %3399 = vst [vmem:[#allocation2 + $0x42c] sm:$0xf] %v3335
      %3400 = vst [vmem:[#allocation2 + $0x450] sm:$0xf] %v3336
      %3401 = vst [vmem:[#allocation2 + $0x474] sm:$0xf] %v3337
      %v3402 = vsel %vm2986, 1, 0
      %v3403 = vsel %vm2987, 1, 0
      %v3404 = vsel %vm2988, 1, 0
      %v3405 = vsel %vm2989, 1, 0
      %v3406 = vsel %vm2990, 1, 0
      %v3407 = vsel %vm2991, 1, 0
      %v3408 = vsel %vm2992, 1, 0
      %v3409 = vsel %vm2993, 1, 0
      %v3410 = vsel %vm2994, 1, 0
      %v3411 = vsel %vm2995, 1, 0
      %v3412 = vsel %vm2996, 1, 0
      %v3413 = vsel %vm2997, 1, 0
      %v3414 = vsel %vm2998, 1, 0
      %v3415 = vsel %vm2999, 1, 0
      %v3416 = vsel %vm3000, 1, 0
      %v3417 = vsel %vm3001, 1, 0
      %v3418 = vsel %vm3002, 1, 0
      %v3419 = vsel %vm3003, 1, 0
      %v3420 = vsel %vm3004, 1, 0
      %v3421 = vsel %vm3005, 1, 0
      %v3422 = vsel %vm3006, 1, 0
      %v3423 = vsel %vm3007, 1, 0
      %v3424 = vsel %vm3008, 1, 0
      %v3425 = vsel %vm3009, 1, 0
      %v3426 = vsel %vm3010, 1, 0
      %v3427 = vsel %vm3011, 1, 0
      %v3428 = vsel %vm3012, 1, 0
      %v3429 = vsel %vm3013, 1, 0
      %v3430 = vsel %vm3014, 1, 0
      %v3431 = vsel %vm3015, 1, 0
      %v3432 = vsel %vm3016, 1, 0
      %v3433 = vsel %vm3017, 1, 0
      %3434 = vset.pattern.permute.xlu0 0
      %3435 = vperm.xlu0 %3434, %v3402
      %v3436 = vpop.permute.xlu0 %3435
      %3437 = vset.pattern.permute.xlu0 0
      %3438 = vperm.xlu0 %3437, %v3403
      %v3439 = vpop.permute.xlu0 %3438
      %3440 = vset.pattern.permute.xlu0 0
      %3441 = vperm.xlu0 %3440, %v3404
      %v3442 = vpop.permute.xlu0 %3441
      %3443 = vset.pattern.permute.xlu0 0
      %3444 = vperm.xlu0 %3443, %v3405
      %v3445 = vpop.permute.xlu0 %3444
      %3446 = vset.pattern.permute.xlu0 0
      %3447 = vperm.xlu0 %3446, %v3406
      %v3448 = vpop.permute.xlu0 %3447
      %3449 = vset.pattern.permute.xlu0 0
      %3450 = vperm.xlu0 %3449, %v3407
      %v3451 = vpop.permute.xlu0 %3450
      %3452 = vset.pattern.permute.xlu0 0
      %3453 = vperm.xlu0 %3452, %v3408
      %v3454 = vpop.permute.xlu0 %3453
      %3455 = vset.pattern.permute.xlu0 0
      %3456 = vperm.xlu0 %3455, %v3409
      %v3457 = vpop.permute.xlu0 %3456
      %3458 = vset.pattern.permute.xlu0 0
      %3459 = vperm.xlu0 %3458, %v3410
      %v3460 = vpop.permute.xlu0 %3459
      %3461 = vset.pattern.permute.xlu0 0
      %3462 = vperm.xlu0 %3461, %v3411
      %v3463 = vpop.permute.xlu0 %3462
      %3464 = vset.pattern.permute.xlu0 0
      %3465 = vperm.xlu0 %3464, %v3412
      %v3466 = vpop.permute.xlu0 %3465
      %3467 = vset.pattern.permute.xlu0 0
      %3468 = vperm.xlu0 %3467, %v3413
      %v3469 = vpop.permute.xlu0 %3468
      %3470 = vset.pattern.permute.xlu0 0
      %3471 = vperm.xlu0 %3470, %v3414
      %v3472 = vpop.permute.xlu0 %3471
      %3473 = vset.pattern.permute.xlu0 0
      %3474 = vperm.xlu0 %3473, %v3415
      %v3475 = vpop.permute.xlu0 %3474
      %3476 = vset.pattern.permute.xlu0 0
      %3477 = vperm.xlu0 %3476, %v3416
      %v3478 = vpop.permute.xlu0 %3477
      %3479 = vset.pattern.permute.xlu0 0
      %3480 = vperm.xlu0 %3479, %v3417
      %v3481 = vpop.permute.xlu0 %3480
      %3482 = vset.pattern.permute.xlu0 0
      %3483 = vperm.xlu0 %3482, %v3418
      %v3484 = vpop.permute.xlu0 %3483
      %3485 = vset.pattern.permute.xlu0 0
      %3486 = vperm.xlu0 %3485, %v3419
      %v3487 = vpop.permute.xlu0 %3486
      %3488 = vset.pattern.permute.xlu0 0
      %3489 = vperm.xlu0 %3488, %v3420
      %v3490 = vpop.permute.xlu0 %3489
      %3491 = vset.pattern.permute.xlu0 0
      %3492 = vperm.xlu0 %3491, %v3421
      %v3493 = vpop.permute.xlu0 %3492
      %3494 = vset.pattern.permute.xlu0 0
      %3495 = vperm.xlu0 %3494, %v3422
      %v3496 = vpop.permute.xlu0 %3495
      %3497 = vset.pattern.permute.xlu0 0
      %3498 = vperm.xlu0 %3497, %v3423
      %v3499 = vpop.permute.xlu0 %3498
      %3500 = vset.pattern.permute.xlu0 0
      %3501 = vperm.xlu0 %3500, %v3424
      %v3502 = vpop.permute.xlu0 %3501
      %3503 = vset.pattern.permute.xlu0 0
      %3504 = vperm.xlu0 %3503, %v3425
      %v3505 = vpop.permute.xlu0 %3504
      %3506 = vset.pattern.permute.xlu0 0
      %3507 = vperm.xlu0 %3506, %v3426
      %v3508 = vpop.permute.xlu0 %3507
      %3509 = vset.pattern.permute.xlu0 0
      %3510 = vperm.xlu0 %3509, %v3427
      %v3511 = vpop.permute.xlu0 %3510
      %3512 = vset.pattern.permute.xlu0 0
      %3513 = vperm.xlu0 %3512, %v3428
      %v3514 = vpop.permute.xlu0 %3513
      %3515 = vset.pattern.permute.xlu0 0
      %3516 = vperm.xlu0 %3515, %v3429
      %v3517 = vpop.permute.xlu0 %3516
      %3518 = vset.pattern.permute.xlu0 0
      %3519 = vperm.xlu0 %3518, %v3430
      %v3520 = vpop.permute.xlu0 %3519
      %3521 = vset.pattern.permute.xlu0 0
      %3522 = vperm.xlu0 %3521, %v3431
      %v3523 = vpop.permute.xlu0 %3522
      %3524 = vset.pattern.permute.xlu0 0
      %3525 = vperm.xlu0 %3524, %v3432
      %v3526 = vpop.permute.xlu0 %3525
      %3527 = vset.pattern.permute.xlu0 0
      %3528 = vperm.xlu0 %3527, %v3433
      %v3529 = vpop.permute.xlu0 %3528
      %vm3530 = vcmp.eq.s32.totalorder %v3436, 1
      %vm3531 = vcmp.eq.s32.totalorder %v3439, 1
      %vm3532 = vcmp.eq.s32.totalorder %v3442, 1
      %vm3533 = vcmp.eq.s32.totalorder %v3445, 1
      %vm3534 = vcmp.eq.s32.totalorder %v3448, 1
      %vm3535 = vcmp.eq.s32.totalorder %v3451, 1
      %vm3536 = vcmp.eq.s32.totalorder %v3454, 1
      %vm3537 = vcmp.eq.s32.totalorder %v3457, 1
      %vm3538 = vcmp.eq.s32.totalorder %v3460, 1
      %vm3539 = vcmp.eq.s32.totalorder %v3463, 1
      %vm3540 = vcmp.eq.s32.totalorder %v3466, 1
      %vm3541 = vcmp.eq.s32.totalorder %v3469, 1
      %vm3542 = vcmp.eq.s32.totalorder %v3472, 1
      %vm3543 = vcmp.eq.s32.totalorder %v3475, 1
      %vm3544 = vcmp.eq.s32.totalorder %v3478, 1
      %vm3545 = vcmp.eq.s32.totalorder %v3481, 1
      %vm3546 = vcmp.eq.s32.totalorder %v3484, 1
      %vm3547 = vcmp.eq.s32.totalorder %v3487, 1
      %vm3548 = vcmp.eq.s32.totalorder %v3490, 1
      %vm3549 = vcmp.eq.s32.totalorder %v3493, 1
      %vm3550 = vcmp.eq.s32.totalorder %v3496, 1
      %vm3551 = vcmp.eq.s32.totalorder %v3499, 1
      %vm3552 = vcmp.eq.s32.totalorder %v3502, 1
      %vm3553 = vcmp.eq.s32.totalorder %v3505, 1
      %vm3554 = vcmp.eq.s32.totalorder %v3508, 1
      %vm3555 = vcmp.eq.s32.totalorder %v3511, 1
      %vm3556 = vcmp.eq.s32.totalorder %v3514, 1
      %vm3557 = vcmp.eq.s32.totalorder %v3517, 1
      %vm3558 = vcmp.eq.s32.totalorder %v3520, 1
      %vm3559 = vcmp.eq.s32.totalorder %v3523, 1
      %vm3560 = vcmp.eq.s32.totalorder %v3526, 1
      %vm3561 = vcmp.eq.s32.totalorder %v3529, 1
      %v3562 = vsel %vm3530, %v680, 0.0
      %v3563 = vsel %vm3531, %v681, 0.0
      %v3564 = vsel %vm3532, %v682, 0.0
      %v3565 = vsel %vm3533, %v683, 0.0
      %v3566 = vsel %vm3534, %v684, 0.0
      %v3567 = vsel %vm3535, %v685, 0.0
      %v3568 = vsel %vm3536, %v686, 0.0
      %v3569 = vsel %vm3537, %v687, 0.0
      %v3570 = vsel %vm3538, %v688, 0.0
      %v3571 = vsel %vm3539, %v689, 0.0
      %v3572 = vsel %vm3540, %v690, 0.0
      %v3573 = vsel %vm3541, %v691, 0.0
      %v3574 = vsel %vm3542, %v692, 0.0
      %v3575 = vsel %vm3543, %v693, 0.0
      %v3576 = vsel %vm3544, %v694, 0.0
      %v3577 = vsel %vm3545, %v695, 0.0
      %v3578 = vsel %vm3546, %v696, 0.0
      %v3579 = vsel %vm3547, %v697, 0.0
      %v3580 = vsel %vm3548, %v698, 0.0
      %v3581 = vsel %vm3549, %v699, 0.0
      %v3582 = vsel %vm3550, %v700, 0.0
      %v3583 = vsel %vm3551, %v701, 0.0
      %v3584 = vsel %vm3552, %v702, 0.0
      %v3585 = vsel %vm3553, %v703, 0.0
      %v3586 = vsel %vm3554, %v704, 0.0
      %v3587 = vsel %vm3555, %v705, 0.0
      %v3588 = vsel %vm3556, %v706, 0.0
      %v3589 = vsel %vm3557, %v707, 0.0
      %v3590 = vsel %vm3558, %v708, 0.0
      %v3591 = vsel %vm3559, %v709, 0.0
      %v3592 = vsel %vm3560, %v678, 0.0
      %v3593 = vsel %vm3561, %v679, 0.0
      %v3594 = vpack.c.bf16 %v3563, %v3562
      %v3595 = vpack.c.bf16 %v3565, %v3564
      %v3596 = vpack.c.bf16 %v3567, %v3566
      %v3597 = vpack.c.bf16 %v3569, %v3568
      %v3598 = vpack.c.bf16 %v3571, %v3570
      %v3599 = vpack.c.bf16 %v3573, %v3572
      %v3600 = vpack.c.bf16 %v3575, %v3574
      %v3601 = vpack.c.bf16 %v3577, %v3576
      %v3602 = vpack.c.bf16 %v3579, %v3578
      %v3603 = vpack.c.bf16 %v3581, %v3580
      %v3604 = vpack.c.bf16 %v3583, %v3582
      %v3605 = vpack.c.bf16 %v3585, %v3584
      %v3606 = vpack.c.bf16 %v3587, %v3586
      %v3607 = vpack.c.bf16 %v3589, %v3588
      %v3608 = vpack.c.bf16 %v3591, %v3590
      %v3609 = vpack.c.bf16 %v3593, %v3592
      %v3626 = vunpack.c.l.b16 %v3594
      %v3627 = vunpack.c.h.b16 %v3594
      %v3628 = vunpack.c.l.b16 %v3595
      %v3629 = vunpack.c.h.b16 %v3595
      %v3630 = vunpack.c.l.b16 %v3596
      %v3631 = vunpack.c.h.b16 %v3596
      %v3632 = vunpack.c.l.b16 %v3597
      %v3633 = vunpack.c.h.b16 %v3597
      %v3634 = vunpack.c.l.b16 %v3598
      %v3635 = vunpack.c.h.b16 %v3598
      %v3636 = vunpack.c.l.b16 %v3599
      %v3637 = vunpack.c.h.b16 %v3599
      %v3638 = vunpack.c.l.b16 %v3600
      %v3639 = vunpack.c.h.b16 %v3600
      %v3640 = vunpack.c.l.b16 %v3601
      %v3641 = vunpack.c.h.b16 %v3601
      %v3642 = vunpack.c.l.b16 %v3602
      %v3643 = vunpack.c.h.b16 %v3602
      %v3644 = vunpack.c.l.b16 %v3603
      %v3645 = vunpack.c.h.b16 %v3603
      %v3646 = vunpack.c.l.b16 %v3604
      %v3647 = vunpack.c.h.b16 %v3604
      %v3648 = vunpack.c.l.b16 %v3605
      %v3649 = vunpack.c.h.b16 %v3605
      %v3650 = vunpack.c.l.b16 %v3606
      %v3651 = vunpack.c.h.b16 %v3606
      %v3652 = vunpack.c.l.b16 %v3607
      %v3653 = vunpack.c.h.b16 %v3607
      %v3654 = vunpack.c.l.b16 %v3608
      %v3655 = vunpack.c.h.b16 %v3608
      %v3656 = vunpack.c.l.b16 %v3609
      %v3657 = vunpack.c.h.b16 %v3609
      %v3658 = vpack.c.b16 %v3626, %v3626
      %v3659 = vpack.c.b16 %v3627, %v3627
      %v3660 = vpack.c.b16 %v3628, %v3628
      %v3661 = vpack.c.b16 %v3629, %v3629
      %v3662 = vpack.c.b16 %v3630, %v3630
      %v3663 = vpack.c.b16 %v3631, %v3631
      %v3664 = vpack.c.b16 %v3632, %v3632
      %v3665 = vpack.c.b16 %v3633, %v3633
      %v3666 = vpack.c.b16 %v3634, %v3634
      %v3667 = vpack.c.b16 %v3635, %v3635
      %v3668 = vpack.c.b16 %v3636, %v3636
      %v3669 = vpack.c.b16 %v3637, %v3637
      %v3670 = vpack.c.b16 %v3638, %v3638
      %v3671 = vpack.c.b16 %v3639, %v3639
      %v3672 = vpack.c.b16 %v3640, %v3640
      %v3673 = vpack.c.b16 %v3641, %v3641
      %v3674 = vpack.c.b16 %v3642, %v3642
      %v3675 = vpack.c.b16 %v3643, %v3643
      %v3676 = vpack.c.b16 %v3644, %v3644
      %v3677 = vpack.c.b16 %v3645, %v3645
      %v3678 = vpack.c.b16 %v3646, %v3646
      %v3679 = vpack.c.b16 %v3647, %v3647
      %v3680 = vpack.c.b16 %v3648, %v3648
      %v3681 = vpack.c.b16 %v3649, %v3649
      %v3682 = vpack.c.b16 %v3650, %v3650
      %v3683 = vpack.c.b16 %v3651, %v3651
      %v3684 = vpack.c.b16 %v3652, %v3652
      %v3685 = vpack.c.b16 %v3653, %v3653
      %v3686 = vpack.c.b16 %v3654, %v3654
      %v3687 = vpack.c.b16 %v3655, %v3655
      %v3688 = vpack.c.b16 %v3656, %v3656
      %v3689 = vpack.c.b16 %v3657, %v3657
      %3722 = vst [vmem:[#allocation2 + $0x1c] sm:$0xf] %v3658
      %3723 = vst [vmem:[#allocation2 + $0x40] sm:$0xf] %v3659
      %3724 = vst [vmem:[#allocation2 + $0x64] sm:$0xf] %v3660
      %3725 = vst [vmem:[#allocation2 + $0x88] sm:$0xf] %v3661
      %3726 = vst [vmem:[#allocation2 + $0xac] sm:$0xf] %v3662
      %3727 = vst [vmem:[#allocation2 + $0xd0] sm:$0xf] %v3663
      %3728 = vst [vmem:[#allocation2 + $0xf4] sm:$0xf] %v3664
      %3729 = vst [vmem:[#allocation2 + $0x118] sm:$0xf] %v3665
      %3730 = vst [vmem:[#allocation2 + $0x13c] sm:$0xf] %v3666
      %3731 = vst [vmem:[#allocation2 + $0x160] sm:$0xf] %v3667
      %3732 = vst [vmem:[#allocation2 + $0x184] sm:$0xf] %v3668
      %3733 = vst [vmem:[#allocation2 + $0x1a8] sm:$0xf] %v3669
      %3734 = vst [vmem:[#allocation2 + $0x1cc] sm:$0xf] %v3670
      %3735 = vst [vmem:[#allocation2 + $0x1f0] sm:$0xf] %v3671
      %3736 = vst [vmem:[#allocation2 + $0x214] sm:$0xf] %v3672
      %3737 = vst [vmem:[#allocation2 + $0x238] sm:$0xf] %v3673
      %3738 = vst [vmem:[#allocation2 + $0x25c] sm:$0xf] %v3674
      %3739 = vst [vmem:[#allocation2 + $0x280] sm:$0xf] %v3675
      %3740 = vst [vmem:[#allocation2 + $0x2a4] sm:$0xf] %v3676
      %3741 = vst [vmem:[#allocation2 + $0x2c8] sm:$0xf] %v3677
      %3742 = vst [vmem:[#allocation2 + $0x2ec] sm:$0xf] %v3678
      %3743 = vst [vmem:[#allocation2 + $0x310] sm:$0xf] %v3679
      %3744 = vst [vmem:[#allocation2 + $0x334] sm:$0xf] %v3680
      %3745 = vst [vmem:[#allocation2 + $0x358] sm:$0xf] %v3681
      %3746 = vst [vmem:[#allocation2 + $0x37c] sm:$0xf] %v3682
      %3747 = vst [vmem:[#allocation2 + $0x3a0] sm:$0xf] %v3683
      %3748 = vst [vmem:[#allocation2 + $0x3c4] sm:$0xf] %v3684
      %3749 = vst [vmem:[#allocation2 + $0x3e8] sm:$0xf] %v3685
      %3750 = vst [vmem:[#allocation2 + $0x40c] sm:$0xf] %v3686
      %3751 = vst [vmem:[#allocation2 + $0x430] sm:$0xf] %v3687
      %3752 = vst [vmem:[#allocation2 + $0x454] sm:$0xf] %v3688
      %3753 = vst [vmem:[#allocation2 + $0x478] sm:$0xf] %v3689
      %vm3754 = vmand %vm2986, %vm1706
      %vm3755 = vmand %vm2987, %vm1707
      %vm3756 = vmand %vm2988, %vm1708
      %vm3757 = vmand %vm2989, %vm1709
      %vm3758 = vmand %vm2990, %vm1710
      %vm3759 = vmand %vm2991, %vm1711
      %vm3760 = vmand %vm2992, %vm1712
      %vm3761 = vmand %vm2993, %vm1713
      %vm3762 = vmand %vm2994, %vm1714
      %vm3763 = vmand %vm2995, %vm1715
      %vm3764 = vmand %vm2996, %vm1716
      %vm3765 = vmand %vm2997, %vm1717
      %vm3766 = vmand %vm2998, %vm1718
      %vm3767 = vmand %vm2999, %vm1719
      %vm3768 = vmand %vm3000, %vm1720
      %vm3769 = vmand %vm3001, %vm1721
      %vm3770 = vmand %vm3002, %vm1722
      %vm3771 = vmand %vm3003, %vm1723
      %vm3772 = vmand %vm3004, %vm1724
      %vm3773 = vmand %vm3005, %vm1725
      %vm3774 = vmand %vm3006, %vm1726
      %vm3775 = vmand %vm3007, %vm1727
      %vm3776 = vmand %vm3008, %vm1728
      %vm3777 = vmand %vm3009, %vm1729
      %vm3778 = vmand %vm3010, %vm1730
      %vm3779 = vmand %vm3011, %vm1731
      %vm3780 = vmand %vm3012, %vm1732
      %vm3781 = vmand %vm3013, %vm1733
      %vm3782 = vmand %vm3014, %vm1734
      %vm3783 = vmand %vm3015, %vm1735
      %vm3784 = vmand %vm3016, %vm1736
      %vm3785 = vmand %vm3017, %vm1737
      %v3786 = vsel %vm3754, 1, 0
      %v3787 = vsel %vm3755, 1, 0
      %v3788 = vsel %vm3756, 1, 0
      %v3789 = vsel %vm3757, 1, 0
      %v3790 = vsel %vm3758, 1, 0
      %v3791 = vsel %vm3759, 1, 0
      %v3792 = vsel %vm3760, 1, 0
      %v3793 = vsel %vm3761, 1, 0
      %v3794 = vsel %vm3762, 1, 0
      %v3795 = vsel %vm3763, 1, 0
      %v3796 = vsel %vm3764, 1, 0
      %v3797 = vsel %vm3765, 1, 0
      %v3798 = vsel %vm3766, 1, 0
      %v3799 = vsel %vm3767, 1, 0
      %v3800 = vsel %vm3768, 1, 0
      %v3801 = vsel %vm3769, 1, 0
      %v3802 = vsel %vm3770, 1, 0
      %v3803 = vsel %vm3771, 1, 0
      %v3804 = vsel %vm3772, 1, 0
      %v3805 = vsel %vm3773, 1, 0
      %v3806 = vsel %vm3774, 1, 0
      %v3807 = vsel %vm3775, 1, 0
      %v3808 = vsel %vm3776, 1, 0
      %v3809 = vsel %vm3777, 1, 0
      %v3810 = vsel %vm3778, 1, 0
      %v3811 = vsel %vm3779, 1, 0
      %v3812 = vsel %vm3780, 1, 0
      %v3813 = vsel %vm3781, 1, 0
      %v3814 = vsel %vm3782, 1, 0
      %v3815 = vsel %vm3783, 1, 0
      %v3816 = vsel %vm3784, 1, 0
      %v3817 = vsel %vm3785, 1, 0
      %3818 = vset.pattern.permute.xlu0 0
      %3819 = vperm.xlu0 %3818, %v3786
      %v3820 = vpop.permute.xlu0 %3819
      %3821 = vset.pattern.permute.xlu0 0
      %3822 = vperm.xlu0 %3821, %v3787
      %v3823 = vpop.permute.xlu0 %3822
      %3824 = vset.pattern.permute.xlu0 0
      %3825 = vperm.xlu0 %3824, %v3788
      %v3826 = vpop.permute.xlu0 %3825
      %3827 = vset.pattern.permute.xlu0 0
      %3828 = vperm.xlu0 %3827, %v3789
      %v3829 = vpop.permute.xlu0 %3828
      %3830 = vset.pattern.permute.xlu0 0
      %3831 = vperm.xlu0 %3830, %v3790
      %v3832 = vpop.permute.xlu0 %3831
      %3833 = vset.pattern.permute.xlu0 0
      %3834 = vperm.xlu0 %3833, %v3791
      %v3835 = vpop.permute.xlu0 %3834
      %3836 = vset.pattern.permute.xlu0 0
      %3837 = vperm.xlu0 %3836, %v3792
      %v3838 = vpop.permute.xlu0 %3837
      %3839 = vset.pattern.permute.xlu0 0
      %3840 = vperm.xlu0 %3839, %v3793
      %v3841 = vpop.permute.xlu0 %3840
      %3842 = vset.pattern.permute.xlu0 0
      %3843 = vperm.xlu0 %3842, %v3794
      %v3844 = vpop.permute.xlu0 %3843
      %3845 = vset.pattern.permute.xlu0 0
      %3846 = vperm.xlu0 %3845, %v3795
      %v3847 = vpop.permute.xlu0 %3846
      %3848 = vset.pattern.permute.xlu0 0
      %3849 = vperm.xlu0 %3848, %v3796
      %v3850 = vpop.permute.xlu0 %3849
      %3851 = vset.pattern.permute.xlu0 0
      %3852 = vperm.xlu0 %3851, %v3797
      %v3853 = vpop.permute.xlu0 %3852
      %3854 = vset.pattern.permute.xlu0 0
      %3855 = vperm.xlu0 %3854, %v3798
      %v3856 = vpop.permute.xlu0 %3855
      %3857 = vset.pattern.permute.xlu0 0
      %3858 = vperm.xlu0 %3857, %v3799
      %v3859 = vpop.permute.xlu0 %3858
      %3860 = vset.pattern.permute.xlu0 0
      %3861 = vperm.xlu0 %3860, %v3800
      %v3862 = vpop.permute.xlu0 %3861
      %3863 = vset.pattern.permute.xlu0 0
      %3864 = vperm.xlu0 %3863, %v3801
      %v3865 = vpop.permute.xlu0 %3864
      %3866 = vset.pattern.permute.xlu0 0
      %3867 = vperm.xlu0 %3866, %v3802
      %v3868 = vpop.permute.xlu0 %3867
      %3869 = vset.pattern.permute.xlu0 0
      %3870 = vperm.xlu0 %3869, %v3803
      %v3871 = vpop.permute.xlu0 %3870
      %3872 = vset.pattern.permute.xlu0 0
      %3873 = vperm.xlu0 %3872, %v3804
      %v3874 = vpop.permute.xlu0 %3873
      %3875 = vset.pattern.permute.xlu0 0
      %3876 = vperm.xlu0 %3875, %v3805
      %v3877 = vpop.permute.xlu0 %3876
      %3878 = vset.pattern.permute.xlu0 0
      %3879 = vperm.xlu0 %3878, %v3806
      %v3880 = vpop.permute.xlu0 %3879
      %3881 = vset.pattern.permute.xlu0 0
      %3882 = vperm.xlu0 %3881, %v3807
      %v3883 = vpop.permute.xlu0 %3882
      %3884 = vset.pattern.permute.xlu0 0
      %3885 = vperm.xlu0 %3884, %v3808
      %v3886 = vpop.permute.xlu0 %3885
      %3887 = vset.pattern.permute.xlu0 0
      %3888 = vperm.xlu0 %3887, %v3809
      %v3889 = vpop.permute.xlu0 %3888
      %3890 = vset.pattern.permute.xlu0 0
      %3891 = vperm.xlu0 %3890, %v3810
      %v3892 = vpop.permute.xlu0 %3891
      %3893 = vset.pattern.permute.xlu0 0
      %3894 = vperm.xlu0 %3893, %v3811
      %v3895 = vpop.permute.xlu0 %3894
      %3896 = vset.pattern.permute.xlu0 0
      %3897 = vperm.xlu0 %3896, %v3812
      %v3898 = vpop.permute.xlu0 %3897
      %3899 = vset.pattern.permute.xlu0 0
      %3900 = vperm.xlu0 %3899, %v3813
      %v3901 = vpop.permute.xlu0 %3900
      %3902 = vset.pattern.permute.xlu0 0
      %3903 = vperm.xlu0 %3902, %v3814
      %v3904 = vpop.permute.xlu0 %3903
      %3905 = vset.pattern.permute.xlu0 0
      %3906 = vperm.xlu0 %3905, %v3815
      %v3907 = vpop.permute.xlu0 %3906
      %3908 = vset.pattern.permute.xlu0 0
      %3909 = vperm.xlu0 %3908, %v3816
      %v3910 = vpop.permute.xlu0 %3909
      %3911 = vset.pattern.permute.xlu0 0
      %3912 = vperm.xlu0 %3911, %v3817
      %v3913 = vpop.permute.xlu0 %3912
      %vm3914 = vcmp.eq.s32.totalorder %v3820, 1
      %vm3915 = vcmp.eq.s32.totalorder %v3823, 1
      %vm3916 = vcmp.eq.s32.totalorder %v3826, 1
      %vm3917 = vcmp.eq.s32.totalorder %v3829, 1
      %vm3918 = vcmp.eq.s32.totalorder %v3832, 1
      %vm3919 = vcmp.eq.s32.totalorder %v3835, 1
      %vm3920 = vcmp.eq.s32.totalorder %v3838, 1
      %vm3921 = vcmp.eq.s32.totalorder %v3841, 1
      %vm3922 = vcmp.eq.s32.totalorder %v3844, 1
      %vm3923 = vcmp.eq.s32.totalorder %v3847, 1
      %vm3924 = vcmp.eq.s32.totalorder %v3850, 1
      %vm3925 = vcmp.eq.s32.totalorder %v3853, 1
      %vm3926 = vcmp.eq.s32.totalorder %v3856, 1
      %vm3927 = vcmp.eq.s32.totalorder %v3859, 1
      %vm3928 = vcmp.eq.s32.totalorder %v3862, 1
      %vm3929 = vcmp.eq.s32.totalorder %v3865, 1
      %vm3930 = vcmp.eq.s32.totalorder %v3868, 1
      %vm3931 = vcmp.eq.s32.totalorder %v3871, 1
      %vm3932 = vcmp.eq.s32.totalorder %v3874, 1
      %vm3933 = vcmp.eq.s32.totalorder %v3877, 1
      %vm3934 = vcmp.eq.s32.totalorder %v3880, 1
      %vm3935 = vcmp.eq.s32.totalorder %v3883, 1
      %vm3936 = vcmp.eq.s32.totalorder %v3886, 1
      %vm3937 = vcmp.eq.s32.totalorder %v3889, 1
      %vm3938 = vcmp.eq.s32.totalorder %v3892, 1
      %vm3939 = vcmp.eq.s32.totalorder %v3895, 1
      %vm3940 = vcmp.eq.s32.totalorder %v3898, 1
      %vm3941 = vcmp.eq.s32.totalorder %v3901, 1
      %vm3942 = vcmp.eq.s32.totalorder %v3904, 1
      %vm3943 = vcmp.eq.s32.totalorder %v3907, 1
      %vm3944 = vcmp.eq.s32.totalorder %v3910, 1
      %vm3945 = vcmp.eq.s32.totalorder %v3913, 1
      %v3946 = vsel %vm3914, %v1702, 0.0
      %v3947 = vsel %vm3915, %v1701, 0.0
      %v3948 = vsel %vm3916, %v1700, 0.0
      %v3949 = vsel %vm3917, %v1699, 0.0
      %v3950 = vsel %vm3918, %v1698, 0.0
      %v3951 = vsel %vm3919, %v1697, 0.0
      %v3952 = vsel %vm3920, %v1696, 0.0
      %v3953 = vsel %vm3921, %v1695, 0.0
      %v3954 = vsel %vm3922, %v1694, 0.0
      %v3955 = vsel %vm3923, %v1693, 0.0
      %v3956 = vsel %vm3924, %v1692, 0.0
      %v3957 = vsel %vm3925, %v1691, 0.0
      %v3958 = vsel %vm3926, %v1690, 0.0
      %v3959 = vsel %vm3927, %v1689, 0.0
      %v3960 = vsel %vm3928, %v1688, 0.0
      %v3961 = vsel %vm3929, %v1687, 0.0
      %v3962 = vsel %vm3930, %v1686, 0.0
      %v3963 = vsel %vm3931, %v1685, 0.0
      %v3964 = vsel %vm3932, %v1684, 0.0
      %v3965 = vsel %vm3933, %v1683, 0.0
      %v3966 = vsel %vm3934, %v1682, 0.0
      %v3967 = vsel %vm3935, %v1681, 0.0
      %v3968 = vsel %vm3936, %v1680, 0.0
      %v3969 = vsel %vm3937, %v1679, 0.0
      %v3970 = vsel %vm3938, %v1678, 0.0
      %v3971 = vsel %vm3939, %v1677, 0.0
      %v3972 = vsel %vm3940, %v1676, 0.0
      %v3973 = vsel %vm3941, %v1675, 0.0
      %v3974 = vsel %vm3942, %v1674, 0.0
      %v3975 = vsel %vm3943, %v1705, 0.0
      %v3976 = vsel %vm3944, %v1704, 0.0
      %v3977 = vsel %vm3945, %v1703, 0.0
      %v3978 = vpack.c.bf16 %v3947, %v3946
      %v3979 = vpack.c.bf16 %v3949, %v3948
      %v3980 = vpack.c.bf16 %v3951, %v3950
      %v3981 = vpack.c.bf16 %v3953, %v3952
      %v3982 = vpack.c.bf16 %v3955, %v3954
      %v3983 = vpack.c.bf16 %v3957, %v3956
      %v3984 = vpack.c.bf16 %v3959, %v3958
      %v3985 = vpack.c.bf16 %v3961, %v3960
      %v3986 = vpack.c.bf16 %v3963, %v3962
      %v3987 = vpack.c.bf16 %v3965, %v3964
      %v3988 = vpack.c.bf16 %v3967, %v3966
      %v3989 = vpack.c.bf16 %v3969, %v3968
      %v3990 = vpack.c.bf16 %v3971, %v3970
      %v3991 = vpack.c.bf16 %v3973, %v3972
      %v3992 = vpack.c.bf16 %v3975, %v3974
      %v3993 = vpack.c.bf16 %v3977, %v3976
      %v4010 = vunpack.c.l.b16 %v3978
      %v4011 = vunpack.c.h.b16 %v3978
      %v4012 = vunpack.c.l.b16 %v3979
      %v4013 = vunpack.c.h.b16 %v3979
      %v4014 = vunpack.c.l.b16 %v3980
      %v4015 = vunpack.c.h.b16 %v3980
      %v4016 = vunpack.c.l.b16 %v3981
      %v4017 = vunpack.c.h.b16 %v3981
      %v4018 = vunpack.c.l.b16 %v3982
      %v4019 = vunpack.c.h.b16 %v3982
      %v4020 = vunpack.c.l.b16 %v3983
      %v4021 = vunpack.c.h.b16 %v3983
      %v4022 = vunpack.c.l.b16 %v3984
      %v4023 = vunpack.c.h.b16 %v3984
      %v4024 = vunpack.c.l.b16 %v3985
      %v4025 = vunpack.c.h.b16 %v3985
      %v4026 = vunpack.c.l.b16 %v3986
      %v4027 = vunpack.c.h.b16 %v3986
      %v4028 = vunpack.c.l.b16 %v3987
      %v4029 = vunpack.c.h.b16 %v3987
      %v4030 = vunpack.c.l.b16 %v3988
      %v4031 = vunpack.c.h.b16 %v3988
      %v4032 = vunpack.c.l.b16 %v3989
      %v4033 = vunpack.c.h.b16 %v3989
      %v4034 = vunpack.c.l.b16 %v3990
      %v4035 = vunpack.c.h.b16 %v3990
      %v4036 = vunpack.c.l.b16 %v3991
      %v4037 = vunpack.c.h.b16 %v3991
      %v4038 = vunpack.c.l.b16 %v3992
      %v4039 = vunpack.c.h.b16 %v3992
      %v4040 = vunpack.c.l.b16 %v3993
      %v4041 = vunpack.c.h.b16 %v3993
      %v4042 = vpack.c.b16 %v4010, %v4010
      %v4043 = vpack.c.b16 %v4011, %v4011
      %v4044 = vpack.c.b16 %v4012, %v4012
      %v4045 = vpack.c.b16 %v4013, %v4013
      %v4046 = vpack.c.b16 %v4014, %v4014
      %v4047 = vpack.c.b16 %v4015, %v4015
      %v4048 = vpack.c.b16 %v4016, %v4016
      %v4049 = vpack.c.b16 %v4017, %v4017
      %v4050 = vpack.c.b16 %v4018, %v4018
      %v4051 = vpack.c.b16 %v4019, %v4019
      %v4052 = vpack.c.b16 %v4020, %v4020
      %v4053 = vpack.c.b16 %v4021, %v4021
      %v4054 = vpack.c.b16 %v4022, %v4022
      %v4055 = vpack.c.b16 %v4023, %v4023
      %v4056 = vpack.c.b16 %v4024, %v4024
      %v4057 = vpack.c.b16 %v4025, %v4025
      %v4058 = vpack.c.b16 %v4026, %v4026
      %v4059 = vpack.c.b16 %v4027, %v4027
      %v4060 = vpack.c.b16 %v4028, %v4028
      %v4061 = vpack.c.b16 %v4029, %v4029
      %v4062 = vpack.c.b16 %v4030, %v4030
      %v4063 = vpack.c.b16 %v4031, %v4031
      %v4064 = vpack.c.b16 %v4032, %v4032
      %v4065 = vpack.c.b16 %v4033, %v4033
      %v4066 = vpack.c.b16 %v4034, %v4034
      %v4067 = vpack.c.b16 %v4035, %v4035
      %v4068 = vpack.c.b16 %v4036, %v4036
      %v4069 = vpack.c.b16 %v4037, %v4037
      %v4070 = vpack.c.b16 %v4038, %v4038
      %v4071 = vpack.c.b16 %v4039, %v4039
      %v4072 = vpack.c.b16 %v4040, %v4040
      %v4073 = vpack.c.b16 %v4041, %v4041
      %4106 = vst [vmem:[#allocation2 + $0x20] sm:$0xf] %v4042
      %4107 = vst [vmem:[#allocation2 + $0x44] sm:$0xf] %v4043
      %4108 = vst [vmem:[#allocation2 + $0x68] sm:$0xf] %v4044
      %4109 = vst [vmem:[#allocation2 + $0x8c] sm:$0xf] %v4045
      %4110 = vst [vmem:[#allocation2 + $0xb0] sm:$0xf] %v4046
      %4111 = vst [vmem:[#allocation2 + $0xd4] sm:$0xf] %v4047
      %4112 = vst [vmem:[#allocation2 + $0xf8] sm:$0xf] %v4048
      %4113 = vst [vmem:[#allocation2 + $0x11c] sm:$0xf] %v4049
      %4114 = vst [vmem:[#allocation2 + $0x140] sm:$0xf] %v4050
      %4115 = vst [vmem:[#allocation2 + $0x164] sm:$0xf] %v4051
      %4116 = vst [vmem:[#allocation2 + $0x188] sm:$0xf] %v4052
      %4117 = vst [vmem:[#allocation2 + $0x1ac] sm:$0xf] %v4053
      %4118 = vst [vmem:[#allocation2 + $0x1d0] sm:$0xf] %v4054
      %4119 = vst [vmem:[#allocation2 + $0x1f4] sm:$0xf] %v4055
      %4120 = vst [vmem:[#allocation2 + $0x218] sm:$0xf] %v4056
      %4121 = vst [vmem:[#allocation2 + $0x23c] sm:$0xf] %v4057
      %4122 = vst [vmem:[#allocation2 + $0x260] sm:$0xf] %v4058
      %4123 = vst [vmem:[#allocation2 + $0x284] sm:$0xf] %v4059
      %4124 = vst [vmem:[#allocation2 + $0x2a8] sm:$0xf] %v4060
      %4125 = vst [vmem:[#allocation2 + $0x2cc] sm:$0xf] %v4061
      %4126 = vst [vmem:[#allocation2 + $0x2f0] sm:$0xf] %v4062
      %4127 = vst [vmem:[#allocation2 + $0x314] sm:$0xf] %v4063
      %4128 = vst [vmem:[#allocation2 + $0x338] sm:$0xf] %v4064
      %4129 = vst [vmem:[#allocation2 + $0x35c] sm:$0xf] %v4065
      %4130 = vst [vmem:[#allocation2 + $0x380] sm:$0xf] %v4066
      %4131 = vst [vmem:[#allocation2 + $0x3a4] sm:$0xf] %v4067
      %4132 = vst [vmem:[#allocation2 + $0x3c8] sm:$0xf] %v4068
      %4133 = vst [vmem:[#allocation2 + $0x3ec] sm:$0xf] %v4069
      %4134 = vst [vmem:[#allocation2 + $0x410] sm:$0xf] %v4070
      %4135 = vst [vmem:[#allocation2 + $0x434] sm:$0xf] %v4071
      %4136 = vst [vmem:[#allocation2 + $0x458] sm:$0xf] %v4072
      %4137 = vst [vmem:[#allocation2 + $0x47c] sm:$0xf] %v4073
      %v4138 = vld [vmem:[#allocation2] sm:$0xff]
      %v4139 = vld [vmem:[#allocation2 + $0x8] sm:$0xff]
      %v4140 = vld [vmem:[#allocation2 + $0x10] sm:$0xff]
      %v4141 = vld [vmem:[#allocation2 + $0x18] sm:$0xff]
      %v4142 = vld [vmem:[#allocation2 + $0x20] sm:$0xf]
      %v4143 = vld [vmem:[#allocation2 + $0x24] sm:$0xff]
      %v4144 = vld [vmem:[#allocation2 + $0x2c] sm:$0xff]
      %v4145 = vld [vmem:[#allocation2 + $0x34] sm:$0xff]
      %v4146 = vld [vmem:[#allocation2 + $0x3c] sm:$0xff]
      %v4147 = vld [vmem:[#allocation2 + $0x44] sm:$0xf]
      %v4148 = vld [vmem:[#allocation2 + $0x48] sm:$0xff]
      %v4149 = vld [vmem:[#allocation2 + $0x50] sm:$0xff]
      %v4150 = vld [vmem:[#allocation2 + $0x58] sm:$0xff]
      %v4151 = vld [vmem:[#allocation2 + $0x60] sm:$0xff]
      %v4152 = vld [vmem:[#allocation2 + $0x68] sm:$0xf]
      %v4153 = vld [vmem:[#allocation2 + $0x6c] sm:$0xff]
      %v4154 = vld [vmem:[#allocation2 + $0x74] sm:$0xff]
      %v4155 = vld [vmem:[#allocation2 + $0x7c] sm:$0xff]
      %v4156 = vld [vmem:[#allocation2 + $0x84] sm:$0xff]
      %v4157 = vld [vmem:[#allocation2 + $0x8c] sm:$0xf]
      %v4158 = vld [vmem:[#allocation2 + $0x90] sm:$0xff]
      %v4159 = vld [vmem:[#allocation2 + $0x98] sm:$0xff]
      %v4160 = vld [vmem:[#allocation2 + $0xa0] sm:$0xff]
      %v4161 = vld [vmem:[#allocation2 + $0xa8] sm:$0xff]
      %v4162 = vld [vmem:[#allocation2 + $0xb0] sm:$0xf]
      %v4163 = vld [vmem:[#allocation2 + $0xb4] sm:$0xff]
      %v4164 = vld [vmem:[#allocation2 + $0xbc] sm:$0xff]
      %v4165 = vld [vmem:[#allocation2 + $0xc4] sm:$0xff]
      %v4166 = vld [vmem:[#allocation2 + $0xcc] sm:$0xff]
      %v4167 = vld [vmem:[#allocation2 + $0xd4] sm:$0xf]
      %v4168 = vld [vmem:[#allocation2 + $0xd8] sm:$0xff]
      %v4169 = vld [vmem:[#allocation2 + $0xe0] sm:$0xff]
      %v4170 = vld [vmem:[#allocation2 + $0xe8] sm:$0xff]
      %v4171 = vld [vmem:[#allocation2 + $0xf0] sm:$0xff]
      %v4172 = vld [vmem:[#allocation2 + $0xf8] sm:$0xf]
      %v4173 = vld [vmem:[#allocation2 + $0xfc] sm:$0xff]
      %v4174 = vld [vmem:[#allocation2 + $0x104] sm:$0xff]
      %v4175 = vld [vmem:[#allocation2 + $0x10c] sm:$0xff]
      %v4176 = vld [vmem:[#allocation2 + $0x114] sm:$0xff]
      %v4177 = vld [vmem:[#allocation2 + $0x11c] sm:$0xf]
      %v4178 = vld [vmem:[#allocation2 + $0x120] sm:$0xff]
      %v4179 = vld [vmem:[#allocation2 + $0x128] sm:$0xff]
      %v4180 = vld [vmem:[#allocation2 + $0x130] sm:$0xff]
      %v4181 = vld [vmem:[#allocation2 + $0x138] sm:$0xff]
      %v4182 = vld [vmem:[#allocation2 + $0x140] sm:$0xf]
      %v4183 = vld [vmem:[#allocation2 + $0x144] sm:$0xff]
      %v4184 = vld [vmem:[#allocation2 + $0x14c] sm:$0xff]
      %v4185 = vld [vmem:[#allocation2 + $0x154] sm:$0xff]
      %v4186 = vld [vmem:[#allocation2 + $0x15c] sm:$0xff]
      %v4187 = vld [vmem:[#allocation2 + $0x164] sm:$0xf]
      %v4188 = vld [vmem:[#allocation2 + $0x168] sm:$0xff]
      %v4189 = vld [vmem:[#allocation2 + $0x170] sm:$0xff]
      %v4190 = vld [vmem:[#allocation2 + $0x178] sm:$0xff]
      %v4191 = vld [vmem:[#allocation2 + $0x180] sm:$0xff]
      %v4192 = vld [vmem:[#allocation2 + $0x188] sm:$0xf]
      %v4193 = vld [vmem:[#allocation2 + $0x18c] sm:$0xff]
      %v4194 = vld [vmem:[#allocation2 + $0x194] sm:$0xff]
      %v4195 = vld [vmem:[#allocation2 + $0x19c] sm:$0xff]
      %v4196 = vld [vmem:[#allocation2 + $0x1a4] sm:$0xff]
      %v4197 = vld [vmem:[#allocation2 + $0x1ac] sm:$0xf]
      %v4198 = vld [vmem:[#allocation2 + $0x1b0] sm:$0xff]
      %v4199 = vld [vmem:[#allocation2 + $0x1b8] sm:$0xff]
      %v4200 = vld [vmem:[#allocation2 + $0x1c0] sm:$0xff]
      %v4201 = vld [vmem:[#allocation2 + $0x1c8] sm:$0xff]
      %v4202 = vld [vmem:[#allocation2 + $0x1d0] sm:$0xf]
      %v4203 = vld [vmem:[#allocation2 + $0x1d4] sm:$0xff]
      %v4204 = vld [vmem:[#allocation2 + $0x1dc] sm:$0xff]
      %v4205 = vld [vmem:[#allocation2 + $0x1e4] sm:$0xff]
      %v4206 = vld [vmem:[#allocation2 + $0x1ec] sm:$0xff]
      %v4207 = vld [vmem:[#allocation2 + $0x1f4] sm:$0xf]
      %v4208 = vld [vmem:[#allocation2 + $0x1f8] sm:$0xff]
      %v4209 = vld [vmem:[#allocation2 + $0x200] sm:$0xff]
      %v4210 = vld [vmem:[#allocation2 + $0x208] sm:$0xff]
      %v4211 = vld [vmem:[#allocation2 + $0x210] sm:$0xff]
      %v4212 = vld [vmem:[#allocation2 + $0x218] sm:$0xf]
      %v4213 = vld [vmem:[#allocation2 + $0x21c] sm:$0xff]
      %v4214 = vld [vmem:[#allocation2 + $0x224] sm:$0xff]
      %v4215 = vld [vmem:[#allocation2 + $0x22c] sm:$0xff]
      %v4216 = vld [vmem:[#allocation2 + $0x234] sm:$0xff]
      %v4217 = vld [vmem:[#allocation2 + $0x23c] sm:$0xf]
      %v4218 = vld [vmem:[#allocation2 + $0x240] sm:$0xff]
      %v4219 = vld [vmem:[#allocation2 + $0x248] sm:$0xff]
      %v4220 = vld [vmem:[#allocation2 + $0x250] sm:$0xff]
      %v4221 = vld [vmem:[#allocation2 + $0x258] sm:$0xff]
      %v4222 = vld [vmem:[#allocation2 + $0x260] sm:$0xf]
      %v4223 = vld [vmem:[#allocation2 + $0x264] sm:$0xff]
      %v4224 = vld [vmem:[#allocation2 + $0x26c] sm:$0xff]
      %v4225 = vld [vmem:[#allocation2 + $0x274] sm:$0xff]
      %v4226 = vld [vmem:[#allocation2 + $0x27c] sm:$0xff]
      %v4227 = vld [vmem:[#allocation2 + $0x284] sm:$0xf]
      %v4228 = vld [vmem:[#allocation2 + $0x288] sm:$0xff]
      %v4229 = vld [vmem:[#allocation2 + $0x290] sm:$0xff]
      %v4230 = vld [vmem:[#allocation2 + $0x298] sm:$0xff]
      %v4231 = vld [vmem:[#allocation2 + $0x2a0] sm:$0xff]
      %v4232 = vld [vmem:[#allocation2 + $0x2a8] sm:$0xf]
      %v4233 = vld [vmem:[#allocation2 + $0x2ac] sm:$0xff]
      %v4234 = vld [vmem:[#allocation2 + $0x2b4] sm:$0xff]
      %v4235 = vld [vmem:[#allocation2 + $0x2bc] sm:$0xff]
      %v4236 = vld [vmem:[#allocation2 + $0x2c4] sm:$0xff]
      %v4237 = vld [vmem:[#allocation2 + $0x2cc] sm:$0xf]
      %v4238 = vld [vmem:[#allocation2 + $0x2d0] sm:$0xff]
      %v4239 = vld [vmem:[#allocation2 + $0x2d8] sm:$0xff]
      %v4240 = vld [vmem:[#allocation2 + $0x2e0] sm:$0xff]
      %v4241 = vld [vmem:[#allocation2 + $0x2e8] sm:$0xff]
      %v4242 = vld [vmem:[#allocation2 + $0x2f0] sm:$0xf]
      %v4243 = vld [vmem:[#allocation2 + $0x2f4] sm:$0xff]
      %v4244 = vld [vmem:[#allocation2 + $0x2fc] sm:$0xff]
      %v4245 = vld [vmem:[#allocation2 + $0x304] sm:$0xff]
      %v4246 = vld [vmem:[#allocation2 + $0x30c] sm:$0xff]
      %v4247 = vld [vmem:[#allocation2 + $0x314] sm:$0xf]
      %v4248 = vld [vmem:[#allocation2 + $0x318] sm:$0xff]
      %v4249 = vld [vmem:[#allocation2 + $0x320] sm:$0xff]
      %v4250 = vld [vmem:[#allocation2 + $0x328] sm:$0xff]
      %v4251 = vld [vmem:[#allocation2 + $0x330] sm:$0xff]
      %v4252 = vld [vmem:[#allocation2 + $0x338] sm:$0xf]
      %v4253 = vld [vmem:[#allocation2 + $0x33c] sm:$0xff]
      %v4254 = vld [vmem:[#allocation2 + $0x344] sm:$0xff]
      %v4255 = vld [vmem:[#allocation2 + $0x34c] sm:$0xff]
      %v4256 = vld [vmem:[#allocation2 + $0x354] sm:$0xff]
      %v4257 = vld [vmem:[#allocation2 + $0x35c] sm:$0xf]
      %v4258 = vld [vmem:[#allocation2 + $0x360] sm:$0xff]
      %v4259 = vld [vmem:[#allocation2 + $0x368] sm:$0xff]
      %v4260 = vld [vmem:[#allocation2 + $0x370] sm:$0xff]
      %v4261 = vld [vmem:[#allocation2 + $0x378] sm:$0xff]
      %v4262 = vld [vmem:[#allocation2 + $0x380] sm:$0xf]
      %v4263 = vld [vmem:[#allocation2 + $0x384] sm:$0xff]
      %v4264 = vld [vmem:[#allocation2 + $0x38c] sm:$0xff]
      %v4265 = vld [vmem:[#allocation2 + $0x394] sm:$0xff]
      %v4266 = vld [vmem:[#allocation2 + $0x39c] sm:$0xff]
      %v4267 = vld [vmem:[#allocation2 + $0x3a4] sm:$0xf]
      %v4268 = vld [vmem:[#allocation2 + $0x3a8] sm:$0xff]
      %v4269 = vld [vmem:[#allocation2 + $0x3b0] sm:$0xff]
      %v4270 = vld [vmem:[#allocation2 + $0x3b8] sm:$0xff]
      %v4271 = vld [vmem:[#allocation2 + $0x3c0] sm:$0xff]
      %v4272 = vld [vmem:[#allocation2 + $0x3c8] sm:$0xf]
      %v4273 = vld [vmem:[#allocation2 + $0x3cc] sm:$0xff]
      %v4274 = vld [vmem:[#allocation2 + $0x3d4] sm:$0xff]
      %v4275 = vld [vmem:[#allocation2 + $0x3dc] sm:$0xff]
      %v4276 = vld [vmem:[#allocation2 + $0x3e4] sm:$0xff]
      %v4277 = vld [vmem:[#allocation2 + $0x3ec] sm:$0xf]
      %v4278 = vld [vmem:[#allocation2 + $0x3f0] sm:$0xff]
      %v4279 = vld [vmem:[#allocation2 + $0x3f8] sm:$0xff]
      %v4280 = vld [vmem:[#allocation2 + $0x400] sm:$0xff]
      %v4281 = vld [vmem:[#allocation2 + $0x408] sm:$0xff]
      %v4282 = vld [vmem:[#allocation2 + $0x410] sm:$0xf]
      %v4283 = vld [vmem:[#allocation2 + $0x414] sm:$0xff]
      %v4284 = vld [vmem:[#allocation2 + $0x41c] sm:$0xff]
      %v4285 = vld [vmem:[#allocation2 + $0x424] sm:$0xff]
      %v4286 = vld [vmem:[#allocation2 + $0x42c] sm:$0xff]
      %v4287 = vld [vmem:[#allocation2 + $0x434] sm:$0xf]
      %v4288 = vld [vmem:[#allocation2 + $0x438] sm:$0xff]
      %v4289 = vld [vmem:[#allocation2 + $0x440] sm:$0xff]
      %v4290 = vld [vmem:[#allocation2 + $0x448] sm:$0xff]
      %v4291 = vld [vmem:[#allocation2 + $0x450] sm:$0xff]
      %v4292 = vld [vmem:[#allocation2 + $0x458] sm:$0xf]
      %v4293 = vld [vmem:[#allocation2 + $0x45c] sm:$0xff]
      %v4294 = vld [vmem:[#allocation2 + $0x464] sm:$0xff]
      %v4295 = vld [vmem:[#allocation2 + $0x46c] sm:$0xff]
      %v4296 = vld [vmem:[#allocation2 + $0x474] sm:$0xff]
      %v4297 = vld [vmem:[#allocation2 + $0x47c] sm:$0xf]
      %v4298 = vld [vmem:[%s5] sm:$0xf]
      %v4299 = vld [vmem:[%s5 + $0x4] sm:$0xf]
      %v4300 = vld [vmem:[%s5 + $0x8] sm:$0xf]
      %v4301 = vld [vmem:[%s5 + $0xc] sm:$0xf]
      %v4302 = vld [vmem:[%s5 + $0x10] sm:$0xf]
      %v4303 = vld [vmem:[%s5 + $0x14] sm:$0xf]
      %v4304 = vld [vmem:[%s5 + $0x18] sm:$0xf]
      %v4305 = vld [vmem:[%s5 + $0x1c] sm:$0xf]
      %v4306 = vld [vmem:[%s5 + $0x20] sm:$0xf]
      %v4307 = vld [vmem:[%s5 + $0x24] sm:$0xf]
      %v4308 = vld [vmem:[%s5 + $0x28] sm:$0xf]
      %v4309 = vld [vmem:[%s5 + $0x2c] sm:$0xf]
      %v4310 = vld [vmem:[%s5 + $0x30] sm:$0xf]
      %v4311 = vld [vmem:[%s5 + $0x34] sm:$0xf]
      %v4312 = vld [vmem:[%s5 + $0x38] sm:$0xf]
      %v4313 = vld [vmem:[%s5 + $0x3c] sm:$0xf]
      %v4314 = vld [vmem:[%s5 + $0x40] sm:$0xf]
      %v4315 = vld [vmem:[%s5 + $0x44] sm:$0xf]
      %v4316 = vld [vmem:[%s5 + $0x48] sm:$0xf]
      %v4317 = vld [vmem:[%s5 + $0x4c] sm:$0xf]
      %v4318 = vld [vmem:[%s5 + $0x50] sm:$0xf]
      %v4319 = vld [vmem:[%s5 + $0x54] sm:$0xf]
      %v4320 = vld [vmem:[%s5 + $0x58] sm:$0xf]
      %v4321 = vld [vmem:[%s5 + $0x5c] sm:$0xf]
      %v4322 = vld [vmem:[%s5 + $0x60] sm:$0xf]
      %v4323 = vld [vmem:[%s5 + $0x64] sm:$0xf]
      %v4324 = vld [vmem:[%s5 + $0x68] sm:$0xf]
      %v4325 = vld [vmem:[%s5 + $0x6c] sm:$0xf]
      %v4326 = vld [vmem:[%s5 + $0x70] sm:$0xf]
      %v4327 = vld [vmem:[%s5 + $0x74] sm:$0xf]
      %v4328 = vld [vmem:[%s5 + $0x78] sm:$0xf]
      %v4329 = vld [vmem:[%s5 + $0x7c] sm:$0xf]
      %v4330 = vld [vmem:[%s5 + $0x80] sm:$0xf]
      %v4331 = vld [vmem:[%s5 + $0x84] sm:$0xf]
      %v4332 = vld [vmem:[%s5 + $0x88] sm:$0xf]
      %v4333 = vld [vmem:[%s5 + $0x8c] sm:$0xf]
      %v4334 = vld [vmem:[%s5 + $0x90] sm:$0xf]
      %v4335 = vld [vmem:[%s5 + $0x94] sm:$0xf]
      %v4336 = vld [vmem:[%s5 + $0x98] sm:$0xf]
      %v4337 = vld [vmem:[%s5 + $0x9c] sm:$0xf]
      %v4338 = vld [vmem:[%s5 + $0xa0] sm:$0xf]
      %v4339 = vld [vmem:[%s5 + $0xa4] sm:$0xf]
      %v4340 = vld [vmem:[%s5 + $0xa8] sm:$0xf]
      %v4341 = vld [vmem:[%s5 + $0xac] sm:$0xf]
      %v4342 = vld [vmem:[%s5 + $0xb0] sm:$0xf]
      %v4343 = vld [vmem:[%s5 + $0xb4] sm:$0xf]
      %v4344 = vld [vmem:[%s5 + $0xb8] sm:$0xf]
      %v4345 = vld [vmem:[%s5 + $0xbc] sm:$0xf]
      %v4346 = vld [vmem:[%s5 + $0xc0] sm:$0xf]
      %v4347 = vld [vmem:[%s5 + $0xc4] sm:$0xf]
      %v4348 = vld [vmem:[%s5 + $0xc8] sm:$0xf]
      %v4349 = vld [vmem:[%s5 + $0xcc] sm:$0xf]
      %v4350 = vld [vmem:[%s5 + $0xd0] sm:$0xf]
      %v4351 = vld [vmem:[%s5 + $0xd4] sm:$0xf]
      %v4352 = vld [vmem:[%s5 + $0xd8] sm:$0xf]
      %v4353 = vld [vmem:[%s5 + $0xdc] sm:$0xf]
      %v4354 = vld [vmem:[%s5 + $0xe0] sm:$0xf]
      %v4355 = vld [vmem:[%s5 + $0xe4] sm:$0xf]
      %v4356 = vld [vmem:[%s5 + $0xe8] sm:$0xf]
      %v4357 = vld [vmem:[%s5 + $0xec] sm:$0xf]
      %v4358 = vld [vmem:[%s5 + $0xf0] sm:$0xf]
      %v4359 = vld [vmem:[%s5 + $0xf4] sm:$0xf]
      %v4360 = vld [vmem:[%s5 + $0xf8] sm:$0xf]
      %v4361 = vld [vmem:[%s5 + $0xfc] sm:$0xf]
      %v4362 = vld [vmem:[%s5 + $0x100] sm:$0xf]
      %v4363 = vld [vmem:[%s5 + $0x104] sm:$0xf]
      %v4364 = vld [vmem:[%s5 + $0x108] sm:$0xf]
      %v4365 = vld [vmem:[%s5 + $0x10c] sm:$0xf]
      %v4366 = vld [vmem:[%s5 + $0x110] sm:$0xf]
      %v4367 = vld [vmem:[%s5 + $0x114] sm:$0xf]
      %v4368 = vld [vmem:[%s5 + $0x118] sm:$0xf]
      %v4369 = vld [vmem:[%s5 + $0x11c] sm:$0xf]
      %v4370 = vld [vmem:[%s5 + $0x120] sm:$0xf]
      %v4371 = vld [vmem:[%s5 + $0x124] sm:$0xf]
      %v4372 = vld [vmem:[%s5 + $0x128] sm:$0xf]
      %v4373 = vld [vmem:[%s5 + $0x12c] sm:$0xf]
      %v4374 = vld [vmem:[%s5 + $0x130] sm:$0xf]
      %v4375 = vld [vmem:[%s5 + $0x134] sm:$0xf]
      %v4376 = vld [vmem:[%s5 + $0x138] sm:$0xf]
      %v4377 = vld [vmem:[%s5 + $0x13c] sm:$0xf]
      %v4378 = vld [vmem:[%s5 + $0x140] sm:$0xf]
      %v4379 = vld [vmem:[%s5 + $0x144] sm:$0xf]
      %v4380 = vld [vmem:[%s5 + $0x148] sm:$0xf]
      %v4381 = vld [vmem:[%s5 + $0x14c] sm:$0xf]
      %v4382 = vld [vmem:[%s5 + $0x150] sm:$0xf]
      %v4383 = vld [vmem:[%s5 + $0x154] sm:$0xf]
      %v4384 = vld [vmem:[%s5 + $0x158] sm:$0xf]
      %v4385 = vld [vmem:[%s5 + $0x15c] sm:$0xf]
      %v4386 = vld [vmem:[%s5 + $0x160] sm:$0xf]
      %v4387 = vld [vmem:[%s5 + $0x164] sm:$0xf]
      %v4388 = vld [vmem:[%s5 + $0x168] sm:$0xf]
      %v4389 = vld [vmem:[%s5 + $0x16c] sm:$0xf]
      %v4390 = vld [vmem:[%s5 + $0x170] sm:$0xf]
      %v4391 = vld [vmem:[%s5 + $0x174] sm:$0xf]
      %v4392 = vld [vmem:[%s5 + $0x178] sm:$0xf]
      %v4393 = vld [vmem:[%s5 + $0x17c] sm:$0xf]
      %v4394 = vld [vmem:[%s5 + $0x180] sm:$0xf]
      %v4395 = vld [vmem:[%s5 + $0x184] sm:$0xf]
      %v4396 = vld [vmem:[%s5 + $0x188] sm:$0xf]
      %v4397 = vld [vmem:[%s5 + $0x18c] sm:$0xf]
      %v4398 = vld [vmem:[%s5 + $0x190] sm:$0xf]
      %v4399 = vld [vmem:[%s5 + $0x194] sm:$0xf]
      %v4400 = vld [vmem:[%s5 + $0x198] sm:$0xf]
      %v4401 = vld [vmem:[%s5 + $0x19c] sm:$0xf]
      %v4402 = vld [vmem:[%s5 + $0x1a0] sm:$0xf]
      %v4403 = vld [vmem:[%s5 + $0x1a4] sm:$0xf]
      %v4404 = vld [vmem:[%s5 + $0x1a8] sm:$0xf]
      %v4405 = vld [vmem:[%s5 + $0x1ac] sm:$0xf]
      %v4406 = vld [vmem:[%s5 + $0x1b0] sm:$0xf]
      %v4407 = vld [vmem:[%s5 + $0x1b4] sm:$0xf]
      %v4408 = vld [vmem:[%s5 + $0x1b8] sm:$0xf]
      %v4409 = vld [vmem:[%s5 + $0x1bc] sm:$0xf]
      %v4410 = vld [vmem:[%s5 + $0x1c0] sm:$0xf]
      %v4411 = vld [vmem:[%s5 + $0x1c4] sm:$0xf]
      %v4412 = vld [vmem:[%s5 + $0x1c8] sm:$0xf]
      %v4413 = vld [vmem:[%s5 + $0x1cc] sm:$0xf]
      %v4414 = vld [vmem:[%s5 + $0x1d0] sm:$0xf]
      %v4415 = vld [vmem:[%s5 + $0x1d4] sm:$0xf]
      %v4416 = vld [vmem:[%s5 + $0x1d8] sm:$0xf]
      %v4417 = vld [vmem:[%s5 + $0x1dc] sm:$0xf]
      %v4418 = vld [vmem:[%s5 + $0x1e0] sm:$0xf]
      %v4419 = vld [vmem:[%s5 + $0x1e4] sm:$0xf]
      %v4420 = vld [vmem:[%s5 + $0x1e8] sm:$0xf]
      %v4421 = vld [vmem:[%s5 + $0x1ec] sm:$0xf]
      %v4422 = vld [vmem:[%s5 + $0x1f0] sm:$0xf]
      %v4423 = vld [vmem:[%s5 + $0x1f4] sm:$0xf]
      %v4424 = vld [vmem:[%s5 + $0x1f8] sm:$0xf]
      %v4425 = vld [vmem:[%s5 + $0x1fc] sm:$0xf]
      %v4426 = vld [vmem:[%s5 + $0x200] sm:$0xf]
      %v4427 = vld [vmem:[%s5 + $0x204] sm:$0xf]
      %v4428 = vld [vmem:[%s5 + $0x208] sm:$0xf]
      %v4429 = vld [vmem:[%s5 + $0x20c] sm:$0xf]
      %v4430 = vld [vmem:[%s5 + $0x210] sm:$0xf]
      %v4431 = vld [vmem:[%s5 + $0x214] sm:$0xf]
      %v4432 = vld [vmem:[%s5 + $0x218] sm:$0xf]
      %v4433 = vld [vmem:[%s5 + $0x21c] sm:$0xf]
      %v4434 = vld [vmem:[%s5 + $0x220] sm:$0xf]
      %v4435 = vld [vmem:[%s5 + $0x224] sm:$0xf]
      %v4436 = vld [vmem:[%s5 + $0x228] sm:$0xf]
      %v4437 = vld [vmem:[%s5 + $0x22c] sm:$0xf]
      %v4438 = vld [vmem:[%s5 + $0x230] sm:$0xf]
      %v4439 = vld [vmem:[%s5 + $0x234] sm:$0xf]
      %v4440 = vld [vmem:[%s5 + $0x238] sm:$0xf]
      %v4441 = vld [vmem:[%s5 + $0x23c] sm:$0xf]
      %v4442 = vld [vmem:[%s6] sm:$0x1]
      %v4444 = vlaneseq
      %v4445 = vshrl.u32 %v4444, 7
      %v4446 = vsub.s32 0, %v4445
      %v4447 = vrot.slane %v4442, %v4446
      %v4609 = vunpack.c.l.b16 %v4138
      %v4610 = vunpack.c.h.b16 %v4138
      %v4611 = vunpack.c.l.b16 %v4139
      %v4612 = vunpack.c.h.b16 %v4139
      %v4613 = vunpack.c.l.b16 %v4140
      %v4614 = vunpack.c.h.b16 %v4140
      %v4615 = vunpack.c.l.b16 %v4141
      %v4616 = vunpack.c.h.b16 %v4141
      %v4617 = vunpack.c.l.b16 %v4142
      %v4618 = vunpack.c.l.b16 %v4143
      %v4619 = vunpack.c.h.b16 %v4143
      %v4620 = vunpack.c.l.b16 %v4144
      %v4621 = vunpack.c.h.b16 %v4144
      %v4622 = vunpack.c.l.b16 %v4145
      %v4623 = vunpack.c.h.b16 %v4145
      %v4624 = vunpack.c.l.b16 %v4146
      %v4625 = vunpack.c.h.b16 %v4146
      %v4626 = vunpack.c.l.b16 %v4147
      %v4627 = vunpack.c.l.b16 %v4148
      %v4628 = vunpack.c.h.b16 %v4148
      %v4629 = vunpack.c.l.b16 %v4149
      %v4630 = vunpack.c.h.b16 %v4149
      %v4631 = vunpack.c.l.b16 %v4150
      %v4632 = vunpack.c.h.b16 %v4150
      %v4633 = vunpack.c.l.b16 %v4151
      %v4634 = vunpack.c.h.b16 %v4151
      %v4635 = vunpack.c.l.b16 %v4152
      %v4636 = vunpack.c.l.b16 %v4153
      %v4637 = vunpack.c.h.b16 %v4153
      %v4638 = vunpack.c.l.b16 %v4154
      %v4639 = vunpack.c.h.b16 %v4154
      %v4640 = vunpack.c.l.b16 %v4155
      %v4641 = vunpack.c.h.b16 %v4155
      %v4642 = vunpack.c.l.b16 %v4156
      %v4643 = vunpack.c.h.b16 %v4156
      %v4644 = vunpack.c.l.b16 %v4157
      %v4645 = vunpack.c.l.b16 %v4158
      %v4646 = vunpack.c.h.b16 %v4158
      %v4647 = vunpack.c.l.b16 %v4159
      %v4648 = vunpack.c.h.b16 %v4159
      %v4649 = vunpack.c.l.b16 %v4160
      %v4650 = vunpack.c.h.b16 %v4160
      %v4651 = vunpack.c.l.b16 %v4161
      %v4652 = vunpack.c.h.b16 %v4161
      %v4653 = vunpack.c.l.b16 %v4162
      %v4654 = vunpack.c.l.b16 %v4163
      %v4655 = vunpack.c.h.b16 %v4163
      %v4656 = vunpack.c.l.b16 %v4164
      %v4657 = vunpack.c.h.b16 %v4164
      %v4658 = vunpack.c.l.b16 %v4165
      %v4659 = vunpack.c.h.b16 %v4165
      %v4660 = vunpack.c.l.b16 %v4166
      %v4661 = vunpack.c.h.b16 %v4166
      %v4662 = vunpack.c.l.b16 %v4167
      %v4663 = vunpack.c.l.b16 %v4168
      %v4664 = vunpack.c.h.b16 %v4168
      %v4665 = vunpack.c.l.b16 %v4169
      %v4666 = vunpack.c.h.b16 %v4169
      %v4667 = vunpack.c.l.b16 %v4170
      %v4668 = vunpack.c.h.b16 %v4170
      %v4669 = vunpack.c.l.b16 %v4171
      %v4670 = vunpack.c.h.b16 %v4171
      %v4671 = vunpack.c.l.b16 %v4172
      %v4672 = vunpack.c.l.b16 %v4173
      %v4673 = vunpack.c.h.b16 %v4173
      %v4674 = vunpack.c.l.b16 %v4174
      %v4675 = vunpack.c.h.b16 %v4174
      %v4676 = vunpack.c.l.b16 %v4175
      %v4677 = vunpack.c.h.b16 %v4175
      %v4678 = vunpack.c.l.b16 %v4176
      %v4679 = vunpack.c.h.b16 %v4176
      %v4680 = vunpack.c.l.b16 %v4177
      %v4681 = vunpack.c.l.b16 %v4178
      %v4682 = vunpack.c.h.b16 %v4178
      %v4683 = vunpack.c.l.b16 %v4179
      %v4684 = vunpack.c.h.b16 %v4179
      %v4685 = vunpack.c.l.b16 %v4180
      %v4686 = vunpack.c.h.b16 %v4180
      %v4687 = vunpack.c.l.b16 %v4181
      %v4688 = vunpack.c.h.b16 %v4181
      %v4689 = vunpack.c.l.b16 %v4182
      %v4690 = vunpack.c.l.b16 %v4183
      %v4691 = vunpack.c.h.b16 %v4183
      %v4692 = vunpack.c.l.b16 %v4184
      %v4693 = vunpack.c.h.b16 %v4184
      %v4694 = vunpack.c.l.b16 %v4185
      %v4695 = vunpack.c.h.b16 %v4185
      %v4696 = vunpack.c.l.b16 %v4186
      %v4697 = vunpack.c.h.b16 %v4186
      %v4698 = vunpack.c.l.b16 %v4187
      %v4699 = vunpack.c.l.b16 %v4188
      %v4700 = vunpack.c.h.b16 %v4188
      %v4701 = vunpack.c.l.b16 %v4189
      %v4702 = vunpack.c.h.b16 %v4189
      %v4703 = vunpack.c.l.b16 %v4190
      %v4704 = vunpack.c.h.b16 %v4190
      %v4705 = vunpack.c.l.b16 %v4191
      %v4706 = vunpack.c.h.b16 %v4191
      %v4707 = vunpack.c.l.b16 %v4192
      %v4708 = vunpack.c.l.b16 %v4193
      %v4709 = vunpack.c.h.b16 %v4193
      %v4710 = vunpack.c.l.b16 %v4194
      %v4711 = vunpack.c.h.b16 %v4194
      %v4712 = vunpack.c.l.b16 %v4195
      %v4713 = vunpack.c.h.b16 %v4195
      %v4714 = vunpack.c.l.b16 %v4196
      %v4715 = vunpack.c.h.b16 %v4196
      %v4716 = vunpack.c.l.b16 %v4197
      %v4717 = vunpack.c.l.b16 %v4198
      %v4718 = vunpack.c.h.b16 %v4198
      %v4719 = vunpack.c.l.b16 %v4199
      %v4720 = vunpack.c.h.b16 %v4199
      %v4721 = vunpack.c.l.b16 %v4200
      %v4722 = vunpack.c.h.b16 %v4200
      %v4723 = vunpack.c.l.b16 %v4201
      %v4724 = vunpack.c.h.b16 %v4201
      %v4725 = vunpack.c.l.b16 %v4202
      %v4726 = vunpack.c.l.b16 %v4203
      %v4727 = vunpack.c.h.b16 %v4203
      %v4728 = vunpack.c.l.b16 %v4204
      %v4729 = vunpack.c.h.b16 %v4204
      %v4730 = vunpack.c.l.b16 %v4205
      %v4731 = vunpack.c.h.b16 %v4205
      %v4732 = vunpack.c.l.b16 %v4206
      %v4733 = vunpack.c.h.b16 %v4206
      %v4734 = vunpack.c.l.b16 %v4207
      %v4735 = vunpack.c.l.b16 %v4208
      %v4736 = vunpack.c.h.b16 %v4208
      %v4737 = vunpack.c.l.b16 %v4209
      %v4738 = vunpack.c.h.b16 %v4209
      %v4739 = vunpack.c.l.b16 %v4210
      %v4740 = vunpack.c.h.b16 %v4210
      %v4741 = vunpack.c.l.b16 %v4211
      %v4742 = vunpack.c.h.b16 %v4211
      %v4743 = vunpack.c.l.b16 %v4212
      %v4744 = vunpack.c.l.b16 %v4213
      %v4745 = vunpack.c.h.b16 %v4213
      %v4746 = vunpack.c.l.b16 %v4214
      %v4747 = vunpack.c.h.b16 %v4214
      %v4748 = vunpack.c.l.b16 %v4215
      %v4749 = vunpack.c.h.b16 %v4215
      %v4750 = vunpack.c.l.b16 %v4216
      %v4751 = vunpack.c.h.b16 %v4216
      %v4752 = vunpack.c.l.b16 %v4217
      %v4753 = vunpack.c.l.b16 %v4218
      %v4754 = vunpack.c.h.b16 %v4218
      %v4755 = vunpack.c.l.b16 %v4219
      %v4756 = vunpack.c.h.b16 %v4219
      %v4757 = vunpack.c.l.b16 %v4220
      %v4758 = vunpack.c.h.b16 %v4220
      %v4759 = vunpack.c.l.b16 %v4221
      %v4760 = vunpack.c.h.b16 %v4221
      %v4761 = vunpack.c.l.b16 %v4222
      %v4762 = vunpack.c.l.b16 %v4223
      %v4763 = vunpack.c.h.b16 %v4223
      %v4764 = vunpack.c.l.b16 %v4224
      %v4765 = vunpack.c.h.b16 %v4224
      %v4766 = vunpack.c.l.b16 %v4225
      %v4767 = vunpack.c.h.b16 %v4225
      %v4768 = vunpack.c.l.b16 %v4226
      %v4769 = vunpack.c.h.b16 %v4226
      %v4770 = vunpack.c.l.b16 %v4227
      %v4771 = vunpack.c.l.b16 %v4228
      %v4772 = vunpack.c.h.b16 %v4228
      %v4773 = vunpack.c.l.b16 %v4229
      %v4774 = vunpack.c.h.b16 %v4229
      %v4775 = vunpack.c.l.b16 %v4230
      %v4776 = vunpack.c.h.b16 %v4230
      %v4777 = vunpack.c.l.b16 %v4231
      %v4778 = vunpack.c.h.b16 %v4231
      %v4779 = vunpack.c.l.b16 %v4232
      %v4780 = vunpack.c.l.b16 %v4233
      %v4781 = vunpack.c.h.b16 %v4233
      %v4782 = vunpack.c.l.b16 %v4234
      %v4783 = vunpack.c.h.b16 %v4234
      %v4784 = vunpack.c.l.b16 %v4235
      %v4785 = vunpack.c.h.b16 %v4235
      %v4786 = vunpack.c.l.b16 %v4236
      %v4787 = vunpack.c.h.b16 %v4236
      %v4788 = vunpack.c.l.b16 %v4237
      %v4789 = vunpack.c.l.b16 %v4238
      %v4790 = vunpack.c.h.b16 %v4238
      %v4791 = vunpack.c.l.b16 %v4239
      %v4792 = vunpack.c.h.b16 %v4239
      %v4793 = vunpack.c.l.b16 %v4240
      %v4794 = vunpack.c.h.b16 %v4240
      %v4795 = vunpack.c.l.b16 %v4241
      %v4796 = vunpack.c.h.b16 %v4241
      %v4797 = vunpack.c.l.b16 %v4242
      %v4798 = vunpack.c.l.b16 %v4243
      %v4799 = vunpack.c.h.b16 %v4243
      %v4800 = vunpack.c.l.b16 %v4244
      %v4801 = vunpack.c.h.b16 %v4244
      %v4802 = vunpack.c.l.b16 %v4245
      %v4803 = vunpack.c.h.b16 %v4245
      %v4804 = vunpack.c.l.b16 %v4246
      %v4805 = vunpack.c.h.b16 %v4246
      %v4806 = vunpack.c.l.b16 %v4247
      %v4807 = vunpack.c.l.b16 %v4248
      %v4808 = vunpack.c.h.b16 %v4248
      %v4809 = vunpack.c.l.b16 %v4249
      %v4810 = vunpack.c.h.b16 %v4249
      %v4811 = vunpack.c.l.b16 %v4250
      %v4812 = vunpack.c.h.b16 %v4250
      %v4813 = vunpack.c.l.b16 %v4251
      %v4814 = vunpack.c.h.b16 %v4251
      %v4815 = vunpack.c.l.b16 %v4252
      %v4816 = vunpack.c.l.b16 %v4253
      %v4817 = vunpack.c.h.b16 %v4253
      %v4818 = vunpack.c.l.b16 %v4254
      %v4819 = vunpack.c.h.b16 %v4254
      %v4820 = vunpack.c.l.b16 %v4255
      %v4821 = vunpack.c.h.b16 %v4255
      %v4822 = vunpack.c.l.b16 %v4256
      %v4823 = vunpack.c.h.b16 %v4256
      %v4824 = vunpack.c.l.b16 %v4257
      %v4825 = vunpack.c.l.b16 %v4258
      %v4826 = vunpack.c.h.b16 %v4258
      %v4827 = vunpack.c.l.b16 %v4259
      %v4828 = vunpack.c.h.b16 %v4259
      %v4829 = vunpack.c.l.b16 %v4260
      %v4830 = vunpack.c.h.b16 %v4260
      %v4831 = vunpack.c.l.b16 %v4261
      %v4832 = vunpack.c.h.b16 %v4261
      %v4833 = vunpack.c.l.b16 %v4262
      %v4834 = vunpack.c.l.b16 %v4263
      %v4835 = vunpack.c.h.b16 %v4263
      %v4836 = vunpack.c.l.b16 %v4264
      %v4837 = vunpack.c.h.b16 %v4264
      %v4838 = vunpack.c.l.b16 %v4265
      %v4839 = vunpack.c.h.b16 %v4265
      %v4840 = vunpack.c.l.b16 %v4266
      %v4841 = vunpack.c.h.b16 %v4266
      %v4842 = vunpack.c.l.b16 %v4267
      %v4843 = vunpack.c.l.b16 %v4268
      %v4844 = vunpack.c.h.b16 %v4268
      %v4845 = vunpack.c.l.b16 %v4269
      %v4846 = vunpack.c.h.b16 %v4269
      %v4847 = vunpack.c.l.b16 %v4270
      %v4848 = vunpack.c.h.b16 %v4270
      %v4849 = vunpack.c.l.b16 %v4271
      %v4850 = vunpack.c.h.b16 %v4271
      %v4851 = vunpack.c.l.b16 %v4272
      %v4852 = vunpack.c.l.b16 %v4273
      %v4853 = vunpack.c.h.b16 %v4273
      %v4854 = vunpack.c.l.b16 %v4274
      %v4855 = vunpack.c.h.b16 %v4274
      %v4856 = vunpack.c.l.b16 %v4275
      %v4857 = vunpack.c.h.b16 %v4275
      %v4858 = vunpack.c.l.b16 %v4276
      %v4859 = vunpack.c.h.b16 %v4276
      %v4860 = vunpack.c.l.b16 %v4277
      %v4861 = vunpack.c.l.b16 %v4278
      %v4862 = vunpack.c.h.b16 %v4278
      %v4863 = vunpack.c.l.b16 %v4279
      %v4864 = vunpack.c.h.b16 %v4279
      %v4865 = vunpack.c.l.b16 %v4280
      %v4866 = vunpack.c.h.b16 %v4280
      %v4867 = vunpack.c.l.b16 %v4281
      %v4868 = vunpack.c.h.b16 %v4281
      %v4869 = vunpack.c.l.b16 %v4282
      %v4870 = vunpack.c.l.b16 %v4283
      %v4871 = vunpack.c.h.b16 %v4283
      %v4872 = vunpack.c.l.b16 %v4284
      %v4873 = vunpack.c.h.b16 %v4284
      %v4874 = vunpack.c.l.b16 %v4285
      %v4875 = vunpack.c.h.b16 %v4285
      %v4876 = vunpack.c.l.b16 %v4286
      %v4877 = vunpack.c.h.b16 %v4286
      %v4878 = vunpack.c.l.b16 %v4287
      %v4879 = vunpack.c.l.b16 %v4288
      %v4880 = vunpack.c.h.b16 %v4288
      %v4881 = vunpack.c.l.b16 %v4289
      %v4882 = vunpack.c.h.b16 %v4289
      %v4883 = vunpack.c.l.b16 %v4290
      %v4884 = vunpack.c.h.b16 %v4290
      %v4885 = vunpack.c.l.b16 %v4291
      %v4886 = vunpack.c.h.b16 %v4291
      %v4887 = vunpack.c.l.b16 %v4292
      %v4888 = vunpack.c.l.b16 %v4293
      %v4889 = vunpack.c.h.b16 %v4293
      %v4890 = vunpack.c.l.b16 %v4294
      %v4891 = vunpack.c.h.b16 %v4294
      %v4892 = vunpack.c.l.b16 %v4295
      %v4893 = vunpack.c.h.b16 %v4295
      %v4894 = vunpack.c.l.b16 %v4296
      %v4895 = vunpack.c.h.b16 %v4296
      %v4896 = vunpack.c.l.b16 %v4297
      %v4897 = vpack.c.b16 %v4618, %v4609
      %v4898 = vpack.c.b16 %v4619, %v4610
      %v4899 = vpack.c.b16 %v4620, %v4611
      %v4900 = vpack.c.b16 %v4621, %v4612
      %v4901 = vpack.c.b16 %v4622, %v4613
      %v4902 = vpack.c.b16 %v4623, %v4614
      %v4903 = vpack.c.b16 %v4624, %v4615
      %v4904 = vpack.c.b16 %v4625, %v4616
      %v4905 = vpack.c.b16 %v4626, %v4617
      %v4906 = vpack.c.b16 %v4636, %v4627
      %v4907 = vpack.c.b16 %v4637, %v4628
      %v4908 = vpack.c.b16 %v4638, %v4629
      %v4909 = vpack.c.b16 %v4639, %v4630
      %v4910 = vpack.c.b16 %v4640, %v4631
      %v4911 = vpack.c.b16 %v4641, %v4632
      %v4912 = vpack.c.b16 %v4642, %v4633
      %v4913 = vpack.c.b16 %v4643, %v4634
      %v4914 = vpack.c.b16 %v4644, %v4635
      %v4915 = vpack.c.b16 %v4654, %v4645
      %v4916 = vpack.c.b16 %v4655, %v4646
      %v4917 = vpack.c.b16 %v4656, %v4647
      %v4918 = vpack.c.b16 %v4657, %v4648
      %v4919 = vpack.c.b16 %v4658, %v4649
      %v4920 = vpack.c.b16 %v4659, %v4650
      %v4921 = vpack.c.b16 %v4660, %v4651
      %v4922 = vpack.c.b16 %v4661, %v4652
      %v4923 = vpack.c.b16 %v4662, %v4653
      %v4924 = vpack.c.b16 %v4672, %v4663
      %v4925 = vpack.c.b16 %v4673, %v4664
      %v4926 = vpack.c.b16 %v4674, %v4665
      %v4927 = vpack.c.b16 %v4675, %v4666
      %v4928 = vpack.c.b16 %v4676, %v4667
      %v4929 = vpack.c.b16 %v4677, %v4668
      %v4930 = vpack.c.b16 %v4678, %v4669
      %v4931 = vpack.c.b16 %v4679, %v4670
      %v4932 = vpack.c.b16 %v4680, %v4671
      %v4933 = vpack.c.b16 %v4690, %v4681
      %v4934 = vpack.c.b16 %v4691, %v4682
      %v4935 = vpack.c.b16 %v4692, %v4683
      %v4936 = vpack.c.b16 %v4693, %v4684
      %v4937 = vpack.c.b16 %v4694, %v4685
      %v4938 = vpack.c.b16 %v4695, %v4686
      %v4939 = vpack.c.b16 %v4696, %v4687
      %v4940 = vpack.c.b16 %v4697, %v4688
      %v4941 = vpack.c.b16 %v4698, %v4689
      %v4942 = vpack.c.b16 %v4708, %v4699
      %v4943 = vpack.c.b16 %v4709, %v4700
      %v4944 = vpack.c.b16 %v4710, %v4701
      %v4945 = vpack.c.b16 %v4711, %v4702
      %v4946 = vpack.c.b16 %v4712, %v4703
      %v4947 = vpack.c.b16 %v4713, %v4704
      %v4948 = vpack.c.b16 %v4714, %v4705
      %v4949 = vpack.c.b16 %v4715, %v4706
      %v4950 = vpack.c.b16 %v4716, %v4707
      %v4951 = vpack.c.b16 %v4726, %v4717
      %v4952 = vpack.c.b16 %v4727, %v4718
      %v4953 = vpack.c.b16 %v4728, %v4719
      %v4954 = vpack.c.b16 %v4729, %v4720
      %v4955 = vpack.c.b16 %v4730, %v4721
      %v4956 = vpack.c.b16 %v4731, %v4722
      %v4957 = vpack.c.b16 %v4732, %v4723
      %v4958 = vpack.c.b16 %v4733, %v4724
      %v4959 = vpack.c.b16 %v4734, %v4725
      %v4960 = vpack.c.b16 %v4744, %v4735
      %v4961 = vpack.c.b16 %v4745, %v4736
      %v4962 = vpack.c.b16 %v4746, %v4737
      %v4963 = vpack.c.b16 %v4747, %v4738
      %v4964 = vpack.c.b16 %v4748, %v4739
      %v4965 = vpack.c.b16 %v4749, %v4740
      %v4966 = vpack.c.b16 %v4750, %v4741
      %v4967 = vpack.c.b16 %v4751, %v4742
      %v4968 = vpack.c.b16 %v4752, %v4743
      %v4969 = vpack.c.b16 %v4762, %v4753
      %v4970 = vpack.c.b16 %v4763, %v4754
      %v4971 = vpack.c.b16 %v4764, %v4755
      %v4972 = vpack.c.b16 %v4765, %v4756
      %v4973 = vpack.c.b16 %v4766, %v4757
      %v4974 = vpack.c.b16 %v4767, %v4758
      %v4975 = vpack.c.b16 %v4768, %v4759
      %v4976 = vpack.c.b16 %v4769, %v4760
      %v4977 = vpack.c.b16 %v4770, %v4761
      %v4978 = vpack.c.b16 %v4780, %v4771
      %v4979 = vpack.c.b16 %v4781, %v4772
      %v4980 = vpack.c.b16 %v4782, %v4773
      %v4981 = vpack.c.b16 %v4783, %v4774
      %v4982 = vpack.c.b16 %v4784, %v4775
      %v4983 = vpack.c.b16 %v4785, %v4776
      %v4984 = vpack.c.b16 %v4786, %v4777
      %v4985 = vpack.c.b16 %v4787, %v4778
      %v4986 = vpack.c.b16 %v4788, %v4779
      %v4987 = vpack.c.b16 %v4798, %v4789
      %v4988 = vpack.c.b16 %v4799, %v4790
      %v4989 = vpack.c.b16 %v4800, %v4791
      %v4990 = vpack.c.b16 %v4801, %v4792
      %v4991 = vpack.c.b16 %v4802, %v4793
      %v4992 = vpack.c.b16 %v4803, %v4794
      %v4993 = vpack.c.b16 %v4804, %v4795
      %v4994 = vpack.c.b16 %v4805, %v4796
      %v4995 = vpack.c.b16 %v4806, %v4797
      %v4996 = vpack.c.b16 %v4816, %v4807
      %v4997 = vpack.c.b16 %v4817, %v4808
      %v4998 = vpack.c.b16 %v4818, %v4809
      %v4999 = vpack.c.b16 %v4819, %v4810
      %v5000 = vpack.c.b16 %v4820, %v4811
      %v5001 = vpack.c.b16 %v4821, %v4812
      %v5002 = vpack.c.b16 %v4822, %v4813
      %v5003 = vpack.c.b16 %v4823, %v4814
      %v5004 = vpack.c.b16 %v4824, %v4815
      %v5005 = vpack.c.b16 %v4834, %v4825
      %v5006 = vpack.c.b16 %v4835, %v4826
      %v5007 = vpack.c.b16 %v4836, %v4827
      %v5008 = vpack.c.b16 %v4837, %v4828
      %v5009 = vpack.c.b16 %v4838, %v4829
      %v5010 = vpack.c.b16 %v4839, %v4830
      %v5011 = vpack.c.b16 %v4840, %v4831
      %v5012 = vpack.c.b16 %v4841, %v4832
      %v5013 = vpack.c.b16 %v4842, %v4833
      %v5014 = vpack.c.b16 %v4852, %v4843
      %v5015 = vpack.c.b16 %v4853, %v4844
      %v5016 = vpack.c.b16 %v4854, %v4845
      %v5017 = vpack.c.b16 %v4855, %v4846
      %v5018 = vpack.c.b16 %v4856, %v4847
      %v5019 = vpack.c.b16 %v4857, %v4848
      %v5020 = vpack.c.b16 %v4858, %v4849
      %v5021 = vpack.c.b16 %v4859, %v4850
      %v5022 = vpack.c.b16 %v4860, %v4851
      %v5023 = vpack.c.b16 %v4870, %v4861
      %v5024 = vpack.c.b16 %v4871, %v4862
      %v5025 = vpack.c.b16 %v4872, %v4863
      %v5026 = vpack.c.b16 %v4873, %v4864
      %v5027 = vpack.c.b16 %v4874, %v4865
      %v5028 = vpack.c.b16 %v4875, %v4866
      %v5029 = vpack.c.b16 %v4876, %v4867
      %v5030 = vpack.c.b16 %v4877, %v4868
      %v5031 = vpack.c.b16 %v4878, %v4869
      %v5032 = vpack.c.b16 %v4888, %v4879
      %v5033 = vpack.c.b16 %v4889, %v4880
      %v5034 = vpack.c.b16 %v4890, %v4881
      %v5035 = vpack.c.b16 %v4891, %v4882
      %v5036 = vpack.c.b16 %v4892, %v4883
      %v5037 = vpack.c.b16 %v4893, %v4884
      %v5038 = vpack.c.b16 %v4894, %v4885
      %v5039 = vpack.c.b16 %v4895, %v4886
      %v5040 = vpack.c.b16 %v4896, %v4887
      %v5329 = vunpack.c.l.b16 %v4298
      %v5330 = vunpack.c.l.b16 %v4299
      %v5331 = vunpack.c.l.b16 %v4300
      %v5332 = vunpack.c.l.b16 %v4301
      %v5333 = vunpack.c.l.b16 %v4302
      %v5334 = vunpack.c.l.b16 %v4303
      %v5335 = vunpack.c.l.b16 %v4304
      %v5336 = vunpack.c.l.b16 %v4305
      %v5337 = vunpack.c.l.b16 %v4306
      %v5338 = vunpack.c.l.b16 %v4307
      %v5339 = vunpack.c.l.b16 %v4308
      %v5340 = vunpack.c.l.b16 %v4309
      %v5341 = vunpack.c.l.b16 %v4310
      %v5342 = vunpack.c.l.b16 %v4311
      %v5343 = vunpack.c.l.b16 %v4312
      %v5344 = vunpack.c.l.b16 %v4313
      %v5345 = vunpack.c.l.b16 %v4314
      %v5346 = vunpack.c.l.b16 %v4315
      %v5347 = vunpack.c.l.b16 %v4316
      %v5348 = vunpack.c.l.b16 %v4317
      %v5349 = vunpack.c.l.b16 %v4318
      %v5350 = vunpack.c.l.b16 %v4319
      %v5351 = vunpack.c.l.b16 %v4320
      %v5352 = vunpack.c.l.b16 %v4321
      %v5353 = vunpack.c.l.b16 %v4322
      %v5354 = vunpack.c.l.b16 %v4323
      %v5355 = vunpack.c.l.b16 %v4324
      %v5356 = vunpack.c.l.b16 %v4325
      %v5357 = vunpack.c.l.b16 %v4326
      %v5358 = vunpack.c.l.b16 %v4327
      %v5359 = vunpack.c.l.b16 %v4328
      %v5360 = vunpack.c.l.b16 %v4329
      %v5361 = vunpack.c.l.b16 %v4330
      %v5362 = vunpack.c.l.b16 %v4331
      %v5363 = vunpack.c.l.b16 %v4332
      %v5364 = vunpack.c.l.b16 %v4333
      %v5365 = vunpack.c.l.b16 %v4334
      %v5366 = vunpack.c.l.b16 %v4335
      %v5367 = vunpack.c.l.b16 %v4336
      %v5368 = vunpack.c.l.b16 %v4337
      %v5369 = vunpack.c.l.b16 %v4338
      %v5370 = vunpack.c.l.b16 %v4339
      %v5371 = vunpack.c.l.b16 %v4340
      %v5372 = vunpack.c.l.b16 %v4341
      %v5373 = vunpack.c.l.b16 %v4342
      %v5374 = vunpack.c.l.b16 %v4343
      %v5375 = vunpack.c.l.b16 %v4344
      %v5376 = vunpack.c.l.b16 %v4345
      %v5377 = vunpack.c.l.b16 %v4346
      %v5378 = vunpack.c.l.b16 %v4347
      %v5379 = vunpack.c.l.b16 %v4348
      %v5380 = vunpack.c.l.b16 %v4349
      %v5381 = vunpack.c.l.b16 %v4350
      %v5382 = vunpack.c.l.b16 %v4351
      %v5383 = vunpack.c.l.b16 %v4352
      %v5384 = vunpack.c.l.b16 %v4353
      %v5385 = vunpack.c.l.b16 %v4354
      %v5386 = vunpack.c.l.b16 %v4355
      %v5387 = vunpack.c.l.b16 %v4356
      %v5388 = vunpack.c.l.b16 %v4357
      %v5389 = vunpack.c.l.b16 %v4358
      %v5390 = vunpack.c.l.b16 %v4359
      %v5391 = vunpack.c.l.b16 %v4360
      %v5392 = vunpack.c.l.b16 %v4361
      %v5393 = vunpack.c.l.b16 %v4362
      %v5394 = vunpack.c.l.b16 %v4363
      %v5395 = vunpack.c.l.b16 %v4364
      %v5396 = vunpack.c.l.b16 %v4365
      %v5397 = vunpack.c.l.b16 %v4366
      %v5398 = vunpack.c.l.b16 %v4367
      %v5399 = vunpack.c.l.b16 %v4368
      %v5400 = vunpack.c.l.b16 %v4369
      %v5401 = vunpack.c.l.b16 %v4370
      %v5402 = vunpack.c.l.b16 %v4371
      %v5403 = vunpack.c.l.b16 %v4372
      %v5404 = vunpack.c.l.b16 %v4373
      %v5405 = vunpack.c.l.b16 %v4374
      %v5406 = vunpack.c.l.b16 %v4375
      %v5407 = vunpack.c.l.b16 %v4376
      %v5408 = vunpack.c.l.b16 %v4377
      %v5409 = vunpack.c.l.b16 %v4378
      %v5410 = vunpack.c.l.b16 %v4379
      %v5411 = vunpack.c.l.b16 %v4380
      %v5412 = vunpack.c.l.b16 %v4381
      %v5413 = vunpack.c.l.b16 %v4382
      %v5414 = vunpack.c.l.b16 %v4383
      %v5415 = vunpack.c.l.b16 %v4384
      %v5416 = vunpack.c.l.b16 %v4385
      %v5417 = vunpack.c.l.b16 %v4386
      %v5418 = vunpack.c.l.b16 %v4387
      %v5419 = vunpack.c.l.b16 %v4388
      %v5420 = vunpack.c.l.b16 %v4389
      %v5421 = vunpack.c.l.b16 %v4390
      %v5422 = vunpack.c.l.b16 %v4391
      %v5423 = vunpack.c.l.b16 %v4392
      %v5424 = vunpack.c.l.b16 %v4393
      %v5425 = vunpack.c.l.b16 %v4394
      %v5426 = vunpack.c.l.b16 %v4395
      %v5427 = vunpack.c.l.b16 %v4396
      %v5428 = vunpack.c.l.b16 %v4397
      %v5429 = vunpack.c.l.b16 %v4398
      %v5430 = vunpack.c.l.b16 %v4399
      %v5431 = vunpack.c.l.b16 %v4400
      %v5432 = vunpack.c.l.b16 %v4401
      %v5433 = vunpack.c.l.b16 %v4402
      %v5434 = vunpack.c.l.b16 %v4403
      %v5435 = vunpack.c.l.b16 %v4404
      %v5436 = vunpack.c.l.b16 %v4405
      %v5437 = vunpack.c.l.b16 %v4406
      %v5438 = vunpack.c.l.b16 %v4407
      %v5439 = vunpack.c.l.b16 %v4408
      %v5440 = vunpack.c.l.b16 %v4409
      %v5441 = vunpack.c.l.b16 %v4410
      %v5442 = vunpack.c.l.b16 %v4411
      %v5443 = vunpack.c.l.b16 %v4412
      %v5444 = vunpack.c.l.b16 %v4413
      %v5445 = vunpack.c.l.b16 %v4414
      %v5446 = vunpack.c.l.b16 %v4415
      %v5447 = vunpack.c.l.b16 %v4416
      %v5448 = vunpack.c.l.b16 %v4417
      %v5449 = vunpack.c.l.b16 %v4418
      %v5450 = vunpack.c.l.b16 %v4419
      %v5451 = vunpack.c.l.b16 %v4420
      %v5452 = vunpack.c.l.b16 %v4421
      %v5453 = vunpack.c.l.b16 %v4422
      %v5454 = vunpack.c.l.b16 %v4423
      %v5455 = vunpack.c.l.b16 %v4424
      %v5456 = vunpack.c.l.b16 %v4425
      %v5457 = vunpack.c.l.b16 %v4426
      %v5458 = vunpack.c.l.b16 %v4427
      %v5459 = vunpack.c.l.b16 %v4428
      %v5460 = vunpack.c.l.b16 %v4429
      %v5461 = vunpack.c.l.b16 %v4430
      %v5462 = vunpack.c.l.b16 %v4431
      %v5463 = vunpack.c.l.b16 %v4432
      %v5464 = vunpack.c.l.b16 %v4433
      %v5465 = vunpack.c.l.b16 %v4434
      %v5466 = vunpack.c.l.b16 %v4435
      %v5467 = vunpack.c.l.b16 %v4436
      %v5468 = vunpack.c.l.b16 %v4437
      %v5469 = vunpack.c.l.b16 %v4438
      %v5470 = vunpack.c.l.b16 %v4439
      %v5471 = vunpack.c.l.b16 %v4440
      %v5472 = vunpack.c.l.b16 %v4441
      %v5473 = vpack.c.b16 %v5330, %v5329
      %v5474 = vpack.c.b16 %v5332, %v5331
      %v5475 = vpack.c.b16 %v5334, %v5333
      %v5476 = vpack.c.b16 %v5336, %v5335
      %v5477 = vpack.c.b16 %v5338, %v5337
      %v5478 = vpack.c.b16 %v5340, %v5339
      %v5479 = vpack.c.b16 %v5342, %v5341
      %v5480 = vpack.c.b16 %v5344, %v5343
      %v5481 = vpack.c.b16 %v5346, %v5345
      %v5482 = vpack.c.b16 %v5348, %v5347
      %v5483 = vpack.c.b16 %v5350, %v5349
      %v5484 = vpack.c.b16 %v5352, %v5351
      %v5485 = vpack.c.b16 %v5354, %v5353
      %v5486 = vpack.c.b16 %v5356, %v5355
      %v5487 = vpack.c.b16 %v5358, %v5357
      %v5488 = vpack.c.b16 %v5360, %v5359
      %v5489 = vpack.c.b16 %v5362, %v5361
      %v5490 = vpack.c.b16 %v5364, %v5363
      %v5491 = vpack.c.b16 %v5366, %v5365
      %v5492 = vpack.c.b16 %v5368, %v5367
      %v5493 = vpack.c.b16 %v5370, %v5369
      %v5494 = vpack.c.b16 %v5372, %v5371
      %v5495 = vpack.c.b16 %v5374, %v5373
      %v5496 = vpack.c.b16 %v5376, %v5375
      %v5497 = vpack.c.b16 %v5378, %v5377
      %v5498 = vpack.c.b16 %v5380, %v5379
      %v5499 = vpack.c.b16 %v5382, %v5381
      %v5500 = vpack.c.b16 %v5384, %v5383
      %v5501 = vpack.c.b16 %v5386, %v5385
      %v5502 = vpack.c.b16 %v5388, %v5387
      %v5503 = vpack.c.b16 %v5390, %v5389
      %v5504 = vpack.c.b16 %v5392, %v5391
      %v5505 = vpack.c.b16 %v5394, %v5393
      %v5506 = vpack.c.b16 %v5396, %v5395
      %v5507 = vpack.c.b16 %v5398, %v5397
      %v5508 = vpack.c.b16 %v5400, %v5399
      %v5509 = vpack.c.b16 %v5402, %v5401
      %v5510 = vpack.c.b16 %v5404, %v5403
      %v5511 = vpack.c.b16 %v5406, %v5405
      %v5512 = vpack.c.b16 %v5408, %v5407
      %v5513 = vpack.c.b16 %v5410, %v5409
      %v5514 = vpack.c.b16 %v5412, %v5411
      %v5515 = vpack.c.b16 %v5414, %v5413
      %v5516 = vpack.c.b16 %v5416, %v5415
      %v5517 = vpack.c.b16 %v5418, %v5417
      %v5518 = vpack.c.b16 %v5420, %v5419
      %v5519 = vpack.c.b16 %v5422, %v5421
      %v5520 = vpack.c.b16 %v5424, %v5423
      %v5521 = vpack.c.b16 %v5426, %v5425
      %v5522 = vpack.c.b16 %v5428, %v5427
      %v5523 = vpack.c.b16 %v5430, %v5429
      %v5524 = vpack.c.b16 %v5432, %v5431
      %v5525 = vpack.c.b16 %v5434, %v5433
      %v5526 = vpack.c.b16 %v5436, %v5435
      %v5527 = vpack.c.b16 %v5438, %v5437
      %v5528 = vpack.c.b16 %v5440, %v5439
      %v5529 = vpack.c.b16 %v5442, %v5441
      %v5530 = vpack.c.b16 %v5444, %v5443
      %v5531 = vpack.c.b16 %v5446, %v5445
      %v5532 = vpack.c.b16 %v5448, %v5447
      %v5533 = vpack.c.b16 %v5450, %v5449
      %v5534 = vpack.c.b16 %v5452, %v5451
      %v5535 = vpack.c.b16 %v5454, %v5453
      %v5536 = vpack.c.b16 %v5456, %v5455
      %v5537 = vpack.c.b16 %v5458, %v5457
      %v5538 = vpack.c.b16 %v5460, %v5459
      %v5539 = vpack.c.b16 %v5462, %v5461
      %v5540 = vpack.c.b16 %v5464, %v5463
      %v5541 = vpack.c.b16 %v5466, %v5465
      %v5542 = vpack.c.b16 %v5468, %v5467
      %v5543 = vpack.c.b16 %v5470, %v5469
      %v5544 = vpack.c.b16 %v5472, %v5471
      %5617 = vmatprep.subr.bf16.mxu0 0
      %5618 = vmatpush1.bf16.msra.mxu0 %v5480
      %5619 = vmatprep.subr.bf16.mxu0 0
      %5620 = vmatpush1.bf16.msra.mxu0 %v5479
      %5621 = vmatprep.subr.bf16.mxu0 0
      %5622 = vmatpush1.bf16.msra.mxu0 %v5478
      %5623 = vmatprep.subr.bf16.mxu0 0
      %5624 = vmatpush1.bf16.msra.mxu0 %v5477
      %5625 = vmatprep.subr.bf16.mxu0 0
      %5626 = vmatpush1.bf16.msra.mxu0 %v5476
      %5627 = vmatprep.subr.bf16.mxu0 0
      %5628 = vmatpush1.bf16.msra.mxu0 %v5475
      %5629 = vmatprep.subr.bf16.mxu0 0
      %5630 = vmatpush1.bf16.msra.mxu0 %v5474
      %5631 = vmatprep.subr.bf16.mxu0 0
      %5632 = vmatpush1.bf16.msra.mxu0 %v5473
      %5633 = vmatprep.subr.bf16.mxu0 0
      %5634 = vmatpush2.bf16.msra.mxu0 %v5488
      %5635 = vmatprep.subr.bf16.mxu0 0
      %5636 = vmatpush2.bf16.msra.mxu0 %v5487
      %5637 = vmatprep.subr.bf16.mxu0 0
      %5638 = vmatpush2.bf16.msra.mxu0 %v5486
      %5639 = vmatprep.subr.bf16.mxu0 0
      %5640 = vmatpush2.bf16.msra.mxu0 %v5485
      %5641 = vmatprep.subr.bf16.mxu0 0
      %5642 = vmatpush2.bf16.msra.mxu0 %v5484
      %5643 = vmatprep.subr.bf16.mxu0 0
      %5644 = vmatpush2.bf16.msra.mxu0 %v5483
      %5645 = vmatprep.subr.bf16.mxu0 0
      %5646 = vmatpush2.bf16.msra.mxu0 %v5482
      %5647 = vmatprep.subr.bf16.mxu0 0
      %5648 = vmatpush2.bf16.msra.mxu0 %v5481
      %5649 = vmatprep.mubr.bf16.mxu0 %v4898
      %5650 = vmatmul.mubr.bf16.gmra.mxu0 %v4897
      %v5651 = vpop.f32.mrf.mxu0
      %v5652 = vadd.f32 %v4447, %v5651
      %v5653 = vpop.f32.mrf.mxu0
      %v5654 = vpop.f32.mrf.mxu0
      %v5655 = vadd.f32 %v4447, %v5654
      %v5656 = vpop.f32.mrf.mxu0
      %5657 = vmatprep.mubr.bf16.mxu0 %v4907
      %5658 = vmatmul.mubr.bf16.gmra.mxu0 %v4906
      %v5659 = vpop.f32.mrf.mxu0
      %v5660 = vadd.f32 %v4447, %v5659
      %v5661 = vpop.f32.mrf.mxu0
      %v5662 = vpop.f32.mrf.mxu0
      %v5663 = vadd.f32 %v4447, %v5662
      %v5664 = vpop.f32.mrf.mxu0
      %5665 = vmatprep.mubr.bf16.mxu0 %v4916
      %5666 = vmatmul.mubr.bf16.gmra.mxu0 %v4915
      %v5667 = vpop.f32.mrf.mxu0
      %v5668 = vadd.f32 %v4447, %v5667
      %v5669 = vpop.f32.mrf.mxu0
      %v5670 = vpop.f32.mrf.mxu0
      %v5671 = vadd.f32 %v4447, %v5670
      %v5672 = vpop.f32.mrf.mxu0
      %5673 = vmatprep.mubr.bf16.mxu0 %v4925
      %5674 = vmatmul.mubr.bf16.gmra.mxu0 %v4924
      %v5675 = vpop.f32.mrf.mxu0
      %v5676 = vadd.f32 %v4447, %v5675
      %v5677 = vpop.f32.mrf.mxu0
      %v5678 = vpop.f32.mrf.mxu0
      %v5679 = vadd.f32 %v4447, %v5678
      %v5680 = vpop.f32.mrf.mxu0
      %5681 = vmatprep.mubr.bf16.mxu0 %v4934
      %5682 = vmatmul.mubr.bf16.gmra.mxu0 %v4933
      %v5683 = vpop.f32.mrf.mxu0
      %v5684 = vadd.f32 %v4447, %v5683
      %v5685 = vpop.f32.mrf.mxu0
      %v5686 = vpop.f32.mrf.mxu0
      %v5687 = vadd.f32 %v4447, %v5686
      %v5688 = vpop.f32.mrf.mxu0
      %5689 = vmatprep.mubr.bf16.mxu0 %v4943
      %5690 = vmatmul.mubr.bf16.gmra.mxu0 %v4942
      %v5691 = vpop.f32.mrf.mxu0
      %v5692 = vadd.f32 %v4447, %v5691
      %v5693 = vpop.f32.mrf.mxu0
      %v5694 = vpop.f32.mrf.mxu0
      %v5695 = vadd.f32 %v4447, %v5694
      %v5696 = vpop.f32.mrf.mxu0
      %5697 = vmatprep.mubr.bf16.mxu0 %v4952
      %5698 = vmatmul.mubr.bf16.gmra.mxu0 %v4951
      %v5699 = vpop.f32.mrf.mxu0
      %v5700 = vadd.f32 %v4447, %v5699
      %v5701 = vpop.f32.mrf.mxu0
      %v5702 = vpop.f32.mrf.mxu0
      %v5703 = vadd.f32 %v4447, %v5702
      %v5704 = vpop.f32.mrf.mxu0
      %5705 = vmatprep.mubr.bf16.mxu0 %v4961
      %5706 = vmatmul.mubr.bf16.gmra.mxu0 %v4960
      %v5707 = vpop.f32.mrf.mxu0
      %v5708 = vadd.f32 %v4447, %v5707
      %v5709 = vpop.f32.mrf.mxu0
      %v5710 = vpop.f32.mrf.mxu0
      %v5711 = vadd.f32 %v4447, %v5710
      %v5712 = vpop.f32.mrf.mxu0
      %5713 = vmatprep.mubr.bf16.mxu0 %v4970
      %5714 = vmatmul.mubr.bf16.gmra.mxu0 %v4969
      %v5715 = vpop.f32.mrf.mxu0
      %v5716 = vadd.f32 %v4447, %v5715
      %v5717 = vpop.f32.mrf.mxu0
      %v5718 = vpop.f32.mrf.mxu0
      %v5719 = vadd.f32 %v4447, %v5718
      %v5720 = vpop.f32.mrf.mxu0
      %5721 = vmatprep.mubr.bf16.mxu0 %v4979
      %5722 = vmatmul.mubr.bf16.gmra.mxu0 %v4978
      %v5723 = vpop.f32.mrf.mxu0
      %v5724 = vadd.f32 %v4447, %v5723
      %v5725 = vpop.f32.mrf.mxu0
      %v5726 = vpop.f32.mrf.mxu0
      %v5727 = vadd.f32 %v4447, %v5726
      %v5728 = vpop.f32.mrf.mxu0
      %5729 = vmatprep.mubr.bf16.mxu0 %v4988
      %5730 = vmatmul.mubr.bf16.gmra.mxu0 %v4987
      %v5731 = vpop.f32.mrf.mxu0
      %v5732 = vadd.f32 %v4447, %v5731
      %v5733 = vpop.f32.mrf.mxu0
      %v5734 = vpop.f32.mrf.mxu0
      %v5735 = vadd.f32 %v4447, %v5734
      %v5736 = vpop.f32.mrf.mxu0
      %5737 = vmatprep.mubr.bf16.mxu0 %v4997
      %5738 = vmatmul.mubr.bf16.gmra.mxu0 %v4996
      %v5739 = vpop.f32.mrf.mxu0
      %v5740 = vadd.f32 %v4447, %v5739
      %v5741 = vpop.f32.mrf.mxu0
      %v5742 = vpop.f32.mrf.mxu0
      %v5743 = vadd.f32 %v4447, %v5742
      %v5744 = vpop.f32.mrf.mxu0
      %5745 = vmatprep.mubr.bf16.mxu0 %v5006
      %5746 = vmatmul.mubr.bf16.gmra.mxu0 %v5005
      %v5747 = vpop.f32.mrf.mxu0
      %v5748 = vadd.f32 %v4447, %v5747
      %v5749 = vpop.f32.mrf.mxu0
      %v5750 = vpop.f32.mrf.mxu0
      %v5751 = vadd.f32 %v4447, %v5750
      %v5752 = vpop.f32.mrf.mxu0
      %5753 = vmatprep.mubr.bf16.mxu0 %v5015
      %5754 = vmatmul.mubr.bf16.gmra.mxu0 %v5014
      %v5755 = vpop.f32.mrf.mxu0
      %v5756 = vadd.f32 %v4447, %v5755
      %v5757 = vpop.f32.mrf.mxu0
      %v5758 = vpop.f32.mrf.mxu0
      %v5759 = vadd.f32 %v4447, %v5758
      %v5760 = vpop.f32.mrf.mxu0
      %5761 = vmatprep.mubr.bf16.mxu0 %v5024
      %5762 = vmatmul.mubr.bf16.gmra.mxu0 %v5023
      %v5763 = vpop.f32.mrf.mxu0
      %v5764 = vadd.f32 %v4447, %v5763
      %v5765 = vpop.f32.mrf.mxu0
      %v5766 = vpop.f32.mrf.mxu0
      %v5767 = vadd.f32 %v4447, %v5766
      %v5768 = vpop.f32.mrf.mxu0
      %5769 = vmatprep.mubr.bf16.mxu0 %v5033
      %5770 = vmatmul.mubr.bf16.gmra.mxu0 %v5032
      %v5771 = vpop.f32.mrf.mxu0
      %v5772 = vadd.f32 %v4447, %v5771
      %v5773 = vpop.f32.mrf.mxu0
      %v5774 = vpop.f32.mrf.mxu0
      %v5775 = vadd.f32 %v4447, %v5774
      %v5776 = vpop.f32.mrf.mxu0
      %5777 = vdwg.mxu0
      %5778 = vmatprep.subr.bf16.mxu0 0
      %5779 = vmatpush1.bf16.msra.mxu0 %v5496
      %5780 = vmatprep.subr.bf16.mxu0 0
      %5781 = vmatpush1.bf16.msra.mxu0 %v5495
      %5782 = vmatprep.subr.bf16.mxu0 0
      %5783 = vmatpush1.bf16.msra.mxu0 %v5494
      %5784 = vmatprep.subr.bf16.mxu0 0
      %5785 = vmatpush1.bf16.msra.mxu0 %v5493
      %5786 = vmatprep.subr.bf16.mxu0 0
      %5787 = vmatpush1.bf16.msra.mxu0 %v5492
      %5788 = vmatprep.subr.bf16.mxu0 0
      %5789 = vmatpush1.bf16.msra.mxu0 %v5491
      %5790 = vmatprep.subr.bf16.mxu0 0
      %5791 = vmatpush1.bf16.msra.mxu0 %v5490
      %5792 = vmatprep.subr.bf16.mxu0 0
      %5793 = vmatpush1.bf16.msra.mxu0 %v5489
      %5794 = vmatprep.subr.bf16.mxu0 0
      %5795 = vmatpush2.bf16.msra.mxu0 %v5504
      %5796 = vmatprep.subr.bf16.mxu0 0
      %5797 = vmatpush2.bf16.msra.mxu0 %v5503
      %5798 = vmatprep.subr.bf16.mxu0 0
      %5799 = vmatpush2.bf16.msra.mxu0 %v5502
      %5800 = vmatprep.subr.bf16.mxu0 0
      %5801 = vmatpush2.bf16.msra.mxu0 %v5501
      %5802 = vmatprep.subr.bf16.mxu0 0
      %5803 = vmatpush2.bf16.msra.mxu0 %v5500
      %5804 = vmatprep.subr.bf16.mxu0 0
      %5805 = vmatpush2.bf16.msra.mxu0 %v5499
      %5806 = vmatprep.subr.bf16.mxu0 0
      %5807 = vmatpush2.bf16.msra.mxu0 %v5498
      %5808 = vmatprep.subr.bf16.mxu0 0
      %5809 = vmatpush2.bf16.msra.mxu0 %v5497
      %5810 = vmatprep.mubr.bf16.mxu0 %v4900
      %5811 = vmatmul.mubr.bf16.gmra.mxu0 %v4899
      %v5812 = vpop.f32.mrf.mxu0
      %v5813 = vadd.f32 %v5652, %v5812
      %v5814 = vpop.f32.mrf.mxu0
      %v5815 = vpop.f32.mrf.mxu0
      %v5816 = vadd.f32 %v5655, %v5815
      %v5817 = vpop.f32.mrf.mxu0
      %5818 = vmatprep.mubr.bf16.mxu0 %v4909
      %5819 = vmatmul.mubr.bf16.gmra.mxu0 %v4908
      %v5820 = vpop.f32.mrf.mxu0
      %v5821 = vadd.f32 %v5660, %v5820
      %v5822 = vpop.f32.mrf.mxu0
      %v5823 = vpop.f32.mrf.mxu0
      %v5824 = vadd.f32 %v5663, %v5823
      %v5825 = vpop.f32.mrf.mxu0
      %5826 = vmatprep.mubr.bf16.mxu0 %v4918
      %5827 = vmatmul.mubr.bf16.gmra.mxu0 %v4917
      %v5828 = vpop.f32.mrf.mxu0
      %v5829 = vadd.f32 %v5668, %v5828
      %v5830 = vpop.f32.mrf.mxu0
      %v5831 = vpop.f32.mrf.mxu0
      %v5832 = vadd.f32 %v5671, %v5831
      %v5833 = vpop.f32.mrf.mxu0
      %5834 = vmatprep.mubr.bf16.mxu0 %v4927
      %5835 = vmatmul.mubr.bf16.gmra.mxu0 %v4926
      %v5836 = vpop.f32.mrf.mxu0
      %v5837 = vadd.f32 %v5676, %v5836
      %v5838 = vpop.f32.mrf.mxu0
      %v5839 = vpop.f32.mrf.mxu0
      %v5840 = vadd.f32 %v5679, %v5839
      %v5841 = vpop.f32.mrf.mxu0
      %5842 = vmatprep.mubr.bf16.mxu0 %v4936
      %5843 = vmatmul.mubr.bf16.gmra.mxu0 %v4935
      %v5844 = vpop.f32.mrf.mxu0
      %v5845 = vadd.f32 %v5684, %v5844
      %v5846 = vpop.f32.mrf.mxu0
      %v5847 = vpop.f32.mrf.mxu0
      %v5848 = vadd.f32 %v5687, %v5847
      %v5849 = vpop.f32.mrf.mxu0
      %5850 = vmatprep.mubr.bf16.mxu0 %v4945
      %5851 = vmatmul.mubr.bf16.gmra.mxu0 %v4944
      %v5852 = vpop.f32.mrf.mxu0
      %v5853 = vadd.f32 %v5692, %v5852
      %v5854 = vpop.f32.mrf.mxu0
      %v5855 = vpop.f32.mrf.mxu0
      %v5856 = vadd.f32 %v5695, %v5855
      %v5857 = vpop.f32.mrf.mxu0
      %5858 = vmatprep.mubr.bf16.mxu0 %v4954
      %5859 = vmatmul.mubr.bf16.gmra.mxu0 %v4953
      %v5860 = vpop.f32.mrf.mxu0
      %v5861 = vadd.f32 %v5700, %v5860
      %v5862 = vpop.f32.mrf.mxu0
      %v5863 = vpop.f32.mrf.mxu0
      %v5864 = vadd.f32 %v5703, %v5863
      %v5865 = vpop.f32.mrf.mxu0
      %5866 = vmatprep.mubr.bf16.mxu0 %v4963
      %5867 = vmatmul.mubr.bf16.gmra.mxu0 %v4962
      %v5868 = vpop.f32.mrf.mxu0
      %v5869 = vadd.f32 %v5708, %v5868
      %v5870 = vpop.f32.mrf.mxu0
      %v5871 = vpop.f32.mrf.mxu0
      %v5872 = vadd.f32 %v5711, %v5871
      %v5873 = vpop.f32.mrf.mxu0
      %5874 = vmatprep.mubr.bf16.mxu0 %v4972
      %5875 = vmatmul.mubr.bf16.gmra.mxu0 %v4971
      %v5876 = vpop.f32.mrf.mxu0
      %v5877 = vadd.f32 %v5716, %v5876
      %v5878 = vpop.f32.mrf.mxu0
      %v5879 = vpop.f32.mrf.mxu0
      %v5880 = vadd.f32 %v5719, %v5879
      %v5881 = vpop.f32.mrf.mxu0
      %5882 = vmatprep.mubr.bf16.mxu0 %v4981
      %5883 = vmatmul.mubr.bf16.gmra.mxu0 %v4980
      %v5884 = vpop.f32.mrf.mxu0
      %v5885 = vadd.f32 %v5724, %v5884
      %v5886 = vpop.f32.mrf.mxu0
      %v5887 = vpop.f32.mrf.mxu0
      %v5888 = vadd.f32 %v5727, %v5887
      %v5889 = vpop.f32.mrf.mxu0
      %5890 = vmatprep.mubr.bf16.mxu0 %v4990
      %5891 = vmatmul.mubr.bf16.gmra.mxu0 %v4989
      %v5892 = vpop.f32.mrf.mxu0
      %v5893 = vadd.f32 %v5732, %v5892
      %v5894 = vpop.f32.mrf.mxu0
      %v5895 = vpop.f32.mrf.mxu0
      %v5896 = vadd.f32 %v5735, %v5895
      %v5897 = vpop.f32.mrf.mxu0
      %5898 = vmatprep.mubr.bf16.mxu0 %v4999
      %5899 = vmatmul.mubr.bf16.gmra.mxu0 %v4998
      %v5900 = vpop.f32.mrf.mxu0
      %v5901 = vadd.f32 %v5740, %v5900
      %v5902 = vpop.f32.mrf.mxu0
      %v5903 = vpop.f32.mrf.mxu0
      %v5904 = vadd.f32 %v5743, %v5903
      %v5905 = vpop.f32.mrf.mxu0
      %5906 = vmatprep.mubr.bf16.mxu0 %v5008
      %5907 = vmatmul.mubr.bf16.gmra.mxu0 %v5007
      %v5908 = vpop.f32.mrf.mxu0
      %v5909 = vadd.f32 %v5748, %v5908
      %v5910 = vpop.f32.mrf.mxu0
      %v5911 = vpop.f32.mrf.mxu0
      %v5912 = vadd.f32 %v5751, %v5911
      %v5913 = vpop.f32.mrf.mxu0
      %5914 = vmatprep.mubr.bf16.mxu0 %v5017
      %5915 = vmatmul.mubr.bf16.gmra.mxu0 %v5016
      %v5916 = vpop.f32.mrf.mxu0
      %v5917 = vadd.f32 %v5756, %v5916
      %v5918 = vpop.f32.mrf.mxu0
      %v5919 = vpop.f32.mrf.mxu0
      %v5920 = vadd.f32 %v5759, %v5919
      %v5921 = vpop.f32.mrf.mxu0
      %5922 = vmatprep.mubr.bf16.mxu0 %v5026
      %5923 = vmatmul.mubr.bf16.gmra.mxu0 %v5025
      %v5924 = vpop.f32.mrf.mxu0
      %v5925 = vadd.f32 %v5764, %v5924
      %v5926 = vpop.f32.mrf.mxu0
      %v5927 = vpop.f32.mrf.mxu0
      %v5928 = vadd.f32 %v5767, %v5927
      %v5929 = vpop.f32.mrf.mxu0
      %5930 = vmatprep.mubr.bf16.mxu0 %v5035
      %5931 = vmatmul.mubr.bf16.gmra.mxu0 %v5034
      %v5932 = vpop.f32.mrf.mxu0
      %v5933 = vadd.f32 %v5772, %v5932
      %v5934 = vpop.f32.mrf.mxu0
      %v5935 = vpop.f32.mrf.mxu0
      %v5936 = vadd.f32 %v5775, %v5935
      %v5937 = vpop.f32.mrf.mxu0
      %5938 = vdwg.mxu0
      %5939 = vmatprep.subr.bf16.mxu0 0
      %5940 = vmatpush1.bf16.msra.mxu0 %v5512
      %5941 = vmatprep.subr.bf16.mxu0 0
      %5942 = vmatpush1.bf16.msra.mxu0 %v5511
      %5943 = vmatprep.subr.bf16.mxu0 0
      %5944 = vmatpush1.bf16.msra.mxu0 %v5510
      %5945 = vmatprep.subr.bf16.mxu0 0
      %5946 = vmatpush1.bf16.msra.mxu0 %v5509
      %5947 = vmatprep.subr.bf16.mxu0 0
      %5948 = vmatpush1.bf16.msra.mxu0 %v5508
      %5949 = vmatprep.subr.bf16.mxu0 0
      %5950 = vmatpush1.bf16.msra.mxu0 %v5507
      %5951 = vmatprep.subr.bf16.mxu0 0
      %5952 = vmatpush1.bf16.msra.mxu0 %v5506
      %5953 = vmatprep.subr.bf16.mxu0 0
      %5954 = vmatpush1.bf16.msra.mxu0 %v5505
      %5955 = vmatprep.subr.bf16.mxu0 0
      %5956 = vmatpush2.bf16.msra.mxu0 %v5520
      %5957 = vmatprep.subr.bf16.mxu0 0
      %5958 = vmatpush2.bf16.msra.mxu0 %v5519
      %5959 = vmatprep.subr.bf16.mxu0 0
      %5960 = vmatpush2.bf16.msra.mxu0 %v5518
      %5961 = vmatprep.subr.bf16.mxu0 0
      %5962 = vmatpush2.bf16.msra.mxu0 %v5517
      %5963 = vmatprep.subr.bf16.mxu0 0
      %5964 = vmatpush2.bf16.msra.mxu0 %v5516
      %5965 = vmatprep.subr.bf16.mxu0 0
      %5966 = vmatpush2.bf16.msra.mxu0 %v5515
      %5967 = vmatprep.subr.bf16.mxu0 0
      %5968 = vmatpush2.bf16.msra.mxu0 %v5514
      %5969 = vmatprep.subr.bf16.mxu0 0
      %5970 = vmatpush2.bf16.msra.mxu0 %v5513
      %5971 = vmatprep.mubr.bf16.mxu0 %v4902
      %5972 = vmatmul.mubr.bf16.gmra.mxu0 %v4901
      %v5973 = vpop.f32.mrf.mxu0
      %v5974 = vadd.f32 %v5813, %v5973
      %v5975 = vpop.f32.mrf.mxu0
      %v5976 = vpop.f32.mrf.mxu0
      %v5977 = vadd.f32 %v5816, %v5976
      %v5978 = vpop.f32.mrf.mxu0
      %5979 = vmatprep.mubr.bf16.mxu0 %v4911
      %5980 = vmatmul.mubr.bf16.gmra.mxu0 %v4910
      %v5981 = vpop.f32.mrf.mxu0
      %v5982 = vadd.f32 %v5821, %v5981
      %v5983 = vpop.f32.mrf.mxu0
      %v5984 = vpop.f32.mrf.mxu0
      %v5985 = vadd.f32 %v5824, %v5984
      %v5986 = vpop.f32.mrf.mxu0
      %5987 = vmatprep.mubr.bf16.mxu0 %v4920
      %5988 = vmatmul.mubr.bf16.gmra.mxu0 %v4919
      %v5989 = vpop.f32.mrf.mxu0
      %v5990 = vadd.f32 %v5829, %v5989
      %v5991 = vpop.f32.mrf.mxu0
      %v5992 = vpop.f32.mrf.mxu0
      %v5993 = vadd.f32 %v5832, %v5992
      %v5994 = vpop.f32.mrf.mxu0
      %5995 = vmatprep.mubr.bf16.mxu0 %v4929
      %5996 = vmatmul.mubr.bf16.gmra.mxu0 %v4928
      %v5997 = vpop.f32.mrf.mxu0
      %v5998 = vadd.f32 %v5837, %v5997
      %v5999 = vpop.f32.mrf.mxu0
      %v6000 = vpop.f32.mrf.mxu0
      %v6001 = vadd.f32 %v5840, %v6000
      %v6002 = vpop.f32.mrf.mxu0
      %6003 = vmatprep.mubr.bf16.mxu0 %v4938
      %6004 = vmatmul.mubr.bf16.gmra.mxu0 %v4937
      %v6005 = vpop.f32.mrf.mxu0
      %v6006 = vadd.f32 %v5845, %v6005
      %v6007 = vpop.f32.mrf.mxu0
      %v6008 = vpop.f32.mrf.mxu0
      %v6009 = vadd.f32 %v5848, %v6008
      %v6010 = vpop.f32.mrf.mxu0
      %6011 = vmatprep.mubr.bf16.mxu0 %v4947
      %6012 = vmatmul.mubr.bf16.gmra.mxu0 %v4946
      %v6013 = vpop.f32.mrf.mxu0
      %v6014 = vadd.f32 %v5853, %v6013
      %v6015 = vpop.f32.mrf.mxu0
      %v6016 = vpop.f32.mrf.mxu0
      %v6017 = vadd.f32 %v5856, %v6016
      %v6018 = vpop.f32.mrf.mxu0
      %6019 = vmatprep.mubr.bf16.mxu0 %v4956
      %6020 = vmatmul.mubr.bf16.gmra.mxu0 %v4955
      %v6021 = vpop.f32.mrf.mxu0
      %v6022 = vadd.f32 %v5861, %v6021
      %v6023 = vpop.f32.mrf.mxu0
      %v6024 = vpop.f32.mrf.mxu0
      %v6025 = vadd.f32 %v5864, %v6024
      %v6026 = vpop.f32.mrf.mxu0
      %6027 = vmatprep.mubr.bf16.mxu0 %v4965
      %6028 = vmatmul.mubr.bf16.gmra.mxu0 %v4964
      %v6029 = vpop.f32.mrf.mxu0
      %v6030 = vadd.f32 %v5869, %v6029
      %v6031 = vpop.f32.mrf.mxu0
      %v6032 = vpop.f32.mrf.mxu0
      %v6033 = vadd.f32 %v5872, %v6032
      %v6034 = vpop.f32.mrf.mxu0
      %6035 = vmatprep.mubr.bf16.mxu0 %v4974
      %6036 = vmatmul.mubr.bf16.gmra.mxu0 %v4973
      %v6037 = vpop.f32.mrf.mxu0
      %v6038 = vadd.f32 %v5877, %v6037
      %v6039 = vpop.f32.mrf.mxu0
      %v6040 = vpop.f32.mrf.mxu0
      %v6041 = vadd.f32 %v5880, %v6040
      %v6042 = vpop.f32.mrf.mxu0
      %6043 = vmatprep.mubr.bf16.mxu0 %v4983
      %6044 = vmatmul.mubr.bf16.gmra.mxu0 %v4982
      %v6045 = vpop.f32.mrf.mxu0
      %v6046 = vadd.f32 %v5885, %v6045
      %v6047 = vpop.f32.mrf.mxu0
      %v6048 = vpop.f32.mrf.mxu0
      %v6049 = vadd.f32 %v5888, %v6048
      %v6050 = vpop.f32.mrf.mxu0
      %6051 = vmatprep.mubr.bf16.mxu0 %v4992
      %6052 = vmatmul.mubr.bf16.gmra.mxu0 %v4991
      %v6053 = vpop.f32.mrf.mxu0
      %v6054 = vadd.f32 %v5893, %v6053
      %v6055 = vpop.f32.mrf.mxu0
      %v6056 = vpop.f32.mrf.mxu0
      %v6057 = vadd.f32 %v5896, %v6056
      %v6058 = vpop.f32.mrf.mxu0
      %6059 = vmatprep.mubr.bf16.mxu0 %v5001
      %6060 = vmatmul.mubr.bf16.gmra.mxu0 %v5000
      %v6061 = vpop.f32.mrf.mxu0
      %v6062 = vadd.f32 %v5901, %v6061
      %v6063 = vpop.f32.mrf.mxu0
      %v6064 = vpop.f32.mrf.mxu0
      %v6065 = vadd.f32 %v5904, %v6064
      %v6066 = vpop.f32.mrf.mxu0
      %6067 = vmatprep.mubr.bf16.mxu0 %v5010
      %6068 = vmatmul.mubr.bf16.gmra.mxu0 %v5009
      %v6069 = vpop.f32.mrf.mxu0
      %v6070 = vadd.f32 %v5909, %v6069
      %v6071 = vpop.f32.mrf.mxu0
      %v6072 = vpop.f32.mrf.mxu0
      %v6073 = vadd.f32 %v5912, %v6072
      %v6074 = vpop.f32.mrf.mxu0
      %6075 = vmatprep.mubr.bf16.mxu0 %v5019
      %6076 = vmatmul.mubr.bf16.gmra.mxu0 %v5018
      %v6077 = vpop.f32.mrf.mxu0
      %v6078 = vadd.f32 %v5917, %v6077
      %v6079 = vpop.f32.mrf.mxu0
      %v6080 = vpop.f32.mrf.mxu0
      %v6081 = vadd.f32 %v5920, %v6080
      %v6082 = vpop.f32.mrf.mxu0
      %6083 = vmatprep.mubr.bf16.mxu0 %v5028
      %6084 = vmatmul.mubr.bf16.gmra.mxu0 %v5027
      %v6085 = vpop.f32.mrf.mxu0
      %v6086 = vadd.f32 %v5925, %v6085
      %v6087 = vpop.f32.mrf.mxu0
      %v6088 = vpop.f32.mrf.mxu0
      %v6089 = vadd.f32 %v5928, %v6088
      %v6090 = vpop.f32.mrf.mxu0
      %6091 = vmatprep.mubr.bf16.mxu0 %v5037
      %6092 = vmatmul.mubr.bf16.gmra.mxu0 %v5036
      %v6093 = vpop.f32.mrf.mxu0
      %v6094 = vadd.f32 %v5933, %v6093
      %v6095 = vpop.f32.mrf.mxu0
      %v6096 = vpop.f32.mrf.mxu0
      %v6097 = vadd.f32 %v5936, %v6096
      %v6098 = vpop.f32.mrf.mxu0
      %6099 = vdwg.mxu0
      %6100 = vmatprep.subr.bf16.mxu0 0
      %6101 = vmatpush1.bf16.msra.mxu0 %v5528
      %6102 = vmatprep.subr.bf16.mxu0 0
      %6103 = vmatpush1.bf16.msra.mxu0 %v5527
      %6104 = vmatprep.subr.bf16.mxu0 0
      %6105 = vmatpush1.bf16.msra.mxu0 %v5526
      %6106 = vmatprep.subr.bf16.mxu0 0
      %6107 = vmatpush1.bf16.msra.mxu0 %v5525
      %6108 = vmatprep.subr.bf16.mxu0 0
      %6109 = vmatpush1.bf16.msra.mxu0 %v5524
      %6110 = vmatprep.subr.bf16.mxu0 0
      %6111 = vmatpush1.bf16.msra.mxu0 %v5523
      %6112 = vmatprep.subr.bf16.mxu0 0
      %6113 = vmatpush1.bf16.msra.mxu0 %v5522
      %6114 = vmatprep.subr.bf16.mxu0 0
      %6115 = vmatpush1.bf16.msra.mxu0 %v5521
      %6116 = vmatprep.subr.bf16.mxu0 0
      %6117 = vmatpush2.bf16.msra.mxu0 %v5536
      %6118 = vmatprep.subr.bf16.mxu0 0
      %6119 = vmatpush2.bf16.msra.mxu0 %v5535
      %6120 = vmatprep.subr.bf16.mxu0 0
      %6121 = vmatpush2.bf16.msra.mxu0 %v5534
      %6122 = vmatprep.subr.bf16.mxu0 0
      %6123 = vmatpush2.bf16.msra.mxu0 %v5533
      %6124 = vmatprep.subr.bf16.mxu0 0
      %6125 = vmatpush2.bf16.msra.mxu0 %v5532
      %6126 = vmatprep.subr.bf16.mxu0 0
      %6127 = vmatpush2.bf16.msra.mxu0 %v5531
      %6128 = vmatprep.subr.bf16.mxu0 0
      %6129 = vmatpush2.bf16.msra.mxu0 %v5530
      %6130 = vmatprep.subr.bf16.mxu0 0
      %6131 = vmatpush2.bf16.msra.mxu0 %v5529
      %6132 = vmatprep.mubr.bf16.mxu0 %v4904
      %6133 = vmatmul.mubr.bf16.gmra.mxu0 %v4903
      %v6134 = vpop.f32.mrf.mxu0
      %v6135 = vadd.f32 %v5974, %v6134
      %v6136 = vpop.f32.mrf.mxu0
      %v6137 = vpop.f32.mrf.mxu0
      %v6138 = vadd.f32 %v5977, %v6137
      %v6139 = vpop.f32.mrf.mxu0
      %6140 = vmatprep.mubr.bf16.mxu0 %v4913
      %6141 = vmatmul.mubr.bf16.gmra.mxu0 %v4912
      %v6142 = vpop.f32.mrf.mxu0
      %v6143 = vadd.f32 %v5982, %v6142
      %v6144 = vpop.f32.mrf.mxu0
      %v6145 = vpop.f32.mrf.mxu0
      %v6146 = vadd.f32 %v5985, %v6145
      %v6147 = vpop.f32.mrf.mxu0
      %6148 = vmatprep.mubr.bf16.mxu0 %v4922
      %6149 = vmatmul.mubr.bf16.gmra.mxu0 %v4921
      %v6150 = vpop.f32.mrf.mxu0
      %v6151 = vadd.f32 %v5990, %v6150
      %v6152 = vpop.f32.mrf.mxu0
      %v6153 = vpop.f32.mrf.mxu0
      %v6154 = vadd.f32 %v5993, %v6153
      %v6155 = vpop.f32.mrf.mxu0
      %6156 = vmatprep.mubr.bf16.mxu0 %v4931
      %6157 = vmatmul.mubr.bf16.gmra.mxu0 %v4930
      %v6158 = vpop.f32.mrf.mxu0
      %v6159 = vadd.f32 %v5998, %v6158
      %v6160 = vpop.f32.mrf.mxu0
      %v6161 = vpop.f32.mrf.mxu0
      %v6162 = vadd.f32 %v6001, %v6161
      %v6163 = vpop.f32.mrf.mxu0
      %6164 = vmatprep.mubr.bf16.mxu0 %v4940
      %6165 = vmatmul.mubr.bf16.gmra.mxu0 %v4939
      %v6166 = vpop.f32.mrf.mxu0
      %v6167 = vadd.f32 %v6006, %v6166
      %v6168 = vpop.f32.mrf.mxu0
      %v6169 = vpop.f32.mrf.mxu0
      %v6170 = vadd.f32 %v6009, %v6169
      %v6171 = vpop.f32.mrf.mxu0
      %6172 = vmatprep.mubr.bf16.mxu0 %v4949
      %6173 = vmatmul.mubr.bf16.gmra.mxu0 %v4948
      %v6174 = vpop.f32.mrf.mxu0
      %v6175 = vadd.f32 %v6014, %v6174
      %v6176 = vpop.f32.mrf.mxu0
      %v6177 = vpop.f32.mrf.mxu0
      %v6178 = vadd.f32 %v6017, %v6177
      %v6179 = vpop.f32.mrf.mxu0
      %6180 = vmatprep.mubr.bf16.mxu0 %v4958
      %6181 = vmatmul.mubr.bf16.gmra.mxu0 %v4957
      %v6182 = vpop.f32.mrf.mxu0
      %v6183 = vadd.f32 %v6022, %v6182
      %v6184 = vpop.f32.mrf.mxu0
      %v6185 = vpop.f32.mrf.mxu0
      %v6186 = vadd.f32 %v6025, %v6185
      %v6187 = vpop.f32.mrf.mxu0
      %6188 = vmatprep.mubr.bf16.mxu0 %v4967
      %6189 = vmatmul.mubr.bf16.gmra.mxu0 %v4966
      %v6190 = vpop.f32.mrf.mxu0
      %v6191 = vadd.f32 %v6030, %v6190
      %v6192 = vpop.f32.mrf.mxu0
      %v6193 = vpop.f32.mrf.mxu0
      %v6194 = vadd.f32 %v6033, %v6193
      %v6195 = vpop.f32.mrf.mxu0
      %6196 = vmatprep.mubr.bf16.mxu0 %v4976
      %6197 = vmatmul.mubr.bf16.gmra.mxu0 %v4975
      %v6198 = vpop.f32.mrf.mxu0
      %v6199 = vadd.f32 %v6038, %v6198
      %v6200 = vpop.f32.mrf.mxu0
      %v6201 = vpop.f32.mrf.mxu0
      %v6202 = vadd.f32 %v6041, %v6201
      %v6203 = vpop.f32.mrf.mxu0
      %6204 = vmatprep.mubr.bf16.mxu0 %v4985
      %6205 = vmatmul.mubr.bf16.gmra.mxu0 %v4984
      %v6206 = vpop.f32.mrf.mxu0
      %v6207 = vadd.f32 %v6046, %v6206
      %v6208 = vpop.f32.mrf.mxu0
      %v6209 = vpop.f32.mrf.mxu0
      %v6210 = vadd.f32 %v6049, %v6209
      %v6211 = vpop.f32.mrf.mxu0
      %6212 = vmatprep.mubr.bf16.mxu0 %v4994
      %6213 = vmatmul.mubr.bf16.gmra.mxu0 %v4993
      %v6214 = vpop.f32.mrf.mxu0
      %v6215 = vadd.f32 %v6054, %v6214
      %v6216 = vpop.f32.mrf.mxu0
      %v6217 = vpop.f32.mrf.mxu0
      %v6218 = vadd.f32 %v6057, %v6217
      %v6219 = vpop.f32.mrf.mxu0
      %6220 = vmatprep.mubr.bf16.mxu0 %v5003
      %6221 = vmatmul.mubr.bf16.gmra.mxu0 %v5002
      %v6222 = vpop.f32.mrf.mxu0
      %v6223 = vadd.f32 %v6062, %v6222
      %v6224 = vpop.f32.mrf.mxu0
      %v6225 = vpop.f32.mrf.mxu0
      %v6226 = vadd.f32 %v6065, %v6225
      %v6227 = vpop.f32.mrf.mxu0
      %6228 = vmatprep.mubr.bf16.mxu0 %v5012
      %6229 = vmatmul.mubr.bf16.gmra.mxu0 %v5011
      %v6230 = vpop.f32.mrf.mxu0
      %v6231 = vadd.f32 %v6070, %v6230
      %v6232 = vpop.f32.mrf.mxu0
      %v6233 = vpop.f32.mrf.mxu0
      %v6234 = vadd.f32 %v6073, %v6233
      %v6235 = vpop.f32.mrf.mxu0
      %6236 = vmatprep.mubr.bf16.mxu0 %v5021
      %6237 = vmatmul.mubr.bf16.gmra.mxu0 %v5020
      %v6238 = vpop.f32.mrf.mxu0
      %v6239 = vadd.f32 %v6078, %v6238
      %v6240 = vpop.f32.mrf.mxu0
      %v6241 = vpop.f32.mrf.mxu0
      %v6242 = vadd.f32 %v6081, %v6241
      %v6243 = vpop.f32.mrf.mxu0
      %6244 = vmatprep.mubr.bf16.mxu0 %v5030
      %6245 = vmatmul.mubr.bf16.gmra.mxu0 %v5029
      %v6246 = vpop.f32.mrf.mxu0
      %v6247 = vadd.f32 %v6086, %v6246
      %v6248 = vpop.f32.mrf.mxu0
      %v6249 = vpop.f32.mrf.mxu0
      %v6250 = vadd.f32 %v6089, %v6249
      %v6251 = vpop.f32.mrf.mxu0
      %6252 = vmatprep.mubr.bf16.mxu0 %v5039
      %6253 = vmatmul.mubr.bf16.gmra.mxu0 %v5038
      %v6254 = vpop.f32.mrf.mxu0
      %v6255 = vadd.f32 %v6094, %v6254
      %v6256 = vpop.f32.mrf.mxu0
      %v6257 = vpop.f32.mrf.mxu0
      %v6258 = vadd.f32 %v6097, %v6257
      %v6259 = vpop.f32.mrf.mxu0
      %6260 = vdwg.mxu0
      %6261 = vmatprep.subr.bf16.mxu0 0
      %6262 = vmatpush1.bf16.msra.mxu0 %v5544
      %6263 = vmatprep.subr.bf16.mxu0 0
      %6264 = vmatpush1.bf16.msra.mxu0 %v5543
      %6265 = vmatprep.subr.bf16.mxu0 0
      %6266 = vmatpush1.bf16.msra.mxu0 %v5542
      %6267 = vmatprep.subr.bf16.mxu0 0
      %6268 = vmatpush1.bf16.msra.mxu0 %v5541
      %6269 = vmatprep.subr.bf16.mxu0 0
      %6270 = vmatpush1.bf16.msra.mxu0 %v5540
      %6271 = vmatprep.subr.bf16.mxu0 0
      %6272 = vmatpush1.bf16.msra.mxu0 %v5539
      %6273 = vmatprep.subr.bf16.mxu0 0
      %6274 = vmatpush1.bf16.msra.mxu0 %v5538
      %6275 = vmatprep.subr.bf16.mxu0 0
      %6276 = vmatpush1.bf16.msra.mxu0 %v5537
      %6277 = vmatprep.subr.bf16.mxu0 0
      %6278 = vmatpush2.bf16.msra.mxu0 0
      %6279 = vmatprep.subr.bf16.mxu0 0
      %6280 = vmatpush2.bf16.msra.mxu0 0
      %6281 = vmatprep.subr.bf16.mxu0 0
      %6282 = vmatpush2.bf16.msra.mxu0 0
      %6283 = vmatprep.subr.bf16.mxu0 0
      %6284 = vmatpush2.bf16.msra.mxu0 0
      %6285 = vmatprep.subr.bf16.mxu0 0
      %6286 = vmatpush2.bf16.msra.mxu0 0
      %6287 = vmatprep.subr.bf16.mxu0 0
      %6288 = vmatpush2.bf16.msra.mxu0 0
      %6289 = vmatprep.subr.bf16.mxu0 0
      %6290 = vmatpush2.bf16.msra.mxu0 0
      %6291 = vmatprep.subr.bf16.mxu0 0
      %6292 = vmatpush2.bf16.msra.mxu0 0
      %6293 = vmatprep.mubr.bf16.mxu0 0
      %6294 = vmatmul.mubr.bf16.gmra.mxu0 %v4905
      %v6295 = vpop.f32.mrf.mxu0
      %v6296 = vadd.f32 %v6135, %v6295
      %v6297 = vpop.f32.mrf.mxu0
      %v6298 = vpop.f32.mrf.mxu0
      %v6299 = vadd.f32 %v6138, %v6298
      %v6300 = vpop.f32.mrf.mxu0
      %6301 = vmatprep.mubr.bf16.mxu0 0
      %6302 = vmatmul.mubr.bf16.gmra.mxu0 %v4914
      %v6303 = vpop.f32.mrf.mxu0
      %v6304 = vadd.f32 %v6143, %v6303
      %v6305 = vpop.f32.mrf.mxu0
      %v6306 = vpop.f32.mrf.mxu0
      %v6307 = vadd.f32 %v6146, %v6306
      %v6308 = vpop.f32.mrf.mxu0
      %6309 = vmatprep.mubr.bf16.mxu0 0
      %6310 = vmatmul.mubr.bf16.gmra.mxu0 %v4923
      %v6311 = vpop.f32.mrf.mxu0
      %v6312 = vadd.f32 %v6151, %v6311
      %v6313 = vpop.f32.mrf.mxu0
      %v6314 = vpop.f32.mrf.mxu0
      %v6315 = vadd.f32 %v6154, %v6314
      %v6316 = vpop.f32.mrf.mxu0
      %6317 = vmatprep.mubr.bf16.mxu0 0
      %6318 = vmatmul.mubr.bf16.gmra.mxu0 %v4932
      %v6319 = vpop.f32.mrf.mxu0
      %v6320 = vadd.f32 %v6159, %v6319
      %v6321 = vpop.f32.mrf.mxu0
      %v6322 = vpop.f32.mrf.mxu0
      %v6323 = vadd.f32 %v6162, %v6322
      %v6324 = vpop.f32.mrf.mxu0
      %6325 = vmatprep.mubr.bf16.mxu0 0
      %6326 = vmatmul.mubr.bf16.gmra.mxu0 %v4941
      %v6327 = vpop.f32.mrf.mxu0
      %v6328 = vadd.f32 %v6167, %v6327
      %v6329 = vpop.f32.mrf.mxu0
      %v6330 = vpop.f32.mrf.mxu0
      %v6331 = vadd.f32 %v6170, %v6330
      %v6332 = vpop.f32.mrf.mxu0
      %6333 = vmatprep.mubr.bf16.mxu0 0
      %6334 = vmatmul.mubr.bf16.gmra.mxu0 %v4950
      %v6335 = vpop.f32.mrf.mxu0
      %v6336 = vadd.f32 %v6175, %v6335
      %v6337 = vpop.f32.mrf.mxu0
      %v6338 = vpop.f32.mrf.mxu0
      %v6339 = vadd.f32 %v6178, %v6338
      %v6340 = vpop.f32.mrf.mxu0
      %6341 = vmatprep.mubr.bf16.mxu0 0
      %6342 = vmatmul.mubr.bf16.gmra.mxu0 %v4959
      %v6343 = vpop.f32.mrf.mxu0
      %v6344 = vadd.f32 %v6183, %v6343
      %v6345 = vpop.f32.mrf.mxu0
      %v6346 = vpop.f32.mrf.mxu0
      %v6347 = vadd.f32 %v6186, %v6346
      %v6348 = vpop.f32.mrf.mxu0
      %6349 = vmatprep.mubr.bf16.mxu0 0
      %6350 = vmatmul.mubr.bf16.gmra.mxu0 %v4968
      %v6351 = vpop.f32.mrf.mxu0
      %v6352 = vadd.f32 %v6191, %v6351
      %v6353 = vpop.f32.mrf.mxu0
      %v6354 = vpop.f32.mrf.mxu0
      %v6355 = vadd.f32 %v6194, %v6354
      %v6356 = vpop.f32.mrf.mxu0
      %6357 = vmatprep.mubr.bf16.mxu0 0
      %6358 = vmatmul.mubr.bf16.gmra.mxu0 %v4977
      %v6359 = vpop.f32.mrf.mxu0
      %v6360 = vadd.f32 %v6199, %v6359
      %v6361 = vpop.f32.mrf.mxu0
      %v6362 = vpop.f32.mrf.mxu0
      %v6363 = vadd.f32 %v6202, %v6362
      %v6364 = vpop.f32.mrf.mxu0
      %6365 = vmatprep.mubr.bf16.mxu0 0
      %6366 = vmatmul.mubr.bf16.gmra.mxu0 %v4986
      %v6367 = vpop.f32.mrf.mxu0
      %v6368 = vadd.f32 %v6207, %v6367
      %v6369 = vpop.f32.mrf.mxu0
      %v6370 = vpop.f32.mrf.mxu0
      %v6371 = vadd.f32 %v6210, %v6370
      %v6372 = vpop.f32.mrf.mxu0
      %6373 = vmatprep.mubr.bf16.mxu0 0
      %6374 = vmatmul.mubr.bf16.gmra.mxu0 %v4995
      %v6375 = vpop.f32.mrf.mxu0
      %v6376 = vadd.f32 %v6215, %v6375
      %v6377 = vpop.f32.mrf.mxu0
      %v6378 = vpop.f32.mrf.mxu0
      %v6379 = vadd.f32 %v6218, %v6378
      %v6380 = vpop.f32.mrf.mxu0
      %6381 = vmatprep.mubr.bf16.mxu0 0
      %6382 = vmatmul.mubr.bf16.gmra.mxu0 %v5004
      %v6383 = vpop.f32.mrf.mxu0
      %v6384 = vadd.f32 %v6223, %v6383
      %v6385 = vpop.f32.mrf.mxu0
      %v6386 = vpop.f32.mrf.mxu0
      %v6387 = vadd.f32 %v6226, %v6386
      %v6388 = vpop.f32.mrf.mxu0
      %6389 = vmatprep.mubr.bf16.mxu0 0
      %6390 = vmatmul.mubr.bf16.gmra.mxu0 %v5013
      %v6391 = vpop.f32.mrf.mxu0
      %v6392 = vadd.f32 %v6231, %v6391
      %v6393 = vpop.f32.mrf.mxu0
      %v6394 = vpop.f32.mrf.mxu0
      %v6395 = vadd.f32 %v6234, %v6394
      %v6396 = vpop.f32.mrf.mxu0
      %6397 = vmatprep.mubr.bf16.mxu0 0
      %6398 = vmatmul.mubr.bf16.gmra.mxu0 %v5022
      %v6399 = vpop.f32.mrf.mxu0
      %v6400 = vadd.f32 %v6239, %v6399
      %v6401 = vpop.f32.mrf.mxu0
      %v6402 = vpop.f32.mrf.mxu0
      %v6403 = vadd.f32 %v6242, %v6402
      %v6404 = vpop.f32.mrf.mxu0
      %6405 = vmatprep.mubr.bf16.mxu0 0
      %6406 = vmatmul.mubr.bf16.gmra.mxu0 %v5031
      %v6407 = vpop.f32.mrf.mxu0
      %v6408 = vadd.f32 %v6247, %v6407
      %v6409 = vpop.f32.mrf.mxu0
      %v6410 = vpop.f32.mrf.mxu0
      %v6411 = vadd.f32 %v6250, %v6410
      %v6412 = vpop.f32.mrf.mxu0
      %6413 = vmatprep.mubr.bf16.mxu0 0
      %6414 = vmatmul.mubr.bf16.gmra.mxu0 %v5040
      %v6415 = vpop.f32.mrf.mxu0
      %v6416 = vadd.f32 %v6255, %v6415
      %v6417 = vpop.f32.mrf.mxu0
      %v6418 = vpop.f32.mrf.mxu0
      %v6419 = vadd.f32 %v6258, %v6418
      %v6420 = vpop.f32.mrf.mxu0
      %6421 = vdwg.mxu0
      %vm6422 = vcmp.ge.f32.partialorder %v6296, 0.0
      %vm6423 = vcmp.ge.f32.partialorder %v6299, 0.0
      %vm6424 = vcmp.ge.f32.partialorder %v6304, 0.0
      %vm6425 = vcmp.ge.f32.partialorder %v6307, 0.0
      %vm6426 = vcmp.ge.f32.partialorder %v6312, 0.0
      %vm6427 = vcmp.ge.f32.partialorder %v6315, 0.0
      %vm6428 = vcmp.ge.f32.partialorder %v6320, 0.0
      %vm6429 = vcmp.ge.f32.partialorder %v6323, 0.0
      %vm6430 = vcmp.ge.f32.partialorder %v6328, 0.0
      %vm6431 = vcmp.ge.f32.partialorder %v6331, 0.0
      %vm6432 = vcmp.ge.f32.partialorder %v6336, 0.0
      %vm6433 = vcmp.ge.f32.partialorder %v6339, 0.0
      %vm6434 = vcmp.ge.f32.partialorder %v6344, 0.0
      %vm6435 = vcmp.ge.f32.partialorder %v6347, 0.0
      %vm6436 = vcmp.ge.f32.partialorder %v6352, 0.0
      %vm6437 = vcmp.ge.f32.partialorder %v6355, 0.0
      %vm6438 = vcmp.ge.f32.partialorder %v6360, 0.0
      %vm6439 = vcmp.ge.f32.partialorder %v6363, 0.0
      %vm6440 = vcmp.ge.f32.partialorder %v6368, 0.0
      %vm6441 = vcmp.ge.f32.partialorder %v6371, 0.0
      %vm6442 = vcmp.ge.f32.partialorder %v6376, 0.0
      %vm6443 = vcmp.ge.f32.partialorder %v6379, 0.0
      %vm6444 = vcmp.ge.f32.partialorder %v6384, 0.0
      %vm6445 = vcmp.ge.f32.partialorder %v6387, 0.0
      %vm6446 = vcmp.ge.f32.partialorder %v6392, 0.0
      %vm6447 = vcmp.ge.f32.partialorder %v6395, 0.0
      %vm6448 = vcmp.ge.f32.partialorder %v6400, 0.0
      %vm6449 = vcmp.ge.f32.partialorder %v6403, 0.0
      %vm6450 = vcmp.ge.f32.partialorder %v6408, 0.0
      %vm6451 = vcmp.ge.f32.partialorder %v6411, 0.0
      %vm6452 = vcmp.ge.f32.partialorder %v6416, 0.0
      %vm6453 = vcmp.ge.f32.partialorder %v6419, 0.0
      %v6454 = vmul.f32 %v6296, 0.01
      %v6455 = vmul.f32 %v6299, 0.01
      %v6456 = vmul.f32 %v6304, 0.01
      %v6457 = vmul.f32 %v6307, 0.01
      %v6458 = vmul.f32 %v6312, 0.01
      %v6459 = vmul.f32 %v6315, 0.01
      %v6460 = vmul.f32 %v6320, 0.01
      %v6461 = vmul.f32 %v6323, 0.01
      %v6462 = vmul.f32 %v6328, 0.01
      %v6463 = vmul.f32 %v6331, 0.01
      %v6464 = vmul.f32 %v6336, 0.01
      %v6465 = vmul.f32 %v6339, 0.01
      %v6466 = vmul.f32 %v6344, 0.01
      %v6467 = vmul.f32 %v6347, 0.01
      %v6468 = vmul.f32 %v6352, 0.01
      %v6469 = vmul.f32 %v6355, 0.01
      %v6470 = vmul.f32 %v6360, 0.01
      %v6471 = vmul.f32 %v6363, 0.01
      %v6472 = vmul.f32 %v6368, 0.01
      %v6473 = vmul.f32 %v6371, 0.01
      %v6474 = vmul.f32 %v6376, 0.01
      %v6475 = vmul.f32 %v6379, 0.01
      %v6476 = vmul.f32 %v6384, 0.01
      %v6477 = vmul.f32 %v6387, 0.01
      %v6478 = vmul.f32 %v6392, 0.01
      %v6479 = vmul.f32 %v6395, 0.01
      %v6480 = vmul.f32 %v6400, 0.01
      %v6481 = vmul.f32 %v6403, 0.01
      %v6482 = vmul.f32 %v6408, 0.01
      %v6483 = vmul.f32 %v6411, 0.01
      %v6484 = vmul.f32 %v6416, 0.01
      %v6485 = vmul.f32 %v6419, 0.01
      %v6486 = vsel %vm6422, %v6296, %v6454
      %v6487 = vsel %vm6423, %v6299, %v6455
      %v6488 = vsel %vm6424, %v6304, %v6456
      %v6489 = vsel %vm6425, %v6307, %v6457
      %v6490 = vsel %vm6426, %v6312, %v6458
      %v6491 = vsel %vm6427, %v6315, %v6459
      %v6492 = vsel %vm6428, %v6320, %v6460
      %v6493 = vsel %vm6429, %v6323, %v6461
      %v6494 = vsel %vm6430, %v6328, %v6462
      %v6495 = vsel %vm6431, %v6331, %v6463
      %v6496 = vsel %vm6432, %v6336, %v6464
      %v6497 = vsel %vm6433, %v6339, %v6465
      %v6498 = vsel %vm6434, %v6344, %v6466
      %v6499 = vsel %vm6435, %v6347, %v6467
      %v6500 = vsel %vm6436, %v6352, %v6468
      %v6501 = vsel %vm6437, %v6355, %v6469
      %v6502 = vsel %vm6438, %v6360, %v6470
      %v6503 = vsel %vm6439, %v6363, %v6471
      %v6504 = vsel %vm6440, %v6368, %v6472
      %v6505 = vsel %vm6441, %v6371, %v6473
      %v6506 = vsel %vm6442, %v6376, %v6474
      %v6507 = vsel %vm6443, %v6379, %v6475
      %v6508 = vsel %vm6444, %v6384, %v6476
      %v6509 = vsel %vm6445, %v6387, %v6477
      %v6510 = vsel %vm6446, %v6392, %v6478
      %v6511 = vsel %vm6447, %v6395, %v6479
      %v6512 = vsel %vm6448, %v6400, %v6480
      %v6513 = vsel %vm6449, %v6403, %v6481
      %v6514 = vsel %vm6450, %v6408, %v6482
      %v6515 = vsel %vm6451, %v6411, %v6483
      %v6516 = vsel %vm6452, %v6416, %v6484
      %v6517 = vsel %vm6453, %v6419, %v6485
      %v6518 = vpack.c.bf16 %v6487, %v6486
      %v6519 = vpack.c.bf16 %v6489, %v6488
      %v6520 = vpack.c.bf16 %v6491, %v6490
      %v6521 = vpack.c.bf16 %v6493, %v6492
      %v6522 = vpack.c.bf16 %v6495, %v6494
      %v6523 = vpack.c.bf16 %v6497, %v6496
      %v6524 = vpack.c.bf16 %v6499, %v6498
      %v6525 = vpack.c.bf16 %v6501, %v6500
      %v6526 = vpack.c.bf16 %v6503, %v6502
      %v6527 = vpack.c.bf16 %v6505, %v6504
      %v6528 = vpack.c.bf16 %v6507, %v6506
      %v6529 = vpack.c.bf16 %v6509, %v6508
      %v6530 = vpack.c.bf16 %v6511, %v6510
      %v6531 = vpack.c.bf16 %v6513, %v6512
      %v6532 = vpack.c.bf16 %v6515, %v6514
      %v6533 = vpack.c.bf16 %v6517, %v6516
      %v6534 = vld [vmem:[%s7] sm:$0xf]
      %v6535 = vld [vmem:[%s7 + $0x4] sm:$0xf]
      %v6536 = vld [vmem:[%s7 + $0x8] sm:$0xf]
      %v6537 = vld [vmem:[%s7 + $0xc] sm:$0xf]
      %v6538 = vld [vmem:[%s7 + $0x10] sm:$0xf]
      %v6539 = vld [vmem:[%s7 + $0x14] sm:$0xf]
      %v6540 = vld [vmem:[%s7 + $0x18] sm:$0xf]
      %v6541 = vld [vmem:[%s7 + $0x1c] sm:$0xf]
      %v6542 = vld [vmem:[%s7 + $0x20] sm:$0xf]
      %v6543 = vld [vmem:[%s7 + $0x24] sm:$0xf]
      %v6544 = vld [vmem:[%s7 + $0x28] sm:$0xf]
      %v6545 = vld [vmem:[%s7 + $0x2c] sm:$0xf]
      %v6546 = vld [vmem:[%s7 + $0x30] sm:$0xf]
      %v6547 = vld [vmem:[%s7 + $0x34] sm:$0xf]
      %v6548 = vld [vmem:[%s7 + $0x38] sm:$0xf]
      %v6549 = vld [vmem:[%s7 + $0x3c] sm:$0xf]
      %v6550 = vld [vmem:[%s8] sm:$0x1]
      %v6552 = vlaneseq
      %v6553 = vshrl.u32 %v6552, 7
      %v6554 = vsub.s32 0, %v6553
      %v6555 = vrot.slane %v6550, %v6554
      %v6573 = vunpack.c.l.b16 %v6534
      %v6574 = vunpack.c.l.b16 %v6535
      %v6575 = vunpack.c.l.b16 %v6536
      %v6576 = vunpack.c.l.b16 %v6537
      %v6577 = vunpack.c.l.b16 %v6538
      %v6578 = vunpack.c.l.b16 %v6539
      %v6579 = vunpack.c.l.b16 %v6540
      %v6580 = vunpack.c.l.b16 %v6541
      %v6581 = vunpack.c.l.b16 %v6542
      %v6582 = vunpack.c.l.b16 %v6543
      %v6583 = vunpack.c.l.b16 %v6544
      %v6584 = vunpack.c.l.b16 %v6545
      %v6585 = vunpack.c.l.b16 %v6546
      %v6586 = vunpack.c.l.b16 %v6547
      %v6587 = vunpack.c.l.b16 %v6548
      %v6588 = vunpack.c.l.b16 %v6549
      %v6589 = vpack.c.b16 %v6574, %v6573
      %v6590 = vpack.c.b16 %v6576, %v6575
      %v6591 = vpack.c.b16 %v6578, %v6577
      %v6592 = vpack.c.b16 %v6580, %v6579
      %v6593 = vpack.c.b16 %v6582, %v6581
      %v6594 = vpack.c.b16 %v6584, %v6583
      %v6595 = vpack.c.b16 %v6586, %v6585
      %v6596 = vpack.c.b16 %v6588, %v6587
      %6605 = vmatprep.subr.bf16.mxu0 0
      %6606 = vmatpush1.bf16.msra.mxu0 %v6596
      %6607 = vmatprep.subr.bf16.mxu0 0
      %6608 = vmatpush1.bf16.msra.mxu0 %v6595
      %6609 = vmatprep.subr.bf16.mxu0 0
      %6610 = vmatpush1.bf16.msra.mxu0 %v6594
      %6611 = vmatprep.subr.bf16.mxu0 0
      %6612 = vmatpush1.bf16.msra.mxu0 %v6593
      %6613 = vmatprep.subr.bf16.mxu0 0
      %6614 = vmatpush1.bf16.msra.mxu0 %v6592
      %6615 = vmatprep.subr.bf16.mxu0 0
      %6616 = vmatpush1.bf16.msra.mxu0 %v6591
      %6617 = vmatprep.subr.bf16.mxu0 0
      %6618 = vmatpush1.bf16.msra.mxu0 %v6590
      %6619 = vmatprep.subr.bf16.mxu0 0
      %6620 = vmatpush1.bf16.msra.mxu0 %v6589
      %6621 = vmatprep.subr.bf16.mxu0 0
      %6622 = vmatpush2.bf16.msra.mxu0 0
      %6623 = vmatprep.subr.bf16.mxu0 0
      %6624 = vmatpush2.bf16.msra.mxu0 0
      %6625 = vmatprep.subr.bf16.mxu0 0
      %6626 = vmatpush2.bf16.msra.mxu0 0
      %6627 = vmatprep.subr.bf16.mxu0 0
      %6628 = vmatpush2.bf16.msra.mxu0 0
      %6629 = vmatprep.subr.bf16.mxu0 0
      %6630 = vmatpush2.bf16.msra.mxu0 0
      %6631 = vmatprep.subr.bf16.mxu0 0
      %6632 = vmatpush2.bf16.msra.mxu0 0
      %6633 = vmatprep.subr.bf16.mxu0 0
      %6634 = vmatpush2.bf16.msra.mxu0 0
      %6635 = vmatprep.subr.bf16.mxu0 0
      %6636 = vmatpush2.bf16.msra.mxu0 0
      %6637 = vmatprep.mubr.bf16.mxu0 0
      %6638 = vmatmul.mubr.bf16.gmra.mxu0 %v6518
      %v6639 = vpop.f32.mrf.mxu0
      %v6640 = vadd.f32 %v6555, %v6639
      %v6641 = vpop.f32.mrf.mxu0
      %v6642 = vpop.f32.mrf.mxu0
      %v6643 = vadd.f32 %v6555, %v6642
      %v6644 = vpop.f32.mrf.mxu0
      %6645 = vmatprep.mubr.bf16.mxu0 0
      %6646 = vmatmul.mubr.bf16.gmra.mxu0 %v6519
      %v6647 = vpop.f32.mrf.mxu0
      %v6648 = vadd.f32 %v6555, %v6647
      %v6649 = vpop.f32.mrf.mxu0
      %v6650 = vpop.f32.mrf.mxu0
      %v6651 = vadd.f32 %v6555, %v6650
      %v6652 = vpop.f32.mrf.mxu0
      %6653 = vmatprep.mubr.bf16.mxu0 0
      %6654 = vmatmul.mubr.bf16.gmra.mxu0 %v6520
      %v6655 = vpop.f32.mrf.mxu0
      %v6656 = vadd.f32 %v6555, %v6655
      %v6657 = vpop.f32.mrf.mxu0
      %v6658 = vpop.f32.mrf.mxu0
      %v6659 = vadd.f32 %v6555, %v6658
      %v6660 = vpop.f32.mrf.mxu0
      %6661 = vmatprep.mubr.bf16.mxu0 0
      %6662 = vmatmul.mubr.bf16.gmra.mxu0 %v6521
      %v6663 = vpop.f32.mrf.mxu0
      %v6664 = vadd.f32 %v6555, %v6663
      %v6665 = vpop.f32.mrf.mxu0
      %v6666 = vpop.f32.mrf.mxu0
      %v6667 = vadd.f32 %v6555, %v6666
      %v6668 = vpop.f32.mrf.mxu0
      %6669 = vmatprep.mubr.bf16.mxu0 0
      %6670 = vmatmul.mubr.bf16.gmra.mxu0 %v6522
      %v6671 = vpop.f32.mrf.mxu0
      %v6672 = vadd.f32 %v6555, %v6671
      %v6673 = vpop.f32.mrf.mxu0
      %v6674 = vpop.f32.mrf.mxu0
      %v6675 = vadd.f32 %v6555, %v6674
      %v6676 = vpop.f32.mrf.mxu0
      %6677 = vmatprep.mubr.bf16.mxu0 0
      %6678 = vmatmul.mubr.bf16.gmra.mxu0 %v6523
      %v6679 = vpop.f32.mrf.mxu0
      %v6680 = vadd.f32 %v6555, %v6679
      %v6681 = vpop.f32.mrf.mxu0
      %v6682 = vpop.f32.mrf.mxu0
      %v6683 = vadd.f32 %v6555, %v6682
      %v6684 = vpop.f32.mrf.mxu0
      %6685 = vmatprep.mubr.bf16.mxu0 0
      %6686 = vmatmul.mubr.bf16.gmra.mxu0 %v6524
      %v6687 = vpop.f32.mrf.mxu0
      %v6688 = vadd.f32 %v6555, %v6687
      %v6689 = vpop.f32.mrf.mxu0
      %v6690 = vpop.f32.mrf.mxu0
      %v6691 = vadd.f32 %v6555, %v6690
      %v6692 = vpop.f32.mrf.mxu0
      %6693 = vmatprep.mubr.bf16.mxu0 0
      %6694 = vmatmul.mubr.bf16.gmra.mxu0 %v6525
      %v6695 = vpop.f32.mrf.mxu0
      %v6696 = vadd.f32 %v6555, %v6695
      %v6697 = vpop.f32.mrf.mxu0
      %v6698 = vpop.f32.mrf.mxu0
      %v6699 = vadd.f32 %v6555, %v6698
      %v6700 = vpop.f32.mrf.mxu0
      %6701 = vmatprep.mubr.bf16.mxu0 0
      %6702 = vmatmul.mubr.bf16.gmra.mxu0 %v6526
      %v6703 = vpop.f32.mrf.mxu0
      %v6704 = vadd.f32 %v6555, %v6703
      %v6705 = vpop.f32.mrf.mxu0
      %v6706 = vpop.f32.mrf.mxu0
      %v6707 = vadd.f32 %v6555, %v6706
      %v6708 = vpop.f32.mrf.mxu0
      %6709 = vmatprep.mubr.bf16.mxu0 0
      %6710 = vmatmul.mubr.bf16.gmra.mxu0 %v6527
      %v6711 = vpop.f32.mrf.mxu0
      %v6712 = vadd.f32 %v6555, %v6711
      %v6713 = vpop.f32.mrf.mxu0
      %v6714 = vpop.f32.mrf.mxu0
      %v6715 = vadd.f32 %v6555, %v6714
      %v6716 = vpop.f32.mrf.mxu0
      %6717 = vmatprep.mubr.bf16.mxu0 0
      %6718 = vmatmul.mubr.bf16.gmra.mxu0 %v6528
      %v6719 = vpop.f32.mrf.mxu0
      %v6720 = vadd.f32 %v6555, %v6719
      %v6721 = vpop.f32.mrf.mxu0
      %v6722 = vpop.f32.mrf.mxu0
      %v6723 = vadd.f32 %v6555, %v6722
      %v6724 = vpop.f32.mrf.mxu0
      %6725 = vmatprep.mubr.bf16.mxu0 0
      %6726 = vmatmul.mubr.bf16.gmra.mxu0 %v6529
      %v6727 = vpop.f32.mrf.mxu0
      %v6728 = vadd.f32 %v6555, %v6727
      %v6729 = vpop.f32.mrf.mxu0
      %v6730 = vpop.f32.mrf.mxu0
      %v6731 = vadd.f32 %v6555, %v6730
      %v6732 = vpop.f32.mrf.mxu0
      %6733 = vmatprep.mubr.bf16.mxu0 0
      %6734 = vmatmul.mubr.bf16.gmra.mxu0 %v6530
      %v6735 = vpop.f32.mrf.mxu0
      %v6736 = vadd.f32 %v6555, %v6735
      %v6737 = vpop.f32.mrf.mxu0
      %v6738 = vpop.f32.mrf.mxu0
      %v6739 = vadd.f32 %v6555, %v6738
      %v6740 = vpop.f32.mrf.mxu0
      %6741 = vmatprep.mubr.bf16.mxu0 0
      %6742 = vmatmul.mubr.bf16.gmra.mxu0 %v6531
      %v6743 = vpop.f32.mrf.mxu0
      %v6744 = vadd.f32 %v6555, %v6743
      %v6745 = vpop.f32.mrf.mxu0
      %v6746 = vpop.f32.mrf.mxu0
      %v6747 = vadd.f32 %v6555, %v6746
      %v6748 = vpop.f32.mrf.mxu0
      %6749 = vmatprep.mubr.bf16.mxu0 0
      %6750 = vmatmul.mubr.bf16.gmra.mxu0 %v6532
      %v6751 = vpop.f32.mrf.mxu0
      %v6752 = vadd.f32 %v6555, %v6751
      %v6753 = vpop.f32.mrf.mxu0
      %v6754 = vpop.f32.mrf.mxu0
      %v6755 = vadd.f32 %v6555, %v6754
      %v6756 = vpop.f32.mrf.mxu0
      %6757 = vmatprep.mubr.bf16.mxu0 0
      %6758 = vmatmul.mubr.bf16.gmra.mxu0 %v6533
      %v6759 = vpop.f32.mrf.mxu0
      %v6760 = vadd.f32 %v6555, %v6759
      %v6761 = vpop.f32.mrf.mxu0
      %v6762 = vpop.f32.mrf.mxu0
      %v6763 = vadd.f32 %v6555, %v6762
      %v6764 = vpop.f32.mrf.mxu0
      %6765 = vdwg.mxu0
      %v6766 = vadd.f32 %v6640, %v334
      %v6767 = vadd.f32 %v6643, %v335
      %v6768 = vadd.f32 %v6648, %v336
      %v6769 = vadd.f32 %v6651, %v337
      %v6770 = vadd.f32 %v6656, %v338
      %v6771 = vadd.f32 %v6659, %v339
      %v6772 = vadd.f32 %v6664, %v340
      %v6773 = vadd.f32 %v6667, %v341
      %v6774 = vadd.f32 %v6672, %v342
      %v6775 = vadd.f32 %v6675, %v343
      %v6776 = vadd.f32 %v6680, %v344
      %v6777 = vadd.f32 %v6683, %v345
      %v6778 = vadd.f32 %v6688, %v346
      %v6779 = vadd.f32 %v6691, %v347
      %v6780 = vadd.f32 %v6696, %v348
      %v6781 = vadd.f32 %v6699, %v349
      %v6782 = vadd.f32 %v6704, %v350
      %v6783 = vadd.f32 %v6707, %v351
      %v6784 = vadd.f32 %v6712, %v352
      %v6785 = vadd.f32 %v6715, %v353
      %v6786 = vadd.f32 %v6720, %v354
      %v6787 = vadd.f32 %v6723, %v355
      %v6788 = vadd.f32 %v6728, %v356
      %v6789 = vadd.f32 %v6731, %v357
      %v6790 = vadd.f32 %v6736, %v358
      %v6791 = vadd.f32 %v6739, %v359
      %v6792 = vadd.f32 %v6744, %v360
      %v6793 = vadd.f32 %v6747, %v361
      %v6794 = vadd.f32 %v6752, %v362
      %v6795 = vadd.f32 %v6755, %v363
      %v6796 = vadd.f32 %v6760, %v364
      %v6797 = vadd.f32 %v6763, %v365
      %vm6798 = vcmp.ge.f32.partialorder %v6766, 0.0
      %vm6799 = vcmp.ge.f32.partialorder %v6767, 0.0
      %vm6800 = vcmp.ge.f32.partialorder %v6768, 0.0
      %vm6801 = vcmp.ge.f32.partialorder %v6769, 0.0
      %vm6802 = vcmp.ge.f32.partialorder %v6770, 0.0
      %vm6803 = vcmp.ge.f32.partialorder %v6771, 0.0
      %vm6804 = vcmp.ge.f32.partialorder %v6772, 0.0
      %vm6805 = vcmp.ge.f32.partialorder %v6773, 0.0
      %vm6806 = vcmp.ge.f32.partialorder %v6774, 0.0
      %vm6807 = vcmp.ge.f32.partialorder %v6775, 0.0
      %vm6808 = vcmp.ge.f32.partialorder %v6776, 0.0
      %vm6809 = vcmp.ge.f32.partialorder %v6777, 0.0
      %vm6810 = vcmp.ge.f32.partialorder %v6778, 0.0
      %vm6811 = vcmp.ge.f32.partialorder %v6779, 0.0
      %vm6812 = vcmp.ge.f32.partialorder %v6780, 0.0
      %vm6813 = vcmp.ge.f32.partialorder %v6781, 0.0
      %vm6814 = vcmp.ge.f32.partialorder %v6782, 0.0
      %vm6815 = vcmp.ge.f32.partialorder %v6783, 0.0
      %vm6816 = vcmp.ge.f32.partialorder %v6784, 0.0
      %vm6817 = vcmp.ge.f32.partialorder %v6785, 0.0
      %vm6818 = vcmp.ge.f32.partialorder %v6786, 0.0
      %vm6819 = vcmp.ge.f32.partialorder %v6787, 0.0
      %vm6820 = vcmp.ge.f32.partialorder %v6788, 0.0
      %vm6821 = vcmp.ge.f32.partialorder %v6789, 0.0
      %vm6822 = vcmp.ge.f32.partialorder %v6790, 0.0
      %vm6823 = vcmp.ge.f32.partialorder %v6791, 0.0
      %vm6824 = vcmp.ge.f32.partialorder %v6792, 0.0
      %vm6825 = vcmp.ge.f32.partialorder %v6793, 0.0
      %vm6826 = vcmp.ge.f32.partialorder %v6794, 0.0
      %vm6827 = vcmp.ge.f32.partialorder %v6795, 0.0
      %vm6828 = vcmp.ge.f32.partialorder %v6796, 0.0
      %vm6829 = vcmp.ge.f32.partialorder %v6797, 0.0
      %v6830 = vmul.f32 %v6766, 0.01
      %v6831 = vmul.f32 %v6767, 0.01
      %v6832 = vmul.f32 %v6768, 0.01
      %v6833 = vmul.f32 %v6769, 0.01
      %v6834 = vmul.f32 %v6770, 0.01
      %v6835 = vmul.f32 %v6771, 0.01
      %v6836 = vmul.f32 %v6772, 0.01
      %v6837 = vmul.f32 %v6773, 0.01
      %v6838 = vmul.f32 %v6774, 0.01
      %v6839 = vmul.f32 %v6775, 0.01
      %v6840 = vmul.f32 %v6776, 0.01
      %v6841 = vmul.f32 %v6777, 0.01
      %v6842 = vmul.f32 %v6778, 0.01
      %v6843 = vmul.f32 %v6779, 0.01
      %v6844 = vmul.f32 %v6780, 0.01
      %v6845 = vmul.f32 %v6781, 0.01
      %v6846 = vmul.f32 %v6782, 0.01
      %v6847 = vmul.f32 %v6783, 0.01
      %v6848 = vmul.f32 %v6784, 0.01
      %v6849 = vmul.f32 %v6785, 0.01
      %v6850 = vmul.f32 %v6786, 0.01
      %v6851 = vmul.f32 %v6787, 0.01
      %v6852 = vmul.f32 %v6788, 0.01
      %v6853 = vmul.f32 %v6789, 0.01
      %v6854 = vmul.f32 %v6790, 0.01
      %v6855 = vmul.f32 %v6791, 0.01
      %v6856 = vmul.f32 %v6792, 0.01
      %v6857 = vmul.f32 %v6793, 0.01
      %v6858 = vmul.f32 %v6794, 0.01
      %v6859 = vmul.f32 %v6795, 0.01
      %v6860 = vmul.f32 %v6796, 0.01
      %v6861 = vmul.f32 %v6797, 0.01
      %v6862 = vsel %vm6798, %v6766, %v6830
      %v6863 = vsel %vm6799, %v6767, %v6831
      %v6864 = vsel %vm6800, %v6768, %v6832
      %v6865 = vsel %vm6801, %v6769, %v6833
      %v6866 = vsel %vm6802, %v6770, %v6834
      %v6867 = vsel %vm6803, %v6771, %v6835
      %v6868 = vsel %vm6804, %v6772, %v6836
      %v6869 = vsel %vm6805, %v6773, %v6837
      %v6870 = vsel %vm6806, %v6774, %v6838
      %v6871 = vsel %vm6807, %v6775, %v6839
      %v6872 = vsel %vm6808, %v6776, %v6840
      %v6873 = vsel %vm6809, %v6777, %v6841
      %v6874 = vsel %vm6810, %v6778, %v6842
      %v6875 = vsel %vm6811, %v6779, %v6843
      %v6876 = vsel %vm6812, %v6780, %v6844
      %v6877 = vsel %vm6813, %v6781, %v6845
      %v6878 = vsel %vm6814, %v6782, %v6846
      %v6879 = vsel %vm6815, %v6783, %v6847
      %v6880 = vsel %vm6816, %v6784, %v6848
      %v6881 = vsel %vm6817, %v6785, %v6849
      %v6882 = vsel %vm6818, %v6786, %v6850
      %v6883 = vsel %vm6819, %v6787, %v6851
      %v6884 = vsel %vm6820, %v6788, %v6852
      %v6885 = vsel %vm6821, %v6789, %v6853
      %v6886 = vsel %vm6822, %v6790, %v6854
      %v6887 = vsel %vm6823, %v6791, %v6855
      %v6888 = vsel %vm6824, %v6792, %v6856
      %v6889 = vsel %vm6825, %v6793, %v6857
      %v6890 = vsel %vm6826, %v6794, %v6858
      %v6891 = vsel %vm6827, %v6795, %v6859
      %v6892 = vsel %vm6828, %v6796, %v6860
      %v6893 = vsel %vm6829, %v6797, %v6861
      %6894 = vst [vmem:[%s332] sm:$0xff] %v6862
      %6895 = vst [vmem:[%s332 + $0x8] sm:$0xff] %v6863
      %6896 = vst [vmem:[%s332 + $0x10] sm:$0xff] %v6864
      %6897 = vst [vmem:[%s332 + $0x18] sm:$0xff] %v6865
      %6898 = vst [vmem:[%s332 + $0x20] sm:$0xff] %v6866
      %6899 = vst [vmem:[%s332 + $0x28] sm:$0xff] %v6867
      %6900 = vst [vmem:[%s332 + $0x30] sm:$0xff] %v6868
      %6901 = vst [vmem:[%s332 + $0x38] sm:$0xff] %v6869
      %6902 = vst [vmem:[%s332 + $0x40] sm:$0xff] %v6870
      %6903 = vst [vmem:[%s332 + $0x48] sm:$0xff] %v6871
      %6904 = vst [vmem:[%s332 + $0x50] sm:$0xff] %v6872
      %6905 = vst [vmem:[%s332 + $0x58] sm:$0xff] %v6873
      %6906 = vst [vmem:[%s332 + $0x60] sm:$0xff] %v6874
      %6907 = vst [vmem:[%s332 + $0x68] sm:$0xff] %v6875
      %6908 = vst [vmem:[%s332 + $0x70] sm:$0xff] %v6876
      %6909 = vst [vmem:[%s332 + $0x78] sm:$0xff] %v6877
      %6910 = vst [vmem:[%s332 + $0x80] sm:$0xff] %v6878
      %6911 = vst [vmem:[%s332 + $0x88] sm:$0xff] %v6879
      %6912 = vst [vmem:[%s332 + $0x90] sm:$0xff] %v6880
      %6913 = vst [vmem:[%s332 + $0x98] sm:$0xff] %v6881
      %6914 = vst [vmem:[%s332 + $0xa0] sm:$0xff] %v6882
      %6915 = vst [vmem:[%s332 + $0xa8] sm:$0xff] %v6883
      %6916 = vst [vmem:[%s332 + $0xb0] sm:$0xff] %v6884
      %6917 = vst [vmem:[%s332 + $0xb8] sm:$0xff] %v6885
      %6918 = vst [vmem:[%s332 + $0xc0] sm:$0xff] %v6886
      %6919 = vst [vmem:[%s332 + $0xc8] sm:$0xff] %v6887
      %6920 = vst [vmem:[%s332 + $0xd0] sm:$0xff] %v6888
      %6921 = vst [vmem:[%s332 + $0xd8] sm:$0xff] %v6889
      %6922 = vst [vmem:[%s332 + $0xe0] sm:$0xff] %v6890
      %6923 = vst [vmem:[%s332 + $0xe8] sm:$0xff] %v6891
      %6924 = vst [vmem:[%s332 + $0xf0] sm:$0xff] %v6892
      %6925 = vst [vmem:[%s332 + $0xf8] sm:$0xff] %v6893
      %p6926 = scmp.lt.s32.totalorder %s20, 1
      %s6927 = scalar_select %p6926, %s20, 1
      %s6928 = smul.addr %s6927, 32
      %s6929 = smul.addr %s6928, 8
      %s6930 = scalar_lea.vmem %s9, %s6929
      // Predicated region
      $region57: #{bottleneck_forward.1} parent=55 // pred_check
        %p6931 = pneg %p232
      $region58: #{bottleneck_forward.1} parent=55 // pred_check_branch
        %6933 = sbr.rel (%p6931) target = $region60
      $region59: #{bottleneck_forward.1} parent=55 // pred_region
        _
      $region60: #{bottleneck_forward.1} parent=55 // pred_fallthru
        _
    $region56: #{bottleneck_forward.1} parent=5 // pred_fallthru
      _
    %p6934 = scmp.le.s32.totalorder 2, %s15
    // Predicated region
    $region61: #{bottleneck_forward.1} parent=5 // pred_check
      %p6935 = pneg %p6934
    $region62: #{bottleneck_forward.1} parent=5 // pred_check_branch
      %6937 = sbr.rel (%p6935) target = $region64
    $region63: #{bottleneck_forward.1} parent=5 // pred_region
      %s6938 = ssub.s32 %s15, 2
      // Predicated region
      $region65: #{bottleneck_forward.1} parent=63 // pred_check
        %p6939 = pneg %p238
      $region66: #{bottleneck_forward.1} parent=63 // pred_check_branch
        %6941 = sbr.rel (%p6939) target = $region68
      $region67: #{bottleneck_forward.1} parent=63 // pred_region
        %p6942 = scmp.lt.s32.totalorder %s21, 1
        %s6943 = scalar_select %p6942, %s21, 1
        %s6944 = smul.addr %s6943, 32
        %s6945 = smul.addr %s6944, 8
        %s6946 = scalar_lea.vmem %s9, %s6945
      $region68: #{bottleneck_forward.1} parent=63 // pred_fallthru
        _
    $region64: #{bottleneck_forward.1} parent=5 // pred_fallthru
      _
  $region6: #{bottleneck_forward.1} parent=0 // loop_footer
    %s19 = sadd.s32 1, %s15
  $region7: #{bottleneck_forward.1} parent=0 // loop_footer_branch
    %14 = sbr.rel target = $region3
  $region8: #{bottleneck_forward.1} parent=0 // loop_exit
    _

</llo_original>
